<compile_context>
chip_gen: v5e
topology: v5e:2x2
jax: 0.10.0
libtpu: 0.0.40
codegen_flags: <defaults>
</compile_context>

<pallas_src>
import jax
import jax.numpy as jnp
from jax import lax
from jax.experimental import pallas as pl
from jax.experimental.pallas import tpu as pltpu

BN_EPS = 1e-5


# --------------------------------------------------------------------------
# fused kernel builder
# --------------------------------------------------------------------------

def _block_geoms(H, W, in_ch, couts):
    """Static (H_in, W_in, C_in, C_out) per Conv2dBlock."""
    geoms = []
    h, w, cin = H, W, in_ch
    for cout in couts:
        geoms.append((h, w, cin, cout))
        h, w, cin = h // 2, w // 2, cout
    return geoms, (h, w)


def _make_fused_kernel(N, H, W, in_ch, couts):
    geoms, (hf, wf) = _block_geoms(H, W, in_ch, couts)
    if hf != 1 or wf != 1:
        # TODO(synk): general NCHW Flatten order for a >1x1 final map is not
        # implemented; the default ConvClassifier config ends at 1x1.
        raise NotImplementedError("fused FC assumes a 1x1 final feature map")
    L = len(couts)

    def conv_pool(src_ref, w_ref, Hin, Win):
        """3x3 'same' conv as ONE bf16 MXU matmul (K = 9*Cin, f32 accumulate),
        then a 2x2 max-combine via two XLU sublane rolls (no VMEM round-trip).
        The returned (M, Cout) f32 value holds the pooled outputs at the rows
        with odd padded coordinates (hp, wp).  Rows corrupted by the roll
        wrap-around all lie at r >= M - Wp - 1, i.e. in padded positions that
        are never gathered."""
        Hp, Wp = Hin + 2, Win + 2
        M = N * Hp * Wp
        S = Wp + 1                       # extension rows at the buffer front
        # im2col: the 9 taps are contiguous row-shifted windows of the
        # extended buffer, concatenated along the channel (lane) axis.
        slabs = []
        for ky in range(3):
            for kx in range(3):
                off = S + (ky - 1) * Wp + (kx - 1)
                slabs.append(src_ref[off:off + M, :])          # bf16, no cast
        x = jnp.concatenate(slabs, axis=-1)                    # (M, 9*Cin) bf16
        y = jnp.dot(x, w_ref[...], preferred_element_type=jnp.float32)
        # horizontal pair max: yh[r] = max(y[r], y[r+1])
        yh = jnp.maximum(y, pltpu.roll(y, M - 1, axis=0))
        # vertical pair max:  ym[r] = max(yh[r], yh[r+Wp])
        return jnp.maximum(yh, pltpu.roll(yh, M - Wp, axis=0))

    def bn_affine(pooled, g_ref, be_ref):
        """Batch-statistic BatchNorm folded into one (scale, shift) affine.
        The conv bias is dropped: a per-channel constant commutes with the
        max-pool and cancels exactly in (y - mean)."""
        cnt = float(pooled.shape[0])
        mean = jnp.sum(pooled, axis=0, keepdims=True) / cnt
        var = jnp.sum(jnp.square(pooled - mean), axis=0, keepdims=True) / cnt
        scale = g_ref[...] * lax.rsqrt(var + BN_EPS)
        shift = be_ref[...] - mean * scale
        return scale, shift

    def kernel(*refs):
        it = iter(refs)
        x0_ref = next(it)
        w_refs = [next(it) for _ in range(L)]
        g_refs = [next(it) for _ in range(L)]
        be_refs = [next(it) for _ in range(L)]
        fcw_ref = next(it)
        fcb_ref = next(it)
        o_ref = next(it)
        ext_refs = [next(it) for _ in range(L - 1)]
        ym_refs = [next(it) for _ in range(L)]

        # Zero the intermediate activation buffers once: the untouched ring is
        # the zero 'same'-padding of the next block's conv.
        for er in ext_refs:
            er[...] = jnp.zeros(er.shape, er.dtype)

        src = x0_ref
        for l in range(L):
            Hin, Win, _, Cout = geoms[l]
            Hout, Wout = Hin // 2, Win // 2
            Hp, Wp = Hin + 2, Win + 2

            ym = conv_pool(src, w_refs[l], Hin, Win)
            # Single full store; only the pooled rows are re-read below with
            # stride-2 ref loads (no shifted full-map reloads, no write-back).
            ym_refs[l][...] = ym

            if l < L - 1:
                # Gather the pooled rows as values, compute BN stats exactly
                # over them, apply the folded affine + ReLU, cast to bf16 and
                # scatter into the interior of the next block's padded buffer.
                chunks = []
                for n in range(N):
                    for i in range(Hout):
                        r0 = n * Hp * Wp + (2 * i + 1) * Wp + 1
                        chunks.append(ym_refs[l][pl.ds(r0, Wout, 2), :])
                scale, shift = bn_affine(jnp.concatenate(chunks, axis=0),
                                         g_refs[l], be_refs[l])
                scale_b = jnp.broadcast_to(scale, (Wout, Cout))   # hoisted once
                shift_b = jnp.broadcast_to(shift, (Wout, Cout))

                dst = ext_refs[l]
                Hp2, Wp2 = Hout + 2, Wout + 2
                S2 = Wp2 + 1
                k = 0
                for n in range(N):
                    for i in range(Hout):
                        rd = S2 + n * Hp2 * Wp2 + (i + 1) * Wp2 + 1
                        dst[rd:rd + Wout, :] = jnp.maximum(
                            chunks[k] * scale_b + shift_b, 0.0
                        ).astype(jnp.bfloat16)
                        k += 1
                src = dst
            else:
                # Last block: 1x1 map.  BN over the N pooled rows, ReLU, then
                # ONE fused FC matmul and ONE output store (Flatten of a 1x1
                # NCHW map is just the channel axis).
                rows = [ym_refs[l][n * Hp * Wp + Wp + 1:n * Hp * Wp + Wp + 2, :]
                        for n in range(N)]
                feats = jnp.concatenate(rows, axis=0)            # (N, Cout) f32
                scale, shift = bn_affine(feats, g_refs[l], be_refs[l])
                feat = jnp.maximum(feats * scale + shift, 0.0).astype(jnp.bfloat16)
                o_ref[...] = (jnp.dot(feat, fcw_ref[...],
                                      preferred_element_type=jnp.float32)
                              + fcb_ref[...])

    return kernel, geoms


# --------------------------------------------------------------------------
# wrapper
# --------------------------------------------------------------------------

def conv_classifier_forward(params, x_nhwc):
    """Fused Pallas forward pass of ConvClassifier (NHWC input)."""
    N, H, W, Cin = x_nhwc.shape
    couts = [w.shape[-1] for (w, _, _, _) in params["blocks"]]
    out_dim = params["fc_w"].shape[-1]
    kernel, geoms = _make_fused_kernel(N, H, W, Cin, couts)

    # One-time input prep (pure layout): zero-pad and flatten the input into
    # the extended row-buffer layout, cast to bf16 (the reference casts every
    # conv input to bf16 as well).
    Wp0 = W + 2
    xflat = jnp.pad(x_nhwc, ((0, 0), (1, 1), (1, 1), (0, 0))
                    ).reshape(N * (H + 2) * (W + 2), Cin)
    x0 = jnp.pad(xflat, ((Wp0 + 1, Wp0 + 1), (0, 0))).astype(jnp.bfloat16)

    wbs, gs, bes = [], [], []
    for (w, b, g, bt) in params["blocks"]:
        cin, cout = w.shape[2], w.shape[3]
        wbs.append(w.reshape(9 * cin, cout).astype(jnp.bfloat16))  # (9*Cin, Cout)
        gs.append(g.reshape(1, cout))
        bes.append(bt.reshape(1, cout))
        # conv bias b is NOT passed: it cancels exactly under batch-stat BN.
    fcw = params["fc_w"].astype(jnp.bfloat16)
    fcb = params["fc_b"].reshape(1, out_dim)

    inputs = [x0] + wbs + gs + bes + [fcw, fcb]

    # VMEM scratch: bf16 padded activation buffers for blocks 1..L-1 and one
    # f32 conv/pool workspace per block.  Everything stays on-chip (<1 MiB).
    scratch = []
    for (gh, gw, gcin, _) in geoms[1:]:
        mext = N * (gh + 2) * (gw + 2) + 2 * (gw + 3)
        scratch.append(pltpu.VMEM((mext, gcin), jnp.bfloat16))
    for (gh, gw, _, gcout) in geoms:
        scratch.append(pltpu.VMEM((N * (gh + 2) * (gw + 2), gcout), jnp.float32))

    # TODO(synk): for large N*H*W, add a batch grid with
    # dimension_semantics=("parallel",) (v7x has 2 TensorCores), turn the BN
    # batch statistics into a cross-tile (sum, sum-of-squares) reduction,
    # reuse one max-sized ym/ext scratch (pl.run_scoped) and derive
    # vmem_limit_bytes against v7x's 64 MiB VMEM.
    return pl.pallas_call(
        kernel,
        out_shape=jax.ShapeDtypeStruct((N, out_dim), jnp.float32),
        in_specs=[pl.BlockSpec(memory_space=pltpu.MemorySpace.VMEM)
                  for _ in inputs],
        out_specs=pl.BlockSpec(memory_space=pltpu.MemorySpace.VMEM),
        scratch_shapes=scratch,
    )(*inputs)


# --------------------------------------------------------------------------
# parameters & pure-JAX reference (same bf16-matmul / f32-elsewhere precision)
# --------------------------------------------------------------------------

def init_params(key, in_channels, out_dim, num_filters, num_hidden, fc_in):
    dims = [(in_channels, num_filters)]
    for i in range(num_hidden):
        dims.append(((1 if i == 0 else 2) * num_filters, 2 * num_filters))
    blocks = []
    for (cin, cout) in dims:
        key, k1, k2 = jax.random.split(key, 3)
        w = 0.1 * jax.random.normal(k1, (3, 3, cin, cout), jnp.float32)  # HWIO
        bb = 0.1 * jax.random.normal(k2, (cout,), jnp.float32)
        gamma = jnp.ones((cout,), jnp.float32)   # BatchNorm2d default init
        beta = jnp.zeros((cout,), jnp.float32)
        blocks.append((w, bb, gamma, beta))
    key, k1, k2 = jax.random.split(key, 3)
    fc_w = 0.1 * jax.random.normal(k1, (fc_in, out_dim), jnp.float32)
    fc_b = 0.1 * jax.random.normal(k2, (out_dim,), jnp.float32)
    return {"blocks": blocks, "fc_w": fc_w, "fc_b": fc_b}


def reference_forward(params, x_nhwc):
    h = x_nhwc
    for (w, b, g, bt) in params["blocks"]:
        y = lax.conv_general_dilated(
            h.astype(jnp.bfloat16), w.astype(jnp.bfloat16),
            window_strides=(1, 1), padding="SAME",
            dimension_numbers=("NHWC", "HWIO", "NHWC"),
            preferred_element_type=jnp.float32) + b
        y = lax.reduce_window(y, -jnp.inf, lax.max,
                              (1, 2, 2, 1), (1, 2, 2, 1), "VALID")
        mean = jnp.mean(y, axis=(0, 1, 2), keepdims=True)
        var = jnp.mean(jnp.square(y - mean), axis=(0, 1, 2), keepdims=True)
        h = jnp.maximum(g * (y - mean) * lax.rsqrt(var + BN_EPS) + bt, 0.0)
    N = h.shape[0]
    flat = jnp.transpose(h, (0, 3, 1, 2)).reshape(N, -1)   # nn.Flatten (NCHW)
    return jnp.dot(flat.astype(jnp.bfloat16),
                   params["fc_w"].astype(jnp.bfloat16),
                   preferred_element_type=jnp.float32) + params["fc_b"]


# --------------------------------------------------------------------------
# main
# --------------------------------------------------------------------------

if __name__ == "__main__":
    N, C, H, W = 2, 4, 16, 16          # PyTorch-style NCHW input shape
    num_filters, out_dim, num_hidden = 8, 10, 3

    key = jax.random.PRNGKey(0)
    kx, kp = jax.random.split(key)
    x_nchw = jax.random.normal(kx, (N, C, H, W), jnp.float32)
    x_nhwc = jnp.transpose(x_nchw, (0, 2, 3, 1))   # layout-only boundary transpose

    final_sp = H // (2 ** (num_hidden + 1))            # 16 -> 8 -> 4 -> 2 -> 1
    fc_in = 2 * num_filters * final_sp * final_sp      # LazyLinear in-features
    params = init_params(kp, C, out_dim, num_filters, num_hidden, fc_in)

    out = jax.block_until_ready(conv_classifier_forward(params, x_nhwc))
    ref = jax.block_until_ready(reference_forward(params, x_nhwc))

    assert out.shape == (N, out_dim)
    assert jnp.allclose(out, ref, atol=3e-2, rtol=3e-2), (
        "max abs diff %f" % float(jnp.max(jnp.abs(out - ref))))
    print("KERNEL_OK")
</pallas_src>

<mosaic_0001>
module attributes {stable_mosaic.version = 11 : i64} {
  func.func @kernel(%arg0: memref<686x4xbf16, #tpu.memory_space<vmem>>, %arg1: memref<36x8xbf16, #tpu.memory_space<vmem>>, %arg2: memref<72x16xbf16, #tpu.memory_space<vmem>>, %arg3: memref<144x16xbf16, #tpu.memory_space<vmem>>, %arg4: memref<144x16xbf16, #tpu.memory_space<vmem>>, %arg5: memref<1x8xf32, #tpu.memory_space<vmem>>, %arg6: memref<1x16xf32, #tpu.memory_space<vmem>>, %arg7: memref<1x16xf32, #tpu.memory_space<vmem>>, %arg8: memref<1x16xf32, #tpu.memory_space<vmem>>, %arg9: memref<1x8xf32, #tpu.memory_space<vmem>>, %arg10: memref<1x16xf32, #tpu.memory_space<vmem>>, %arg11: memref<1x16xf32, #tpu.memory_space<vmem>>, %arg12: memref<1x16xf32, #tpu.memory_space<vmem>>, %arg13: memref<16x10xbf16, #tpu.memory_space<vmem>>, %arg14: memref<1x10xf32, #tpu.memory_space<vmem>>, %arg15: memref<2x10xf32, #tpu.memory_space<vmem>>, %arg16: memref<222x8xbf16, #tpu.memory_space<vmem>>, %arg17: memref<86x16xbf16, #tpu.memory_space<vmem>>, %arg18: memref<42x16xbf16, #tpu.memory_space<vmem>>, %arg19: memref<648x8xf32, #tpu.memory_space<vmem>>, %arg20: memref<200x16xf32, #tpu.memory_space<vmem>>, %arg21: memref<72x16xf32, #tpu.memory_space<vmem>>, %arg22: memref<32x16xf32, #tpu.memory_space<vmem>>) attributes {dimension_semantics = [], scalar_prefetch = 0 : i64, scratch_operands = 7 : i64, tpu.core_type = #tpu.core_type<tc>} {
    %cst = arith.constant 0.000000e+00 : bf16
    %0 = vector.broadcast %cst : bf16 to vector<222x8xbf16>
    %c0 = arith.constant 0 : index
    %c0_0 = arith.constant 0 : index
    %1 = vector.load %arg16[%c0, %c0_0] : memref<222x8xbf16, #tpu.memory_space<vmem>>, vector<222x8xbf16>
    tpu.vector_store %arg16[%c0, %c0_0], %0 {strides = array<i32>} : memref<222x8xbf16, #tpu.memory_space<vmem>>, vector<222x8xbf16>,
    %cst_1 = arith.constant 0.000000e+00 : bf16
    %2 = vector.broadcast %cst_1 : bf16 to vector<86x16xbf16>
    %c0_2 = arith.constant 0 : index
    %c0_3 = arith.constant 0 : index
    %3 = vector.load %arg17[%c0_2, %c0_3] : memref<86x16xbf16, #tpu.memory_space<vmem>>, vector<86x16xbf16>
    tpu.vector_store %arg17[%c0_2, %c0_3], %2 {strides = array<i32>} : memref<86x16xbf16, #tpu.memory_space<vmem>>, vector<86x16xbf16>,
    %cst_4 = arith.constant 0.000000e+00 : bf16
    %4 = vector.broadcast %cst_4 : bf16 to vector<42x16xbf16>
    %c0_5 = arith.constant 0 : index
    %c0_6 = arith.constant 0 : index
    %5 = vector.load %arg18[%c0_5, %c0_6] : memref<42x16xbf16, #tpu.memory_space<vmem>>, vector<42x16xbf16>
    tpu.vector_store %arg18[%c0_5, %c0_6], %4 {strides = array<i32>} : memref<42x16xbf16, #tpu.memory_space<vmem>>, vector<42x16xbf16>,
    %c0_7 = arith.constant 0 : index
    %c0_8 = arith.constant 0 : index
    %6 = vector.load %arg0[%c0_7, %c0_8] : memref<686x4xbf16, #tpu.memory_space<vmem>>, vector<648x4xbf16>
    %c1 = arith.constant 1 : index
    %c0_9 = arith.constant 0 : index
    %7 = vector.load %arg0[%c1, %c0_9] : memref<686x4xbf16, #tpu.memory_space<vmem>>, vector<648x4xbf16>
    %c2 = arith.constant 2 : index
    %c0_10 = arith.constant 0 : index
    %8 = vector.load %arg0[%c2, %c0_10] : memref<686x4xbf16, #tpu.memory_space<vmem>>, vector<648x4xbf16>
    %c18 = arith.constant 18 : index
    %c0_11 = arith.constant 0 : index
    %9 = vector.load %arg0[%c18, %c0_11] : memref<686x4xbf16, #tpu.memory_space<vmem>>, vector<648x4xbf16>
    %c19 = arith.constant 19 : index
    %c0_12 = arith.constant 0 : index
    %10 = vector.load %arg0[%c19, %c0_12] : memref<686x4xbf16, #tpu.memory_space<vmem>>, vector<648x4xbf16>
    %c20 = arith.constant 20 : index
    %c0_13 = arith.constant 0 : index
    %11 = vector.load %arg0[%c20, %c0_13] : memref<686x4xbf16, #tpu.memory_space<vmem>>, vector<648x4xbf16>
    %c36 = arith.constant 36 : index
    %c0_14 = arith.constant 0 : index
    %12 = vector.load %arg0[%c36, %c0_14] : memref<686x4xbf16, #tpu.memory_space<vmem>>, vector<648x4xbf16>
    %c37 = arith.constant 37 : index
    %c0_15 = arith.constant 0 : index
    %13 = vector.load %arg0[%c37, %c0_15] : memref<686x4xbf16, #tpu.memory_space<vmem>>, vector<648x4xbf16>
    %c38 = arith.constant 38 : index
    %c0_16 = arith.constant 0 : index
    %14 = vector.load %arg0[%c38, %c0_16] : memref<686x4xbf16, #tpu.memory_space<vmem>>, vector<648x4xbf16>
    %15 = tpu.concatenate %6, %7, %8, %9, %10, %11, %12, %13, %14 in 1 : vector<648x4xbf16>, vector<648x4xbf16>, vector<648x4xbf16>, vector<648x4xbf16>, vector<648x4xbf16>, vector<648x4xbf16>, vector<648x4xbf16>, vector<648x4xbf16>, vector<648x4xbf16> -> vector<648x36xbf16>
    %c0_17 = arith.constant 0 : index
    %c0_18 = arith.constant 0 : index
    %16 = vector.load %arg1[%c0_17, %c0_18] : memref<36x8xbf16, #tpu.memory_space<vmem>>, vector<36x8xbf16>
    %cst_19 = arith.constant dense<0.000000e+00> : vector<648x8xf32>
    %17 = tpu.matmul %15, %16, %cst_19 {dimension_numbers = #tpu.dot_dimension_numbers<[1], [0], [0], [1], [0, 0, 1, 1], [], []>} : vector<648x36xbf16>, vector<36x8xbf16>, vector<648x8xf32> -> vector<648x8xf32>
    %c647_i32 = arith.constant 647 : i32
    %18 = tpu.dynamic_rotate %17 by %c647_i32 dim 0 : vector<648x8xf32>, i32 -> vector<648x8xf32>
    %19 = arith.maximumf %17, %18 : vector<648x8xf32>
    %c630_i32 = arith.constant 630 : i32
    %20 = tpu.dynamic_rotate %19 by %c630_i32 dim 0 : vector<648x8xf32>, i32 -> vector<648x8xf32>
    %21 = arith.maximumf %19, %20 : vector<648x8xf32>
    %c0_20 = arith.constant 0 : index
    %c0_21 = arith.constant 0 : index
    %22 = vector.load %arg19[%c0_20, %c0_21] : memref<648x8xf32, #tpu.memory_space<vmem>>, vector<648x8xf32>
    tpu.vector_store %arg19[%c0_20, %c0_21], %21 {strides = array<i32>} : memref<648x8xf32, #tpu.memory_space<vmem>>, vector<648x8xf32>,
    %c19_22 = arith.constant 19 : index
    %c0_23 = arith.constant 0 : index
    %23 = tpu.strided_load %arg19[%c19_22, %c0_23] {strides = array<i32: 2, 1>} : memref<648x8xf32, #tpu.memory_space<vmem>>, vector<8x8xf32>
    %c55 = arith.constant 55 : index
    %c0_24 = arith.constant 0 : index
    %24 = tpu.strided_load %arg19[%c55, %c0_24] {strides = array<i32: 2, 1>} : memref<648x8xf32, #tpu.memory_space<vmem>>, vector<8x8xf32>
    %c91 = arith.constant 91 : index
    %c0_25 = arith.constant 0 : index
    %25 = tpu.strided_load %arg19[%c91, %c0_25] {strides = array<i32: 2, 1>} : memref<648x8xf32, #tpu.memory_space<vmem>>, vector<8x8xf32>
    %c127 = arith.constant 127 : index
    %c0_26 = arith.constant 0 : index
    %26 = tpu.strided_load %arg19[%c127, %c0_26] {strides = array<i32: 2, 1>} : memref<648x8xf32, #tpu.memory_space<vmem>>, vector<8x8xf32>
    %c163 = arith.constant 163 : index
    %c0_27 = arith.constant 0 : index
    %27 = tpu.strided_load %arg19[%c163, %c0_27] {strides = array<i32: 2, 1>} : memref<648x8xf32, #tpu.memory_space<vmem>>, vector<8x8xf32>
    %c199 = arith.constant 199 : index
    %c0_28 = arith.constant 0 : index
    %28 = tpu.strided_load %arg19[%c199, %c0_28] {strides = array<i32: 2, 1>} : memref<648x8xf32, #tpu.memory_space<vmem>>, vector<8x8xf32>
    %c235 = arith.constant 235 : index
    %c0_29 = arith.constant 0 : index
    %29 = tpu.strided_load %arg19[%c235, %c0_29] {strides = array<i32: 2, 1>} : memref<648x8xf32, #tpu.memory_space<vmem>>, vector<8x8xf32>
    %c271 = arith.constant 271 : index
    %c0_30 = arith.constant 0 : index
    %30 = tpu.strided_load %arg19[%c271, %c0_30] {strides = array<i32: 2, 1>} : memref<648x8xf32, #tpu.memory_space<vmem>>, vector<8x8xf32>
    %c343 = arith.constant 343 : index
    %c0_31 = arith.constant 0 : index
    %31 = tpu.strided_load %arg19[%c343, %c0_31] {strides = array<i32: 2, 1>} : memref<648x8xf32, #tpu.memory_space<vmem>>, vector<8x8xf32>
    %c379 = arith.constant 379 : index
    %c0_32 = arith.constant 0 : index
    %32 = tpu.strided_load %arg19[%c379, %c0_32] {strides = array<i32: 2, 1>} : memref<648x8xf32, #tpu.memory_space<vmem>>, vector<8x8xf32>
    %c415 = arith.constant 415 : index
    %c0_33 = arith.constant 0 : index
    %33 = tpu.strided_load %arg19[%c415, %c0_33] {strides = array<i32: 2, 1>} : memref<648x8xf32, #tpu.memory_space<vmem>>, vector<8x8xf32>
    %c451 = arith.constant 451 : index
    %c0_34 = arith.constant 0 : index
    %34 = tpu.strided_load %arg19[%c451, %c0_34] {strides = array<i32: 2, 1>} : memref<648x8xf32, #tpu.memory_space<vmem>>, vector<8x8xf32>
    %c487 = arith.constant 487 : index
    %c0_35 = arith.constant 0 : index
    %35 = tpu.strided_load %arg19[%c487, %c0_35] {strides = array<i32: 2, 1>} : memref<648x8xf32, #tpu.memory_space<vmem>>, vector<8x8xf32>
    %c523 = arith.constant 523 : index
    %c0_36 = arith.constant 0 : index
    %36 = tpu.strided_load %arg19[%c523, %c0_36] {strides = array<i32: 2, 1>} : memref<648x8xf32, #tpu.memory_space<vmem>>, vector<8x8xf32>
    %c559 = arith.constant 559 : index
    %c0_37 = arith.constant 0 : index
    %37 = tpu.strided_load %arg19[%c559, %c0_37] {strides = array<i32: 2, 1>} : memref<648x8xf32, #tpu.memory_space<vmem>>, vector<8x8xf32>
    %c595 = arith.constant 595 : index
    %c0_38 = arith.constant 0 : index
    %38 = tpu.strided_load %arg19[%c595, %c0_38] {strides = array<i32: 2, 1>} : memref<648x8xf32, #tpu.memory_space<vmem>>, vector<8x8xf32>
    %39 = tpu.concatenate %23, %24, %25, %26, %27, %28, %29, %30, %31, %32, %33, %34, %35, %36, %37, %38 in 0 : vector<8x8xf32>, vector<8x8xf32>, vector<8x8xf32>, vector<8x8xf32>, vector<8x8xf32>, vector<8x8xf32>, vector<8x8xf32>, vector<8x8xf32>, vector<8x8xf32>, vector<8x8xf32>, vector<8x8xf32>, vector<8x8xf32>, vector<8x8xf32>, vector<8x8xf32>, vector<8x8xf32>, vector<8x8xf32> -> vector<128x8xf32>
    %cst_39 = arith.constant dense<0.000000e+00> : vector<8xf32>
    %40 = vector.multi_reduction <add>, %39, %cst_39 [0] : vector<128x8xf32> to vector<8xf32>
    %41 = vector.shape_cast %40 : vector<8xf32> to vector<1x8xf32>
    %cst_40 = arith.constant 1.280000e+02 : f32
    %42 = vector.broadcast %cst_40 : f32 to vector<1x8xf32>
    %43 = arith.divf %41, %42 : vector<1x8xf32>
    %44 = vector.broadcast %43 : vector<1x8xf32> to vector<128x8xf32>
    %45 = arith.subf %39, %44 : vector<128x8xf32>
    %46 = arith.mulf %45, %45 : vector<128x8xf32>
    %cst_41 = arith.constant dense<0.000000e+00> : vector<8xf32>
    %47 = vector.multi_reduction <add>, %46, %cst_41 [0] : vector<128x8xf32> to vector<8xf32>
    %48 = vector.shape_cast %47 : vector<8xf32> to vector<1x8xf32>
    %cst_42 = arith.constant 1.280000e+02 : f32
    %49 = vector.broadcast %cst_42 : f32 to vector<1x8xf32>
    %50 = arith.divf %48, %49 : vector<1x8xf32>
    %c0_43 = arith.constant 0 : index
    %c0_44 = arith.constant 0 : index
    %51 = vector.load %arg5[%c0_43, %c0_44] : memref<1x8xf32, #tpu.memory_space<vmem>>, vector<1x8xf32>
    %cst_45 = arith.constant 9.99999974E-6 : f32
    %52 = vector.broadcast %cst_45 : f32 to vector<1x8xf32>
    %53 = arith.addf %50, %52 : vector<1x8xf32>
    %54 = math.rsqrt %53 : vector<1x8xf32>
    %55 = arith.mulf %51, %54 : vector<1x8xf32>
    %c0_46 = arith.constant 0 : index
    %c0_47 = arith.constant 0 : index
    %56 = vector.load %arg9[%c0_46, %c0_47] : memref<1x8xf32, #tpu.memory_space<vmem>>, vector<1x8xf32>
    %57 = arith.mulf %43, %55 : vector<1x8xf32>
    %58 = arith.subf %56, %57 : vector<1x8xf32>
    %59 = vector.shape_cast %55 : vector<1x8xf32> to vector<1x8xf32>
    %60 = vector.broadcast %59 : vector<1x8xf32> to vector<8x8xf32>
    %61 = vector.shape_cast %58 : vector<1x8xf32> to vector<1x8xf32>
    %62 = vector.broadcast %61 : vector<1x8xf32> to vector<8x8xf32>
    %63 = arith.mulf %23, %60 : vector<8x8xf32>
    %64 = arith.addf %63, %62 : vector<8x8xf32>
    %cst_48 = arith.constant 0.000000e+00 : f32
    %65 = vector.broadcast %cst_48 : f32 to vector<8x8xf32>
    %66 = arith.maximumf %64, %65 : vector<8x8xf32>
    %67 = arith.truncf %66 : vector<8x8xf32> to vector<8x8xbf16>
    %c22 = arith.constant 22 : index
    %c0_49 = arith.constant 0 : index
    %68 = vector.load %arg16[%c22, %c0_49] : memref<222x8xbf16, #tpu.memory_space<vmem>>, vector<8x8xbf16>
    tpu.vector_store %arg16[%c22, %c0_49], %67 {strides = array<i32>} : memref<222x8xbf16, #tpu.memory_space<vmem>>, vector<8x8xbf16>,
    %69 = arith.mulf %24, %60 : vector<8x8xf32>
    %70 = arith.addf %69, %62 : vector<8x8xf32>
    %cst_50 = arith.constant 0.000000e+00 : f32
    %71 = vector.broadcast %cst_50 : f32 to vector<8x8xf32>
    %72 = arith.maximumf %70, %71 : vector<8x8xf32>
    %73 = arith.truncf %72 : vector<8x8xf32> to vector<8x8xbf16>
    %c32 = arith.constant 32 : index
    %c0_51 = arith.constant 0 : index
    %74 = vector.load %arg16[%c32, %c0_51] : memref<222x8xbf16, #tpu.memory_space<vmem>>, vector<8x8xbf16>
    tpu.vector_store %arg16[%c32, %c0_51], %73 {strides = array<i32>} : memref<222x8xbf16, #tpu.memory_space<vmem>>, vector<8x8xbf16>,
    %75 = arith.mulf %25, %60 : vector<8x8xf32>
    %76 = arith.addf %75, %62 : vector<8x8xf32>
    %cst_52 = arith.constant 0.000000e+00 : f32
    %77 = vector.broadcast %cst_52 : f32 to vector<8x8xf32>
    %78 = arith.maximumf %76, %77 : vector<8x8xf32>
    %79 = arith.truncf %78 : vector<8x8xf32> to vector<8x8xbf16>
    %c42 = arith.constant 42 : index
    %c0_53 = arith.constant 0 : index
    %80 = vector.load %arg16[%c42, %c0_53] : memref<222x8xbf16, #tpu.memory_space<vmem>>, vector<8x8xbf16>
    tpu.vector_store %arg16[%c42, %c0_53], %79 {strides = array<i32>} : memref<222x8xbf16, #tpu.memory_space<vmem>>, vector<8x8xbf16>,
    %81 = arith.mulf %26, %60 : vector<8x8xf32>
    %82 = arith.addf %81, %62 : vector<8x8xf32>
    %cst_54 = arith.constant 0.000000e+00 : f32
    %83 = vector.broadcast %cst_54 : f32 to vector<8x8xf32>
    %84 = arith.maximumf %82, %83 : vector<8x8xf32>
    %85 = arith.truncf %84 : vector<8x8xf32> to vector<8x8xbf16>
    %c52 = arith.constant 52 : index
    %c0_55 = arith.constant 0 : index
    %86 = vector.load %arg16[%c52, %c0_55] : memref<222x8xbf16, #tpu.memory_space<vmem>>, vector<8x8xbf16>
    tpu.vector_store %arg16[%c52, %c0_55], %85 {strides = array<i32>} : memref<222x8xbf16, #tpu.memory_space<vmem>>, vector<8x8xbf16>,
    %87 = arith.mulf %27, %60 : vector<8x8xf32>
    %88 = arith.addf %87, %62 : vector<8x8xf32>
    %cst_56 = arith.constant 0.000000e+00 : f32
    %89 = vector.broadcast %cst_56 : f32 to vector<8x8xf32>
    %90 = arith.maximumf %88, %89 : vector<8x8xf32>
    %91 = arith.truncf %90 : vector<8x8xf32> to vector<8x8xbf16>
    %c62 = arith.constant 62 : index
    %c0_57 = arith.constant 0 : index
    %92 = vector.load %arg16[%c62, %c0_57] : memref<222x8xbf16, #tpu.memory_space<vmem>>, vector<8x8xbf16>
    tpu.vector_store %arg16[%c62, %c0_57], %91 {strides = array<i32>} : memref<222x8xbf16, #tpu.memory_space<vmem>>, vector<8x8xbf16>,
    %93 = arith.mulf %28, %60 : vector<8x8xf32>
    %94 = arith.addf %93, %62 : vector<8x8xf32>
    %cst_58 = arith.constant 0.000000e+00 : f32
    %95 = vector.broadcast %cst_58 : f32 to vector<8x8xf32>
    %96 = arith.maximumf %94, %95 : vector<8x8xf32>
    %97 = arith.truncf %96 : vector<8x8xf32> to vector<8x8xbf16>
    %c72 = arith.constant 72 : index
    %c0_59 = arith.constant 0 : index
    %98 = vector.load %arg16[%c72, %c0_59] : memref<222x8xbf16, #tpu.memory_space<vmem>>, vector<8x8xbf16>
    tpu.vector_store %arg16[%c72, %c0_59], %97 {strides = array<i32>} : memref<222x8xbf16, #tpu.memory_space<vmem>>, vector<8x8xbf16>,
    %99 = arith.mulf %29, %60 : vector<8x8xf32>
    %100 = arith.addf %99, %62 : vector<8x8xf32>
    %cst_60 = arith.constant 0.000000e+00 : f32
    %101 = vector.broadcast %cst_60 : f32 to vector<8x8xf32>
    %102 = arith.maximumf %100, %101 : vector<8x8xf32>
    %103 = arith.truncf %102 : vector<8x8xf32> to vector<8x8xbf16>
    %c82 = arith.constant 82 : index
    %c0_61 = arith.constant 0 : index
    %104 = vector.load %arg16[%c82, %c0_61] : memref<222x8xbf16, #tpu.memory_space<vmem>>, vector<8x8xbf16>
    tpu.vector_store %arg16[%c82, %c0_61], %103 {strides = array<i32>} : memref<222x8xbf16, #tpu.memory_space<vmem>>, vector<8x8xbf16>,
    %105 = arith.mulf %30, %60 : vector<8x8xf32>
    %106 = arith.addf %105, %62 : vector<8x8xf32>
    %cst_62 = arith.constant 0.000000e+00 : f32
    %107 = vector.broadcast %cst_62 : f32 to vector<8x8xf32>
    %108 = arith.maximumf %106, %107 : vector<8x8xf32>
    %109 = arith.truncf %108 : vector<8x8xf32> to vector<8x8xbf16>
    %c92 = arith.constant 92 : index
    %c0_63 = arith.constant 0 : index
    %110 = vector.load %arg16[%c92, %c0_63] : memref<222x8xbf16, #tpu.memory_space<vmem>>, vector<8x8xbf16>
    tpu.vector_store %arg16[%c92, %c0_63], %109 {strides = array<i32>} : memref<222x8xbf16, #tpu.memory_space<vmem>>, vector<8x8xbf16>,
    %111 = arith.mulf %31, %60 : vector<8x8xf32>
    %112 = arith.addf %111, %62 : vector<8x8xf32>
    %cst_64 = arith.constant 0.000000e+00 : f32
    %113 = vector.broadcast %cst_64 : f32 to vector<8x8xf32>
    %114 = arith.maximumf %112, %113 : vector<8x8xf32>
    %115 = arith.truncf %114 : vector<8x8xf32> to vector<8x8xbf16>
    %c122 = arith.constant 122 : index
    %c0_65 = arith.constant 0 : index
    %116 = vector.load %arg16[%c122, %c0_65] : memref<222x8xbf16, #tpu.memory_space<vmem>>, vector<8x8xbf16>
    tpu.vector_store %arg16[%c122, %c0_65], %115 {strides = array<i32>} : memref<222x8xbf16, #tpu.memory_space<vmem>>, vector<8x8xbf16>,
    %117 = arith.mulf %32, %60 : vector<8x8xf32>
    %118 = arith.addf %117, %62 : vector<8x8xf32>
    %cst_66 = arith.constant 0.000000e+00 : f32
    %119 = vector.broadcast %cst_66 : f32 to vector<8x8xf32>
    %120 = arith.maximumf %118, %119 : vector<8x8xf32>
    %121 = arith.truncf %120 : vector<8x8xf32> to vector<8x8xbf16>
    %c132 = arith.constant 132 : index
    %c0_67 = arith.constant 0 : index
    %122 = vector.load %arg16[%c132, %c0_67] : memref<222x8xbf16, #tpu.memory_space<vmem>>, vector<8x8xbf16>
    tpu.vector_store %arg16[%c132, %c0_67], %121 {strides = array<i32>} : memref<222x8xbf16, #tpu.memory_space<vmem>>, vector<8x8xbf16>,
    %123 = arith.mulf %33, %60 : vector<8x8xf32>
    %124 = arith.addf %123, %62 : vector<8x8xf32>
    %cst_68 = arith.constant 0.000000e+00 : f32
    %125 = vector.broadcast %cst_68 : f32 to vector<8x8xf32>
    %126 = arith.maximumf %124, %125 : vector<8x8xf32>
    %127 = arith.truncf %126 : vector<8x8xf32> to vector<8x8xbf16>
    %c142 = arith.constant 142 : index
    %c0_69 = arith.constant 0 : index
    %128 = vector.load %arg16[%c142, %c0_69] : memref<222x8xbf16, #tpu.memory_space<vmem>>, vector<8x8xbf16>
    tpu.vector_store %arg16[%c142, %c0_69], %127 {strides = array<i32>} : memref<222x8xbf16, #tpu.memory_space<vmem>>, vector<8x8xbf16>,
    %129 = arith.mulf %34, %60 : vector<8x8xf32>
    %130 = arith.addf %129, %62 : vector<8x8xf32>
    %cst_70 = arith.constant 0.000000e+00 : f32
    %131 = vector.broadcast %cst_70 : f32 to vector<8x8xf32>
    %132 = arith.maximumf %130, %131 : vector<8x8xf32>
    %133 = arith.truncf %132 : vector<8x8xf32> to vector<8x8xbf16>
    %c152 = arith.constant 152 : index
    %c0_71 = arith.constant 0 : index
    %134 = vector.load %arg16[%c152, %c0_71] : memref<222x8xbf16, #tpu.memory_space<vmem>>, vector<8x8xbf16>
    tpu.vector_store %arg16[%c152, %c0_71], %133 {strides = array<i32>} : memref<222x8xbf16, #tpu.memory_space<vmem>>, vector<8x8xbf16>,
    %135 = arith.mulf %35, %60 : vector<8x8xf32>
    %136 = arith.addf %135, %62 : vector<8x8xf32>
    %cst_72 = arith.constant 0.000000e+00 : f32
    %137 = vector.broadcast %cst_72 : f32 to vector<8x8xf32>
    %138 = arith.maximumf %136, %137 : vector<8x8xf32>
    %139 = arith.truncf %138 : vector<8x8xf32> to vector<8x8xbf16>
    %c162 = arith.constant 162 : index
    %c0_73 = arith.constant 0 : index
    %140 = vector.load %arg16[%c162, %c0_73] : memref<222x8xbf16, #tpu.memory_space<vmem>>, vector<8x8xbf16>
    tpu.vector_store %arg16[%c162, %c0_73], %139 {strides = array<i32>} : memref<222x8xbf16, #tpu.memory_space<vmem>>, vector<8x8xbf16>,
    %141 = arith.mulf %36, %60 : vector<8x8xf32>
    %142 = arith.addf %141, %62 : vector<8x8xf32>
    %cst_74 = arith.constant 0.000000e+00 : f32
    %143 = vector.broadcast %cst_74 : f32 to vector<8x8xf32>
    %144 = arith.maximumf %142, %143 : vector<8x8xf32>
    %145 = arith.truncf %144 : vector<8x8xf32> to vector<8x8xbf16>
    %c172 = arith.constant 172 : index
    %c0_75 = arith.constant 0 : index
    %146 = vector.load %arg16[%c172, %c0_75] : memref<222x8xbf16, #tpu.memory_space<vmem>>, vector<8x8xbf16>
    tpu.vector_store %arg16[%c172, %c0_75], %145 {strides = array<i32>} : memref<222x8xbf16, #tpu.memory_space<vmem>>, vector<8x8xbf16>,
    %147 = arith.mulf %37, %60 : vector<8x8xf32>
    %148 = arith.addf %147, %62 : vector<8x8xf32>
    %cst_76 = arith.constant 0.000000e+00 : f32
    %149 = vector.broadcast %cst_76 : f32 to vector<8x8xf32>
    %150 = arith.maximumf %148, %149 : vector<8x8xf32>
    %151 = arith.truncf %150 : vector<8x8xf32> to vector<8x8xbf16>
    %c182 = arith.constant 182 : index
    %c0_77 = arith.constant 0 : index
    %152 = vector.load %arg16[%c182, %c0_77] : memref<222x8xbf16, #tpu.memory_space<vmem>>, vector<8x8xbf16>
    tpu.vector_store %arg16[%c182, %c0_77], %151 {strides = array<i32>} : memref<222x8xbf16, #tpu.memory_space<vmem>>, vector<8x8xbf16>,
    %153 = arith.mulf %38, %60 : vector<8x8xf32>
    %154 = arith.addf %153, %62 : vector<8x8xf32>
    %cst_78 = arith.constant 0.000000e+00 : f32
    %155 = vector.broadcast %cst_78 : f32 to vector<8x8xf32>
    %156 = arith.maximumf %154, %155 : vector<8x8xf32>
    %157 = arith.truncf %156 : vector<8x8xf32> to vector<8x8xbf16>
    %c192 = arith.constant 192 : index
    %c0_79 = arith.constant 0 : index
    %158 = vector.load %arg16[%c192, %c0_79] : memref<222x8xbf16, #tpu.memory_space<vmem>>, vector<8x8xbf16>
    tpu.vector_store %arg16[%c192, %c0_79], %157 {strides = array<i32>} : memref<222x8xbf16, #tpu.memory_space<vmem>>, vector<8x8xbf16>,
    %c0_80 = arith.constant 0 : index
    %c0_81 = arith.constant 0 : index
    %159 = vector.load %arg16[%c0_80, %c0_81] : memref<222x8xbf16, #tpu.memory_space<vmem>>, vector<200x8xbf16>
    %c1_82 = arith.constant 1 : index
    %c0_83 = arith.constant 0 : index
    %160 = vector.load %arg16[%c1_82, %c0_83] : memref<222x8xbf16, #tpu.memory_space<vmem>>, vector<200x8xbf16>
    %c2_84 = arith.constant 2 : index
    %c0_85 = arith.constant 0 : index
    %161 = vector.load %arg16[%c2_84, %c0_85] : memref<222x8xbf16, #tpu.memory_space<vmem>>, vector<200x8xbf16>
    %c10 = arith.constant 10 : index
    %c0_86 = arith.constant 0 : index
    %162 = vector.load %arg16[%c10, %c0_86] : memref<222x8xbf16, #tpu.memory_space<vmem>>, vector<200x8xbf16>
    %c11 = arith.constant 11 : index
    %c0_87 = arith.constant 0 : index
    %163 = vector.load %arg16[%c11, %c0_87] : memref<222x8xbf16, #tpu.memory_space<vmem>>, vector<200x8xbf16>
    %c12 = arith.constant 12 : index
    %c0_88 = arith.constant 0 : index
    %164 = vector.load %arg16[%c12, %c0_88] : memref<222x8xbf16, #tpu.memory_space<vmem>>, vector<200x8xbf16>
    %c20_89 = arith.constant 20 : index
    %c0_90 = arith.constant 0 : index
    %165 = vector.load %arg16[%c20_89, %c0_90] : memref<222x8xbf16, #tpu.memory_space<vmem>>, vector<200x8xbf16>
    %c21 = arith.constant 21 : index
    %c0_91 = arith.constant 0 : index
    %166 = vector.load %arg16[%c21, %c0_91] : memref<222x8xbf16, #tpu.memory_space<vmem>>, vector<200x8xbf16>
    %c22_92 = arith.constant 22 : index
    %c0_93 = arith.constant 0 : index
    %167 = vector.load %arg16[%c22_92, %c0_93] : memref<222x8xbf16, #tpu.memory_space<vmem>>, vector<200x8xbf16>
    %168 = tpu.concatenate %159, %160, %161, %162, %163, %164, %165, %166, %167 in 1 : vector<200x8xbf16>, vector<200x8xbf16>, vector<200x8xbf16>, vector<200x8xbf16>, vector<200x8xbf16>, vector<200x8xbf16>, vector<200x8xbf16>, vector<200x8xbf16>, vector<200x8xbf16> -> vector<200x72xbf16>
    %c0_94 = arith.constant 0 : index
    %c0_95 = arith.constant 0 : index
    %169 = vector.load %arg2[%c0_94, %c0_95] : memref<72x16xbf16, #tpu.memory_space<vmem>>, vector<72x16xbf16>
    %cst_96 = arith.constant dense<0.000000e+00> : vector<200x16xf32>
    %170 = tpu.matmul %168, %169, %cst_96 {dimension_numbers = #tpu.dot_dimension_numbers<[1], [0], [0], [1], [0, 0, 1, 1], [], []>} : vector<200x72xbf16>, vector<72x16xbf16>, vector<200x16xf32> -> vector<200x16xf32>
    %c199_i32 = arith.constant 199 : i32
    %171 = tpu.dynamic_rotate %170 by %c199_i32 dim 0 : vector<200x16xf32>, i32 -> vector<200x16xf32>
    %172 = arith.maximumf %170, %171 : vector<200x16xf32>
    %c190_i32 = arith.constant 190 : i32
    %173 = tpu.dynamic_rotate %172 by %c190_i32 dim 0 : vector<200x16xf32>, i32 -> vector<200x16xf32>
    %174 = arith.maximumf %172, %173 : vector<200x16xf32>
    %c0_97 = arith.constant 0 : index
    %c0_98 = arith.constant 0 : index
    %175 = vector.load %arg20[%c0_97, %c0_98] : memref<200x16xf32, #tpu.memory_space<vmem>>, vector<200x16xf32>
    tpu.vector_store %arg20[%c0_97, %c0_98], %174 {strides = array<i32>} : memref<200x16xf32, #tpu.memory_space<vmem>>, vector<200x16xf32>,
    %c11_99 = arith.constant 11 : index
    %c0_100 = arith.constant 0 : index
    %176 = tpu.strided_load %arg20[%c11_99, %c0_100] {strides = array<i32: 2, 1>} : memref<200x16xf32, #tpu.memory_space<vmem>>, vector<4x16xf32>
    %c31 = arith.constant 31 : index
    %c0_101 = arith.constant 0 : index
    %177 = tpu.strided_load %arg20[%c31, %c0_101] {strides = array<i32: 2, 1>} : memref<200x16xf32, #tpu.memory_space<vmem>>, vector<4x16xf32>
    %c51 = arith.constant 51 : index
    %c0_102 = arith.constant 0 : index
    %178 = tpu.strided_load %arg20[%c51, %c0_102] {strides = array<i32: 2, 1>} : memref<200x16xf32, #tpu.memory_space<vmem>>, vector<4x16xf32>
    %c71 = arith.constant 71 : index
    %c0_103 = arith.constant 0 : index
    %179 = tpu.strided_load %arg20[%c71, %c0_103] {strides = array<i32: 2, 1>} : memref<200x16xf32, #tpu.memory_space<vmem>>, vector<4x16xf32>
    %c111 = arith.constant 111 : index
    %c0_104 = arith.constant 0 : index
    %180 = tpu.strided_load %arg20[%c111, %c0_104] {strides = array<i32: 2, 1>} : memref<200x16xf32, #tpu.memory_space<vmem>>, vector<4x16xf32>
    %c131 = arith.constant 131 : index
    %c0_105 = arith.constant 0 : index
    %181 = tpu.strided_load %arg20[%c131, %c0_105] {strides = array<i32: 2, 1>} : memref<200x16xf32, #tpu.memory_space<vmem>>, vector<4x16xf32>
    %c151 = arith.constant 151 : index
    %c0_106 = arith.constant 0 : index
    %182 = tpu.strided_load %arg20[%c151, %c0_106] {strides = array<i32: 2, 1>} : memref<200x16xf32, #tpu.memory_space<vmem>>, vector<4x16xf32>
    %c171 = arith.constant 171 : index
    %c0_107 = arith.constant 0 : index
    %183 = tpu.strided_load %arg20[%c171, %c0_107] {strides = array<i32: 2, 1>} : memref<200x16xf32, #tpu.memory_space<vmem>>, vector<4x16xf32>
    %184 = tpu.concatenate %176, %177, %178, %179, %180, %181, %182, %183 in 0 : vector<4x16xf32>, vector<4x16xf32>, vector<4x16xf32>, vector<4x16xf32>, vector<4x16xf32>, vector<4x16xf32>, vector<4x16xf32>, vector<4x16xf32> -> vector<32x16xf32>
    %cst_108 = arith.constant dense<0.000000e+00> : vector<16xf32>
    %185 = vector.multi_reduction <add>, %184, %cst_108 [0] : vector<32x16xf32> to vector<16xf32>
    %186 = vector.shape_cast %185 : vector<16xf32> to vector<1x16xf32>
    %cst_109 = arith.constant 3.200000e+01 : f32
    %187 = vector.broadcast %cst_109 : f32 to vector<1x16xf32>
    %188 = arith.divf %186, %187 : vector<1x16xf32>
    %189 = vector.broadcast %188 : vector<1x16xf32> to vector<32x16xf32>
    %190 = arith.subf %184, %189 : vector<32x16xf32>
    %191 = arith.mulf %190, %190 : vector<32x16xf32>
    %cst_110 = arith.constant dense<0.000000e+00> : vector<16xf32>
    %192 = vector.multi_reduction <add>, %191, %cst_110 [0] : vector<32x16xf32> to vector<16xf32>
    %193 = vector.shape_cast %192 : vector<16xf32> to vector<1x16xf32>
    %cst_111 = arith.constant 3.200000e+01 : f32
    %194 = vector.broadcast %cst_111 : f32 to vector<1x16xf32>
    %195 = arith.divf %193, %194 : vector<1x16xf32>
    %c0_112 = arith.constant 0 : index
    %c0_113 = arith.constant 0 : index
    %196 = vector.load %arg6[%c0_112, %c0_113] : memref<1x16xf32, #tpu.memory_space<vmem>>, vector<1x16xf32>
    %cst_114 = arith.constant 9.99999974E-6 : f32
    %197 = vector.broadcast %cst_114 : f32 to vector<1x16xf32>
    %198 = arith.addf %195, %197 : vector<1x16xf32>
    %199 = math.rsqrt %198 : vector<1x16xf32>
    %200 = arith.mulf %196, %199 : vector<1x16xf32>
    %c0_115 = arith.constant 0 : index
    %c0_116 = arith.constant 0 : index
    %201 = vector.load %arg10[%c0_115, %c0_116] : memref<1x16xf32, #tpu.memory_space<vmem>>, vector<1x16xf32>
    %202 = arith.mulf %188, %200 : vector<1x16xf32>
    %203 = arith.subf %201, %202 : vector<1x16xf32>
    %204 = vector.shape_cast %200 : vector<1x16xf32> to vector<1x16xf32>
    %205 = vector.broadcast %204 : vector<1x16xf32> to vector<4x16xf32>
    %206 = vector.shape_cast %203 : vector<1x16xf32> to vector<1x16xf32>
    %207 = vector.broadcast %206 : vector<1x16xf32> to vector<4x16xf32>
    %208 = arith.mulf %176, %205 : vector<4x16xf32>
    %209 = arith.addf %208, %207 : vector<4x16xf32>
    %cst_117 = arith.constant 0.000000e+00 : f32
    %210 = vector.broadcast %cst_117 : f32 to vector<4x16xf32>
    %211 = arith.maximumf %209, %210 : vector<4x16xf32>
    %212 = arith.truncf %211 : vector<4x16xf32> to vector<4x16xbf16>
    %c14 = arith.constant 14 : index
    %c0_118 = arith.constant 0 : index
    %213 = vector.load %arg17[%c14, %c0_118] : memref<86x16xbf16, #tpu.memory_space<vmem>>, vector<4x16xbf16>
    tpu.vector_store %arg17[%c14, %c0_118], %212 {strides = array<i32>} : memref<86x16xbf16, #tpu.memory_space<vmem>>, vector<4x16xbf16>,
    %214 = arith.mulf %177, %205 : vector<4x16xf32>
    %215 = arith.addf %214, %207 : vector<4x16xf32>
    %cst_119 = arith.constant 0.000000e+00 : f32
    %216 = vector.broadcast %cst_119 : f32 to vector<4x16xf32>
    %217 = arith.maximumf %215, %216 : vector<4x16xf32>
    %218 = arith.truncf %217 : vector<4x16xf32> to vector<4x16xbf16>
    %c20_120 = arith.constant 20 : index
    %c0_121 = arith.constant 0 : index
    %219 = vector.load %arg17[%c20_120, %c0_121] : memref<86x16xbf16, #tpu.memory_space<vmem>>, vector<4x16xbf16>
    tpu.vector_store %arg17[%c20_120, %c0_121], %218 {strides = array<i32>} : memref<86x16xbf16, #tpu.memory_space<vmem>>, vector<4x16xbf16>,
    %220 = arith.mulf %178, %205 : vector<4x16xf32>
    %221 = arith.addf %220, %207 : vector<4x16xf32>
    %cst_122 = arith.constant 0.000000e+00 : f32
    %222 = vector.broadcast %cst_122 : f32 to vector<4x16xf32>
    %223 = arith.maximumf %221, %222 : vector<4x16xf32>
    %224 = arith.truncf %223 : vector<4x16xf32> to vector<4x16xbf16>
    %c26 = arith.constant 26 : index
    %c0_123 = arith.constant 0 : index
    %225 = vector.load %arg17[%c26, %c0_123] : memref<86x16xbf16, #tpu.memory_space<vmem>>, vector<4x16xbf16>
    tpu.vector_store %arg17[%c26, %c0_123], %224 {strides = array<i32>} : memref<86x16xbf16, #tpu.memory_space<vmem>>, vector<4x16xbf16>,
    %226 = arith.mulf %179, %205 : vector<4x16xf32>
    %227 = arith.addf %226, %207 : vector<4x16xf32>
    %cst_124 = arith.constant 0.000000e+00 : f32
    %228 = vector.broadcast %cst_124 : f32 to vector<4x16xf32>
    %229 = arith.maximumf %227, %228 : vector<4x16xf32>
    %230 = arith.truncf %229 : vector<4x16xf32> to vector<4x16xbf16>
    %c32_125 = arith.constant 32 : index
    %c0_126 = arith.constant 0 : index
    %231 = vector.load %arg17[%c32_125, %c0_126] : memref<86x16xbf16, #tpu.memory_space<vmem>>, vector<4x16xbf16>
    tpu.vector_store %arg17[%c32_125, %c0_126], %230 {strides = array<i32>} : memref<86x16xbf16, #tpu.memory_space<vmem>>, vector<4x16xbf16>,
    %232 = arith.mulf %180, %205 : vector<4x16xf32>
    %233 = arith.addf %232, %207 : vector<4x16xf32>
    %cst_127 = arith.constant 0.000000e+00 : f32
    %234 = vector.broadcast %cst_127 : f32 to vector<4x16xf32>
    %235 = arith.maximumf %233, %234 : vector<4x16xf32>
    %236 = arith.truncf %235 : vector<4x16xf32> to vector<4x16xbf16>
    %c50 = arith.constant 50 : index
    %c0_128 = arith.constant 0 : index
    %237 = vector.load %arg17[%c50, %c0_128] : memref<86x16xbf16, #tpu.memory_space<vmem>>, vector<4x16xbf16>
    tpu.vector_store %arg17[%c50, %c0_128], %236 {strides = array<i32>} : memref<86x16xbf16, #tpu.memory_space<vmem>>, vector<4x16xbf16>,
    %238 = arith.mulf %181, %205 : vector<4x16xf32>
    %239 = arith.addf %238, %207 : vector<4x16xf32>
    %cst_129 = arith.constant 0.000000e+00 : f32
    %240 = vector.broadcast %cst_129 : f32 to vector<4x16xf32>
    %241 = arith.maximumf %239, %240 : vector<4x16xf32>
    %242 = arith.truncf %241 : vector<4x16xf32> to vector<4x16xbf16>
    %c56 = arith.constant 56 : index
    %c0_130 = arith.constant 0 : index
    %243 = vector.load %arg17[%c56, %c0_130] : memref<86x16xbf16, #tpu.memory_space<vmem>>, vector<4x16xbf16>
    tpu.vector_store %arg17[%c56, %c0_130], %242 {strides = array<i32>} : memref<86x16xbf16, #tpu.memory_space<vmem>>, vector<4x16xbf16>,
    %244 = arith.mulf %182, %205 : vector<4x16xf32>
    %245 = arith.addf %244, %207 : vector<4x16xf32>
    %cst_131 = arith.constant 0.000000e+00 : f32
    %246 = vector.broadcast %cst_131 : f32 to vector<4x16xf32>
    %247 = arith.maximumf %245, %246 : vector<4x16xf32>
    %248 = arith.truncf %247 : vector<4x16xf32> to vector<4x16xbf16>
    %c62_132 = arith.constant 62 : index
    %c0_133 = arith.constant 0 : index
    %249 = vector.load %arg17[%c62_132, %c0_133] : memref<86x16xbf16, #tpu.memory_space<vmem>>, vector<4x16xbf16>
    tpu.vector_store %arg17[%c62_132, %c0_133], %248 {strides = array<i32>} : memref<86x16xbf16, #tpu.memory_space<vmem>>, vector<4x16xbf16>,
    %250 = arith.mulf %183, %205 : vector<4x16xf32>
    %251 = arith.addf %250, %207 : vector<4x16xf32>
    %cst_134 = arith.constant 0.000000e+00 : f32
    %252 = vector.broadcast %cst_134 : f32 to vector<4x16xf32>
    %253 = arith.maximumf %251, %252 : vector<4x16xf32>
    %254 = arith.truncf %253 : vector<4x16xf32> to vector<4x16xbf16>
    %c68 = arith.constant 68 : index
    %c0_135 = arith.constant 0 : index
    %255 = vector.load %arg17[%c68, %c0_135] : memref<86x16xbf16, #tpu.memory_space<vmem>>, vector<4x16xbf16>
    tpu.vector_store %arg17[%c68, %c0_135], %254 {strides = array<i32>} : memref<86x16xbf16, #tpu.memory_space<vmem>>, vector<4x16xbf16>,
    %c0_136 = arith.constant 0 : index
    %c0_137 = arith.constant 0 : index
    %256 = vector.load %arg17[%c0_136, %c0_137] : memref<86x16xbf16, #tpu.memory_space<vmem>>, vector<72x16xbf16>
    %c1_138 = arith.constant 1 : index
    %c0_139 = arith.constant 0 : index
    %257 = vector.load %arg17[%c1_138, %c0_139] : memref<86x16xbf16, #tpu.memory_space<vmem>>, vector<72x16xbf16>
    %c2_140 = arith.constant 2 : index
    %c0_141 = arith.constant 0 : index
    %258 = vector.load %arg17[%c2_140, %c0_141] : memref<86x16xbf16, #tpu.memory_space<vmem>>, vector<72x16xbf16>
    %c6 = arith.constant 6 : index
    %c0_142 = arith.constant 0 : index
    %259 = vector.load %arg17[%c6, %c0_142] : memref<86x16xbf16, #tpu.memory_space<vmem>>, vector<72x16xbf16>
    %c7 = arith.constant 7 : index
    %c0_143 = arith.constant 0 : index
    %260 = vector.load %arg17[%c7, %c0_143] : memref<86x16xbf16, #tpu.memory_space<vmem>>, vector<72x16xbf16>
    %c8 = arith.constant 8 : index
    %c0_144 = arith.constant 0 : index
    %261 = vector.load %arg17[%c8, %c0_144] : memref<86x16xbf16, #tpu.memory_space<vmem>>, vector<72x16xbf16>
    %c12_145 = arith.constant 12 : index
    %c0_146 = arith.constant 0 : index
    %262 = vector.load %arg17[%c12_145, %c0_146] : memref<86x16xbf16, #tpu.memory_space<vmem>>, vector<72x16xbf16>
    %c13 = arith.constant 13 : index
    %c0_147 = arith.constant 0 : index
    %263 = vector.load %arg17[%c13, %c0_147] : memref<86x16xbf16, #tpu.memory_space<vmem>>, vector<72x16xbf16>
    %c14_148 = arith.constant 14 : index
    %c0_149 = arith.constant 0 : index
    %264 = vector.load %arg17[%c14_148, %c0_149] : memref<86x16xbf16, #tpu.memory_space<vmem>>, vector<72x16xbf16>
    %265 = tpu.concatenate %256, %257, %258, %259, %260, %261, %262, %263, %264 in 1 : vector<72x16xbf16>, vector<72x16xbf16>, vector<72x16xbf16>, vector<72x16xbf16>, vector<72x16xbf16>, vector<72x16xbf16>, vector<72x16xbf16>, vector<72x16xbf16>, vector<72x16xbf16> -> vector<72x144xbf16>
    %c0_150 = arith.constant 0 : index
    %c0_151 = arith.constant 0 : index
    %266 = vector.load %arg3[%c0_150, %c0_151] : memref<144x16xbf16, #tpu.memory_space<vmem>>, vector<144x16xbf16>
    %cst_152 = arith.constant dense<0.000000e+00> : vector<72x16xf32>
    %267 = tpu.matmul %265, %266, %cst_152 {dimension_numbers = #tpu.dot_dimension_numbers<[1], [0], [0], [1], [0, 0, 1, 1], [], []>} : vector<72x144xbf16>, vector<144x16xbf16>, vector<72x16xf32> -> vector<72x16xf32>
    %c71_i32 = arith.constant 71 : i32
    %268 = tpu.dynamic_rotate %267 by %c71_i32 dim 0 : vector<72x16xf32>, i32 -> vector<72x16xf32>
    %269 = arith.maximumf %267, %268 : vector<72x16xf32>
    %c66_i32 = arith.constant 66 : i32
    %270 = tpu.dynamic_rotate %269 by %c66_i32 dim 0 : vector<72x16xf32>, i32 -> vector<72x16xf32>
    %271 = arith.maximumf %269, %270 : vector<72x16xf32>
    %c0_153 = arith.constant 0 : index
    %c0_154 = arith.constant 0 : index
    %272 = vector.load %arg21[%c0_153, %c0_154] : memref<72x16xf32, #tpu.memory_space<vmem>>, vector<72x16xf32>
    tpu.vector_store %arg21[%c0_153, %c0_154], %271 {strides = array<i32>} : memref<72x16xf32, #tpu.memory_space<vmem>>, vector<72x16xf32>,
    %c7_155 = arith.constant 7 : index
    %c0_156 = arith.constant 0 : index
    %273 = tpu.strided_load %arg21[%c7_155, %c0_156] {strides = array<i32: 2, 1>} : memref<72x16xf32, #tpu.memory_space<vmem>>, vector<2x16xf32>
    %c19_157 = arith.constant 19 : index
    %c0_158 = arith.constant 0 : index
    %274 = tpu.strided_load %arg21[%c19_157, %c0_158] {strides = array<i32: 2, 1>} : memref<72x16xf32, #tpu.memory_space<vmem>>, vector<2x16xf32>
    %c43 = arith.constant 43 : index
    %c0_159 = arith.constant 0 : index
    %275 = tpu.strided_load %arg21[%c43, %c0_159] {strides = array<i32: 2, 1>} : memref<72x16xf32, #tpu.memory_space<vmem>>, vector<2x16xf32>
    %c55_160 = arith.constant 55 : index
    %c0_161 = arith.constant 0 : index
    %276 = tpu.strided_load %arg21[%c55_160, %c0_161] {strides = array<i32: 2, 1>} : memref<72x16xf32, #tpu.memory_space<vmem>>, vector<2x16xf32>
    %277 = tpu.concatenate %273, %274, %275, %276 in 0 : vector<2x16xf32>, vector<2x16xf32>, vector<2x16xf32>, vector<2x16xf32> -> vector<8x16xf32>
    %cst_162 = arith.constant dense<0.000000e+00> : vector<16xf32>
    %278 = vector.multi_reduction <add>, %277, %cst_162 [0] : vector<8x16xf32> to vector<16xf32>
    %279 = vector.shape_cast %278 : vector<16xf32> to vector<1x16xf32>
    %cst_163 = arith.constant 8.000000e+00 : f32
    %280 = vector.broadcast %cst_163 : f32 to vector<1x16xf32>
    %281 = arith.divf %279, %280 : vector<1x16xf32>
    %282 = vector.broadcast %281 : vector<1x16xf32> to vector<8x16xf32>
    %283 = arith.subf %277, %282 : vector<8x16xf32>
    %284 = arith.mulf %283, %283 : vector<8x16xf32>
    %cst_164 = arith.constant dense<0.000000e+00> : vector<16xf32>
    %285 = vector.multi_reduction <add>, %284, %cst_164 [0] : vector<8x16xf32> to vector<16xf32>
    %286 = vector.shape_cast %285 : vector<16xf32> to vector<1x16xf32>
    %cst_165 = arith.constant 8.000000e+00 : f32
    %287 = vector.broadcast %cst_165 : f32 to vector<1x16xf32>
    %288 = arith.divf %286, %287 : vector<1x16xf32>
    %c0_166 = arith.constant 0 : index
    %c0_167 = arith.constant 0 : index
    %289 = vector.load %arg7[%c0_166, %c0_167] : memref<1x16xf32, #tpu.memory_space<vmem>>, vector<1x16xf32>
    %cst_168 = arith.constant 9.99999974E-6 : f32
    %290 = vector.broadcast %cst_168 : f32 to vector<1x16xf32>
    %291 = arith.addf %288, %290 : vector<1x16xf32>
    %292 = math.rsqrt %291 : vector<1x16xf32>
    %293 = arith.mulf %289, %292 : vector<1x16xf32>
    %c0_169 = arith.constant 0 : index
    %c0_170 = arith.constant 0 : index
    %294 = vector.load %arg11[%c0_169, %c0_170] : memref<1x16xf32, #tpu.memory_space<vmem>>, vector<1x16xf32>
    %295 = arith.mulf %281, %293 : vector<1x16xf32>
    %296 = arith.subf %294, %295 : vector<1x16xf32>
    %297 = vector.shape_cast %293 : vector<1x16xf32> to vector<1x16xf32>
    %298 = vector.broadcast %297 : vector<1x16xf32> to vector<2x16xf32>
    %299 = vector.shape_cast %296 : vector<1x16xf32> to vector<1x16xf32>
    %300 = vector.broadcast %299 : vector<1x16xf32> to vector<2x16xf32>
    %301 = arith.mulf %273, %298 : vector<2x16xf32>
    %302 = arith.addf %301, %300 : vector<2x16xf32>
    %cst_171 = arith.constant 0.000000e+00 : f32
    %303 = vector.broadcast %cst_171 : f32 to vector<2x16xf32>
    %304 = arith.maximumf %302, %303 : vector<2x16xf32>
    %305 = arith.truncf %304 : vector<2x16xf32> to vector<2x16xbf16>
    %c10_172 = arith.constant 10 : index
    %c0_173 = arith.constant 0 : index
    %306 = vector.load %arg18[%c10_172, %c0_173] : memref<42x16xbf16, #tpu.memory_space<vmem>>, vector<2x16xbf16>
    tpu.vector_store %arg18[%c10_172, %c0_173], %305 {strides = array<i32>} : memref<42x16xbf16, #tpu.memory_space<vmem>>, vector<2x16xbf16>,
    %307 = arith.mulf %274, %298 : vector<2x16xf32>
    %308 = arith.addf %307, %300 : vector<2x16xf32>
    %cst_174 = arith.constant 0.000000e+00 : f32
    %309 = vector.broadcast %cst_174 : f32 to vector<2x16xf32>
    %310 = arith.maximumf %308, %309 : vector<2x16xf32>
    %311 = arith.truncf %310 : vector<2x16xf32> to vector<2x16xbf16>
    %c14_175 = arith.constant 14 : index
    %c0_176 = arith.constant 0 : index
    %312 = vector.load %arg18[%c14_175, %c0_176] : memref<42x16xbf16, #tpu.memory_space<vmem>>, vector<2x16xbf16>
    tpu.vector_store %arg18[%c14_175, %c0_176], %311 {strides = array<i32>} : memref<42x16xbf16, #tpu.memory_space<vmem>>, vector<2x16xbf16>,
    %313 = arith.mulf %275, %298 : vector<2x16xf32>
    %314 = arith.addf %313, %300 : vector<2x16xf32>
    %cst_177 = arith.constant 0.000000e+00 : f32
    %315 = vector.broadcast %cst_177 : f32 to vector<2x16xf32>
    %316 = arith.maximumf %314, %315 : vector<2x16xf32>
    %317 = arith.truncf %316 : vector<2x16xf32> to vector<2x16xbf16>
    %c26_178 = arith.constant 26 : index
    %c0_179 = arith.constant 0 : index
    %318 = vector.load %arg18[%c26_178, %c0_179] : memref<42x16xbf16, #tpu.memory_space<vmem>>, vector<2x16xbf16>
    tpu.vector_store %arg18[%c26_178, %c0_179], %317 {strides = array<i32>} : memref<42x16xbf16, #tpu.memory_space<vmem>>, vector<2x16xbf16>,
    %319 = arith.mulf %276, %298 : vector<2x16xf32>
    %320 = arith.addf %319, %300 : vector<2x16xf32>
    %cst_180 = arith.constant 0.000000e+00 : f32
    %321 = vector.broadcast %cst_180 : f32 to vector<2x16xf32>
    %322 = arith.maximumf %320, %321 : vector<2x16xf32>
    %323 = arith.truncf %322 : vector<2x16xf32> to vector<2x16xbf16>
    %c30 = arith.constant 30 : index
    %c0_181 = arith.constant 0 : index
    %324 = vector.load %arg18[%c30, %c0_181] : memref<42x16xbf16, #tpu.memory_space<vmem>>, vector<2x16xbf16>
    tpu.vector_store %arg18[%c30, %c0_181], %323 {strides = array<i32>} : memref<42x16xbf16, #tpu.memory_space<vmem>>, vector<2x16xbf16>,
    %c0_182 = arith.constant 0 : index
    %c0_183 = arith.constant 0 : index
    %325 = vector.load %arg18[%c0_182, %c0_183] : memref<42x16xbf16, #tpu.memory_space<vmem>>, vector<32x16xbf16>
    %c1_184 = arith.constant 1 : index
    %c0_185 = arith.constant 0 : index
    %326 = vector.load %arg18[%c1_184, %c0_185] : memref<42x16xbf16, #tpu.memory_space<vmem>>, vector<32x16xbf16>
    %c2_186 = arith.constant 2 : index
    %c0_187 = arith.constant 0 : index
    %327 = vector.load %arg18[%c2_186, %c0_187] : memref<42x16xbf16, #tpu.memory_space<vmem>>, vector<32x16xbf16>
    %c4 = arith.constant 4 : index
    %c0_188 = arith.constant 0 : index
    %328 = vector.load %arg18[%c4, %c0_188] : memref<42x16xbf16, #tpu.memory_space<vmem>>, vector<32x16xbf16>
    %c5 = arith.constant 5 : index
    %c0_189 = arith.constant 0 : index
    %329 = vector.load %arg18[%c5, %c0_189] : memref<42x16xbf16, #tpu.memory_space<vmem>>, vector<32x16xbf16>
    %c6_190 = arith.constant 6 : index
    %c0_191 = arith.constant 0 : index
    %330 = vector.load %arg18[%c6_190, %c0_191] : memref<42x16xbf16, #tpu.memory_space<vmem>>, vector<32x16xbf16>
    %c8_192 = arith.constant 8 : index
    %c0_193 = arith.constant 0 : index
    %331 = vector.load %arg18[%c8_192, %c0_193] : memref<42x16xbf16, #tpu.memory_space<vmem>>, vector<32x16xbf16>
    %c9 = arith.constant 9 : index
    %c0_194 = arith.constant 0 : index
    %332 = vector.load %arg18[%c9, %c0_194] : memref<42x16xbf16, #tpu.memory_space<vmem>>, vector<32x16xbf16>
    %c10_195 = arith.constant 10 : index
    %c0_196 = arith.constant 0 : index
    %333 = vector.load %arg18[%c10_195, %c0_196] : memref<42x16xbf16, #tpu.memory_space<vmem>>, vector<32x16xbf16>
    %334 = tpu.concatenate %325, %326, %327, %328, %329, %330, %331, %332, %333 in 1 : vector<32x16xbf16>, vector<32x16xbf16>, vector<32x16xbf16>, vector<32x16xbf16>, vector<32x16xbf16>, vector<32x16xbf16>, vector<32x16xbf16>, vector<32x16xbf16>, vector<32x16xbf16> -> vector<32x144xbf16>
    %c0_197 = arith.constant 0 : index
    %c0_198 = arith.constant 0 : index
    %335 = vector.load %arg4[%c0_197, %c0_198] : memref<144x16xbf16, #tpu.memory_space<vmem>>, vector<144x16xbf16>
    %cst_199 = arith.constant dense<0.000000e+00> : vector<32x16xf32>
    %336 = tpu.matmul %334, %335, %cst_199 {dimension_numbers = #tpu.dot_dimension_numbers<[1], [0], [0], [1], [0, 0, 1, 1], [], []>} : vector<32x144xbf16>, vector<144x16xbf16>, vector<32x16xf32> -> vector<32x16xf32>
    %c31_i32 = arith.constant 31 : i32
    %337 = tpu.dynamic_rotate %336 by %c31_i32 dim 0 : vector<32x16xf32>, i32 -> vector<32x16xf32>
    %338 = arith.maximumf %336, %337 : vector<32x16xf32>
    %c28_i32 = arith.constant 28 : i32
    %339 = tpu.dynamic_rotate %338 by %c28_i32 dim 0 : vector<32x16xf32>, i32 -> vector<32x16xf32>
    %340 = arith.maximumf %338, %339 : vector<32x16xf32>
    %c0_200 = arith.constant 0 : index
    %c0_201 = arith.constant 0 : index
    %341 = vector.load %arg22[%c0_200, %c0_201] : memref<32x16xf32, #tpu.memory_space<vmem>>, vector<32x16xf32>
    tpu.vector_store %arg22[%c0_200, %c0_201], %340 {strides = array<i32>} : memref<32x16xf32, #tpu.memory_space<vmem>>, vector<32x16xf32>,
    %c5_202 = arith.constant 5 : index
    %c0_203 = arith.constant 0 : index
    %342 = vector.load %arg22[%c5_202, %c0_203] : memref<32x16xf32, #tpu.memory_space<vmem>>, vector<1x16xf32>
    %c21_204 = arith.constant 21 : index
    %c0_205 = arith.constant 0 : index
    %343 = vector.load %arg22[%c21_204, %c0_205] : memref<32x16xf32, #tpu.memory_space<vmem>>, vector<1x16xf32>
    %344 = tpu.concatenate %342, %343 in 0 : vector<1x16xf32>, vector<1x16xf32> -> vector<2x16xf32>
    %cst_206 = arith.constant dense<0.000000e+00> : vector<16xf32>
    %345 = vector.multi_reduction <add>, %344, %cst_206 [0] : vector<2x16xf32> to vector<16xf32>
    %346 = vector.shape_cast %345 : vector<16xf32> to vector<1x16xf32>
    %cst_207 = arith.constant 2.000000e+00 : f32
    %347 = vector.broadcast %cst_207 : f32 to vector<1x16xf32>
    %348 = arith.divf %346, %347 : vector<1x16xf32>
    %349 = vector.broadcast %348 : vector<1x16xf32> to vector<2x16xf32>
    %350 = arith.subf %344, %349 : vector<2x16xf32>
    %351 = arith.mulf %350, %350 : vector<2x16xf32>
    %cst_208 = arith.constant dense<0.000000e+00> : vector<16xf32>
    %352 = vector.multi_reduction <add>, %351, %cst_208 [0] : vector<2x16xf32> to vector<16xf32>
    %353 = vector.shape_cast %352 : vector<16xf32> to vector<1x16xf32>
    %cst_209 = arith.constant 2.000000e+00 : f32
    %354 = vector.broadcast %cst_209 : f32 to vector<1x16xf32>
    %355 = arith.divf %353, %354 : vector<1x16xf32>
    %c0_210 = arith.constant 0 : index
    %c0_211 = arith.constant 0 : index
    %356 = vector.load %arg8[%c0_210, %c0_211] : memref<1x16xf32, #tpu.memory_space<vmem>>, vector<1x16xf32>
    %cst_212 = arith.constant 9.99999974E-6 : f32
    %357 = vector.broadcast %cst_212 : f32 to vector<1x16xf32>
    %358 = arith.addf %355, %357 : vector<1x16xf32>
    %359 = math.rsqrt %358 : vector<1x16xf32>
    %360 = arith.mulf %356, %359 : vector<1x16xf32>
    %c0_213 = arith.constant 0 : index
    %c0_214 = arith.constant 0 : index
    %361 = vector.load %arg12[%c0_213, %c0_214] : memref<1x16xf32, #tpu.memory_space<vmem>>, vector<1x16xf32>
    %362 = arith.mulf %348, %360 : vector<1x16xf32>
    %363 = arith.subf %361, %362 : vector<1x16xf32>
    %364 = vector.broadcast %360 : vector<1x16xf32> to vector<2x16xf32>
    %365 = arith.mulf %344, %364 : vector<2x16xf32>
    %366 = vector.broadcast %363 : vector<1x16xf32> to vector<2x16xf32>
    %367 = arith.addf %365, %366 : vector<2x16xf32>
    %cst_215 = arith.constant 0.000000e+00 : f32
    %368 = vector.broadcast %cst_215 : f32 to vector<2x16xf32>
    %369 = arith.maximumf %367, %368 : vector<2x16xf32>
    %370 = arith.truncf %369 : vector<2x16xf32> to vector<2x16xbf16>
    %c0_216 = arith.constant 0 : index
    %c0_217 = arith.constant 0 : index
    %371 = vector.load %arg13[%c0_216, %c0_217] : memref<16x10xbf16, #tpu.memory_space<vmem>>, vector<16x10xbf16>
    %cst_218 = arith.constant dense<0.000000e+00> : vector<2x10xf32>
    %372 = tpu.matmul %370, %371, %cst_218 {dimension_numbers = #tpu.dot_dimension_numbers<[1], [0], [0], [1], [0, 0, 1, 1], [], []>} : vector<2x16xbf16>, vector<16x10xbf16>, vector<2x10xf32> -> vector<2x10xf32>
    %c0_219 = arith.constant 0 : index
    %c0_220 = arith.constant 0 : index
    %373 = vector.load %arg14[%c0_219, %c0_220] : memref<1x10xf32, #tpu.memory_space<vmem>>, vector<1x10xf32>
    %374 = vector.broadcast %373 : vector<1x10xf32> to vector<2x10xf32>
    %375 = arith.addf %372, %374 : vector<2x10xf32>
    %c0_221 = arith.constant 0 : index
    %c0_222 = arith.constant 0 : index
    %376 = vector.load %arg15[%c0_221, %c0_222] : memref<2x10xf32, #tpu.memory_space<vmem>>, vector<2x10xf32>
    tpu.vector_store %arg15[%c0_221, %c0_222], %375 {strides = array<i32>} : memref<2x10xf32, #tpu.memory_space<vmem>>, vector<2x10xf32>,
    return
  }
}

</mosaic_0001>

<llo_original>
// kernel: tpu_custom_call.1
$region0: #{tpu_custom_call.1}
  #allocation0 [shape = 'u32[]', space=smem, size = 0x4, offset = 0x4, fixed_abs, tag = 'smem constant byte address 0x4 - core index']
  #allocation1 [shape = 'u32[72,128]{1,0:T(1,128)}', space=vmem, size = 0x9000, scoped, tag = 'internal scratch']
  #allocation2 [shape = 'bf16[222,8]{1,0:T(8,128)(2,1)}', space=vmem, size = 0xe000, scoped, tag = 'scratch operand']
  #allocation3 [shape = 'bf16[86,16]{1,0:T(8,128)(2,1)}', space=vmem, size = 0x5800, scoped, tag = 'scratch operand']
  #allocation4 [shape = 'bf16[42,16]{1,0:T(8,128)(2,1)}', space=vmem, size = 0x3000, scoped, tag = 'scratch operand']
  #allocation5 [shape = 'f32[648,8]{1,0:T(8,128)}', space=vmem, size = 0x51000, scoped, tag = 'scratch operand']
  #allocation6 [shape = 'f32[200,16]{1,0:T(8,128)}', space=vmem, size = 0x19000, scoped, tag = 'scratch operand']
  #allocation7 [shape = 'f32[72,16]{1,0:T(8,128)}', space=vmem, size = 0x9000, scoped, tag = 'scratch operand']
  #allocation8 [shape = 'f32[32,16]{1,0:T(8,128)}', space=vmem, size = 0x4000, scoped, tag = 'scratch operand']
  %s0 = inlined_call_operand.vmem [shape: bf16[686,4], index: 0, kind: input, shape index: {}]
  %s1 = inlined_call_operand.vmem [shape: bf16[36,8], index: 1, kind: input, shape index: {}]
  %s2 = inlined_call_operand.vmem [shape: bf16[72,16], index: 2, kind: input, shape index: {}]
  %s3 = inlined_call_operand.vmem [shape: bf16[144,16], index: 3, kind: input, shape index: {}]
  %s4 = inlined_call_operand.vmem [shape: bf16[144,16], index: 4, kind: input, shape index: {}]
  %s5 = inlined_call_operand.vmem [shape: f32[1,8], index: 5, kind: input, shape index: {}]
  %s6 = inlined_call_operand.vmem [shape: f32[1,16], index: 6, kind: input, shape index: {}]
  %s7 = inlined_call_operand.vmem [shape: f32[1,16], index: 7, kind: input, shape index: {}]
  %s8 = inlined_call_operand.vmem [shape: f32[1,16], index: 8, kind: input, shape index: {}]
  %s9 = inlined_call_operand.vmem [shape: f32[1,8], index: 9, kind: input, shape index: {}]
  %s10 = inlined_call_operand.vmem [shape: f32[1,16], index: 10, kind: input, shape index: {}]
  %s11 = inlined_call_operand.vmem [shape: f32[1,16], index: 11, kind: input, shape index: {}]
  %s12 = inlined_call_operand.vmem [shape: f32[1,16], index: 12, kind: input, shape index: {}]
  %s13 = inlined_call_operand.vmem [shape: bf16[16,10], index: 13, kind: input, shape index: {}]
  %s14 = inlined_call_operand.vmem [shape: f32[1,10], index: 14, kind: input, shape index: {}]
  %s15 = inlined_call_operand.hbm [shape: f32[2,10], index: 15, kind: output, shape index: {}]
  %s16 = sld [smem:[#allocation0]]
  $region70: #{tpu_custom_call.1} parent=0
    _
  %s18 = ssub.s32 1, %s16
  %s19 = scalar_select 0, %s18, %s16
  $region1: #{tpu_custom_call.1} parent=0
    #allocation9 [shape = 'u8[1024]{0}', space=vmem, size = 0x400, scoped, tag = 'output window, operand 0, single buffered']
    #allocation10 [shape = 's32[1]{0}', space=sflag, size = 0x4, scoped, tag = 'scoped memory for tpu_custom_call.1']
    %20 = vsyncpa [#allocation10], 0
    // Predicated region
    $region2: #{tpu_custom_call.1} parent=1 // pred_check
      _
    $region3: #{tpu_custom_call.1} parent=1 // pred_check_branch
      %22 = sbr.rel (0) target = $region5
    $region4: #{tpu_custom_call.1} parent=1 // pred_region
      _
    $region5: #{tpu_custom_call.1} parent=1 // pred_fallthru
      _
    // Predicated region
    $region6: #{tpu_custom_call.1} parent=1 // pred_check
      _
    $region7: #{tpu_custom_call.1} parent=1 // pred_check_branch
      %24 = sbr.rel (0) target = $region9
    $region8: #{tpu_custom_call.1} parent=1 // pred_region
      _
    $region9: #{tpu_custom_call.1} parent=1 // pred_fallthru
      _
    // Predicated region
    $region10: #{tpu_custom_call.1} parent=1 // pred_check
      _
    $region11: #{tpu_custom_call.1} parent=1 // pred_check_branch
      %26 = sbr.rel (0) target = $region13
    $region12: #{tpu_custom_call.1} parent=1 // pred_region
      _
    $region13: #{tpu_custom_call.1} parent=1 // pred_fallthru
      _
    // Predicated region
    $region14: #{tpu_custom_call.1} parent=1 // pred_check
      _
    $region15: #{tpu_custom_call.1} parent=1 // pred_check_branch
      %28 = sbr.rel (0) target = $region17
    $region16: #{tpu_custom_call.1} parent=1 // pred_region
      _
    $region17: #{tpu_custom_call.1} parent=1 // pred_fallthru
      _
    // Predicated region
    $region18: #{tpu_custom_call.1} parent=1 // pred_check
      _
    $region19: #{tpu_custom_call.1} parent=1 // pred_check_branch
      %30 = sbr.rel (0) target = $region21
    $region20: #{tpu_custom_call.1} parent=1 // pred_region
      _
    $region21: #{tpu_custom_call.1} parent=1 // pred_fallthru
      _
    // Predicated region
    $region22: #{tpu_custom_call.1} parent=1 // pred_check
      _
    $region23: #{tpu_custom_call.1} parent=1 // pred_check_branch
      %32 = sbr.rel (0) target = $region25
    $region24: #{tpu_custom_call.1} parent=1 // pred_region
      _
    $region25: #{tpu_custom_call.1} parent=1 // pred_fallthru
      _
    // Predicated region
    $region26: #{tpu_custom_call.1} parent=1 // pred_check
      _
    $region27: #{tpu_custom_call.1} parent=1 // pred_check_branch
      %34 = sbr.rel (0) target = $region29
    $region28: #{tpu_custom_call.1} parent=1 // pred_region
      _
    $region29: #{tpu_custom_call.1} parent=1 // pred_fallthru
      _
    // Predicated region
    $region30: #{tpu_custom_call.1} parent=1 // pred_check
      _
    $region31: #{tpu_custom_call.1} parent=1 // pred_check_branch
      %36 = sbr.rel (0) target = $region33
    $region32: #{tpu_custom_call.1} parent=1 // pred_region
      _
    $region33: #{tpu_custom_call.1} parent=1 // pred_fallthru
      _
    // Predicated region
    $region34: #{tpu_custom_call.1} parent=1 // pred_check
      _
    $region35: #{tpu_custom_call.1} parent=1 // pred_check_branch
      %38 = sbr.rel (0) target = $region37
    $region36: #{tpu_custom_call.1} parent=1 // pred_region
      _
    $region37: #{tpu_custom_call.1} parent=1 // pred_fallthru
      _
    // Predicated region
    $region38: #{tpu_custom_call.1} parent=1 // pred_check
      _
    $region39: #{tpu_custom_call.1} parent=1 // pred_check_branch
      %40 = sbr.rel (0) target = $region41
    $region40: #{tpu_custom_call.1} parent=1 // pred_region
      _
    $region41: #{tpu_custom_call.1} parent=1 // pred_fallthru
      _
    // Predicated region
    $region42: #{tpu_custom_call.1} parent=1 // pred_check
      _
    $region43: #{tpu_custom_call.1} parent=1 // pred_check_branch
      %42 = sbr.rel (0) target = $region45
    $region44: #{tpu_custom_call.1} parent=1 // pred_region
      _
    $region45: #{tpu_custom_call.1} parent=1 // pred_fallthru
      _
    // Predicated region
    $region46: #{tpu_custom_call.1} parent=1 // pred_check
      _
    $region47: #{tpu_custom_call.1} parent=1 // pred_check_branch
      %44 = sbr.rel (0) target = $region49
    $region48: #{tpu_custom_call.1} parent=1 // pred_region
      _
    $region49: #{tpu_custom_call.1} parent=1 // pred_fallthru
      _
    // Predicated region
    $region50: #{tpu_custom_call.1} parent=1 // pred_check
      _
    $region51: #{tpu_custom_call.1} parent=1 // pred_check_branch
      %46 = sbr.rel (0) target = $region53
    $region52: #{tpu_custom_call.1} parent=1 // pred_region
      _
    $region53: #{tpu_custom_call.1} parent=1 // pred_fallthru
      _
    // Predicated region
    $region54: #{tpu_custom_call.1} parent=1 // pred_check
      _
    $region55: #{tpu_custom_call.1} parent=1 // pred_check_branch
      %48 = sbr.rel (0) target = $region57
    $region56: #{tpu_custom_call.1} parent=1 // pred_region
      _
    $region57: #{tpu_custom_call.1} parent=1 // pred_fallthru
      _
    // Predicated region
    $region58: #{tpu_custom_call.1} parent=1 // pred_check
      _
    $region59: #{tpu_custom_call.1} parent=1 // pred_check_branch
      %50 = sbr.rel (0) target = $region61
    $region60: #{tpu_custom_call.1} parent=1 // pred_region
      _
    $region61: #{tpu_custom_call.1} parent=1 // pred_fallthru
      _
    %vm52 = vcmask 60416
    %53 = vst.msk [vmem:[#allocation2] sm:$0xf] %vm52, 0
    %54 = vst.msk [vmem:[#allocation2 + $0x4] sm:$0xf] %vm52, 0
    %55 = vst.msk [vmem:[#allocation2 + $0x8] sm:$0xf] %vm52, 0
    %56 = vst.msk [vmem:[#allocation2 + $0xc] sm:$0xf] %vm52, 0
    %57 = vst.msk [vmem:[#allocation2 + $0x10] sm:$0xf] %vm52, 0
    %58 = vst.msk [vmem:[#allocation2 + $0x14] sm:$0xf] %vm52, 0
    %59 = vst.msk [vmem:[#allocation2 + $0x18] sm:$0xf] %vm52, 0
    %60 = vst.msk [vmem:[#allocation2 + $0x1c] sm:$0xf] %vm52, 0
    %61 = vst.msk [vmem:[#allocation2 + $0x20] sm:$0xf] %vm52, 0
    %62 = vst.msk [vmem:[#allocation2 + $0x24] sm:$0xf] %vm52, 0
    %63 = vst.msk [vmem:[#allocation2 + $0x28] sm:$0xf] %vm52, 0
    %64 = vst.msk [vmem:[#allocation2 + $0x2c] sm:$0xf] %vm52, 0
    %65 = vst.msk [vmem:[#allocation2 + $0x30] sm:$0xf] %vm52, 0
    %66 = vst.msk [vmem:[#allocation2 + $0x34] sm:$0xf] %vm52, 0
    %67 = vst.msk [vmem:[#allocation2 + $0x38] sm:$0xf] %vm52, 0
    %68 = vst.msk [vmem:[#allocation2 + $0x3c] sm:$0xf] %vm52, 0
    %69 = vst.msk [vmem:[#allocation2 + $0x40] sm:$0xf] %vm52, 0
    %70 = vst.msk [vmem:[#allocation2 + $0x44] sm:$0xf] %vm52, 0
    %71 = vst.msk [vmem:[#allocation2 + $0x48] sm:$0xf] %vm52, 0
    %72 = vst.msk [vmem:[#allocation2 + $0x4c] sm:$0xf] %vm52, 0
    %73 = vst.msk [vmem:[#allocation2 + $0x50] sm:$0xf] %vm52, 0
    %74 = vst.msk [vmem:[#allocation2 + $0x54] sm:$0xf] %vm52, 0
    %75 = vst.msk [vmem:[#allocation2 + $0x58] sm:$0xf] %vm52, 0
    %76 = vst.msk [vmem:[#allocation2 + $0x5c] sm:$0xf] %vm52, 0
    %77 = vst.msk [vmem:[#allocation2 + $0x60] sm:$0xf] %vm52, 0
    %78 = vst.msk [vmem:[#allocation2 + $0x64] sm:$0xf] %vm52, 0
    %79 = vst.msk [vmem:[#allocation2 + $0x68] sm:$0xf] %vm52, 0
    %vm80 = vcmask 59392
    %81 = vst.msk [vmem:[#allocation2 + $0x6c] sm:$0x7] %vm80, 0
    %vm82 = vcmask 125952
    %83 = vst.msk [vmem:[#allocation3] sm:$0xf] %vm82, 0
    %84 = vst.msk [vmem:[#allocation3 + $0x4] sm:$0xf] %vm82, 0
    %85 = vst.msk [vmem:[#allocation3 + $0x8] sm:$0xf] %vm82, 0
    %86 = vst.msk [vmem:[#allocation3 + $0xc] sm:$0xf] %vm82, 0
    %87 = vst.msk [vmem:[#allocation3 + $0x10] sm:$0xf] %vm82, 0
    %88 = vst.msk [vmem:[#allocation3 + $0x14] sm:$0xf] %vm82, 0
    %89 = vst.msk [vmem:[#allocation3 + $0x18] sm:$0xf] %vm82, 0
    %90 = vst.msk [vmem:[#allocation3 + $0x1c] sm:$0xf] %vm82, 0
    %91 = vst.msk [vmem:[#allocation3 + $0x20] sm:$0xf] %vm82, 0
    %92 = vst.msk [vmem:[#allocation3 + $0x24] sm:$0xf] %vm82, 0
    %vm93 = vcmask 124928
    %94 = vst.msk [vmem:[#allocation3 + $0x28] sm:$0x7] %vm93, 0
    %95 = vst.msk [vmem:[#allocation4] sm:$0xf] %vm82, 0
    %96 = vst.msk [vmem:[#allocation4 + $0x4] sm:$0xf] %vm82, 0
    %97 = vst.msk [vmem:[#allocation4 + $0x8] sm:$0xf] %vm82, 0
    %98 = vst.msk [vmem:[#allocation4 + $0xc] sm:$0xf] %vm82, 0
    %99 = vst.msk [vmem:[#allocation4 + $0x10] sm:$0xf] %vm82, 0
    %vm100 = vcmask 122880
    %101 = vst.msk [vmem:[#allocation4 + $0x14] sm:$0x1] %vm100, 0
    %v102 = vld [vmem:[%s0] sm:$0xf]
    %v103 = vld [vmem:[%s0 + $0x4] sm:$0xf]
    %v104 = vld [vmem:[%s0 + $0x8] sm:$0xf]
    %v105 = vld [vmem:[%s0 + $0xc] sm:$0xf]
    %v106 = vld [vmem:[%s0 + $0x10] sm:$0xf]
    %v107 = vld [vmem:[%s0 + $0x14] sm:$0xf]
    %v108 = vld [vmem:[%s0 + $0x18] sm:$0xf]
    %v109 = vld [vmem:[%s0 + $0x1c] sm:$0xf]
    %v110 = vld [vmem:[%s0 + $0x20] sm:$0xf]
    %v111 = vld [vmem:[%s0 + $0x24] sm:$0xf]
    %v112 = vld [vmem:[%s0 + $0x28] sm:$0xf]
    %v113 = vld [vmem:[%s0 + $0x2c] sm:$0xf]
    %v114 = vld [vmem:[%s0 + $0x30] sm:$0xf]
    %v115 = vld [vmem:[%s0 + $0x34] sm:$0xf]
    %v116 = vld [vmem:[%s0 + $0x38] sm:$0xf]
    %v117 = vld [vmem:[%s0 + $0x3c] sm:$0xf]
    %v118 = vld [vmem:[%s0 + $0x40] sm:$0xf]
    %v119 = vld [vmem:[%s0 + $0x44] sm:$0xf]
    %v120 = vld [vmem:[%s0 + $0x48] sm:$0xf]
    %v121 = vld [vmem:[%s0 + $0x4c] sm:$0xf]
    %v122 = vld [vmem:[%s0 + $0x50] sm:$0xf]
    %v123 = vld [vmem:[%s0 + $0x54] sm:$0xf]
    %v124 = vld [vmem:[%s0 + $0x58] sm:$0xf]
    %v125 = vld [vmem:[%s0 + $0x5c] sm:$0xf]
    %v126 = vld [vmem:[%s0 + $0x60] sm:$0xf]
    %v127 = vld [vmem:[%s0 + $0x64] sm:$0xf]
    %v128 = vld [vmem:[%s0 + $0x68] sm:$0xf]
    %v129 = vld [vmem:[%s0 + $0x6c] sm:$0xf]
    %v130 = vld [vmem:[%s0 + $0x70] sm:$0xf]
    %v131 = vld [vmem:[%s0 + $0x74] sm:$0xf]
    %v132 = vld [vmem:[%s0 + $0x78] sm:$0xf]
    %v133 = vld [vmem:[%s0 + $0x7c] sm:$0xf]
    %v134 = vld [vmem:[%s0 + $0x80] sm:$0xf]
    %v135 = vld [vmem:[%s0 + $0x84] sm:$0xf]
    %v136 = vld [vmem:[%s0 + $0x88] sm:$0xf]
    %v137 = vld [vmem:[%s0 + $0x8c] sm:$0xf]
    %v138 = vld [vmem:[%s0 + $0x90] sm:$0xf]
    %v139 = vld [vmem:[%s0 + $0x94] sm:$0xf]
    %v140 = vld [vmem:[%s0 + $0x98] sm:$0xf]
    %v141 = vld [vmem:[%s0 + $0x9c] sm:$0xf]
    %v142 = vld [vmem:[%s0 + $0xa0] sm:$0xf]
    %v143 = vld [vmem:[%s0 + $0xa4] sm:$0xf]
    %v144 = vld [vmem:[%s0 + $0xa8] sm:$0xf]
    %v145 = vld [vmem:[%s0 + $0xac] sm:$0xf]
    %v146 = vld [vmem:[%s0 + $0xb0] sm:$0xf]
    %v147 = vld [vmem:[%s0 + $0xb4] sm:$0xf]
    %v148 = vld [vmem:[%s0 + $0xb8] sm:$0xf]
    %v149 = vld [vmem:[%s0 + $0xbc] sm:$0xf]
    %v150 = vld [vmem:[%s0 + $0xc0] sm:$0xf]
    %v151 = vld [vmem:[%s0 + $0xc4] sm:$0xf]
    %v152 = vld [vmem:[%s0 + $0xc8] sm:$0xf]
    %v153 = vld [vmem:[%s0 + $0xcc] sm:$0xf]
    %v154 = vld [vmem:[%s0 + $0xd0] sm:$0xf]
    %v155 = vld [vmem:[%s0 + $0xd4] sm:$0xf]
    %v156 = vld [vmem:[%s0 + $0xd8] sm:$0xf]
    %v157 = vld [vmem:[%s0 + $0xdc] sm:$0xf]
    %v158 = vld [vmem:[%s0 + $0xe0] sm:$0xf]
    %v159 = vld [vmem:[%s0 + $0xe4] sm:$0xf]
    %v160 = vld [vmem:[%s0 + $0xe8] sm:$0xf]
    %v161 = vld [vmem:[%s0 + $0xec] sm:$0xf]
    %v162 = vld [vmem:[%s0 + $0xf0] sm:$0xf]
    %v163 = vld [vmem:[%s0 + $0xf4] sm:$0xf]
    %v164 = vld [vmem:[%s0 + $0xf8] sm:$0xf]
    %v165 = vld [vmem:[%s0 + $0xfc] sm:$0xf]
    %v166 = vld [vmem:[%s0 + $0x100] sm:$0xf]
    %v167 = vld [vmem:[%s0 + $0x104] sm:$0xf]
    %v168 = vld [vmem:[%s0 + $0x108] sm:$0xf]
    %v169 = vld [vmem:[%s0 + $0x10c] sm:$0xf]
    %v170 = vld [vmem:[%s0 + $0x110] sm:$0xf]
    %v171 = vld [vmem:[%s0 + $0x114] sm:$0xf]
    %v172 = vld [vmem:[%s0 + $0x118] sm:$0xf]
    %v173 = vld [vmem:[%s0 + $0x11c] sm:$0xf]
    %v174 = vld [vmem:[%s0 + $0x120] sm:$0xf]
    %v175 = vld [vmem:[%s0 + $0x124] sm:$0xf]
    %v176 = vld [vmem:[%s0 + $0x128] sm:$0xf]
    %v177 = vld [vmem:[%s0 + $0x12c] sm:$0xf]
    %v178 = vld [vmem:[%s0 + $0x130] sm:$0xf]
    %v179 = vld [vmem:[%s0 + $0x134] sm:$0xf]
    %v180 = vld [vmem:[%s0 + $0x138] sm:$0xf]
    %v181 = vld [vmem:[%s0 + $0x13c] sm:$0xf]
    %v182 = vld [vmem:[%s0 + $0x140] sm:$0xf]
    %v183 = vld [vmem:[%s0 + $0x144] sm:$0x1]
    %v184 = vld [vmem:[%s0] sm:$0xe]
    %v185 = vld [vmem:[%s0 + $0x8] sm:$0xe]
    %v186 = vld [vmem:[%s0 + $0x144] sm:$0xf]
    %v187 = vld [vmem:[%s0 + $0x148] sm:$0xf]
    %v188 = vld [vmem:[%s0 + $0x14c] sm:$0x1]
    %v189 = vld [vmem:[%s0 + $0x14c] sm:$0x3]
    %v190 = vld [vmem:[%s0 + $0x8] sm:$0xc]
    %v191 = vld [vmem:[%s0 + $0x10] sm:$0xc]
    %v192 = vld [vmem:[%s0 + $0x14c] sm:$0xf]
    %v193 = vld [vmem:[%s0 + $0x150] sm:$0xf]
    %v194 = vld [vmem:[%s0 + $0x154] sm:$0x3]
    %v195 = vld [vmem:[%s0 + $0x154] sm:$0x7]
    %v196 = vld [vmem:[%s0 + $0x10] sm:$0x8]
    %v278 = vunpack.c.l.b16 %v102
    %v279 = vunpack.c.l.b16 %v103
    %v280 = vunpack.c.l.b16 %v104
    %v281 = vunpack.c.l.b16 %v105
    %v282 = vunpack.c.l.b16 %v106
    %v283 = vunpack.c.l.b16 %v107
    %v284 = vunpack.c.l.b16 %v108
    %v285 = vunpack.c.l.b16 %v109
    %v286 = vunpack.c.l.b16 %v110
    %v287 = vunpack.c.l.b16 %v111
    %v288 = vunpack.c.l.b16 %v112
    %v289 = vunpack.c.l.b16 %v113
    %v290 = vunpack.c.l.b16 %v114
    %v291 = vunpack.c.l.b16 %v115
    %v292 = vunpack.c.l.b16 %v116
    %v293 = vunpack.c.l.b16 %v117
    %v294 = vunpack.c.l.b16 %v118
    %v295 = vunpack.c.l.b16 %v119
    %v296 = vunpack.c.l.b16 %v120
    %v297 = vunpack.c.l.b16 %v121
    %v298 = vunpack.c.l.b16 %v122
    %v299 = vunpack.c.l.b16 %v123
    %v300 = vunpack.c.l.b16 %v124
    %v301 = vunpack.c.l.b16 %v125
    %v302 = vunpack.c.l.b16 %v126
    %v303 = vunpack.c.l.b16 %v127
    %v304 = vunpack.c.l.b16 %v128
    %v305 = vunpack.c.l.b16 %v129
    %v306 = vunpack.c.l.b16 %v130
    %v307 = vunpack.c.l.b16 %v131
    %v308 = vunpack.c.l.b16 %v132
    %v309 = vunpack.c.l.b16 %v133
    %v310 = vunpack.c.l.b16 %v134
    %v311 = vunpack.c.l.b16 %v135
    %v312 = vunpack.c.l.b16 %v136
    %v313 = vunpack.c.l.b16 %v137
    %v314 = vunpack.c.l.b16 %v138
    %v315 = vunpack.c.l.b16 %v139
    %v316 = vunpack.c.l.b16 %v140
    %v317 = vunpack.c.l.b16 %v141
    %v318 = vunpack.c.l.b16 %v142
    %v319 = vunpack.c.l.b16 %v143
    %v320 = vunpack.c.l.b16 %v144
    %v321 = vunpack.c.l.b16 %v145
    %v322 = vunpack.c.l.b16 %v146
    %v323 = vunpack.c.l.b16 %v147
    %v324 = vunpack.c.l.b16 %v148
    %v325 = vunpack.c.l.b16 %v149
    %v326 = vunpack.c.l.b16 %v150
    %v327 = vunpack.c.l.b16 %v151
    %v328 = vunpack.c.l.b16 %v152
    %v329 = vunpack.c.l.b16 %v153
    %v330 = vunpack.c.l.b16 %v154
    %v331 = vunpack.c.l.b16 %v155
    %v332 = vunpack.c.l.b16 %v156
    %v333 = vunpack.c.l.b16 %v157
    %v334 = vunpack.c.l.b16 %v158
    %v335 = vunpack.c.l.b16 %v159
    %v336 = vunpack.c.l.b16 %v160
    %v337 = vunpack.c.l.b16 %v161
    %v338 = vunpack.c.l.b16 %v162
    %v339 = vunpack.c.l.b16 %v163
    %v340 = vunpack.c.l.b16 %v164
    %v341 = vunpack.c.l.b16 %v165
    %v342 = vunpack.c.l.b16 %v166
    %v343 = vunpack.c.l.b16 %v167
    %v344 = vunpack.c.l.b16 %v168
    %v345 = vunpack.c.l.b16 %v169
    %v346 = vunpack.c.l.b16 %v170
    %v347 = vunpack.c.l.b16 %v171
    %v348 = vunpack.c.l.b16 %v172
    %v349 = vunpack.c.l.b16 %v173
    %v350 = vunpack.c.l.b16 %v174
    %v351 = vunpack.c.l.b16 %v175
    %v352 = vunpack.c.l.b16 %v176
    %v353 = vunpack.c.l.b16 %v177
    %v354 = vunpack.c.l.b16 %v178
    %v355 = vunpack.c.l.b16 %v179
    %v356 = vunpack.c.l.b16 %v180
    %v357 = vunpack.c.l.b16 %v181
    %v358 = vunpack.c.l.b16 %v182
    %v359 = vpack.c.b16 %v279, %v278
    %v360 = vpack.c.b16 %v281, %v280
    %v361 = vpack.c.b16 %v283, %v282
    %v362 = vpack.c.b16 %v285, %v284
    %v363 = vpack.c.b16 %v287, %v286
    %v364 = vpack.c.b16 %v289, %v288
    %v365 = vpack.c.b16 %v291, %v290
    %v366 = vpack.c.b16 %v293, %v292
    %v367 = vpack.c.b16 %v295, %v294
    %v368 = vpack.c.b16 %v297, %v296
    %v369 = vpack.c.b16 %v299, %v298
    %v370 = vpack.c.b16 %v301, %v300
    %v371 = vpack.c.b16 %v303, %v302
    %v372 = vpack.c.b16 %v305, %v304
    %v373 = vpack.c.b16 %v307, %v306
    %v374 = vpack.c.b16 %v309, %v308
    %v375 = vpack.c.b16 %v311, %v310
    %v376 = vpack.c.b16 %v313, %v312
    %v377 = vpack.c.b16 %v315, %v314
    %v378 = vpack.c.b16 %v317, %v316
    %v379 = vpack.c.b16 %v319, %v318
    %v380 = vpack.c.b16 %v321, %v320
    %v381 = vpack.c.b16 %v323, %v322
    %v382 = vpack.c.b16 %v325, %v324
    %v383 = vpack.c.b16 %v327, %v326
    %v384 = vpack.c.b16 %v329, %v328
    %v385 = vpack.c.b16 %v331, %v330
    %v386 = vpack.c.b16 %v333, %v332
    %v387 = vpack.c.b16 %v335, %v334
    %v388 = vpack.c.b16 %v337, %v336
    %v389 = vpack.c.b16 %v339, %v338
    %v390 = vpack.c.b16 %v341, %v340
    %v391 = vpack.c.b16 %v343, %v342
    %v392 = vpack.c.b16 %v345, %v344
    %v393 = vpack.c.b16 %v347, %v346
    %v394 = vpack.c.b16 %v349, %v348
    %v395 = vpack.c.b16 %v351, %v350
    %v396 = vpack.c.b16 %v353, %v352
    %v397 = vpack.c.b16 %v355, %v354
    %v398 = vpack.c.b16 %v357, %v356
    %v399 = vpack.c.b16 %v358, %v358
    %v401 = vunpack.c.l.b16 %v183
    %v402 = vpack.c.b16 %v401, %v358
    %vm403 = vsmask.f32 7424
    %v405 = vshrl.u32 %v359, 16
    %v407 = vshll.u32 %v359, 16
    %v409 = vrot.slane %v407, 1
    %v410 = vor.u32 %v405, %v409
    %v412 = vshll.u32 %v360, 16
    %v414 = vrot.slane %v412, 1
    %v415 = vsel %vm403, %v410, %v414
    %v416 = vshrl.u32 %v360, 16
    %v418 = vor.u32 %v416, %v414
    %v420 = vshll.u32 %v361, 16
    %v422 = vrot.slane %v420, 1
    %v423 = vsel %vm403, %v418, %v422
    %v424 = vshrl.u32 %v361, 16
    %v426 = vor.u32 %v424, %v422
    %v428 = vshll.u32 %v362, 16
    %v430 = vrot.slane %v428, 1
    %v431 = vsel %vm403, %v426, %v430
    %v432 = vshrl.u32 %v362, 16
    %v434 = vor.u32 %v432, %v430
    %v436 = vshll.u32 %v363, 16
    %v438 = vrot.slane %v436, 1
    %v439 = vsel %vm403, %v434, %v438
    %v440 = vshrl.u32 %v363, 16
    %v442 = vor.u32 %v440, %v438
    %v444 = vshll.u32 %v364, 16
    %v446 = vrot.slane %v444, 1
    %v447 = vsel %vm403, %v442, %v446
    %v448 = vshrl.u32 %v364, 16
    %v450 = vor.u32 %v448, %v446
    %v452 = vshll.u32 %v365, 16
    %v454 = vrot.slane %v452, 1
    %v455 = vsel %vm403, %v450, %v454
    %v456 = vshrl.u32 %v365, 16
    %v458 = vor.u32 %v456, %v454
    %v460 = vshll.u32 %v366, 16
    %v462 = vrot.slane %v460, 1
    %v463 = vsel %vm403, %v458, %v462
    %v464 = vshrl.u32 %v366, 16
    %v466 = vor.u32 %v464, %v462
    %v468 = vshll.u32 %v367, 16
    %v470 = vrot.slane %v468, 1
    %v471 = vsel %vm403, %v466, %v470
    %v472 = vshrl.u32 %v367, 16
    %v474 = vor.u32 %v472, %v470
    %v476 = vshll.u32 %v368, 16
    %v478 = vrot.slane %v476, 1
    %v479 = vsel %vm403, %v474, %v478
    %v480 = vshrl.u32 %v368, 16
    %v482 = vor.u32 %v480, %v478
    %v484 = vshll.u32 %v369, 16
    %v486 = vrot.slane %v484, 1
    %v487 = vsel %vm403, %v482, %v486
    %v488 = vshrl.u32 %v369, 16
    %v490 = vor.u32 %v488, %v486
    %v492 = vshll.u32 %v370, 16
    %v494 = vrot.slane %v492, 1
    %v495 = vsel %vm403, %v490, %v494
    %v496 = vshrl.u32 %v370, 16
    %v498 = vor.u32 %v496, %v494
    %v500 = vshll.u32 %v371, 16
    %v502 = vrot.slane %v500, 1
    %v503 = vsel %vm403, %v498, %v502
    %v504 = vshrl.u32 %v371, 16
    %v506 = vor.u32 %v504, %v502
    %v508 = vshll.u32 %v372, 16
    %v510 = vrot.slane %v508, 1
    %v511 = vsel %vm403, %v506, %v510
    %v512 = vshrl.u32 %v372, 16
    %v514 = vor.u32 %v512, %v510
    %v516 = vshll.u32 %v373, 16
    %v518 = vrot.slane %v516, 1
    %v519 = vsel %vm403, %v514, %v518
    %v520 = vshrl.u32 %v373, 16
    %v522 = vor.u32 %v520, %v518
    %v524 = vshll.u32 %v374, 16
    %v526 = vrot.slane %v524, 1
    %v527 = vsel %vm403, %v522, %v526
    %v528 = vshrl.u32 %v374, 16
    %v530 = vor.u32 %v528, %v526
    %v532 = vshll.u32 %v375, 16
    %v534 = vrot.slane %v532, 1
    %v535 = vsel %vm403, %v530, %v534
    %v536 = vshrl.u32 %v375, 16
    %v538 = vor.u32 %v536, %v534
    %v540 = vshll.u32 %v376, 16
    %v542 = vrot.slane %v540, 1
    %v543 = vsel %vm403, %v538, %v542
    %v544 = vshrl.u32 %v376, 16
    %v546 = vor.u32 %v544, %v542
    %v548 = vshll.u32 %v377, 16
    %v550 = vrot.slane %v548, 1
    %v551 = vsel %vm403, %v546, %v550
    %v552 = vshrl.u32 %v377, 16
    %v554 = vor.u32 %v552, %v550
    %v556 = vshll.u32 %v378, 16
    %v558 = vrot.slane %v556, 1
    %v559 = vsel %vm403, %v554, %v558
    %v560 = vshrl.u32 %v378, 16
    %v562 = vor.u32 %v560, %v558
    %v564 = vshll.u32 %v379, 16
    %v566 = vrot.slane %v564, 1
    %v567 = vsel %vm403, %v562, %v566
    %v568 = vshrl.u32 %v379, 16
    %v570 = vor.u32 %v568, %v566
    %v572 = vshll.u32 %v380, 16
    %v574 = vrot.slane %v572, 1
    %v575 = vsel %vm403, %v570, %v574
    %v576 = vshrl.u32 %v380, 16
    %v578 = vor.u32 %v576, %v574
    %v580 = vshll.u32 %v381, 16
    %v582 = vrot.slane %v580, 1
    %v583 = vsel %vm403, %v578, %v582
    %v584 = vshrl.u32 %v381, 16
    %v586 = vor.u32 %v584, %v582
    %v588 = vshll.u32 %v382, 16
    %v590 = vrot.slane %v588, 1
    %v591 = vsel %vm403, %v586, %v590
    %v592 = vshrl.u32 %v382, 16
    %v594 = vor.u32 %v592, %v590
    %v596 = vshll.u32 %v383, 16
    %v598 = vrot.slane %v596, 1
    %v599 = vsel %vm403, %v594, %v598
    %v600 = vshrl.u32 %v383, 16
    %v602 = vor.u32 %v600, %v598
    %v604 = vshll.u32 %v384, 16
    %v606 = vrot.slane %v604, 1
    %v607 = vsel %vm403, %v602, %v606
    %v608 = vshrl.u32 %v384, 16
    %v610 = vor.u32 %v608, %v606
    %v612 = vshll.u32 %v385, 16
    %v614 = vrot.slane %v612, 1
    %v615 = vsel %vm403, %v610, %v614
    %v616 = vshrl.u32 %v385, 16
    %v618 = vor.u32 %v616, %v614
    %v620 = vshll.u32 %v386, 16
    %v622 = vrot.slane %v620, 1
    %v623 = vsel %vm403, %v618, %v622
    %v624 = vshrl.u32 %v386, 16
    %v626 = vor.u32 %v624, %v622
    %v628 = vshll.u32 %v387, 16
    %v630 = vrot.slane %v628, 1
    %v631 = vsel %vm403, %v626, %v630
    %v632 = vshrl.u32 %v387, 16
    %v634 = vor.u32 %v632, %v630
    %v636 = vshll.u32 %v388, 16
    %v638 = vrot.slane %v636, 1
    %v639 = vsel %vm403, %v634, %v638
    %v640 = vshrl.u32 %v388, 16
    %v642 = vor.u32 %v640, %v638
    %v644 = vshll.u32 %v389, 16
    %v646 = vrot.slane %v644, 1
    %v647 = vsel %vm403, %v642, %v646
    %v648 = vshrl.u32 %v389, 16
    %v650 = vor.u32 %v648, %v646
    %v652 = vshll.u32 %v390, 16
    %v654 = vrot.slane %v652, 1
    %v655 = vsel %vm403, %v650, %v654
    %v656 = vshrl.u32 %v390, 16
    %v658 = vor.u32 %v656, %v654
    %v660 = vshll.u32 %v391, 16
    %v662 = vrot.slane %v660, 1
    %v663 = vsel %vm403, %v658, %v662
    %v664 = vshrl.u32 %v391, 16
    %v666 = vor.u32 %v664, %v662
    %v668 = vshll.u32 %v392, 16
    %v670 = vrot.slane %v668, 1
    %v671 = vsel %vm403, %v666, %v670
    %v672 = vshrl.u32 %v392, 16
    %v674 = vor.u32 %v672, %v670
    %v676 = vshll.u32 %v393, 16
    %v678 = vrot.slane %v676, 1
    %v679 = vsel %vm403, %v674, %v678
    %v680 = vshrl.u32 %v393, 16
    %v682 = vor.u32 %v680, %v678
    %v684 = vshll.u32 %v394, 16
    %v686 = vrot.slane %v684, 1
    %v687 = vsel %vm403, %v682, %v686
    %v688 = vshrl.u32 %v394, 16
    %v690 = vor.u32 %v688, %v686
    %v692 = vshll.u32 %v395, 16
    %v694 = vrot.slane %v692, 1
    %v695 = vsel %vm403, %v690, %v694
    %v696 = vshrl.u32 %v395, 16
    %v698 = vor.u32 %v696, %v694
    %v700 = vshll.u32 %v396, 16
    %v702 = vrot.slane %v700, 1
    %v703 = vsel %vm403, %v698, %v702
    %v704 = vshrl.u32 %v396, 16
    %v706 = vor.u32 %v704, %v702
    %v708 = vshll.u32 %v397, 16
    %v710 = vrot.slane %v708, 1
    %v711 = vsel %vm403, %v706, %v710
    %v712 = vshrl.u32 %v397, 16
    %v714 = vor.u32 %v712, %v710
    %v716 = vshll.u32 %v398, 16
    %v718 = vrot.slane %v716, 1
    %v719 = vsel %vm403, %v714, %v718
    %v720 = vshrl.u32 %v398, 16
    %v722 = vor.u32 %v720, %v718
    %v724 = vshll.u32 %v402, 16
    %v726 = vrot.slane %v724, 1
    %v727 = vsel %vm403, %v722, %v726
    %v728 = vshrl.u32 %v402, 16
    %v730 = vor.u32 %v728, %v726
    %731 = vrot.lane.b32.xlu0 %v415, 4
    %v732 = vpop.permute.xlu0 %731
    %733 = vrot.lane.b32.xlu0 %v423, 4
    %v734 = vpop.permute.xlu0 %733
    %735 = vrot.lane.b32.xlu0 %v431, 4
    %v736 = vpop.permute.xlu0 %735
    %737 = vrot.lane.b32.xlu0 %v439, 4
    %v738 = vpop.permute.xlu0 %737
    %739 = vrot.lane.b32.xlu0 %v447, 4
    %v740 = vpop.permute.xlu0 %739
    %741 = vrot.lane.b32.xlu0 %v455, 4
    %v742 = vpop.permute.xlu0 %741
    %743 = vrot.lane.b32.xlu0 %v463, 4
    %v744 = vpop.permute.xlu0 %743
    %745 = vrot.lane.b32.xlu0 %v471, 4
    %v746 = vpop.permute.xlu0 %745
    %747 = vrot.lane.b32.xlu0 %v479, 4
    %v748 = vpop.permute.xlu0 %747
    %749 = vrot.lane.b32.xlu0 %v487, 4
    %v750 = vpop.permute.xlu0 %749
    %751 = vrot.lane.b32.xlu0 %v495, 4
    %v752 = vpop.permute.xlu0 %751
    %753 = vrot.lane.b32.xlu0 %v503, 4
    %v754 = vpop.permute.xlu0 %753
    %755 = vrot.lane.b32.xlu0 %v511, 4
    %v756 = vpop.permute.xlu0 %755
    %757 = vrot.lane.b32.xlu0 %v519, 4
    %v758 = vpop.permute.xlu0 %757
    %759 = vrot.lane.b32.xlu0 %v527, 4
    %v760 = vpop.permute.xlu0 %759
    %761 = vrot.lane.b32.xlu0 %v535, 4
    %v762 = vpop.permute.xlu0 %761
    %763 = vrot.lane.b32.xlu0 %v543, 4
    %v764 = vpop.permute.xlu0 %763
    %765 = vrot.lane.b32.xlu0 %v551, 4
    %v766 = vpop.permute.xlu0 %765
    %767 = vrot.lane.b32.xlu0 %v559, 4
    %v768 = vpop.permute.xlu0 %767
    %769 = vrot.lane.b32.xlu0 %v567, 4
    %v770 = vpop.permute.xlu0 %769
    %771 = vrot.lane.b32.xlu0 %v575, 4
    %v772 = vpop.permute.xlu0 %771
    %773 = vrot.lane.b32.xlu0 %v583, 4
    %v774 = vpop.permute.xlu0 %773
    %775 = vrot.lane.b32.xlu0 %v591, 4
    %v776 = vpop.permute.xlu0 %775
    %777 = vrot.lane.b32.xlu0 %v599, 4
    %v778 = vpop.permute.xlu0 %777
    %779 = vrot.lane.b32.xlu0 %v607, 4
    %v780 = vpop.permute.xlu0 %779
    %781 = vrot.lane.b32.xlu0 %v615, 4
    %v782 = vpop.permute.xlu0 %781
    %783 = vrot.lane.b32.xlu0 %v623, 4
    %v784 = vpop.permute.xlu0 %783
    %785 = vrot.lane.b32.xlu0 %v631, 4
    %v786 = vpop.permute.xlu0 %785
    %787 = vrot.lane.b32.xlu0 %v639, 4
    %v788 = vpop.permute.xlu0 %787
    %789 = vrot.lane.b32.xlu0 %v647, 4
    %v790 = vpop.permute.xlu0 %789
    %791 = vrot.lane.b32.xlu0 %v655, 4
    %v792 = vpop.permute.xlu0 %791
    %793 = vrot.lane.b32.xlu0 %v663, 4
    %v794 = vpop.permute.xlu0 %793
    %795 = vrot.lane.b32.xlu0 %v671, 4
    %v796 = vpop.permute.xlu0 %795
    %797 = vrot.lane.b32.xlu0 %v679, 4
    %v798 = vpop.permute.xlu0 %797
    %799 = vrot.lane.b32.xlu0 %v687, 4
    %v800 = vpop.permute.xlu0 %799
    %801 = vrot.lane.b32.xlu0 %v695, 4
    %v802 = vpop.permute.xlu0 %801
    %803 = vrot.lane.b32.xlu0 %v703, 4
    %v804 = vpop.permute.xlu0 %803
    %805 = vrot.lane.b32.xlu0 %v711, 4
    %v806 = vpop.permute.xlu0 %805
    %807 = vrot.lane.b32.xlu0 %v719, 4
    %v808 = vpop.permute.xlu0 %807
    %809 = vrot.lane.b32.xlu0 %v727, 4
    %v810 = vpop.permute.xlu0 %809
    %811 = vrot.lane.b32.xlu0 %v730, 4
    %v812 = vpop.permute.xlu0 %811
    %v814 = vunpack.c.l.b16 %v184
    %v815 = vpack.c.b16 %v279, %v814
    %vm816 = vcmask 1046528
    %v817 = vrot.slane %v815, 1
    %v818 = vrot.slane %v360, 1
    %v819 = vsel %vm816, %v817, %v818
    %v820 = vrot.slane %v361, 1
    %v821 = vsel %vm816, %v818, %v820
    %v822 = vrot.slane %v362, 1
    %v823 = vsel %vm816, %v820, %v822
    %v824 = vrot.slane %v363, 1
    %v825 = vsel %vm816, %v822, %v824
    %v826 = vrot.slane %v364, 1
    %v827 = vsel %vm816, %v824, %v826
    %v828 = vrot.slane %v365, 1
    %v829 = vsel %vm816, %v826, %v828
    %v830 = vrot.slane %v366, 1
    %v831 = vsel %vm816, %v828, %v830
    %v832 = vrot.slane %v367, 1
    %v833 = vsel %vm816, %v830, %v832
    %v834 = vrot.slane %v368, 1
    %v835 = vsel %vm816, %v832, %v834
    %v836 = vrot.slane %v369, 1
    %v837 = vsel %vm816, %v834, %v836
    %v838 = vrot.slane %v370, 1
    %v839 = vsel %vm816, %v836, %v838
    %v840 = vrot.slane %v371, 1
    %v841 = vsel %vm816, %v838, %v840
    %v842 = vrot.slane %v372, 1
    %v843 = vsel %vm816, %v840, %v842
    %v844 = vrot.slane %v373, 1
    %v845 = vsel %vm816, %v842, %v844
    %v846 = vrot.slane %v374, 1
    %v847 = vsel %vm816, %v844, %v846
    %v848 = vrot.slane %v375, 1
    %v849 = vsel %vm816, %v846, %v848
    %v850 = vrot.slane %v376, 1
    %v851 = vsel %vm816, %v848, %v850
    %v852 = vrot.slane %v377, 1
    %v853 = vsel %vm816, %v850, %v852
    %v854 = vrot.slane %v378, 1
    %v855 = vsel %vm816, %v852, %v854
    %v856 = vrot.slane %v379, 1
    %v857 = vsel %vm816, %v854, %v856
    %v858 = vrot.slane %v380, 1
    %v859 = vsel %vm816, %v856, %v858
    %v860 = vrot.slane %v381, 1
    %v861 = vsel %vm816, %v858, %v860
    %v862 = vrot.slane %v382, 1
    %v863 = vsel %vm816, %v860, %v862
    %v864 = vrot.slane %v383, 1
    %v865 = vsel %vm816, %v862, %v864
    %v866 = vrot.slane %v384, 1
    %v867 = vsel %vm816, %v864, %v866
    %v868 = vrot.slane %v385, 1
    %v869 = vsel %vm816, %v866, %v868
    %v870 = vrot.slane %v386, 1
    %v871 = vsel %vm816, %v868, %v870
    %v872 = vrot.slane %v387, 1
    %v873 = vsel %vm816, %v870, %v872
    %v874 = vrot.slane %v388, 1
    %v875 = vsel %vm816, %v872, %v874
    %v876 = vrot.slane %v389, 1
    %v877 = vsel %vm816, %v874, %v876
    %v878 = vrot.slane %v390, 1
    %v879 = vsel %vm816, %v876, %v878
    %v880 = vrot.slane %v391, 1
    %v881 = vsel %vm816, %v878, %v880
    %v882 = vrot.slane %v392, 1
    %v883 = vsel %vm816, %v880, %v882
    %v884 = vrot.slane %v393, 1
    %v885 = vsel %vm816, %v882, %v884
    %v886 = vrot.slane %v394, 1
    %v887 = vsel %vm816, %v884, %v886
    %v888 = vrot.slane %v395, 1
    %v889 = vsel %vm816, %v886, %v888
    %v890 = vrot.slane %v396, 1
    %v891 = vsel %vm816, %v888, %v890
    %v892 = vrot.slane %v397, 1
    %v893 = vsel %vm816, %v890, %v892
    %v894 = vrot.slane %v398, 1
    %v895 = vsel %vm816, %v892, %v894
    %v896 = vrot.slane %v402, 1
    %v897 = vsel %vm816, %v894, %v896
    %898 = vrot.lane.b32.xlu0 %v819, 8
    %v899 = vpop.permute.xlu0 %898
    %900 = vrot.lane.b32.xlu0 %v821, 8
    %v901 = vpop.permute.xlu0 %900
    %902 = vrot.lane.b32.xlu0 %v823, 8
    %v903 = vpop.permute.xlu0 %902
    %904 = vrot.lane.b32.xlu0 %v825, 8
    %v905 = vpop.permute.xlu0 %904
    %906 = vrot.lane.b32.xlu0 %v827, 8
    %v907 = vpop.permute.xlu0 %906
    %908 = vrot.lane.b32.xlu0 %v829, 8
    %v909 = vpop.permute.xlu0 %908
    %910 = vrot.lane.b32.xlu0 %v831, 8
    %v911 = vpop.permute.xlu0 %910
    %912 = vrot.lane.b32.xlu0 %v833, 8
    %v913 = vpop.permute.xlu0 %912
    %914 = vrot.lane.b32.xlu0 %v835, 8
    %v915 = vpop.permute.xlu0 %914
    %916 = vrot.lane.b32.xlu0 %v837, 8
    %v917 = vpop.permute.xlu0 %916
    %918 = vrot.lane.b32.xlu0 %v839, 8
    %v919 = vpop.permute.xlu0 %918
    %920 = vrot.lane.b32.xlu0 %v841, 8
    %v921 = vpop.permute.xlu0 %920
    %922 = vrot.lane.b32.xlu0 %v843, 8
    %v923 = vpop.permute.xlu0 %922
    %924 = vrot.lane.b32.xlu0 %v845, 8
    %v925 = vpop.permute.xlu0 %924
    %926 = vrot.lane.b32.xlu0 %v847, 8
    %v927 = vpop.permute.xlu0 %926
    %928 = vrot.lane.b32.xlu0 %v849, 8
    %v929 = vpop.permute.xlu0 %928
    %930 = vrot.lane.b32.xlu0 %v851, 8
    %v931 = vpop.permute.xlu0 %930
    %932 = vrot.lane.b32.xlu0 %v853, 8
    %v933 = vpop.permute.xlu0 %932
    %934 = vrot.lane.b32.xlu0 %v855, 8
    %v935 = vpop.permute.xlu0 %934
    %936 = vrot.lane.b32.xlu0 %v857, 8
    %v937 = vpop.permute.xlu0 %936
    %938 = vrot.lane.b32.xlu0 %v859, 8
    %v939 = vpop.permute.xlu0 %938
    %940 = vrot.lane.b32.xlu0 %v861, 8
    %v941 = vpop.permute.xlu0 %940
    %942 = vrot.lane.b32.xlu0 %v863, 8
    %v943 = vpop.permute.xlu0 %942
    %944 = vrot.lane.b32.xlu0 %v865, 8
    %v945 = vpop.permute.xlu0 %944
    %946 = vrot.lane.b32.xlu0 %v867, 8
    %v947 = vpop.permute.xlu0 %946
    %948 = vrot.lane.b32.xlu0 %v869, 8
    %v949 = vpop.permute.xlu0 %948
    %950 = vrot.lane.b32.xlu0 %v871, 8
    %v951 = vpop.permute.xlu0 %950
    %952 = vrot.lane.b32.xlu0 %v873, 8
    %v953 = vpop.permute.xlu0 %952
    %954 = vrot.lane.b32.xlu0 %v875, 8
    %v955 = vpop.permute.xlu0 %954
    %956 = vrot.lane.b32.xlu0 %v877, 8
    %v957 = vpop.permute.xlu0 %956
    %958 = vrot.lane.b32.xlu0 %v879, 8
    %v959 = vpop.permute.xlu0 %958
    %960 = vrot.lane.b32.xlu0 %v881, 8
    %v961 = vpop.permute.xlu0 %960
    %962 = vrot.lane.b32.xlu0 %v883, 8
    %v963 = vpop.permute.xlu0 %962
    %964 = vrot.lane.b32.xlu0 %v885, 8
    %v965 = vpop.permute.xlu0 %964
    %966 = vrot.lane.b32.xlu0 %v887, 8
    %v967 = vpop.permute.xlu0 %966
    %968 = vrot.lane.b32.xlu0 %v889, 8
    %v969 = vpop.permute.xlu0 %968
    %970 = vrot.lane.b32.xlu0 %v891, 8
    %v971 = vpop.permute.xlu0 %970
    %972 = vrot.lane.b32.xlu0 %v893, 8
    %v973 = vpop.permute.xlu0 %972
    %974 = vrot.lane.b32.xlu0 %v895, 8
    %v975 = vpop.permute.xlu0 %974
    %976 = vrot.lane.b32.xlu0 %v897, 8
    %v977 = vpop.permute.xlu0 %976
    %978 = vrot.lane.b32.xlu0 %v896, 8
    %v979 = vpop.permute.xlu0 %978
    %v984 = vunpack.c.l.b16 %v185
    %v985 = vunpack.c.l.b16 %v186
    %v986 = vunpack.c.l.b16 %v187
    %v987 = vunpack.c.l.b16 %v188
    %v988 = vpack.c.b16 %v281, %v984
    %v989 = vpack.c.b16 %v985, %v358
    %v990 = vpack.c.b16 %v987, %v986
    %v991 = vrot.slane %v988, 1
    %v992 = vsel %vm816, %v991, %v820
    %v993 = vrot.slane %v989, 1
    %v994 = vsel %vm816, %v894, %v993
    %v995 = vrot.slane %v990, 1
    %v996 = vsel %vm816, %v993, %v995
    %997 = vrot.lane.b32.xlu0 %v992, 12
    %v998 = vpop.permute.xlu0 %997
    %999 = vrot.lane.b32.xlu0 %v823, 12
    %v1000 = vpop.permute.xlu0 %999
    %1001 = vrot.lane.b32.xlu0 %v825, 12
    %v1002 = vpop.permute.xlu0 %1001
    %1003 = vrot.lane.b32.xlu0 %v827, 12
    %v1004 = vpop.permute.xlu0 %1003
    %1005 = vrot.lane.b32.xlu0 %v829, 12
    %v1006 = vpop.permute.xlu0 %1005
    %1007 = vrot.lane.b32.xlu0 %v831, 12
    %v1008 = vpop.permute.xlu0 %1007
    %1009 = vrot.lane.b32.xlu0 %v833, 12
    %v1010 = vpop.permute.xlu0 %1009
    %1011 = vrot.lane.b32.xlu0 %v835, 12
    %v1012 = vpop.permute.xlu0 %1011
    %1013 = vrot.lane.b32.xlu0 %v837, 12
    %v1014 = vpop.permute.xlu0 %1013
    %1015 = vrot.lane.b32.xlu0 %v839, 12
    %v1016 = vpop.permute.xlu0 %1015
    %1017 = vrot.lane.b32.xlu0 %v841, 12
    %v1018 = vpop.permute.xlu0 %1017
    %1019 = vrot.lane.b32.xlu0 %v843, 12
    %v1020 = vpop.permute.xlu0 %1019
    %1021 = vrot.lane.b32.xlu0 %v845, 12
    %v1022 = vpop.permute.xlu0 %1021
    %1023 = vrot.lane.b32.xlu0 %v847, 12
    %v1024 = vpop.permute.xlu0 %1023
    %1025 = vrot.lane.b32.xlu0 %v849, 12
    %v1026 = vpop.permute.xlu0 %1025
    %1027 = vrot.lane.b32.xlu0 %v851, 12
    %v1028 = vpop.permute.xlu0 %1027
    %1029 = vrot.lane.b32.xlu0 %v853, 12
    %v1030 = vpop.permute.xlu0 %1029
    %1031 = vrot.lane.b32.xlu0 %v855, 12
    %v1032 = vpop.permute.xlu0 %1031
    %1033 = vrot.lane.b32.xlu0 %v857, 12
    %v1034 = vpop.permute.xlu0 %1033
    %1035 = vrot.lane.b32.xlu0 %v859, 12
    %v1036 = vpop.permute.xlu0 %1035
    %1037 = vrot.lane.b32.xlu0 %v861, 12
    %v1038 = vpop.permute.xlu0 %1037
    %1039 = vrot.lane.b32.xlu0 %v863, 12
    %v1040 = vpop.permute.xlu0 %1039
    %1041 = vrot.lane.b32.xlu0 %v865, 12
    %v1042 = vpop.permute.xlu0 %1041
    %1043 = vrot.lane.b32.xlu0 %v867, 12
    %v1044 = vpop.permute.xlu0 %1043
    %1045 = vrot.lane.b32.xlu0 %v869, 12
    %v1046 = vpop.permute.xlu0 %1045
    %1047 = vrot.lane.b32.xlu0 %v871, 12
    %v1048 = vpop.permute.xlu0 %1047
    %1049 = vrot.lane.b32.xlu0 %v873, 12
    %v1050 = vpop.permute.xlu0 %1049
    %1051 = vrot.lane.b32.xlu0 %v875, 12
    %v1052 = vpop.permute.xlu0 %1051
    %1053 = vrot.lane.b32.xlu0 %v877, 12
    %v1054 = vpop.permute.xlu0 %1053
    %1055 = vrot.lane.b32.xlu0 %v879, 12
    %v1056 = vpop.permute.xlu0 %1055
    %1057 = vrot.lane.b32.xlu0 %v881, 12
    %v1058 = vpop.permute.xlu0 %1057
    %1059 = vrot.lane.b32.xlu0 %v883, 12
    %v1060 = vpop.permute.xlu0 %1059
    %1061 = vrot.lane.b32.xlu0 %v885, 12
    %v1062 = vpop.permute.xlu0 %1061
    %1063 = vrot.lane.b32.xlu0 %v887, 12
    %v1064 = vpop.permute.xlu0 %1063
    %1065 = vrot.lane.b32.xlu0 %v889, 12
    %v1066 = vpop.permute.xlu0 %1065
    %1067 = vrot.lane.b32.xlu0 %v891, 12
    %v1068 = vpop.permute.xlu0 %1067
    %1069 = vrot.lane.b32.xlu0 %v893, 12
    %v1070 = vpop.permute.xlu0 %1069
    %1071 = vrot.lane.b32.xlu0 %v895, 12
    %v1072 = vpop.permute.xlu0 %1071
    %1073 = vrot.lane.b32.xlu0 %v994, 12
    %v1074 = vpop.permute.xlu0 %1073
    %1075 = vrot.lane.b32.xlu0 %v996, 12
    %v1076 = vpop.permute.xlu0 %1075
    %1077 = vrot.lane.b32.xlu0 %v995, 12
    %v1078 = vpop.permute.xlu0 %1077
    %v1080 = vunpack.c.l.b16 %v189
    %v1081 = vpack.c.b16 %v1080, %v986
    %vm1082 = vsmask.f32 6400
    %v1084 = vshrl.u32 %v988, 16
    %v1086 = vrot.slane %v1084, 1
    %v1087 = vshll.u32 %v988, 16
    %v1089 = vrot.slane %v1087, 2
    %v1090 = vor.u32 %v1086, %v1089
    %v1091 = vrot.slane %v424, 1
    %v1092 = vrot.slane %v420, 2
    %v1093 = vor.u32 %v1091, %v1092
    %v1094 = vsel %vm1082, %v1090, %v1093
    %v1095 = vrot.slane %v432, 1
    %v1096 = vrot.slane %v428, 2
    %v1097 = vor.u32 %v1095, %v1096
    %v1098 = vsel %vm1082, %v1093, %v1097
    %v1099 = vrot.slane %v440, 1
    %v1100 = vrot.slane %v436, 2
    %v1101 = vor.u32 %v1099, %v1100
    %v1102 = vsel %vm1082, %v1097, %v1101
    %v1103 = vrot.slane %v448, 1
    %v1104 = vrot.slane %v444, 2
    %v1105 = vor.u32 %v1103, %v1104
    %v1106 = vsel %vm1082, %v1101, %v1105
    %v1107 = vrot.slane %v456, 1
    %v1108 = vrot.slane %v452, 2
    %v1109 = vor.u32 %v1107, %v1108
    %v1110 = vsel %vm1082, %v1105, %v1109
    %v1111 = vrot.slane %v464, 1
    %v1112 = vrot.slane %v460, 2
    %v1113 = vor.u32 %v1111, %v1112
    %v1114 = vsel %vm1082, %v1109, %v1113
    %v1115 = vrot.slane %v472, 1
    %v1116 = vrot.slane %v468, 2
    %v1117 = vor.u32 %v1115, %v1116
    %v1118 = vsel %vm1082, %v1113, %v1117
    %v1119 = vrot.slane %v480, 1
    %v1120 = vrot.slane %v476, 2
    %v1121 = vor.u32 %v1119, %v1120
    %v1122 = vsel %vm1082, %v1117, %v1121
    %v1123 = vrot.slane %v488, 1
    %v1124 = vrot.slane %v484, 2
    %v1125 = vor.u32 %v1123, %v1124
    %v1126 = vsel %vm1082, %v1121, %v1125
    %v1127 = vrot.slane %v496, 1
    %v1128 = vrot.slane %v492, 2
    %v1129 = vor.u32 %v1127, %v1128
    %v1130 = vsel %vm1082, %v1125, %v1129
    %v1131 = vrot.slane %v504, 1
    %v1132 = vrot.slane %v500, 2
    %v1133 = vor.u32 %v1131, %v1132
    %v1134 = vsel %vm1082, %v1129, %v1133
    %v1135 = vrot.slane %v512, 1
    %v1136 = vrot.slane %v508, 2
    %v1137 = vor.u32 %v1135, %v1136
    %v1138 = vsel %vm1082, %v1133, %v1137
    %v1139 = vrot.slane %v520, 1
    %v1140 = vrot.slane %v516, 2
    %v1141 = vor.u32 %v1139, %v1140
    %v1142 = vsel %vm1082, %v1137, %v1141
    %v1143 = vrot.slane %v528, 1
    %v1144 = vrot.slane %v524, 2
    %v1145 = vor.u32 %v1143, %v1144
    %v1146 = vsel %vm1082, %v1141, %v1145
    %v1147 = vrot.slane %v536, 1
    %v1148 = vrot.slane %v532, 2
    %v1149 = vor.u32 %v1147, %v1148
    %v1150 = vsel %vm1082, %v1145, %v1149
    %v1151 = vrot.slane %v544, 1
    %v1152 = vrot.slane %v540, 2
    %v1153 = vor.u32 %v1151, %v1152
    %v1154 = vsel %vm1082, %v1149, %v1153
    %v1155 = vrot.slane %v552, 1
    %v1156 = vrot.slane %v548, 2
    %v1157 = vor.u32 %v1155, %v1156
    %v1158 = vsel %vm1082, %v1153, %v1157
    %v1159 = vrot.slane %v560, 1
    %v1160 = vrot.slane %v556, 2
    %v1161 = vor.u32 %v1159, %v1160
    %v1162 = vsel %vm1082, %v1157, %v1161
    %v1163 = vrot.slane %v568, 1
    %v1164 = vrot.slane %v564, 2
    %v1165 = vor.u32 %v1163, %v1164
    %v1166 = vsel %vm1082, %v1161, %v1165
    %v1167 = vrot.slane %v576, 1
    %v1168 = vrot.slane %v572, 2
    %v1169 = vor.u32 %v1167, %v1168
    %v1170 = vsel %vm1082, %v1165, %v1169
    %v1171 = vrot.slane %v584, 1
    %v1172 = vrot.slane %v580, 2
    %v1173 = vor.u32 %v1171, %v1172
    %v1174 = vsel %vm1082, %v1169, %v1173
    %v1175 = vrot.slane %v592, 1
    %v1176 = vrot.slane %v588, 2
    %v1177 = vor.u32 %v1175, %v1176
    %v1178 = vsel %vm1082, %v1173, %v1177
    %v1179 = vrot.slane %v600, 1
    %v1180 = vrot.slane %v596, 2
    %v1181 = vor.u32 %v1179, %v1180
    %v1182 = vsel %vm1082, %v1177, %v1181
    %v1183 = vrot.slane %v608, 1
    %v1184 = vrot.slane %v604, 2
    %v1185 = vor.u32 %v1183, %v1184
    %v1186 = vsel %vm1082, %v1181, %v1185
    %v1187 = vrot.slane %v616, 1
    %v1188 = vrot.slane %v612, 2
    %v1189 = vor.u32 %v1187, %v1188
    %v1190 = vsel %vm1082, %v1185, %v1189
    %v1191 = vrot.slane %v624, 1
    %v1192 = vrot.slane %v620, 2
    %v1193 = vor.u32 %v1191, %v1192
    %v1194 = vsel %vm1082, %v1189, %v1193
    %v1195 = vrot.slane %v632, 1
    %v1196 = vrot.slane %v628, 2
    %v1197 = vor.u32 %v1195, %v1196
    %v1198 = vsel %vm1082, %v1193, %v1197
    %v1199 = vrot.slane %v640, 1
    %v1200 = vrot.slane %v636, 2
    %v1201 = vor.u32 %v1199, %v1200
    %v1202 = vsel %vm1082, %v1197, %v1201
    %v1203 = vrot.slane %v648, 1
    %v1204 = vrot.slane %v644, 2
    %v1205 = vor.u32 %v1203, %v1204
    %v1206 = vsel %vm1082, %v1201, %v1205
    %v1207 = vrot.slane %v656, 1
    %v1208 = vrot.slane %v652, 2
    %v1209 = vor.u32 %v1207, %v1208
    %v1210 = vsel %vm1082, %v1205, %v1209
    %v1211 = vrot.slane %v664, 1
    %v1212 = vrot.slane %v660, 2
    %v1213 = vor.u32 %v1211, %v1212
    %v1214 = vsel %vm1082, %v1209, %v1213
    %v1215 = vrot.slane %v672, 1
    %v1216 = vrot.slane %v668, 2
    %v1217 = vor.u32 %v1215, %v1216
    %v1218 = vsel %vm1082, %v1213, %v1217
    %v1219 = vrot.slane %v680, 1
    %v1220 = vrot.slane %v676, 2
    %v1221 = vor.u32 %v1219, %v1220
    %v1222 = vsel %vm1082, %v1217, %v1221
    %v1223 = vrot.slane %v688, 1
    %v1224 = vrot.slane %v684, 2
    %v1225 = vor.u32 %v1223, %v1224
    %v1226 = vsel %vm1082, %v1221, %v1225
    %v1227 = vrot.slane %v696, 1
    %v1228 = vrot.slane %v692, 2
    %v1229 = vor.u32 %v1227, %v1228
    %v1230 = vsel %vm1082, %v1225, %v1229
    %v1231 = vrot.slane %v704, 1
    %v1232 = vrot.slane %v700, 2
    %v1233 = vor.u32 %v1231, %v1232
    %v1234 = vsel %vm1082, %v1229, %v1233
    %v1235 = vrot.slane %v712, 1
    %v1236 = vrot.slane %v708, 2
    %v1237 = vor.u32 %v1235, %v1236
    %v1238 = vsel %vm1082, %v1233, %v1237
    %v1239 = vrot.slane %v720, 1
    %v1240 = vrot.slane %v716, 2
    %v1241 = vor.u32 %v1239, %v1240
    %v1242 = vsel %vm1082, %v1237, %v1241
    %v1244 = vshrl.u32 %v989, 16
    %v1246 = vrot.slane %v1244, 1
    %v1247 = vshll.u32 %v989, 16
    %v1249 = vrot.slane %v1247, 2
    %v1250 = vor.u32 %v1246, %v1249
    %v1251 = vsel %vm1082, %v1241, %v1250
    %v1253 = vshrl.u32 %v1081, 16
    %v1255 = vrot.slane %v1253, 1
    %v1256 = vshll.u32 %v1081, 16
    %v1258 = vrot.slane %v1256, 2
    %v1259 = vor.u32 %v1255, %v1258
    %v1260 = vsel %vm1082, %v1250, %v1259
    %1261 = vrot.lane.b32.xlu0 %v1094, 16
    %v1262 = vpop.permute.xlu0 %1261
    %1263 = vrot.lane.b32.xlu0 %v1098, 16
    %v1264 = vpop.permute.xlu0 %1263
    %1265 = vrot.lane.b32.xlu0 %v1102, 16
    %v1266 = vpop.permute.xlu0 %1265
    %1267 = vrot.lane.b32.xlu0 %v1106, 16
    %v1268 = vpop.permute.xlu0 %1267
    %1269 = vrot.lane.b32.xlu0 %v1110, 16
    %v1270 = vpop.permute.xlu0 %1269
    %1271 = vrot.lane.b32.xlu0 %v1114, 16
    %v1272 = vpop.permute.xlu0 %1271
    %1273 = vrot.lane.b32.xlu0 %v1118, 16
    %v1274 = vpop.permute.xlu0 %1273
    %1275 = vrot.lane.b32.xlu0 %v1122, 16
    %v1276 = vpop.permute.xlu0 %1275
    %1277 = vrot.lane.b32.xlu0 %v1126, 16
    %v1278 = vpop.permute.xlu0 %1277
    %1279 = vrot.lane.b32.xlu0 %v1130, 16
    %v1280 = vpop.permute.xlu0 %1279
    %1281 = vrot.lane.b32.xlu0 %v1134, 16
    %v1282 = vpop.permute.xlu0 %1281
    %1283 = vrot.lane.b32.xlu0 %v1138, 16
    %v1284 = vpop.permute.xlu0 %1283
    %1285 = vrot.lane.b32.xlu0 %v1142, 16
    %v1286 = vpop.permute.xlu0 %1285
    %1287 = vrot.lane.b32.xlu0 %v1146, 16
    %v1288 = vpop.permute.xlu0 %1287
    %1289 = vrot.lane.b32.xlu0 %v1150, 16
    %v1290 = vpop.permute.xlu0 %1289
    %1291 = vrot.lane.b32.xlu0 %v1154, 16
    %v1292 = vpop.permute.xlu0 %1291
    %1293 = vrot.lane.b32.xlu0 %v1158, 16
    %v1294 = vpop.permute.xlu0 %1293
    %1295 = vrot.lane.b32.xlu0 %v1162, 16
    %v1296 = vpop.permute.xlu0 %1295
    %1297 = vrot.lane.b32.xlu0 %v1166, 16
    %v1298 = vpop.permute.xlu0 %1297
    %1299 = vrot.lane.b32.xlu0 %v1170, 16
    %v1300 = vpop.permute.xlu0 %1299
    %1301 = vrot.lane.b32.xlu0 %v1174, 16
    %v1302 = vpop.permute.xlu0 %1301
    %1303 = vrot.lane.b32.xlu0 %v1178, 16
    %v1304 = vpop.permute.xlu0 %1303
    %1305 = vrot.lane.b32.xlu0 %v1182, 16
    %v1306 = vpop.permute.xlu0 %1305
    %1307 = vrot.lane.b32.xlu0 %v1186, 16
    %v1308 = vpop.permute.xlu0 %1307
    %1309 = vrot.lane.b32.xlu0 %v1190, 16
    %v1310 = vpop.permute.xlu0 %1309
    %1311 = vrot.lane.b32.xlu0 %v1194, 16
    %v1312 = vpop.permute.xlu0 %1311
    %1313 = vrot.lane.b32.xlu0 %v1198, 16
    %v1314 = vpop.permute.xlu0 %1313
    %1315 = vrot.lane.b32.xlu0 %v1202, 16
    %v1316 = vpop.permute.xlu0 %1315
    %1317 = vrot.lane.b32.xlu0 %v1206, 16
    %v1318 = vpop.permute.xlu0 %1317
    %1319 = vrot.lane.b32.xlu0 %v1210, 16
    %v1320 = vpop.permute.xlu0 %1319
    %1321 = vrot.lane.b32.xlu0 %v1214, 16
    %v1322 = vpop.permute.xlu0 %1321
    %1323 = vrot.lane.b32.xlu0 %v1218, 16
    %v1324 = vpop.permute.xlu0 %1323
    %1325 = vrot.lane.b32.xlu0 %v1222, 16
    %v1326 = vpop.permute.xlu0 %1325
    %1327 = vrot.lane.b32.xlu0 %v1226, 16
    %v1328 = vpop.permute.xlu0 %1327
    %1329 = vrot.lane.b32.xlu0 %v1230, 16
    %v1330 = vpop.permute.xlu0 %1329
    %1331 = vrot.lane.b32.xlu0 %v1234, 16
    %v1332 = vpop.permute.xlu0 %1331
    %1333 = vrot.lane.b32.xlu0 %v1238, 16
    %v1334 = vpop.permute.xlu0 %1333
    %1335 = vrot.lane.b32.xlu0 %v1242, 16
    %v1336 = vpop.permute.xlu0 %1335
    %1337 = vrot.lane.b32.xlu0 %v1251, 16
    %v1338 = vpop.permute.xlu0 %1337
    %1339 = vrot.lane.b32.xlu0 %v1260, 16
    %v1340 = vpop.permute.xlu0 %1339
    %1341 = vrot.lane.b32.xlu0 %v1259, 16
    %v1342 = vpop.permute.xlu0 %1341
    %v1344 = vunpack.c.l.b16 %v190
    %v1345 = vpack.c.b16 %v281, %v1344
    %vm1346 = vcmask 1045504
    %v1347 = vrot.slane %v1345, 2
    %v1348 = vrot.slane %v361, 2
    %v1349 = vsel %vm1346, %v1347, %v1348
    %v1350 = vrot.slane %v362, 2
    %v1351 = vsel %vm1346, %v1348, %v1350
    %v1352 = vrot.slane %v363, 2
    %v1353 = vsel %vm1346, %v1350, %v1352
    %v1354 = vrot.slane %v364, 2
    %v1355 = vsel %vm1346, %v1352, %v1354
    %v1356 = vrot.slane %v365, 2
    %v1357 = vsel %vm1346, %v1354, %v1356
    %v1358 = vrot.slane %v366, 2
    %v1359 = vsel %vm1346, %v1356, %v1358
    %v1360 = vrot.slane %v367, 2
    %v1361 = vsel %vm1346, %v1358, %v1360
    %v1362 = vrot.slane %v368, 2
    %v1363 = vsel %vm1346, %v1360, %v1362
    %v1364 = vrot.slane %v369, 2
    %v1365 = vsel %vm1346, %v1362, %v1364
    %v1366 = vrot.slane %v370, 2
    %v1367 = vsel %vm1346, %v1364, %v1366
    %v1368 = vrot.slane %v371, 2
    %v1369 = vsel %vm1346, %v1366, %v1368
    %v1370 = vrot.slane %v372, 2
    %v1371 = vsel %vm1346, %v1368, %v1370
    %v1372 = vrot.slane %v373, 2
    %v1373 = vsel %vm1346, %v1370, %v1372
    %v1374 = vrot.slane %v374, 2
    %v1375 = vsel %vm1346, %v1372, %v1374
    %v1376 = vrot.slane %v375, 2
    %v1377 = vsel %vm1346, %v1374, %v1376
    %v1378 = vrot.slane %v376, 2
    %v1379 = vsel %vm1346, %v1376, %v1378
    %v1380 = vrot.slane %v377, 2
    %v1381 = vsel %vm1346, %v1378, %v1380
    %v1382 = vrot.slane %v378, 2
    %v1383 = vsel %vm1346, %v1380, %v1382
    %v1384 = vrot.slane %v379, 2
    %v1385 = vsel %vm1346, %v1382, %v1384
    %v1386 = vrot.slane %v380, 2
    %v1387 = vsel %vm1346, %v1384, %v1386
    %v1388 = vrot.slane %v381, 2
    %v1389 = vsel %vm1346, %v1386, %v1388
    %v1390 = vrot.slane %v382, 2
    %v1391 = vsel %vm1346, %v1388, %v1390
    %v1392 = vrot.slane %v383, 2
    %v1393 = vsel %vm1346, %v1390, %v1392
    %v1394 = vrot.slane %v384, 2
    %v1395 = vsel %vm1346, %v1392, %v1394
    %v1396 = vrot.slane %v385, 2
    %v1397 = vsel %vm1346, %v1394, %v1396
    %v1398 = vrot.slane %v386, 2
    %v1399 = vsel %vm1346, %v1396, %v1398
    %v1400 = vrot.slane %v387, 2
    %v1401 = vsel %vm1346, %v1398, %v1400
    %v1402 = vrot.slane %v388, 2
    %v1403 = vsel %vm1346, %v1400, %v1402
    %v1404 = vrot.slane %v389, 2
    %v1405 = vsel %vm1346, %v1402, %v1404
    %v1406 = vrot.slane %v390, 2
    %v1407 = vsel %vm1346, %v1404, %v1406
    %v1408 = vrot.slane %v391, 2
    %v1409 = vsel %vm1346, %v1406, %v1408
    %v1410 = vrot.slane %v392, 2
    %v1411 = vsel %vm1346, %v1408, %v1410
    %v1412 = vrot.slane %v393, 2
    %v1413 = vsel %vm1346, %v1410, %v1412
    %v1414 = vrot.slane %v394, 2
    %v1415 = vsel %vm1346, %v1412, %v1414
    %v1416 = vrot.slane %v395, 2
    %v1417 = vsel %vm1346, %v1414, %v1416
    %v1418 = vrot.slane %v396, 2
    %v1419 = vsel %vm1346, %v1416, %v1418
    %v1420 = vrot.slane %v397, 2
    %v1421 = vsel %vm1346, %v1418, %v1420
    %v1422 = vrot.slane %v398, 2
    %v1423 = vsel %vm1346, %v1420, %v1422
    %v1424 = vrot.slane %v989, 2
    %v1425 = vsel %vm1346, %v1422, %v1424
    %v1426 = vrot.slane %v1081, 2
    %v1427 = vsel %vm1346, %v1424, %v1426
    %1428 = vrot.lane.b32.xlu0 %v1349, 20
    %v1429 = vpop.permute.xlu0 %1428
    %1430 = vrot.lane.b32.xlu0 %v1351, 20
    %v1431 = vpop.permute.xlu0 %1430
    %1432 = vrot.lane.b32.xlu0 %v1353, 20
    %v1433 = vpop.permute.xlu0 %1432
    %1434 = vrot.lane.b32.xlu0 %v1355, 20
    %v1435 = vpop.permute.xlu0 %1434
    %1436 = vrot.lane.b32.xlu0 %v1357, 20
    %v1437 = vpop.permute.xlu0 %1436
    %1438 = vrot.lane.b32.xlu0 %v1359, 20
    %v1439 = vpop.permute.xlu0 %1438
    %1440 = vrot.lane.b32.xlu0 %v1361, 20
    %v1441 = vpop.permute.xlu0 %1440
    %1442 = vrot.lane.b32.xlu0 %v1363, 20
    %v1443 = vpop.permute.xlu0 %1442
    %1444 = vrot.lane.b32.xlu0 %v1365, 20
    %v1445 = vpop.permute.xlu0 %1444
    %1446 = vrot.lane.b32.xlu0 %v1367, 20
    %v1447 = vpop.permute.xlu0 %1446
    %1448 = vrot.lane.b32.xlu0 %v1369, 20
    %v1449 = vpop.permute.xlu0 %1448
    %1450 = vrot.lane.b32.xlu0 %v1371, 20
    %v1451 = vpop.permute.xlu0 %1450
    %1452 = vrot.lane.b32.xlu0 %v1373, 20
    %v1453 = vpop.permute.xlu0 %1452
    %1454 = vrot.lane.b32.xlu0 %v1375, 20
    %v1455 = vpop.permute.xlu0 %1454
    %1456 = vrot.lane.b32.xlu0 %v1377, 20
    %v1457 = vpop.permute.xlu0 %1456
    %1458 = vrot.lane.b32.xlu0 %v1379, 20
    %v1459 = vpop.permute.xlu0 %1458
    %1460 = vrot.lane.b32.xlu0 %v1381, 20
    %v1461 = vpop.permute.xlu0 %1460
    %1462 = vrot.lane.b32.xlu0 %v1383, 20
    %v1463 = vpop.permute.xlu0 %1462
    %1464 = vrot.lane.b32.xlu0 %v1385, 20
    %v1465 = vpop.permute.xlu0 %1464
    %1466 = vrot.lane.b32.xlu0 %v1387, 20
    %v1467 = vpop.permute.xlu0 %1466
    %1468 = vrot.lane.b32.xlu0 %v1389, 20
    %v1469 = vpop.permute.xlu0 %1468
    %1470 = vrot.lane.b32.xlu0 %v1391, 20
    %v1471 = vpop.permute.xlu0 %1470
    %1472 = vrot.lane.b32.xlu0 %v1393, 20
    %v1473 = vpop.permute.xlu0 %1472
    %1474 = vrot.lane.b32.xlu0 %v1395, 20
    %v1475 = vpop.permute.xlu0 %1474
    %1476 = vrot.lane.b32.xlu0 %v1397, 20
    %v1477 = vpop.permute.xlu0 %1476
    %1478 = vrot.lane.b32.xlu0 %v1399, 20
    %v1479 = vpop.permute.xlu0 %1478
    %1480 = vrot.lane.b32.xlu0 %v1401, 20
    %v1481 = vpop.permute.xlu0 %1480
    %1482 = vrot.lane.b32.xlu0 %v1403, 20
    %v1483 = vpop.permute.xlu0 %1482
    %1484 = vrot.lane.b32.xlu0 %v1405, 20
    %v1485 = vpop.permute.xlu0 %1484
    %1486 = vrot.lane.b32.xlu0 %v1407, 20
    %v1487 = vpop.permute.xlu0 %1486
    %1488 = vrot.lane.b32.xlu0 %v1409, 20
    %v1489 = vpop.permute.xlu0 %1488
    %1490 = vrot.lane.b32.xlu0 %v1411, 20
    %v1491 = vpop.permute.xlu0 %1490
    %1492 = vrot.lane.b32.xlu0 %v1413, 20
    %v1493 = vpop.permute.xlu0 %1492
    %1494 = vrot.lane.b32.xlu0 %v1415, 20
    %v1495 = vpop.permute.xlu0 %1494
    %1496 = vrot.lane.b32.xlu0 %v1417, 20
    %v1497 = vpop.permute.xlu0 %1496
    %1498 = vrot.lane.b32.xlu0 %v1419, 20
    %v1499 = vpop.permute.xlu0 %1498
    %1500 = vrot.lane.b32.xlu0 %v1421, 20
    %v1501 = vpop.permute.xlu0 %1500
    %1502 = vrot.lane.b32.xlu0 %v1423, 20
    %v1503 = vpop.permute.xlu0 %1502
    %1504 = vrot.lane.b32.xlu0 %v1425, 20
    %v1505 = vpop.permute.xlu0 %1504
    %1506 = vrot.lane.b32.xlu0 %v1427, 20
    %v1507 = vpop.permute.xlu0 %1506
    %1508 = vrot.lane.b32.xlu0 %v1426, 20
    %v1509 = vpop.permute.xlu0 %1508
    %v1514 = vunpack.c.l.b16 %v191
    %v1515 = vunpack.c.l.b16 %v192
    %v1516 = vunpack.c.l.b16 %v193
    %v1517 = vunpack.c.l.b16 %v194
    %v1518 = vpack.c.b16 %v283, %v1514
    %v1519 = vpack.c.b16 %v1515, %v986
    %v1520 = vpack.c.b16 %v1517, %v1516
    %v1521 = vrot.slane %v1518, 2
    %v1522 = vsel %vm1346, %v1521, %v1350
    %v1523 = vrot.slane %v1519, 2
    %v1524 = vsel %vm1346, %v1424, %v1523
    %v1525 = vrot.slane %v1520, 2
    %v1526 = vsel %vm1346, %v1523, %v1525
    %1527 = vrot.lane.b32.xlu0 %v1522, 24
    %v1528 = vpop.permute.xlu0 %1527
    %1529 = vrot.lane.b32.xlu0 %v1353, 24
    %v1530 = vpop.permute.xlu0 %1529
    %1531 = vrot.lane.b32.xlu0 %v1355, 24
    %v1532 = vpop.permute.xlu0 %1531
    %1533 = vrot.lane.b32.xlu0 %v1357, 24
    %v1534 = vpop.permute.xlu0 %1533
    %1535 = vrot.lane.b32.xlu0 %v1359, 24
    %v1536 = vpop.permute.xlu0 %1535
    %1537 = vrot.lane.b32.xlu0 %v1361, 24
    %v1538 = vpop.permute.xlu0 %1537
    %1539 = vrot.lane.b32.xlu0 %v1363, 24
    %v1540 = vpop.permute.xlu0 %1539
    %1541 = vrot.lane.b32.xlu0 %v1365, 24
    %v1542 = vpop.permute.xlu0 %1541
    %1543 = vrot.lane.b32.xlu0 %v1367, 24
    %v1544 = vpop.permute.xlu0 %1543
    %1545 = vrot.lane.b32.xlu0 %v1369, 24
    %v1546 = vpop.permute.xlu0 %1545
    %1547 = vrot.lane.b32.xlu0 %v1371, 24
    %v1548 = vpop.permute.xlu0 %1547
    %1549 = vrot.lane.b32.xlu0 %v1373, 24
    %v1550 = vpop.permute.xlu0 %1549
    %1551 = vrot.lane.b32.xlu0 %v1375, 24
    %v1552 = vpop.permute.xlu0 %1551
    %1553 = vrot.lane.b32.xlu0 %v1377, 24
    %v1554 = vpop.permute.xlu0 %1553
    %1555 = vrot.lane.b32.xlu0 %v1379, 24
    %v1556 = vpop.permute.xlu0 %1555
    %1557 = vrot.lane.b32.xlu0 %v1381, 24
    %v1558 = vpop.permute.xlu0 %1557
    %1559 = vrot.lane.b32.xlu0 %v1383, 24
    %v1560 = vpop.permute.xlu0 %1559
    %1561 = vrot.lane.b32.xlu0 %v1385, 24
    %v1562 = vpop.permute.xlu0 %1561
    %1563 = vrot.lane.b32.xlu0 %v1387, 24
    %v1564 = vpop.permute.xlu0 %1563
    %1565 = vrot.lane.b32.xlu0 %v1389, 24
    %v1566 = vpop.permute.xlu0 %1565
    %1567 = vrot.lane.b32.xlu0 %v1391, 24
    %v1568 = vpop.permute.xlu0 %1567
    %1569 = vrot.lane.b32.xlu0 %v1393, 24
    %v1570 = vpop.permute.xlu0 %1569
    %1571 = vrot.lane.b32.xlu0 %v1395, 24
    %v1572 = vpop.permute.xlu0 %1571
    %1573 = vrot.lane.b32.xlu0 %v1397, 24
    %v1574 = vpop.permute.xlu0 %1573
    %1575 = vrot.lane.b32.xlu0 %v1399, 24
    %v1576 = vpop.permute.xlu0 %1575
    %1577 = vrot.lane.b32.xlu0 %v1401, 24
    %v1578 = vpop.permute.xlu0 %1577
    %1579 = vrot.lane.b32.xlu0 %v1403, 24
    %v1580 = vpop.permute.xlu0 %1579
    %1581 = vrot.lane.b32.xlu0 %v1405, 24
    %v1582 = vpop.permute.xlu0 %1581
    %1583 = vrot.lane.b32.xlu0 %v1407, 24
    %v1584 = vpop.permute.xlu0 %1583
    %1585 = vrot.lane.b32.xlu0 %v1409, 24
    %v1586 = vpop.permute.xlu0 %1585
    %1587 = vrot.lane.b32.xlu0 %v1411, 24
    %v1588 = vpop.permute.xlu0 %1587
    %1589 = vrot.lane.b32.xlu0 %v1413, 24
    %v1590 = vpop.permute.xlu0 %1589
    %1591 = vrot.lane.b32.xlu0 %v1415, 24
    %v1592 = vpop.permute.xlu0 %1591
    %1593 = vrot.lane.b32.xlu0 %v1417, 24
    %v1594 = vpop.permute.xlu0 %1593
    %1595 = vrot.lane.b32.xlu0 %v1419, 24
    %v1596 = vpop.permute.xlu0 %1595
    %1597 = vrot.lane.b32.xlu0 %v1421, 24
    %v1598 = vpop.permute.xlu0 %1597
    %1599 = vrot.lane.b32.xlu0 %v1423, 24
    %v1600 = vpop.permute.xlu0 %1599
    %1601 = vrot.lane.b32.xlu0 %v1425, 24
    %v1602 = vpop.permute.xlu0 %1601
    %1603 = vrot.lane.b32.xlu0 %v1524, 24
    %v1604 = vpop.permute.xlu0 %1603
    %1605 = vrot.lane.b32.xlu0 %v1526, 24
    %v1606 = vpop.permute.xlu0 %1605
    %1607 = vrot.lane.b32.xlu0 %v1525, 24
    %v1608 = vpop.permute.xlu0 %1607
    %v1610 = vunpack.c.l.b16 %v195
    %v1611 = vpack.c.b16 %v1610, %v1516
    %vm1612 = vsmask.f32 5376
    %v1614 = vshrl.u32 %v1518, 16
    %v1616 = vrot.slane %v1614, 2
    %v1617 = vshll.u32 %v1518, 16
    %v1619 = vrot.slane %v1617, 3
    %v1620 = vor.u32 %v1616, %v1619
    %v1621 = vrot.slane %v432, 2
    %v1622 = vrot.slane %v428, 3
    %v1623 = vor.u32 %v1621, %v1622
    %v1624 = vsel %vm1612, %v1620, %v1623
    %v1625 = vrot.slane %v440, 2
    %v1626 = vrot.slane %v436, 3
    %v1627 = vor.u32 %v1625, %v1626
    %v1628 = vsel %vm1612, %v1623, %v1627
    %v1629 = vrot.slane %v448, 2
    %v1630 = vrot.slane %v444, 3
    %v1631 = vor.u32 %v1629, %v1630
    %v1632 = vsel %vm1612, %v1627, %v1631
    %v1633 = vrot.slane %v456, 2
    %v1634 = vrot.slane %v452, 3
    %v1635 = vor.u32 %v1633, %v1634
    %v1636 = vsel %vm1612, %v1631, %v1635
    %v1637 = vrot.slane %v464, 2
    %v1638 = vrot.slane %v460, 3
    %v1639 = vor.u32 %v1637, %v1638
    %v1640 = vsel %vm1612, %v1635, %v1639
    %v1641 = vrot.slane %v472, 2
    %v1642 = vrot.slane %v468, 3
    %v1643 = vor.u32 %v1641, %v1642
    %v1644 = vsel %vm1612, %v1639, %v1643
    %v1645 = vrot.slane %v480, 2
    %v1646 = vrot.slane %v476, 3
    %v1647 = vor.u32 %v1645, %v1646
    %v1648 = vsel %vm1612, %v1643, %v1647
    %v1649 = vrot.slane %v488, 2
    %v1650 = vrot.slane %v484, 3
    %v1651 = vor.u32 %v1649, %v1650
    %v1652 = vsel %vm1612, %v1647, %v1651
    %v1653 = vrot.slane %v496, 2
    %v1654 = vrot.slane %v492, 3
    %v1655 = vor.u32 %v1653, %v1654
    %v1656 = vsel %vm1612, %v1651, %v1655
    %v1657 = vrot.slane %v504, 2
    %v1658 = vrot.slane %v500, 3
    %v1659 = vor.u32 %v1657, %v1658
    %v1660 = vsel %vm1612, %v1655, %v1659
    %v1661 = vrot.slane %v512, 2
    %v1662 = vrot.slane %v508, 3
    %v1663 = vor.u32 %v1661, %v1662
    %v1664 = vsel %vm1612, %v1659, %v1663
    %v1665 = vrot.slane %v520, 2
    %v1666 = vrot.slane %v516, 3
    %v1667 = vor.u32 %v1665, %v1666
    %v1668 = vsel %vm1612, %v1663, %v1667
    %v1669 = vrot.slane %v528, 2
    %v1670 = vrot.slane %v524, 3
    %v1671 = vor.u32 %v1669, %v1670
    %v1672 = vsel %vm1612, %v1667, %v1671
    %v1673 = vrot.slane %v536, 2
    %v1674 = vrot.slane %v532, 3
    %v1675 = vor.u32 %v1673, %v1674
    %v1676 = vsel %vm1612, %v1671, %v1675
    %v1677 = vrot.slane %v544, 2
    %v1678 = vrot.slane %v540, 3
    %v1679 = vor.u32 %v1677, %v1678
    %v1680 = vsel %vm1612, %v1675, %v1679
    %v1681 = vrot.slane %v552, 2
    %v1682 = vrot.slane %v548, 3
    %v1683 = vor.u32 %v1681, %v1682
    %v1684 = vsel %vm1612, %v1679, %v1683
    %v1685 = vrot.slane %v560, 2
    %v1686 = vrot.slane %v556, 3
    %v1687 = vor.u32 %v1685, %v1686
    %v1688 = vsel %vm1612, %v1683, %v1687
    %v1689 = vrot.slane %v568, 2
    %v1690 = vrot.slane %v564, 3
    %v1691 = vor.u32 %v1689, %v1690
    %v1692 = vsel %vm1612, %v1687, %v1691
    %v1693 = vrot.slane %v576, 2
    %v1694 = vrot.slane %v572, 3
    %v1695 = vor.u32 %v1693, %v1694
    %v1696 = vsel %vm1612, %v1691, %v1695
    %v1697 = vrot.slane %v584, 2
    %v1698 = vrot.slane %v580, 3
    %v1699 = vor.u32 %v1697, %v1698
    %v1700 = vsel %vm1612, %v1695, %v1699
    %v1701 = vrot.slane %v592, 2
    %v1702 = vrot.slane %v588, 3
    %v1703 = vor.u32 %v1701, %v1702
    %v1704 = vsel %vm1612, %v1699, %v1703
    %v1705 = vrot.slane %v600, 2
    %v1706 = vrot.slane %v596, 3
    %v1707 = vor.u32 %v1705, %v1706
    %v1708 = vsel %vm1612, %v1703, %v1707
    %v1709 = vrot.slane %v608, 2
    %v1710 = vrot.slane %v604, 3
    %v1711 = vor.u32 %v1709, %v1710
    %v1712 = vsel %vm1612, %v1707, %v1711
    %v1713 = vrot.slane %v616, 2
    %v1714 = vrot.slane %v612, 3
    %v1715 = vor.u32 %v1713, %v1714
    %v1716 = vsel %vm1612, %v1711, %v1715
    %v1717 = vrot.slane %v624, 2
    %v1718 = vrot.slane %v620, 3
    %v1719 = vor.u32 %v1717, %v1718
    %v1720 = vsel %vm1612, %v1715, %v1719
    %v1721 = vrot.slane %v632, 2
    %v1722 = vrot.slane %v628, 3
    %v1723 = vor.u32 %v1721, %v1722
    %v1724 = vsel %vm1612, %v1719, %v1723
    %v1725 = vrot.slane %v640, 2
    %v1726 = vrot.slane %v636, 3
    %v1727 = vor.u32 %v1725, %v1726
    %v1728 = vsel %vm1612, %v1723, %v1727
    %v1729 = vrot.slane %v648, 2
    %v1730 = vrot.slane %v644, 3
    %v1731 = vor.u32 %v1729, %v1730
    %v1732 = vsel %vm1612, %v1727, %v1731
    %v1733 = vrot.slane %v656, 2
    %v1734 = vrot.slane %v652, 3
    %v1735 = vor.u32 %v1733, %v1734
    %v1736 = vsel %vm1612, %v1731, %v1735
    %v1737 = vrot.slane %v664, 2
    %v1738 = vrot.slane %v660, 3
    %v1739 = vor.u32 %v1737, %v1738
    %v1740 = vsel %vm1612, %v1735, %v1739
    %v1741 = vrot.slane %v672, 2
    %v1742 = vrot.slane %v668, 3
    %v1743 = vor.u32 %v1741, %v1742
    %v1744 = vsel %vm1612, %v1739, %v1743
    %v1745 = vrot.slane %v680, 2
    %v1746 = vrot.slane %v676, 3
    %v1747 = vor.u32 %v1745, %v1746
    %v1748 = vsel %vm1612, %v1743, %v1747
    %v1749 = vrot.slane %v688, 2
    %v1750 = vrot.slane %v684, 3
    %v1751 = vor.u32 %v1749, %v1750
    %v1752 = vsel %vm1612, %v1747, %v1751
    %v1753 = vrot.slane %v696, 2
    %v1754 = vrot.slane %v692, 3
    %v1755 = vor.u32 %v1753, %v1754
    %v1756 = vsel %vm1612, %v1751, %v1755
    %v1757 = vrot.slane %v704, 2
    %v1758 = vrot.slane %v700, 3
    %v1759 = vor.u32 %v1757, %v1758
    %v1760 = vsel %vm1612, %v1755, %v1759
    %v1761 = vrot.slane %v712, 2
    %v1762 = vrot.slane %v708, 3
    %v1763 = vor.u32 %v1761, %v1762
    %v1764 = vsel %vm1612, %v1759, %v1763
    %v1765 = vrot.slane %v720, 2
    %v1766 = vrot.slane %v716, 3
    %v1767 = vor.u32 %v1765, %v1766
    %v1768 = vsel %vm1612, %v1763, %v1767
    %v1769 = vrot.slane %v1244, 2
    %v1770 = vrot.slane %v1247, 3
    %v1771 = vor.u32 %v1769, %v1770
    %v1772 = vsel %vm1612, %v1767, %v1771
    %v1774 = vshrl.u32 %v1519, 16
    %v1776 = vrot.slane %v1774, 2
    %v1777 = vshll.u32 %v1519, 16
    %v1779 = vrot.slane %v1777, 3
    %v1780 = vor.u32 %v1776, %v1779
    %v1781 = vsel %vm1612, %v1771, %v1780
    %v1783 = vshrl.u32 %v1611, 16
    %v1785 = vrot.slane %v1783, 2
    %v1786 = vshll.u32 %v1611, 16
    %v1788 = vrot.slane %v1786, 3
    %v1789 = vor.u32 %v1785, %v1788
    %v1790 = vsel %vm1612, %v1780, %v1789
    %1791 = vrot.lane.b32.xlu0 %v1624, 28
    %v1792 = vpop.permute.xlu0 %1791
    %1793 = vrot.lane.b32.xlu0 %v1628, 28
    %v1794 = vpop.permute.xlu0 %1793
    %1795 = vrot.lane.b32.xlu0 %v1632, 28
    %v1796 = vpop.permute.xlu0 %1795
    %1797 = vrot.lane.b32.xlu0 %v1636, 28
    %v1798 = vpop.permute.xlu0 %1797
    %1799 = vrot.lane.b32.xlu0 %v1640, 28
    %v1800 = vpop.permute.xlu0 %1799
    %1801 = vrot.lane.b32.xlu0 %v1644, 28
    %v1802 = vpop.permute.xlu0 %1801
    %1803 = vrot.lane.b32.xlu0 %v1648, 28
    %v1804 = vpop.permute.xlu0 %1803
    %1805 = vrot.lane.b32.xlu0 %v1652, 28
    %v1806 = vpop.permute.xlu0 %1805
    %1807 = vrot.lane.b32.xlu0 %v1656, 28
    %v1808 = vpop.permute.xlu0 %1807
    %1809 = vrot.lane.b32.xlu0 %v1660, 28
    %v1810 = vpop.permute.xlu0 %1809
    %1811 = vrot.lane.b32.xlu0 %v1664, 28
    %v1812 = vpop.permute.xlu0 %1811
    %1813 = vrot.lane.b32.xlu0 %v1668, 28
    %v1814 = vpop.permute.xlu0 %1813
    %1815 = vrot.lane.b32.xlu0 %v1672, 28
    %v1816 = vpop.permute.xlu0 %1815
    %1817 = vrot.lane.b32.xlu0 %v1676, 28
    %v1818 = vpop.permute.xlu0 %1817
    %1819 = vrot.lane.b32.xlu0 %v1680, 28
    %v1820 = vpop.permute.xlu0 %1819
    %1821 = vrot.lane.b32.xlu0 %v1684, 28
    %v1822 = vpop.permute.xlu0 %1821
    %1823 = vrot.lane.b32.xlu0 %v1688, 28
    %v1824 = vpop.permute.xlu0 %1823
    %1825 = vrot.lane.b32.xlu0 %v1692, 28
    %v1826 = vpop.permute.xlu0 %1825
    %1827 = vrot.lane.b32.xlu0 %v1696, 28
    %v1828 = vpop.permute.xlu0 %1827
    %1829 = vrot.lane.b32.xlu0 %v1700, 28
    %v1830 = vpop.permute.xlu0 %1829
    %1831 = vrot.lane.b32.xlu0 %v1704, 28
    %v1832 = vpop.permute.xlu0 %1831
    %1833 = vrot.lane.b32.xlu0 %v1708, 28
    %v1834 = vpop.permute.xlu0 %1833
    %1835 = vrot.lane.b32.xlu0 %v1712, 28
    %v1836 = vpop.permute.xlu0 %1835
    %1837 = vrot.lane.b32.xlu0 %v1716, 28
    %v1838 = vpop.permute.xlu0 %1837
    %1839 = vrot.lane.b32.xlu0 %v1720, 28
    %v1840 = vpop.permute.xlu0 %1839
    %1841 = vrot.lane.b32.xlu0 %v1724, 28
    %v1842 = vpop.permute.xlu0 %1841
    %1843 = vrot.lane.b32.xlu0 %v1728, 28
    %v1844 = vpop.permute.xlu0 %1843
    %1845 = vrot.lane.b32.xlu0 %v1732, 28
    %v1846 = vpop.permute.xlu0 %1845
    %1847 = vrot.lane.b32.xlu0 %v1736, 28
    %v1848 = vpop.permute.xlu0 %1847
    %1849 = vrot.lane.b32.xlu0 %v1740, 28
    %v1850 = vpop.permute.xlu0 %1849
    %1851 = vrot.lane.b32.xlu0 %v1744, 28
    %v1852 = vpop.permute.xlu0 %1851
    %1853 = vrot.lane.b32.xlu0 %v1748, 28
    %v1854 = vpop.permute.xlu0 %1853
    %1855 = vrot.lane.b32.xlu0 %v1752, 28
    %v1856 = vpop.permute.xlu0 %1855
    %1857 = vrot.lane.b32.xlu0 %v1756, 28
    %v1858 = vpop.permute.xlu0 %1857
    %1859 = vrot.lane.b32.xlu0 %v1760, 28
    %v1860 = vpop.permute.xlu0 %1859
    %1861 = vrot.lane.b32.xlu0 %v1764, 28
    %v1862 = vpop.permute.xlu0 %1861
    %1863 = vrot.lane.b32.xlu0 %v1768, 28
    %v1864 = vpop.permute.xlu0 %1863
    %1865 = vrot.lane.b32.xlu0 %v1772, 28
    %v1866 = vpop.permute.xlu0 %1865
    %1867 = vrot.lane.b32.xlu0 %v1781, 28
    %v1868 = vpop.permute.xlu0 %1867
    %1869 = vrot.lane.b32.xlu0 %v1790, 28
    %v1870 = vpop.permute.xlu0 %1869
    %1871 = vrot.lane.b32.xlu0 %v1789, 28
    %v1872 = vpop.permute.xlu0 %1871
    %v1874 = vunpack.c.l.b16 %v196
    %v1875 = vpack.c.b16 %v283, %v1874
    %vm1876 = vcmask 1044480
    %v1877 = vrot.slane %v1875, 3
    %v1878 = vrot.slane %v362, 3
    %v1879 = vsel %vm1876, %v1877, %v1878
    %v1880 = vrot.slane %v363, 3
    %v1881 = vsel %vm1876, %v1878, %v1880
    %v1882 = vrot.slane %v364, 3
    %v1883 = vsel %vm1876, %v1880, %v1882
    %v1884 = vrot.slane %v365, 3
    %v1885 = vsel %vm1876, %v1882, %v1884
    %v1886 = vrot.slane %v366, 3
    %v1887 = vsel %vm1876, %v1884, %v1886
    %v1888 = vrot.slane %v367, 3
    %v1889 = vsel %vm1876, %v1886, %v1888
    %v1890 = vrot.slane %v368, 3
    %v1891 = vsel %vm1876, %v1888, %v1890
    %v1892 = vrot.slane %v369, 3
    %v1893 = vsel %vm1876, %v1890, %v1892
    %v1894 = vrot.slane %v370, 3
    %v1895 = vsel %vm1876, %v1892, %v1894
    %v1896 = vrot.slane %v371, 3
    %v1897 = vsel %vm1876, %v1894, %v1896
    %v1898 = vrot.slane %v372, 3
    %v1899 = vsel %vm1876, %v1896, %v1898
    %v1900 = vrot.slane %v373, 3
    %v1901 = vsel %vm1876, %v1898, %v1900
    %v1902 = vrot.slane %v374, 3
    %v1903 = vsel %vm1876, %v1900, %v1902
    %v1904 = vrot.slane %v375, 3
    %v1905 = vsel %vm1876, %v1902, %v1904
    %v1906 = vrot.slane %v376, 3
    %v1907 = vsel %vm1876, %v1904, %v1906
    %v1908 = vrot.slane %v377, 3
    %v1909 = vsel %vm1876, %v1906, %v1908
    %v1910 = vrot.slane %v378, 3
    %v1911 = vsel %vm1876, %v1908, %v1910
    %v1912 = vrot.slane %v379, 3
    %v1913 = vsel %vm1876, %v1910, %v1912
    %v1914 = vrot.slane %v380, 3
    %v1915 = vsel %vm1876, %v1912, %v1914
    %v1916 = vrot.slane %v381, 3
    %v1917 = vsel %vm1876, %v1914, %v1916
    %v1918 = vrot.slane %v382, 3
    %v1919 = vsel %vm1876, %v1916, %v1918
    %v1920 = vrot.slane %v383, 3
    %v1921 = vsel %vm1876, %v1918, %v1920
    %v1922 = vrot.slane %v384, 3
    %v1923 = vsel %vm1876, %v1920, %v1922
    %v1924 = vrot.slane %v385, 3
    %v1925 = vsel %vm1876, %v1922, %v1924
    %v1926 = vrot.slane %v386, 3
    %v1927 = vsel %vm1876, %v1924, %v1926
    %v1928 = vrot.slane %v387, 3
    %v1929 = vsel %vm1876, %v1926, %v1928
    %v1930 = vrot.slane %v388, 3
    %v1931 = vsel %vm1876, %v1928, %v1930
    %v1932 = vrot.slane %v389, 3
    %v1933 = vsel %vm1876, %v1930, %v1932
    %v1934 = vrot.slane %v390, 3
    %v1935 = vsel %vm1876, %v1932, %v1934
    %v1936 = vrot.slane %v391, 3
    %v1937 = vsel %vm1876, %v1934, %v1936
    %v1938 = vrot.slane %v392, 3
    %v1939 = vsel %vm1876, %v1936, %v1938
    %v1940 = vrot.slane %v393, 3
    %v1941 = vsel %vm1876, %v1938, %v1940
    %v1942 = vrot.slane %v394, 3
    %v1943 = vsel %vm1876, %v1940, %v1942
    %v1944 = vrot.slane %v395, 3
    %v1945 = vsel %vm1876, %v1942, %v1944
    %v1946 = vrot.slane %v396, 3
    %v1947 = vsel %vm1876, %v1944, %v1946
    %v1948 = vrot.slane %v397, 3
    %v1949 = vsel %vm1876, %v1946, %v1948
    %v1950 = vrot.slane %v398, 3
    %v1951 = vsel %vm1876, %v1948, %v1950
    %v1952 = vrot.slane %v989, 3
    %v1953 = vsel %vm1876, %v1950, %v1952
    %v1954 = vrot.slane %v1519, 3
    %v1955 = vsel %vm1876, %v1952, %v1954
    %v1956 = vrot.slane %v1611, 3
    %v1957 = vsel %vm1876, %v1954, %v1956
    %1958 = vrot.lane.b32.xlu0 %v1879, 32
    %v1959 = vpop.permute.xlu0 %1958
    %1960 = vrot.lane.b32.xlu0 %v1881, 32
    %v1961 = vpop.permute.xlu0 %1960
    %1962 = vrot.lane.b32.xlu0 %v1883, 32
    %v1963 = vpop.permute.xlu0 %1962
    %1964 = vrot.lane.b32.xlu0 %v1885, 32
    %v1965 = vpop.permute.xlu0 %1964
    %1966 = vrot.lane.b32.xlu0 %v1887, 32
    %v1967 = vpop.permute.xlu0 %1966
    %1968 = vrot.lane.b32.xlu0 %v1889, 32
    %v1969 = vpop.permute.xlu0 %1968
    %1970 = vrot.lane.b32.xlu0 %v1891, 32
    %v1971 = vpop.permute.xlu0 %1970
    %1972 = vrot.lane.b32.xlu0 %v1893, 32
    %v1973 = vpop.permute.xlu0 %1972
    %1974 = vrot.lane.b32.xlu0 %v1895, 32
    %v1975 = vpop.permute.xlu0 %1974
    %1976 = vrot.lane.b32.xlu0 %v1897, 32
    %v1977 = vpop.permute.xlu0 %1976
    %1978 = vrot.lane.b32.xlu0 %v1899, 32
    %v1979 = vpop.permute.xlu0 %1978
    %1980 = vrot.lane.b32.xlu0 %v1901, 32
    %v1981 = vpop.permute.xlu0 %1980
    %1982 = vrot.lane.b32.xlu0 %v1903, 32
    %v1983 = vpop.permute.xlu0 %1982
    %1984 = vrot.lane.b32.xlu0 %v1905, 32
    %v1985 = vpop.permute.xlu0 %1984
    %1986 = vrot.lane.b32.xlu0 %v1907, 32
    %v1987 = vpop.permute.xlu0 %1986
    %1988 = vrot.lane.b32.xlu0 %v1909, 32
    %v1989 = vpop.permute.xlu0 %1988
    %1990 = vrot.lane.b32.xlu0 %v1911, 32
    %v1991 = vpop.permute.xlu0 %1990
    %1992 = vrot.lane.b32.xlu0 %v1913, 32
    %v1993 = vpop.permute.xlu0 %1992
    %1994 = vrot.lane.b32.xlu0 %v1915, 32
    %v1995 = vpop.permute.xlu0 %1994
    %1996 = vrot.lane.b32.xlu0 %v1917, 32
    %v1997 = vpop.permute.xlu0 %1996
    %1998 = vrot.lane.b32.xlu0 %v1919, 32
    %v1999 = vpop.permute.xlu0 %1998
    %2000 = vrot.lane.b32.xlu0 %v1921, 32
    %v2001 = vpop.permute.xlu0 %2000
    %2002 = vrot.lane.b32.xlu0 %v1923, 32
    %v2003 = vpop.permute.xlu0 %2002
    %2004 = vrot.lane.b32.xlu0 %v1925, 32
    %v2005 = vpop.permute.xlu0 %2004
    %2006 = vrot.lane.b32.xlu0 %v1927, 32
    %v2007 = vpop.permute.xlu0 %2006
    %2008 = vrot.lane.b32.xlu0 %v1929, 32
    %v2009 = vpop.permute.xlu0 %2008
    %2010 = vrot.lane.b32.xlu0 %v1931, 32
    %v2011 = vpop.permute.xlu0 %2010
    %2012 = vrot.lane.b32.xlu0 %v1933, 32
    %v2013 = vpop.permute.xlu0 %2012
    %2014 = vrot.lane.b32.xlu0 %v1935, 32
    %v2015 = vpop.permute.xlu0 %2014
    %2016 = vrot.lane.b32.xlu0 %v1937, 32
    %v2017 = vpop.permute.xlu0 %2016
    %2018 = vrot.lane.b32.xlu0 %v1939, 32
    %v2019 = vpop.permute.xlu0 %2018
    %2020 = vrot.lane.b32.xlu0 %v1941, 32
    %v2021 = vpop.permute.xlu0 %2020
    %2022 = vrot.lane.b32.xlu0 %v1943, 32
    %v2023 = vpop.permute.xlu0 %2022
    %2024 = vrot.lane.b32.xlu0 %v1945, 32
    %v2025 = vpop.permute.xlu0 %2024
    %2026 = vrot.lane.b32.xlu0 %v1947, 32
    %v2027 = vpop.permute.xlu0 %2026
    %2028 = vrot.lane.b32.xlu0 %v1949, 32
    %v2029 = vpop.permute.xlu0 %2028
    %2030 = vrot.lane.b32.xlu0 %v1951, 32
    %v2031 = vpop.permute.xlu0 %2030
    %2032 = vrot.lane.b32.xlu0 %v1953, 32
    %v2033 = vpop.permute.xlu0 %2032
    %2034 = vrot.lane.b32.xlu0 %v1955, 32
    %v2035 = vpop.permute.xlu0 %2034
    %2036 = vrot.lane.b32.xlu0 %v1957, 32
    %v2037 = vpop.permute.xlu0 %2036
    %2038 = vrot.lane.b32.xlu0 %v1956, 32
    %v2039 = vpop.permute.xlu0 %2038
    %vm2040 = vcmask 31744
    %v2042 = vsel %vm2040, %v359, %v732
    %v2044 = vsel %vm2040, %v360, %v734
    %v2046 = vsel %vm2040, %v361, %v736
    %v2048 = vsel %vm2040, %v362, %v738
    %v2050 = vsel %vm2040, %v363, %v740
    %v2052 = vsel %vm2040, %v364, %v742
    %v2054 = vsel %vm2040, %v365, %v744
    %v2056 = vsel %vm2040, %v366, %v746
    %v2058 = vsel %vm2040, %v367, %v748
    %v2060 = vsel %vm2040, %v368, %v750
    %v2062 = vsel %vm2040, %v369, %v752
    %v2064 = vsel %vm2040, %v370, %v754
    %v2066 = vsel %vm2040, %v371, %v756
    %v2068 = vsel %vm2040, %v372, %v758
    %v2070 = vsel %vm2040, %v373, %v760
    %v2072 = vsel %vm2040, %v374, %v762
    %v2074 = vsel %vm2040, %v375, %v764
    %v2076 = vsel %vm2040, %v376, %v766
    %v2078 = vsel %vm2040, %v377, %v768
    %v2080 = vsel %vm2040, %v378, %v770
    %v2082 = vsel %vm2040, %v379, %v772
    %v2084 = vsel %vm2040, %v380, %v774
    %v2086 = vsel %vm2040, %v381, %v776
    %v2088 = vsel %vm2040, %v382, %v778
    %v2090 = vsel %vm2040, %v383, %v780
    %v2092 = vsel %vm2040, %v384, %v782
    %v2094 = vsel %vm2040, %v385, %v784
    %v2096 = vsel %vm2040, %v386, %v786
    %v2098 = vsel %vm2040, %v387, %v788
    %v2100 = vsel %vm2040, %v388, %v790
    %v2102 = vsel %vm2040, %v389, %v792
    %v2104 = vsel %vm2040, %v390, %v794
    %v2106 = vsel %vm2040, %v391, %v796
    %v2108 = vsel %vm2040, %v392, %v798
    %v2110 = vsel %vm2040, %v393, %v800
    %v2112 = vsel %vm2040, %v394, %v802
    %v2114 = vsel %vm2040, %v395, %v804
    %v2116 = vsel %vm2040, %v396, %v806
    %v2118 = vsel %vm2040, %v397, %v808
    %v2120 = vsel %vm2040, %v398, %v810
    %v2123 = vsel %vm2040, %v399, %v812
    %vm2124 = vcmask 64512
    %v2126 = vsel %vm2124, %v2042, %v899
    %v2128 = vsel %vm2124, %v2044, %v901
    %v2130 = vsel %vm2124, %v2046, %v903
    %v2132 = vsel %vm2124, %v2048, %v905
    %v2134 = vsel %vm2124, %v2050, %v907
    %v2136 = vsel %vm2124, %v2052, %v909
    %v2138 = vsel %vm2124, %v2054, %v911
    %v2140 = vsel %vm2124, %v2056, %v913
    %v2142 = vsel %vm2124, %v2058, %v915
    %v2144 = vsel %vm2124, %v2060, %v917
    %v2146 = vsel %vm2124, %v2062, %v919
    %v2148 = vsel %vm2124, %v2064, %v921
    %v2150 = vsel %vm2124, %v2066, %v923
    %v2152 = vsel %vm2124, %v2068, %v925
    %v2154 = vsel %vm2124, %v2070, %v927
    %v2156 = vsel %vm2124, %v2072, %v929
    %v2158 = vsel %vm2124, %v2074, %v931
    %v2160 = vsel %vm2124, %v2076, %v933
    %v2162 = vsel %vm2124, %v2078, %v935
    %v2164 = vsel %vm2124, %v2080, %v937
    %v2166 = vsel %vm2124, %v2082, %v939
    %v2168 = vsel %vm2124, %v2084, %v941
    %v2170 = vsel %vm2124, %v2086, %v943
    %v2172 = vsel %vm2124, %v2088, %v945
    %v2174 = vsel %vm2124, %v2090, %v947
    %v2176 = vsel %vm2124, %v2092, %v949
    %v2178 = vsel %vm2124, %v2094, %v951
    %v2180 = vsel %vm2124, %v2096, %v953
    %v2182 = vsel %vm2124, %v2098, %v955
    %v2184 = vsel %vm2124, %v2100, %v957
    %v2186 = vsel %vm2124, %v2102, %v959
    %v2188 = vsel %vm2124, %v2104, %v961
    %v2190 = vsel %vm2124, %v2106, %v963
    %v2192 = vsel %vm2124, %v2108, %v965
    %v2194 = vsel %vm2124, %v2110, %v967
    %v2196 = vsel %vm2124, %v2112, %v969
    %v2198 = vsel %vm2124, %v2114, %v971
    %v2200 = vsel %vm2124, %v2116, %v973
    %v2202 = vsel %vm2124, %v2118, %v975
    %v2204 = vsel %vm2124, %v2120, %v977
    %v2206 = vsel %vm2124, %v2123, %v979
    %vm2207 = vcmask 97280
    %v2209 = vsel %vm2207, %v2126, %v998
    %v2211 = vsel %vm2207, %v2128, %v1000
    %v2213 = vsel %vm2207, %v2130, %v1002
    %v2215 = vsel %vm2207, %v2132, %v1004
    %v2217 = vsel %vm2207, %v2134, %v1006
    %v2219 = vsel %vm2207, %v2136, %v1008
    %v2221 = vsel %vm2207, %v2138, %v1010
    %v2223 = vsel %vm2207, %v2140, %v1012
    %v2225 = vsel %vm2207, %v2142, %v1014
    %v2227 = vsel %vm2207, %v2144, %v1016
    %v2229 = vsel %vm2207, %v2146, %v1018
    %v2231 = vsel %vm2207, %v2148, %v1020
    %v2233 = vsel %vm2207, %v2150, %v1022
    %v2235 = vsel %vm2207, %v2152, %v1024
    %v2237 = vsel %vm2207, %v2154, %v1026
    %v2239 = vsel %vm2207, %v2156, %v1028
    %v2241 = vsel %vm2207, %v2158, %v1030
    %v2243 = vsel %vm2207, %v2160, %v1032
    %v2245 = vsel %vm2207, %v2162, %v1034
    %v2247 = vsel %vm2207, %v2164, %v1036
    %v2249 = vsel %vm2207, %v2166, %v1038
    %v2251 = vsel %vm2207, %v2168, %v1040
    %v2253 = vsel %vm2207, %v2170, %v1042
    %v2255 = vsel %vm2207, %v2172, %v1044
    %v2257 = vsel %vm2207, %v2174, %v1046
    %v2259 = vsel %vm2207, %v2176, %v1048
    %v2261 = vsel %vm2207, %v2178, %v1050
    %v2263 = vsel %vm2207, %v2180, %v1052
    %v2265 = vsel %vm2207, %v2182, %v1054
    %v2267 = vsel %vm2207, %v2184, %v1056
    %v2269 = vsel %vm2207, %v2186, %v1058
    %v2271 = vsel %vm2207, %v2188, %v1060
    %v2273 = vsel %vm2207, %v2190, %v1062
    %v2275 = vsel %vm2207, %v2192, %v1064
    %v2277 = vsel %vm2207, %v2194, %v1066
    %v2279 = vsel %vm2207, %v2196, %v1068
    %v2281 = vsel %vm2207, %v2198, %v1070
    %v2283 = vsel %vm2207, %v2200, %v1072
    %v2285 = vsel %vm2207, %v2202, %v1074
    %v2287 = vsel %vm2207, %v2204, %v1076
    %v2289 = vsel %vm2207, %v2206, %v1078
    %vm2290 = vcmask 130048
    %v2292 = vsel %vm2290, %v2209, %v1262
    %v2294 = vsel %vm2290, %v2211, %v1264
    %v2296 = vsel %vm2290, %v2213, %v1266
    %v2298 = vsel %vm2290, %v2215, %v1268
    %v2300 = vsel %vm2290, %v2217, %v1270
    %v2302 = vsel %vm2290, %v2219, %v1272
    %v2304 = vsel %vm2290, %v2221, %v1274
    %v2306 = vsel %vm2290, %v2223, %v1276
    %v2308 = vsel %vm2290, %v2225, %v1278
    %v2310 = vsel %vm2290, %v2227, %v1280
    %v2312 = vsel %vm2290, %v2229, %v1282
    %v2314 = vsel %vm2290, %v2231, %v1284
    %v2316 = vsel %vm2290, %v2233, %v1286
    %v2318 = vsel %vm2290, %v2235, %v1288
    %v2320 = vsel %vm2290, %v2237, %v1290
    %v2322 = vsel %vm2290, %v2239, %v1292
    %v2324 = vsel %vm2290, %v2241, %v1294
    %v2326 = vsel %vm2290, %v2243, %v1296
    %v2328 = vsel %vm2290, %v2245, %v1298
    %v2330 = vsel %vm2290, %v2247, %v1300
    %v2332 = vsel %vm2290, %v2249, %v1302
    %v2334 = vsel %vm2290, %v2251, %v1304
    %v2336 = vsel %vm2290, %v2253, %v1306
    %v2338 = vsel %vm2290, %v2255, %v1308
    %v2340 = vsel %vm2290, %v2257, %v1310
    %v2342 = vsel %vm2290, %v2259, %v1312
    %v2344 = vsel %vm2290, %v2261, %v1314
    %v2346 = vsel %vm2290, %v2263, %v1316
    %v2348 = vsel %vm2290, %v2265, %v1318
    %v2350 = vsel %vm2290, %v2267, %v1320
    %v2352 = vsel %vm2290, %v2269, %v1322
    %v2354 = vsel %vm2290, %v2271, %v1324
    %v2356 = vsel %vm2290, %v2273, %v1326
    %v2358 = vsel %vm2290, %v2275, %v1328
    %v2360 = vsel %vm2290, %v2277, %v1330
    %v2362 = vsel %vm2290, %v2279, %v1332
    %v2364 = vsel %vm2290, %v2281, %v1334
    %v2366 = vsel %vm2290, %v2283, %v1336
    %v2368 = vsel %vm2290, %v2285, %v1338
    %v2370 = vsel %vm2290, %v2287, %v1340
    %v2372 = vsel %vm2290, %v2289, %v1342
    %vm2373 = vcmask 162816
    %v2375 = vsel %vm2373, %v2292, %v1429
    %v2377 = vsel %vm2373, %v2294, %v1431
    %v2379 = vsel %vm2373, %v2296, %v1433
    %v2381 = vsel %vm2373, %v2298, %v1435
    %v2383 = vsel %vm2373, %v2300, %v1437
    %v2385 = vsel %vm2373, %v2302, %v1439
    %v2387 = vsel %vm2373, %v2304, %v1441
    %v2389 = vsel %vm2373, %v2306, %v1443
    %v2391 = vsel %vm2373, %v2308, %v1445
    %v2393 = vsel %vm2373, %v2310, %v1447
    %v2395 = vsel %vm2373, %v2312, %v1449
    %v2397 = vsel %vm2373, %v2314, %v1451
    %v2399 = vsel %vm2373, %v2316, %v1453
    %v2401 = vsel %vm2373, %v2318, %v1455
    %v2403 = vsel %vm2373, %v2320, %v1457
    %v2405 = vsel %vm2373, %v2322, %v1459
    %v2407 = vsel %vm2373, %v2324, %v1461
    %v2409 = vsel %vm2373, %v2326, %v1463
    %v2411 = vsel %vm2373, %v2328, %v1465
    %v2413 = vsel %vm2373, %v2330, %v1467
    %v2415 = vsel %vm2373, %v2332, %v1469
    %v2417 = vsel %vm2373, %v2334, %v1471
    %v2419 = vsel %vm2373, %v2336, %v1473
    %v2421 = vsel %vm2373, %v2338, %v1475
    %v2423 = vsel %vm2373, %v2340, %v1477
    %v2425 = vsel %vm2373, %v2342, %v1479
    %v2427 = vsel %vm2373, %v2344, %v1481
    %v2429 = vsel %vm2373, %v2346, %v1483
    %v2431 = vsel %vm2373, %v2348, %v1485
    %v2433 = vsel %vm2373, %v2350, %v1487
    %v2435 = vsel %vm2373, %v2352, %v1489
    %v2437 = vsel %vm2373, %v2354, %v1491
    %v2439 = vsel %vm2373, %v2356, %v1493
    %v2441 = vsel %vm2373, %v2358, %v1495
    %v2443 = vsel %vm2373, %v2360, %v1497
    %v2445 = vsel %vm2373, %v2362, %v1499
    %v2447 = vsel %vm2373, %v2364, %v1501
    %v2449 = vsel %vm2373, %v2366, %v1503
    %v2451 = vsel %vm2373, %v2368, %v1505
    %v2453 = vsel %vm2373, %v2370, %v1507
    %v2455 = vsel %vm2373, %v2372, %v1509
    %vm2456 = vcmask 195584
    %v2458 = vsel %vm2456, %v2375, %v1528
    %v2460 = vsel %vm2456, %v2377, %v1530
    %v2462 = vsel %vm2456, %v2379, %v1532
    %v2464 = vsel %vm2456, %v2381, %v1534
    %v2466 = vsel %vm2456, %v2383, %v1536
    %v2468 = vsel %vm2456, %v2385, %v1538
    %v2470 = vsel %vm2456, %v2387, %v1540
    %v2472 = vsel %vm2456, %v2389, %v1542
    %v2474 = vsel %vm2456, %v2391, %v1544
    %v2476 = vsel %vm2456, %v2393, %v1546
    %v2478 = vsel %vm2456, %v2395, %v1548
    %v2480 = vsel %vm2456, %v2397, %v1550
    %v2482 = vsel %vm2456, %v2399, %v1552
    %v2484 = vsel %vm2456, %v2401, %v1554
    %v2486 = vsel %vm2456, %v2403, %v1556
    %v2488 = vsel %vm2456, %v2405, %v1558
    %v2490 = vsel %vm2456, %v2407, %v1560
    %v2492 = vsel %vm2456, %v2409, %v1562
    %v2494 = vsel %vm2456, %v2411, %v1564
    %v2496 = vsel %vm2456, %v2413, %v1566
    %v2498 = vsel %vm2456, %v2415, %v1568
    %v2500 = vsel %vm2456, %v2417, %v1570
    %v2502 = vsel %vm2456, %v2419, %v1572
    %v2504 = vsel %vm2456, %v2421, %v1574
    %v2506 = vsel %vm2456, %v2423, %v1576
    %v2508 = vsel %vm2456, %v2425, %v1578
    %v2510 = vsel %vm2456, %v2427, %v1580
    %v2512 = vsel %vm2456, %v2429, %v1582
    %v2514 = vsel %vm2456, %v2431, %v1584
    %v2516 = vsel %vm2456, %v2433, %v1586
    %v2518 = vsel %vm2456, %v2435, %v1588
    %v2520 = vsel %vm2456, %v2437, %v1590
    %v2522 = vsel %vm2456, %v2439, %v1592
    %v2524 = vsel %vm2456, %v2441, %v1594
    %v2526 = vsel %vm2456, %v2443, %v1596
    %v2528 = vsel %vm2456, %v2445, %v1598
    %v2530 = vsel %vm2456, %v2447, %v1600
    %v2532 = vsel %vm2456, %v2449, %v1602
    %v2534 = vsel %vm2456, %v2451, %v1604
    %v2536 = vsel %vm2456, %v2453, %v1606
    %v2538 = vsel %vm2456, %v2455, %v1608
    %vm2539 = vcmask 228352
    %v2541 = vsel %vm2539, %v2458, %v1792
    %v2543 = vsel %vm2539, %v2460, %v1794
    %v2545 = vsel %vm2539, %v2462, %v1796
    %v2547 = vsel %vm2539, %v2464, %v1798
    %v2549 = vsel %vm2539, %v2466, %v1800
    %v2551 = vsel %vm2539, %v2468, %v1802
    %v2553 = vsel %vm2539, %v2470, %v1804
    %v2555 = vsel %vm2539, %v2472, %v1806
    %v2557 = vsel %vm2539, %v2474, %v1808
    %v2559 = vsel %vm2539, %v2476, %v1810
    %v2561 = vsel %vm2539, %v2478, %v1812
    %v2563 = vsel %vm2539, %v2480, %v1814
    %v2565 = vsel %vm2539, %v2482, %v1816
    %v2567 = vsel %vm2539, %v2484, %v1818
    %v2569 = vsel %vm2539, %v2486, %v1820
    %v2571 = vsel %vm2539, %v2488, %v1822
    %v2573 = vsel %vm2539, %v2490, %v1824
    %v2575 = vsel %vm2539, %v2492, %v1826
    %v2577 = vsel %vm2539, %v2494, %v1828
    %v2579 = vsel %vm2539, %v2496, %v1830
    %v2581 = vsel %vm2539, %v2498, %v1832
    %v2583 = vsel %vm2539, %v2500, %v1834
    %v2585 = vsel %vm2539, %v2502, %v1836
    %v2587 = vsel %vm2539, %v2504, %v1838
    %v2589 = vsel %vm2539, %v2506, %v1840
    %v2591 = vsel %vm2539, %v2508, %v1842
    %v2593 = vsel %vm2539, %v2510, %v1844
    %v2595 = vsel %vm2539, %v2512, %v1846
    %v2597 = vsel %vm2539, %v2514, %v1848
    %v2599 = vsel %vm2539, %v2516, %v1850
    %v2601 = vsel %vm2539, %v2518, %v1852
    %v2603 = vsel %vm2539, %v2520, %v1854
    %v2605 = vsel %vm2539, %v2522, %v1856
    %v2607 = vsel %vm2539, %v2524, %v1858
    %v2609 = vsel %vm2539, %v2526, %v1860
    %v2611 = vsel %vm2539, %v2528, %v1862
    %v2613 = vsel %vm2539, %v2530, %v1864
    %v2615 = vsel %vm2539, %v2532, %v1866
    %v2617 = vsel %vm2539, %v2534, %v1868
    %v2619 = vsel %vm2539, %v2536, %v1870
    %v2621 = vsel %vm2539, %v2538, %v1872
    %vm2622 = vcmask 261120
    %v2624 = vsel %vm2622, %v2541, %v1959
    %v2626 = vsel %vm2622, %v2543, %v1961
    %v2628 = vsel %vm2622, %v2545, %v1963
    %v2630 = vsel %vm2622, %v2547, %v1965
    %v2632 = vsel %vm2622, %v2549, %v1967
    %v2634 = vsel %vm2622, %v2551, %v1969
    %v2636 = vsel %vm2622, %v2553, %v1971
    %v2638 = vsel %vm2622, %v2555, %v1973
    %v2640 = vsel %vm2622, %v2557, %v1975
    %v2642 = vsel %vm2622, %v2559, %v1977
    %v2644 = vsel %vm2622, %v2561, %v1979
    %v2646 = vsel %vm2622, %v2563, %v1981
    %v2648 = vsel %vm2622, %v2565, %v1983
    %v2650 = vsel %vm2622, %v2567, %v1985
    %v2652 = vsel %vm2622, %v2569, %v1987
    %v2654 = vsel %vm2622, %v2571, %v1989
    %v2656 = vsel %vm2622, %v2573, %v1991
    %v2658 = vsel %vm2622, %v2575, %v1993
    %v2660 = vsel %vm2622, %v2577, %v1995
    %v2662 = vsel %vm2622, %v2579, %v1997
    %v2664 = vsel %vm2622, %v2581, %v1999
    %v2666 = vsel %vm2622, %v2583, %v2001
    %v2668 = vsel %vm2622, %v2585, %v2003
    %v2670 = vsel %vm2622, %v2587, %v2005
    %v2672 = vsel %vm2622, %v2589, %v2007
    %v2674 = vsel %vm2622, %v2591, %v2009
    %v2676 = vsel %vm2622, %v2593, %v2011
    %v2678 = vsel %vm2622, %v2595, %v2013
    %v2680 = vsel %vm2622, %v2597, %v2015
    %v2682 = vsel %vm2622, %v2599, %v2017
    %v2684 = vsel %vm2622, %v2601, %v2019
    %v2686 = vsel %vm2622, %v2603, %v2021
    %v2688 = vsel %vm2622, %v2605, %v2023
    %v2690 = vsel %vm2622, %v2607, %v2025
    %v2692 = vsel %vm2622, %v2609, %v2027
    %v2694 = vsel %vm2622, %v2611, %v2029
    %v2696 = vsel %vm2622, %v2613, %v2031
    %v2698 = vsel %vm2622, %v2615, %v2033
    %v2700 = vsel %vm2622, %v2617, %v2035
    %v2702 = vsel %vm2622, %v2619, %v2037
    %v2704 = vsel %vm2622, %v2621, %v2039
    %v2705 = vld [vmem:[%s1] sm:$0xf]
    %v2706 = vld [vmem:[%s1 + $0x4] sm:$0xf]
    %v2707 = vld [vmem:[%s1 + $0x8] sm:$0xf]
    %v2708 = vld [vmem:[%s1 + $0xc] sm:$0xf]
    %v2709 = vld [vmem:[%s1 + $0x10] sm:$0x3]
    %v2715 = vunpack.c.l.b16 %v2705
    %v2716 = vunpack.c.l.b16 %v2706
    %v2717 = vunpack.c.l.b16 %v2707
    %v2718 = vunpack.c.l.b16 %v2708
    %v2719 = vunpack.c.l.b16 %v2709
    %v2720 = vpack.c.b16 %v2716, %v2715
    %v2721 = vpack.c.b16 %v2718, %v2717
    %v2722 = vpack.c.b16 %v2719, %v2719
    %vm2725 = vcmask 293888
    %v2726 = vsel %vm2725, %v2624, 0
    %v2728 = vsel %vm2725, %v2626, 0
    %v2730 = vsel %vm2725, %v2628, 0
    %v2732 = vsel %vm2725, %v2630, 0
    %v2734 = vsel %vm2725, %v2632, 0
    %v2736 = vsel %vm2725, %v2634, 0
    %v2738 = vsel %vm2725, %v2636, 0
    %v2740 = vsel %vm2725, %v2638, 0
    %v2742 = vsel %vm2725, %v2640, 0
    %v2744 = vsel %vm2725, %v2642, 0
    %v2746 = vsel %vm2725, %v2644, 0
    %v2748 = vsel %vm2725, %v2646, 0
    %v2750 = vsel %vm2725, %v2648, 0
    %v2752 = vsel %vm2725, %v2650, 0
    %v2754 = vsel %vm2725, %v2652, 0
    %v2756 = vsel %vm2725, %v2654, 0
    %v2758 = vsel %vm2725, %v2656, 0
    %v2760 = vsel %vm2725, %v2658, 0
    %v2762 = vsel %vm2725, %v2660, 0
    %v2764 = vsel %vm2725, %v2662, 0
    %v2766 = vsel %vm2725, %v2664, 0
    %v2768 = vsel %vm2725, %v2666, 0
    %v2770 = vsel %vm2725, %v2668, 0
    %v2772 = vsel %vm2725, %v2670, 0
    %v2774 = vsel %vm2725, %v2672, 0
    %v2776 = vsel %vm2725, %v2674, 0
    %v2778 = vsel %vm2725, %v2676, 0
    %v2780 = vsel %vm2725, %v2678, 0
    %v2782 = vsel %vm2725, %v2680, 0
    %v2784 = vsel %vm2725, %v2682, 0
    %v2786 = vsel %vm2725, %v2684, 0
    %v2788 = vsel %vm2725, %v2686, 0
    %v2790 = vsel %vm2725, %v2688, 0
    %v2792 = vsel %vm2725, %v2690, 0
    %v2794 = vsel %vm2725, %v2692, 0
    %v2796 = vsel %vm2725, %v2694, 0
    %v2798 = vsel %vm2725, %v2696, 0
    %v2800 = vsel %vm2725, %v2698, 0
    %v2802 = vsel %vm2725, %v2700, 0
    %v2804 = vsel %vm2725, %v2702, 0
    %v2806 = vsel %vm2725, %v2704, 0
    %vm2808 = vcmask 1041408
    %v2810 = vsel %vm2808, %v2722, 0
    %2812 = vmatpush.bf16.msra.mxu0 0
    %2813 = vmatpush.bf16.msra.mxu0 0
    %2814 = vmatpush.bf16.msra.mxu0 0
    %2815 = vmatpush.bf16.msra.mxu0 0
    %2816 = vmatpush.bf16.msra.mxu0 0
    %2817 = vmatpush.bf16.msra.mxu0 %v2810
    %2818 = vmatpush.bf16.msra.mxu0 %v2721
    %2819 = vmatpush.bf16.msra.mxu0 %v2720
    %2820 = vmatmul.bf16.gmra.mxu0 %v2726
    %v2821 = vpop.f32.mrf.mxu0
    %v2822 = vadd.f32 0.0, %v2821
    %v2823 = vpop.f32.mrf.mxu0
    %v2824 = vadd.f32 0.0, %v2823
    %2825 = vmatmul.bf16.gmra.mxu0 %v2728
    %v2826 = vpop.f32.mrf.mxu0
    %v2827 = vadd.f32 0.0, %v2826
    %v2828 = vpop.f32.mrf.mxu0
    %v2829 = vadd.f32 0.0, %v2828
    %2830 = vmatmul.bf16.gmra.mxu0 %v2730
    %v2831 = vpop.f32.mrf.mxu0
    %v2832 = vadd.f32 0.0, %v2831
    %v2833 = vpop.f32.mrf.mxu0
    %v2834 = vadd.f32 0.0, %v2833
    %2835 = vmatmul.bf16.gmra.mxu0 %v2732
    %v2836 = vpop.f32.mrf.mxu0
    %v2837 = vadd.f32 0.0, %v2836
    %v2838 = vpop.f32.mrf.mxu0
    %v2839 = vadd.f32 0.0, %v2838
    %2840 = vmatmul.bf16.gmra.mxu0 %v2734
    %v2841 = vpop.f32.mrf.mxu0
    %v2842 = vadd.f32 0.0, %v2841
    %v2843 = vpop.f32.mrf.mxu0
    %v2844 = vadd.f32 0.0, %v2843
    %2845 = vmatmul.bf16.gmra.mxu0 %v2736
    %v2846 = vpop.f32.mrf.mxu0
    %v2847 = vadd.f32 0.0, %v2846
    %v2848 = vpop.f32.mrf.mxu0
    %v2849 = vadd.f32 0.0, %v2848
    %2850 = vmatmul.bf16.gmra.mxu0 %v2738
    %v2851 = vpop.f32.mrf.mxu0
    %v2852 = vadd.f32 0.0, %v2851
    %v2853 = vpop.f32.mrf.mxu0
    %v2854 = vadd.f32 0.0, %v2853
    %2855 = vmatmul.bf16.gmra.mxu0 %v2740
    %v2856 = vpop.f32.mrf.mxu0
    %v2857 = vadd.f32 0.0, %v2856
    %v2858 = vpop.f32.mrf.mxu0
    %v2859 = vadd.f32 0.0, %v2858
    %2860 = vmatmul.bf16.gmra.mxu0 %v2742
    %v2861 = vpop.f32.mrf.mxu0
    %v2862 = vadd.f32 0.0, %v2861
    %v2863 = vpop.f32.mrf.mxu0
    %v2864 = vadd.f32 0.0, %v2863
    %2865 = vmatmul.bf16.gmra.mxu0 %v2744
    %v2866 = vpop.f32.mrf.mxu0
    %v2867 = vadd.f32 0.0, %v2866
    %v2868 = vpop.f32.mrf.mxu0
    %v2869 = vadd.f32 0.0, %v2868
    %2870 = vmatmul.bf16.gmra.mxu0 %v2746
    %v2871 = vpop.f32.mrf.mxu0
    %v2872 = vadd.f32 0.0, %v2871
    %v2873 = vpop.f32.mrf.mxu0
    %v2874 = vadd.f32 0.0, %v2873
    %2875 = vmatmul.bf16.gmra.mxu0 %v2748
    %v2876 = vpop.f32.mrf.mxu0
    %v2877 = vadd.f32 0.0, %v2876
    %v2878 = vpop.f32.mrf.mxu0
    %v2879 = vadd.f32 0.0, %v2878
    %2880 = vmatmul.bf16.gmra.mxu0 %v2750
    %v2881 = vpop.f32.mrf.mxu0
    %v2882 = vadd.f32 0.0, %v2881
    %v2883 = vpop.f32.mrf.mxu0
    %v2884 = vadd.f32 0.0, %v2883
    %2885 = vmatmul.bf16.gmra.mxu0 %v2752
    %v2886 = vpop.f32.mrf.mxu0
    %v2887 = vadd.f32 0.0, %v2886
    %v2888 = vpop.f32.mrf.mxu0
    %v2889 = vadd.f32 0.0, %v2888
    %2890 = vmatmul.bf16.gmra.mxu0 %v2754
    %v2891 = vpop.f32.mrf.mxu0
    %v2892 = vadd.f32 0.0, %v2891
    %v2893 = vpop.f32.mrf.mxu0
    %v2894 = vadd.f32 0.0, %v2893
    %2895 = vmatmul.bf16.gmra.mxu0 %v2756
    %v2896 = vpop.f32.mrf.mxu0
    %v2897 = vadd.f32 0.0, %v2896
    %v2898 = vpop.f32.mrf.mxu0
    %v2899 = vadd.f32 0.0, %v2898
    %2900 = vmatmul.bf16.gmra.mxu0 %v2758
    %v2901 = vpop.f32.mrf.mxu0
    %v2902 = vadd.f32 0.0, %v2901
    %v2903 = vpop.f32.mrf.mxu0
    %v2904 = vadd.f32 0.0, %v2903
    %2905 = vmatmul.bf16.gmra.mxu0 %v2760
    %v2906 = vpop.f32.mrf.mxu0
    %v2907 = vadd.f32 0.0, %v2906
    %v2908 = vpop.f32.mrf.mxu0
    %v2909 = vadd.f32 0.0, %v2908
    %2910 = vmatmul.bf16.gmra.mxu0 %v2762
    %v2911 = vpop.f32.mrf.mxu0
    %v2912 = vadd.f32 0.0, %v2911
    %v2913 = vpop.f32.mrf.mxu0
    %v2914 = vadd.f32 0.0, %v2913
    %2915 = vmatmul.bf16.gmra.mxu0 %v2764
    %v2916 = vpop.f32.mrf.mxu0
    %v2917 = vadd.f32 0.0, %v2916
    %v2918 = vpop.f32.mrf.mxu0
    %v2919 = vadd.f32 0.0, %v2918
    %2920 = vmatmul.bf16.gmra.mxu0 %v2766
    %v2921 = vpop.f32.mrf.mxu0
    %v2922 = vadd.f32 0.0, %v2921
    %v2923 = vpop.f32.mrf.mxu0
    %v2924 = vadd.f32 0.0, %v2923
    %2925 = vmatmul.bf16.gmra.mxu0 %v2768
    %v2926 = vpop.f32.mrf.mxu0
    %v2927 = vadd.f32 0.0, %v2926
    %v2928 = vpop.f32.mrf.mxu0
    %v2929 = vadd.f32 0.0, %v2928
    %2930 = vmatmul.bf16.gmra.mxu0 %v2770
    %v2931 = vpop.f32.mrf.mxu0
    %v2932 = vadd.f32 0.0, %v2931
    %v2933 = vpop.f32.mrf.mxu0
    %v2934 = vadd.f32 0.0, %v2933
    %2935 = vmatmul.bf16.gmra.mxu0 %v2772
    %v2936 = vpop.f32.mrf.mxu0
    %v2937 = vadd.f32 0.0, %v2936
    %v2938 = vpop.f32.mrf.mxu0
    %v2939 = vadd.f32 0.0, %v2938
    %2940 = vmatmul.bf16.gmra.mxu0 %v2774
    %v2941 = vpop.f32.mrf.mxu0
    %v2942 = vadd.f32 0.0, %v2941
    %v2943 = vpop.f32.mrf.mxu0
    %v2944 = vadd.f32 0.0, %v2943
    %2945 = vmatmul.bf16.gmra.mxu0 %v2776
    %v2946 = vpop.f32.mrf.mxu0
    %v2947 = vadd.f32 0.0, %v2946
    %v2948 = vpop.f32.mrf.mxu0
    %v2949 = vadd.f32 0.0, %v2948
    %2950 = vmatmul.bf16.gmra.mxu0 %v2778
    %v2951 = vpop.f32.mrf.mxu0
    %v2952 = vadd.f32 0.0, %v2951
    %v2953 = vpop.f32.mrf.mxu0
    %v2954 = vadd.f32 0.0, %v2953
    %2955 = vmatmul.bf16.gmra.mxu0 %v2780
    %v2956 = vpop.f32.mrf.mxu0
    %v2957 = vadd.f32 0.0, %v2956
    %v2958 = vpop.f32.mrf.mxu0
    %v2959 = vadd.f32 0.0, %v2958
    %2960 = vmatmul.bf16.gmra.mxu0 %v2782
    %v2961 = vpop.f32.mrf.mxu0
    %v2962 = vadd.f32 0.0, %v2961
    %v2963 = vpop.f32.mrf.mxu0
    %v2964 = vadd.f32 0.0, %v2963
    %2965 = vmatmul.bf16.gmra.mxu0 %v2784
    %v2966 = vpop.f32.mrf.mxu0
    %v2967 = vadd.f32 0.0, %v2966
    %v2968 = vpop.f32.mrf.mxu0
    %v2969 = vadd.f32 0.0, %v2968
    %2970 = vmatmul.bf16.gmra.mxu0 %v2786
    %v2971 = vpop.f32.mrf.mxu0
    %v2972 = vadd.f32 0.0, %v2971
    %v2973 = vpop.f32.mrf.mxu0
    %v2974 = vadd.f32 0.0, %v2973
    %2975 = vmatmul.bf16.gmra.mxu0 %v2788
    %v2976 = vpop.f32.mrf.mxu0
    %v2977 = vadd.f32 0.0, %v2976
    %v2978 = vpop.f32.mrf.mxu0
    %v2979 = vadd.f32 0.0, %v2978
    %2980 = vmatmul.bf16.gmra.mxu0 %v2790
    %v2981 = vpop.f32.mrf.mxu0
    %v2982 = vadd.f32 0.0, %v2981
    %v2983 = vpop.f32.mrf.mxu0
    %v2984 = vadd.f32 0.0, %v2983
    %2985 = vmatmul.bf16.gmra.mxu0 %v2792
    %v2986 = vpop.f32.mrf.mxu0
    %v2987 = vadd.f32 0.0, %v2986
    %v2988 = vpop.f32.mrf.mxu0
    %v2989 = vadd.f32 0.0, %v2988
    %2990 = vmatmul.bf16.gmra.mxu0 %v2794
    %v2991 = vpop.f32.mrf.mxu0
    %v2992 = vadd.f32 0.0, %v2991
    %v2993 = vpop.f32.mrf.mxu0
    %v2994 = vadd.f32 0.0, %v2993
    %2995 = vmatmul.bf16.gmra.mxu0 %v2796
    %v2996 = vpop.f32.mrf.mxu0
    %v2997 = vadd.f32 0.0, %v2996
    %v2998 = vpop.f32.mrf.mxu0
    %v2999 = vadd.f32 0.0, %v2998
    %3000 = vmatmul.bf16.gmra.mxu0 %v2798
    %v3001 = vpop.f32.mrf.mxu0
    %v3002 = vadd.f32 0.0, %v3001
    %v3003 = vpop.f32.mrf.mxu0
    %v3004 = vadd.f32 0.0, %v3003
    %3005 = vmatmul.bf16.gmra.mxu0 %v2800
    %v3006 = vpop.f32.mrf.mxu0
    %v3007 = vadd.f32 0.0, %v3006
    %v3008 = vpop.f32.mrf.mxu0
    %v3009 = vadd.f32 0.0, %v3008
    %3010 = vmatmul.bf16.gmra.mxu0 %v2802
    %v3011 = vpop.f32.mrf.mxu0
    %v3012 = vadd.f32 0.0, %v3011
    %v3013 = vpop.f32.mrf.mxu0
    %v3014 = vadd.f32 0.0, %v3013
    %3015 = vmatmul.bf16.gmra.mxu0 %v2804
    %v3016 = vpop.f32.mrf.mxu0
    %v3017 = vadd.f32 0.0, %v3016
    %v3018 = vpop.f32.mrf.mxu0
    %v3019 = vadd.f32 0.0, %v3018
    %3020 = vmatmul.bf16.gmra.mxu0 %v2806
    %v3021 = vpop.f32.mrf.mxu0
    %v3022 = vadd.f32 0.0, %v3021
    %v3023 = vpop.f32.mrf.mxu0
    %3024 = vdwg.mxu0
    %v3025 = vrot.slane %v2822, 1
    %v3026 = vrot.slane %v2824, 1
    %v3027 = vrot.slane %v2827, 1
    %v3028 = vrot.slane %v2829, 1
    %v3029 = vrot.slane %v2832, 1
    %v3030 = vrot.slane %v2834, 1
    %v3031 = vrot.slane %v2837, 1
    %v3032 = vrot.slane %v2839, 1
    %v3033 = vrot.slane %v2842, 1
    %v3034 = vrot.slane %v2844, 1
    %v3035 = vrot.slane %v2847, 1
    %v3036 = vrot.slane %v2849, 1
    %v3037 = vrot.slane %v2852, 1
    %v3038 = vrot.slane %v2854, 1
    %v3039 = vrot.slane %v2857, 1
    %v3040 = vrot.slane %v2859, 1
    %v3041 = vrot.slane %v2862, 1
    %v3042 = vrot.slane %v2864, 1
    %v3043 = vrot.slane %v2867, 1
    %v3044 = vrot.slane %v2869, 1
    %v3045 = vrot.slane %v2872, 1
    %v3046 = vrot.slane %v2874, 1
    %v3047 = vrot.slane %v2877, 1
    %v3048 = vrot.slane %v2879, 1
    %v3049 = vrot.slane %v2882, 1
    %v3050 = vrot.slane %v2884, 1
    %v3051 = vrot.slane %v2887, 1
    %v3052 = vrot.slane %v2889, 1
    %v3053 = vrot.slane %v2892, 1
    %v3054 = vrot.slane %v2894, 1
    %v3055 = vrot.slane %v2897, 1
    %v3056 = vrot.slane %v2899, 1
    %v3057 = vrot.slane %v2902, 1
    %v3058 = vrot.slane %v2904, 1
    %v3059 = vrot.slane %v2907, 1
    %v3060 = vrot.slane %v2909, 1
    %v3061 = vrot.slane %v2912, 1
    %v3062 = vrot.slane %v2914, 1
    %v3063 = vrot.slane %v2917, 1
    %v3064 = vrot.slane %v2919, 1
    %v3065 = vrot.slane %v2922, 1
    %v3066 = vrot.slane %v2924, 1
    %v3067 = vrot.slane %v2927, 1
    %v3068 = vrot.slane %v2929, 1
    %v3069 = vrot.slane %v2932, 1
    %v3070 = vrot.slane %v2934, 1
    %v3071 = vrot.slane %v2937, 1
    %v3072 = vrot.slane %v2939, 1
    %v3073 = vrot.slane %v2942, 1
    %v3074 = vrot.slane %v2944, 1
    %v3075 = vrot.slane %v2947, 1
    %v3076 = vrot.slane %v2949, 1
    %v3077 = vrot.slane %v2952, 1
    %v3078 = vrot.slane %v2954, 1
    %v3079 = vrot.slane %v2957, 1
    %v3080 = vrot.slane %v2959, 1
    %v3081 = vrot.slane %v2962, 1
    %v3082 = vrot.slane %v2964, 1
    %v3083 = vrot.slane %v2967, 1
    %v3084 = vrot.slane %v2969, 1
    %v3085 = vrot.slane %v2972, 1
    %v3086 = vrot.slane %v2974, 1
    %v3087 = vrot.slane %v2977, 1
    %v3088 = vrot.slane %v2979, 1
    %v3089 = vrot.slane %v2982, 1
    %v3090 = vrot.slane %v2984, 1
    %v3091 = vrot.slane %v2987, 1
    %v3092 = vrot.slane %v2989, 1
    %v3093 = vrot.slane %v2992, 1
    %v3094 = vrot.slane %v2994, 1
    %v3095 = vrot.slane %v2997, 1
    %v3096 = vrot.slane %v2999, 1
    %v3097 = vrot.slane %v3002, 1
    %v3098 = vrot.slane %v3004, 1
    %v3099 = vrot.slane %v3007, 1
    %v3100 = vrot.slane %v3009, 1
    %v3101 = vrot.slane %v3012, 1
    %v3102 = vrot.slane %v3014, 1
    %v3103 = vrot.slane %v3017, 1
    %v3104 = vrot.slane %v3019, 1
    %v3105 = vrot.slane %v3022, 1
    %v3106 = vlaneseq
    %v3107 = vshrl.u32 %v3106, 7
    %vm3108 = vcmp.lt.s32.totalorder %v3107, 7
    %v3109 = vsel %vm3108, %v3104, %v3105
    %v3110 = vsel %vm3108, %v3103, %v3104
    %v3111 = vsel %vm3108, %v3102, %v3103
    %v3112 = vsel %vm3108, %v3101, %v3102
    %v3113 = vsel %vm3108, %v3100, %v3101
    %v3114 = vsel %vm3108, %v3099, %v3100
    %v3115 = vsel %vm3108, %v3098, %v3099
    %v3116 = vsel %vm3108, %v3097, %v3098
    %v3117 = vsel %vm3108, %v3096, %v3097
    %v3118 = vsel %vm3108, %v3095, %v3096
    %v3119 = vsel %vm3108, %v3094, %v3095
    %v3120 = vsel %vm3108, %v3093, %v3094
    %v3121 = vsel %vm3108, %v3092, %v3093
    %v3122 = vsel %vm3108, %v3091, %v3092
    %v3123 = vsel %vm3108, %v3090, %v3091
    %v3124 = vsel %vm3108, %v3089, %v3090
    %v3125 = vsel %vm3108, %v3088, %v3089
    %v3126 = vsel %vm3108, %v3087, %v3088
    %v3127 = vsel %vm3108, %v3086, %v3087
    %v3128 = vsel %vm3108, %v3085, %v3086
    %v3129 = vsel %vm3108, %v3084, %v3085
    %v3130 = vsel %vm3108, %v3083, %v3084
    %v3131 = vsel %vm3108, %v3082, %v3083
    %v3132 = vsel %vm3108, %v3081, %v3082
    %v3133 = vsel %vm3108, %v3080, %v3081
    %v3134 = vsel %vm3108, %v3079, %v3080
    %v3135 = vsel %vm3108, %v3078, %v3079
    %v3136 = vsel %vm3108, %v3077, %v3078
    %v3137 = vsel %vm3108, %v3076, %v3077
    %v3138 = vsel %vm3108, %v3075, %v3076
    %v3139 = vsel %vm3108, %v3074, %v3075
    %v3140 = vsel %vm3108, %v3073, %v3074
    %v3141 = vsel %vm3108, %v3072, %v3073
    %v3142 = vsel %vm3108, %v3071, %v3072
    %v3143 = vsel %vm3108, %v3070, %v3071
    %v3144 = vsel %vm3108, %v3069, %v3070
    %v3145 = vsel %vm3108, %v3068, %v3069
    %v3146 = vsel %vm3108, %v3067, %v3068
    %v3147 = vsel %vm3108, %v3066, %v3067
    %v3148 = vsel %vm3108, %v3065, %v3066
    %v3149 = vsel %vm3108, %v3064, %v3065
    %v3150 = vsel %vm3108, %v3063, %v3064
    %v3151 = vsel %vm3108, %v3062, %v3063
    %v3152 = vsel %vm3108, %v3061, %v3062
    %v3153 = vsel %vm3108, %v3060, %v3061
    %v3154 = vsel %vm3108, %v3059, %v3060
    %v3155 = vsel %vm3108, %v3058, %v3059
    %v3156 = vsel %vm3108, %v3057, %v3058
    %v3157 = vsel %vm3108, %v3056, %v3057
    %v3158 = vsel %vm3108, %v3055, %v3056
    %v3159 = vsel %vm3108, %v3054, %v3055
    %v3160 = vsel %vm3108, %v3053, %v3054
    %v3161 = vsel %vm3108, %v3052, %v3053
    %v3162 = vsel %vm3108, %v3051, %v3052
    %v3163 = vsel %vm3108, %v3050, %v3051
    %v3164 = vsel %vm3108, %v3049, %v3050
    %v3165 = vsel %vm3108, %v3048, %v3049
    %v3166 = vsel %vm3108, %v3047, %v3048
    %v3167 = vsel %vm3108, %v3046, %v3047
    %v3168 = vsel %vm3108, %v3045, %v3046
    %v3169 = vsel %vm3108, %v3044, %v3045
    %v3170 = vsel %vm3108, %v3043, %v3044
    %v3171 = vsel %vm3108, %v3042, %v3043
    %v3172 = vsel %vm3108, %v3041, %v3042
    %v3173 = vsel %vm3108, %v3040, %v3041
    %v3174 = vsel %vm3108, %v3039, %v3040
    %v3175 = vsel %vm3108, %v3038, %v3039
    %v3176 = vsel %vm3108, %v3037, %v3038
    %v3177 = vsel %vm3108, %v3036, %v3037
    %v3178 = vsel %vm3108, %v3035, %v3036
    %v3179 = vsel %vm3108, %v3034, %v3035
    %v3180 = vsel %vm3108, %v3033, %v3034
    %v3181 = vsel %vm3108, %v3032, %v3033
    %v3182 = vsel %vm3108, %v3031, %v3032
    %v3183 = vsel %vm3108, %v3030, %v3031
    %v3184 = vsel %vm3108, %v3029, %v3030
    %v3185 = vsel %vm3108, %v3028, %v3029
    %v3186 = vsel %vm3108, %v3027, %v3028
    %v3187 = vsel %vm3108, %v3026, %v3027
    %v3188 = vsel %vm3108, %v3025, %v3026
    %v3189 = vsel %vm3108, %v3105, %v3025
    %v3190 = vmax.f32 %v2822, %v3188
    %v3191 = vmax.f32 %v2824, %v3187
    %v3192 = vmax.f32 %v2827, %v3186
    %v3193 = vmax.f32 %v2829, %v3185
    %v3194 = vmax.f32 %v2832, %v3184
    %v3195 = vmax.f32 %v2834, %v3183
    %v3196 = vmax.f32 %v2837, %v3182
    %v3197 = vmax.f32 %v2839, %v3181
    %v3198 = vmax.f32 %v2842, %v3180
    %v3199 = vmax.f32 %v2844, %v3179
    %v3200 = vmax.f32 %v2847, %v3178
    %v3201 = vmax.f32 %v2849, %v3177
    %v3202 = vmax.f32 %v2852, %v3176
    %v3203 = vmax.f32 %v2854, %v3175
    %v3204 = vmax.f32 %v2857, %v3174
    %v3205 = vmax.f32 %v2859, %v3173
    %v3206 = vmax.f32 %v2862, %v3172
    %v3207 = vmax.f32 %v2864, %v3171
    %v3208 = vmax.f32 %v2867, %v3170
    %v3209 = vmax.f32 %v2869, %v3169
    %v3210 = vmax.f32 %v2872, %v3168
    %v3211 = vmax.f32 %v2874, %v3167
    %v3212 = vmax.f32 %v2877, %v3166
    %v3213 = vmax.f32 %v2879, %v3165
    %v3214 = vmax.f32 %v2882, %v3164
    %v3215 = vmax.f32 %v2884, %v3163
    %v3216 = vmax.f32 %v2887, %v3162
    %v3217 = vmax.f32 %v2889, %v3161
    %v3218 = vmax.f32 %v2892, %v3160
    %v3219 = vmax.f32 %v2894, %v3159
    %v3220 = vmax.f32 %v2897, %v3158
    %v3221 = vmax.f32 %v2899, %v3157
    %v3222 = vmax.f32 %v2902, %v3156
    %v3223 = vmax.f32 %v2904, %v3155
    %v3224 = vmax.f32 %v2907, %v3154
    %v3225 = vmax.f32 %v2909, %v3153
    %v3226 = vmax.f32 %v2912, %v3152
    %v3227 = vmax.f32 %v2914, %v3151
    %v3228 = vmax.f32 %v2917, %v3150
    %v3229 = vmax.f32 %v2919, %v3149
    %v3230 = vmax.f32 %v2922, %v3148
    %v3231 = vmax.f32 %v2924, %v3147
    %v3232 = vmax.f32 %v2927, %v3146
    %v3233 = vmax.f32 %v2929, %v3145
    %v3234 = vmax.f32 %v2932, %v3144
    %v3235 = vmax.f32 %v2934, %v3143
    %v3236 = vmax.f32 %v2937, %v3142
    %v3237 = vmax.f32 %v2939, %v3141
    %v3238 = vmax.f32 %v2942, %v3140
    %v3239 = vmax.f32 %v2944, %v3139
    %v3240 = vmax.f32 %v2947, %v3138
    %v3241 = vmax.f32 %v2949, %v3137
    %v3242 = vmax.f32 %v2952, %v3136
    %v3243 = vmax.f32 %v2954, %v3135
    %v3244 = vmax.f32 %v2957, %v3134
    %v3245 = vmax.f32 %v2959, %v3133
    %v3246 = vmax.f32 %v2962, %v3132
    %v3247 = vmax.f32 %v2964, %v3131
    %v3248 = vmax.f32 %v2967, %v3130
    %v3249 = vmax.f32 %v2969, %v3129
    %v3250 = vmax.f32 %v2972, %v3128
    %v3251 = vmax.f32 %v2974, %v3127
    %v3252 = vmax.f32 %v2977, %v3126
    %v3253 = vmax.f32 %v2979, %v3125
    %v3254 = vmax.f32 %v2982, %v3124
    %v3255 = vmax.f32 %v2984, %v3123
    %v3256 = vmax.f32 %v2987, %v3122
    %v3257 = vmax.f32 %v2989, %v3121
    %v3258 = vmax.f32 %v2992, %v3120
    %v3259 = vmax.f32 %v2994, %v3119
    %v3260 = vmax.f32 %v2997, %v3118
    %v3261 = vmax.f32 %v2999, %v3117
    %v3262 = vmax.f32 %v3002, %v3116
    %v3263 = vmax.f32 %v3004, %v3115
    %v3264 = vmax.f32 %v3007, %v3114
    %v3265 = vmax.f32 %v3009, %v3113
    %v3266 = vmax.f32 %v3012, %v3112
    %v3267 = vmax.f32 %v3014, %v3111
    %v3268 = vmax.f32 %v3017, %v3110
    %v3269 = vmax.f32 %v3019, %v3109
    %v3270 = vmax.f32 %v3022, %v3189
    %v3271 = vrot.slane %v3190, 2
    %v3272 = vrot.slane %v3191, 2
    %v3273 = vrot.slane %v3192, 2
    %v3274 = vrot.slane %v3193, 2
    %v3275 = vrot.slane %v3194, 2
    %v3276 = vrot.slane %v3195, 2
    %v3277 = vrot.slane %v3196, 2
    %v3278 = vrot.slane %v3197, 2
    %v3279 = vrot.slane %v3198, 2
    %v3280 = vrot.slane %v3199, 2
    %v3281 = vrot.slane %v3200, 2
    %v3282 = vrot.slane %v3201, 2
    %v3283 = vrot.slane %v3202, 2
    %v3284 = vrot.slane %v3203, 2
    %v3285 = vrot.slane %v3204, 2
    %v3286 = vrot.slane %v3205, 2
    %v3287 = vrot.slane %v3206, 2
    %v3288 = vrot.slane %v3207, 2
    %v3289 = vrot.slane %v3208, 2
    %v3290 = vrot.slane %v3209, 2
    %v3291 = vrot.slane %v3210, 2
    %v3292 = vrot.slane %v3211, 2
    %v3293 = vrot.slane %v3212, 2
    %v3294 = vrot.slane %v3213, 2
    %v3295 = vrot.slane %v3214, 2
    %v3296 = vrot.slane %v3215, 2
    %v3297 = vrot.slane %v3216, 2
    %v3298 = vrot.slane %v3217, 2
    %v3299 = vrot.slane %v3218, 2
    %v3300 = vrot.slane %v3219, 2
    %v3301 = vrot.slane %v3220, 2
    %v3302 = vrot.slane %v3221, 2
    %v3303 = vrot.slane %v3222, 2
    %v3304 = vrot.slane %v3223, 2
    %v3305 = vrot.slane %v3224, 2
    %v3306 = vrot.slane %v3225, 2
    %v3307 = vrot.slane %v3226, 2
    %v3308 = vrot.slane %v3227, 2
    %v3309 = vrot.slane %v3228, 2
    %v3310 = vrot.slane %v3229, 2
    %v3311 = vrot.slane %v3230, 2
    %v3312 = vrot.slane %v3231, 2
    %v3313 = vrot.slane %v3232, 2
    %v3314 = vrot.slane %v3233, 2
    %v3315 = vrot.slane %v3234, 2
    %v3316 = vrot.slane %v3235, 2
    %v3317 = vrot.slane %v3236, 2
    %v3318 = vrot.slane %v3237, 2
    %v3319 = vrot.slane %v3238, 2
    %v3320 = vrot.slane %v3239, 2
    %v3321 = vrot.slane %v3240, 2
    %v3322 = vrot.slane %v3241, 2
    %v3323 = vrot.slane %v3242, 2
    %v3324 = vrot.slane %v3243, 2
    %v3325 = vrot.slane %v3244, 2
    %v3326 = vrot.slane %v3245, 2
    %v3327 = vrot.slane %v3246, 2
    %v3328 = vrot.slane %v3247, 2
    %v3329 = vrot.slane %v3248, 2
    %v3330 = vrot.slane %v3249, 2
    %v3331 = vrot.slane %v3250, 2
    %v3332 = vrot.slane %v3251, 2
    %v3333 = vrot.slane %v3252, 2
    %v3334 = vrot.slane %v3253, 2
    %v3335 = vrot.slane %v3254, 2
    %v3336 = vrot.slane %v3255, 2
    %v3337 = vrot.slane %v3256, 2
    %v3338 = vrot.slane %v3257, 2
    %v3339 = vrot.slane %v3258, 2
    %v3340 = vrot.slane %v3259, 2
    %v3341 = vrot.slane %v3260, 2
    %v3342 = vrot.slane %v3261, 2
    %v3343 = vrot.slane %v3262, 2
    %v3344 = vrot.slane %v3263, 2
    %v3345 = vrot.slane %v3264, 2
    %v3346 = vrot.slane %v3265, 2
    %v3347 = vrot.slane %v3266, 2
    %v3348 = vrot.slane %v3267, 2
    %v3349 = vrot.slane %v3268, 2
    %v3350 = vrot.slane %v3269, 2
    %v3351 = vrot.slane %v3270, 2
    %vm3352 = vcmp.lt.s32.totalorder %v3107, 6
    %v3353 = vsel %vm3352, %v3350, %v3351
    %v3354 = vsel %vm3352, %v3349, %v3350
    %v3355 = vsel %vm3352, %v3348, %v3349
    %v3356 = vsel %vm3352, %v3347, %v3348
    %v3357 = vsel %vm3352, %v3346, %v3347
    %v3358 = vsel %vm3352, %v3345, %v3346
    %v3359 = vsel %vm3352, %v3344, %v3345
    %v3360 = vsel %vm3352, %v3343, %v3344
    %v3361 = vsel %vm3352, %v3342, %v3343
    %v3362 = vsel %vm3352, %v3341, %v3342
    %v3363 = vsel %vm3352, %v3340, %v3341
    %v3364 = vsel %vm3352, %v3339, %v3340
    %v3365 = vsel %vm3352, %v3338, %v3339
    %v3366 = vsel %vm3352, %v3337, %v3338
    %v3367 = vsel %vm3352, %v3336, %v3337
    %v3368 = vsel %vm3352, %v3335, %v3336
    %v3369 = vsel %vm3352, %v3334, %v3335
    %v3370 = vsel %vm3352, %v3333, %v3334
    %v3371 = vsel %vm3352, %v3332, %v3333
    %v3372 = vsel %vm3352, %v3331, %v3332
    %v3373 = vsel %vm3352, %v3330, %v3331
    %v3374 = vsel %vm3352, %v3329, %v3330
    %v3375 = vsel %vm3352, %v3328, %v3329
    %v3376 = vsel %vm3352, %v3327, %v3328
    %v3377 = vsel %vm3352, %v3326, %v3327
    %v3378 = vsel %vm3352, %v3325, %v3326
    %v3379 = vsel %vm3352, %v3324, %v3325
    %v3380 = vsel %vm3352, %v3323, %v3324
    %v3381 = vsel %vm3352, %v3322, %v3323
    %v3382 = vsel %vm3352, %v3321, %v3322
    %v3383 = vsel %vm3352, %v3320, %v3321
    %v3384 = vsel %vm3352, %v3319, %v3320
    %v3385 = vsel %vm3352, %v3318, %v3319
    %v3386 = vsel %vm3352, %v3317, %v3318
    %v3387 = vsel %vm3352, %v3316, %v3317
    %v3388 = vsel %vm3352, %v3315, %v3316
    %v3389 = vsel %vm3352, %v3314, %v3315
    %v3390 = vsel %vm3352, %v3313, %v3314
    %v3391 = vsel %vm3352, %v3312, %v3313
    %v3392 = vsel %vm3352, %v3311, %v3312
    %v3393 = vsel %vm3352, %v3310, %v3311
    %v3394 = vsel %vm3352, %v3309, %v3310
    %v3395 = vsel %vm3352, %v3308, %v3309
    %v3396 = vsel %vm3352, %v3307, %v3308
    %v3397 = vsel %vm3352, %v3306, %v3307
    %v3398 = vsel %vm3352, %v3305, %v3306
    %v3399 = vsel %vm3352, %v3304, %v3305
    %v3400 = vsel %vm3352, %v3303, %v3304
    %v3401 = vsel %vm3352, %v3302, %v3303
    %v3402 = vsel %vm3352, %v3301, %v3302
    %v3403 = vsel %vm3352, %v3300, %v3301
    %v3404 = vsel %vm3352, %v3299, %v3300
    %v3405 = vsel %vm3352, %v3298, %v3299
    %v3406 = vsel %vm3352, %v3297, %v3298
    %v3407 = vsel %vm3352, %v3296, %v3297
    %v3408 = vsel %vm3352, %v3295, %v3296
    %v3409 = vsel %vm3352, %v3294, %v3295
    %v3410 = vsel %vm3352, %v3293, %v3294
    %v3411 = vsel %vm3352, %v3292, %v3293
    %v3412 = vsel %vm3352, %v3291, %v3292
    %v3413 = vsel %vm3352, %v3290, %v3291
    %v3414 = vsel %vm3352, %v3289, %v3290
    %v3415 = vsel %vm3352, %v3288, %v3289
    %v3416 = vsel %vm3352, %v3287, %v3288
    %v3417 = vsel %vm3352, %v3286, %v3287
    %v3418 = vsel %vm3352, %v3285, %v3286
    %v3419 = vsel %vm3352, %v3284, %v3285
    %v3420 = vsel %vm3352, %v3283, %v3284
    %v3421 = vsel %vm3352, %v3282, %v3283
    %v3422 = vsel %vm3352, %v3281, %v3282
    %v3423 = vsel %vm3352, %v3280, %v3281
    %v3424 = vsel %vm3352, %v3279, %v3280
    %v3425 = vsel %vm3352, %v3278, %v3279
    %v3426 = vsel %vm3352, %v3277, %v3278
    %v3427 = vsel %vm3352, %v3276, %v3277
    %v3428 = vsel %vm3352, %v3275, %v3276
    %v3429 = vsel %vm3352, %v3274, %v3275
    %v3430 = vsel %vm3352, %v3273, %v3274
    %v3431 = vsel %vm3352, %v3272, %v3273
    %v3432 = vsel %vm3352, %v3271, %v3272
    %v3433 = vsel %vm3352, %v3351, %v3271
    %v3434 = vmax.f32 %v3190, %v3430
    %v3435 = vmax.f32 %v3191, %v3429
    %v3436 = vmax.f32 %v3192, %v3428
    %v3437 = vmax.f32 %v3193, %v3427
    %v3438 = vmax.f32 %v3194, %v3426
    %v3439 = vmax.f32 %v3195, %v3425
    %v3440 = vmax.f32 %v3196, %v3424
    %v3441 = vmax.f32 %v3197, %v3423
    %v3442 = vmax.f32 %v3198, %v3422
    %v3443 = vmax.f32 %v3199, %v3421
    %v3444 = vmax.f32 %v3200, %v3420
    %v3445 = vmax.f32 %v3201, %v3419
    %v3446 = vmax.f32 %v3202, %v3418
    %v3447 = vmax.f32 %v3203, %v3417
    %v3448 = vmax.f32 %v3204, %v3416
    %v3449 = vmax.f32 %v3205, %v3415
    %v3450 = vmax.f32 %v3206, %v3414
    %v3451 = vmax.f32 %v3207, %v3413
    %v3452 = vmax.f32 %v3208, %v3412
    %v3453 = vmax.f32 %v3209, %v3411
    %v3454 = vmax.f32 %v3210, %v3410
    %v3455 = vmax.f32 %v3211, %v3409
    %v3456 = vmax.f32 %v3212, %v3408
    %v3457 = vmax.f32 %v3213, %v3407
    %v3458 = vmax.f32 %v3214, %v3406
    %v3459 = vmax.f32 %v3215, %v3405
    %v3460 = vmax.f32 %v3216, %v3404
    %v3461 = vmax.f32 %v3217, %v3403
    %v3462 = vmax.f32 %v3218, %v3402
    %v3463 = vmax.f32 %v3219, %v3401
    %v3464 = vmax.f32 %v3220, %v3400
    %v3465 = vmax.f32 %v3221, %v3399
    %v3466 = vmax.f32 %v3222, %v3398
    %v3467 = vmax.f32 %v3223, %v3397
    %v3468 = vmax.f32 %v3224, %v3396
    %v3469 = vmax.f32 %v3225, %v3395
    %v3470 = vmax.f32 %v3226, %v3394
    %v3471 = vmax.f32 %v3227, %v3393
    %v3472 = vmax.f32 %v3228, %v3392
    %v3473 = vmax.f32 %v3229, %v3391
    %v3474 = vmax.f32 %v3230, %v3390
    %v3475 = vmax.f32 %v3231, %v3389
    %v3476 = vmax.f32 %v3232, %v3388
    %v3477 = vmax.f32 %v3233, %v3387
    %v3478 = vmax.f32 %v3234, %v3386
    %v3479 = vmax.f32 %v3235, %v3385
    %v3480 = vmax.f32 %v3236, %v3384
    %v3481 = vmax.f32 %v3237, %v3383
    %v3482 = vmax.f32 %v3238, %v3382
    %v3483 = vmax.f32 %v3239, %v3381
    %v3484 = vmax.f32 %v3240, %v3380
    %v3485 = vmax.f32 %v3241, %v3379
    %v3486 = vmax.f32 %v3242, %v3378
    %v3487 = vmax.f32 %v3243, %v3377
    %v3488 = vmax.f32 %v3244, %v3376
    %v3489 = vmax.f32 %v3245, %v3375
    %v3490 = vmax.f32 %v3246, %v3374
    %v3491 = vmax.f32 %v3247, %v3373
    %v3492 = vmax.f32 %v3248, %v3372
    %v3493 = vmax.f32 %v3249, %v3371
    %v3494 = vmax.f32 %v3250, %v3370
    %v3495 = vmax.f32 %v3251, %v3369
    %v3496 = vmax.f32 %v3252, %v3368
    %v3497 = vmax.f32 %v3253, %v3367
    %v3498 = vmax.f32 %v3254, %v3366
    %v3499 = vmax.f32 %v3255, %v3365
    %v3500 = vmax.f32 %v3256, %v3364
    %v3501 = vmax.f32 %v3257, %v3363
    %v3502 = vmax.f32 %v3258, %v3362
    %v3503 = vmax.f32 %v3259, %v3361
    %v3504 = vmax.f32 %v3260, %v3360
    %v3505 = vmax.f32 %v3261, %v3359
    %v3506 = vmax.f32 %v3262, %v3358
    %v3507 = vmax.f32 %v3263, %v3357
    %v3508 = vmax.f32 %v3264, %v3356
    %v3509 = vmax.f32 %v3265, %v3355
    %v3510 = vmax.f32 %v3266, %v3354
    %v3511 = vmax.f32 %v3267, %v3353
    %v3512 = vmax.f32 %v3268, %v3433
    %v3513 = vmax.f32 %v3269, %v3432
    %v3514 = vmax.f32 %v3270, %v3431
    %3515 = vst.msk [vmem:[#allocation5] sm:$0xff] %vm2124, %v3434
    %3516 = vst.msk [vmem:[#allocation5 + $0x8] sm:$0xff] %vm2124, %v3435
    %3517 = vst.msk [vmem:[#allocation5 + $0x10] sm:$0xff] %vm2124, %v3436
    %3518 = vst.msk [vmem:[#allocation5 + $0x18] sm:$0xff] %vm2124, %v3437
    %3519 = vst.msk [vmem:[#allocation5 + $0x20] sm:$0xff] %vm2124, %v3438
    %3520 = vst.msk [vmem:[#allocation5 + $0x28] sm:$0xff] %vm2124, %v3439
    %3521 = vst.msk [vmem:[#allocation5 + $0x30] sm:$0xff] %vm2124, %v3440
    %3522 = vst.msk [vmem:[#allocation5 + $0x38] sm:$0xff] %vm2124, %v3441
    %3523 = vst.msk [vmem:[#allocation5 + $0x40] sm:$0xff] %vm2124, %v3442
    %3524 = vst.msk [vmem:[#allocation5 + $0x48] sm:$0xff] %vm2124, %v3443
    %3525 = vst.msk [vmem:[#allocation5 + $0x50] sm:$0xff] %vm2124, %v3444
    %3526 = vst.msk [vmem:[#allocation5 + $0x58] sm:$0xff] %vm2124, %v3445
    %3527 = vst.msk [vmem:[#allocation5 + $0x60] sm:$0xff] %vm2124, %v3446
    %3528 = vst.msk [vmem:[#allocation5 + $0x68] sm:$0xff] %vm2124, %v3447
    %3529 = vst.msk [vmem:[#allocation5 + $0x70] sm:$0xff] %vm2124, %v3448
    %3530 = vst.msk [vmem:[#allocation5 + $0x78] sm:$0xff] %vm2124, %v3449
    %3531 = vst.msk [vmem:[#allocation5 + $0x80] sm:$0xff] %vm2124, %v3450
    %3532 = vst.msk [vmem:[#allocation5 + $0x88] sm:$0xff] %vm2124, %v3451
    %3533 = vst.msk [vmem:[#allocation5 + $0x90] sm:$0xff] %vm2124, %v3452
    %3534 = vst.msk [vmem:[#allocation5 + $0x98] sm:$0xff] %vm2124, %v3453
    %3535 = vst.msk [vmem:[#allocation5 + $0xa0] sm:$0xff] %vm2124, %v3454
    %3536 = vst.msk [vmem:[#allocation5 + $0xa8] sm:$0xff] %vm2124, %v3455
    %3537 = vst.msk [vmem:[#allocation5 + $0xb0] sm:$0xff] %vm2124, %v3456
    %3538 = vst.msk [vmem:[#allocation5 + $0xb8] sm:$0xff] %vm2124, %v3457
    %3539 = vst.msk [vmem:[#allocation5 + $0xc0] sm:$0xff] %vm2124, %v3458
    %3540 = vst.msk [vmem:[#allocation5 + $0xc8] sm:$0xff] %vm2124, %v3459
    %3541 = vst.msk [vmem:[#allocation5 + $0xd0] sm:$0xff] %vm2124, %v3460
    %3542 = vst.msk [vmem:[#allocation5 + $0xd8] sm:$0xff] %vm2124, %v3461
    %3543 = vst.msk [vmem:[#allocation5 + $0xe0] sm:$0xff] %vm2124, %v3462
    %3544 = vst.msk [vmem:[#allocation5 + $0xe8] sm:$0xff] %vm2124, %v3463
    %3545 = vst.msk [vmem:[#allocation5 + $0xf0] sm:$0xff] %vm2124, %v3464
    %3546 = vst.msk [vmem:[#allocation5 + $0xf8] sm:$0xff] %vm2124, %v3465
    %3547 = vst.msk [vmem:[#allocation5 + $0x100] sm:$0xff] %vm2124, %v3466
    %3548 = vst.msk [vmem:[#allocation5 + $0x108] sm:$0xff] %vm2124, %v3467
    %3549 = vst.msk [vmem:[#allocation5 + $0x110] sm:$0xff] %vm2124, %v3468
    %3550 = vst.msk [vmem:[#allocation5 + $0x118] sm:$0xff] %vm2124, %v3469
    %3551 = vst.msk [vmem:[#allocation5 + $0x120] sm:$0xff] %vm2124, %v3470
    %3552 = vst.msk [vmem:[#allocation5 + $0x128] sm:$0xff] %vm2124, %v3471
    %3553 = vst.msk [vmem:[#allocation5 + $0x130] sm:$0xff] %vm2124, %v3472
    %3554 = vst.msk [vmem:[#allocation5 + $0x138] sm:$0xff] %vm2124, %v3473
    %3555 = vst.msk [vmem:[#allocation5 + $0x140] sm:$0xff] %vm2124, %v3474
    %3556 = vst.msk [vmem:[#allocation5 + $0x148] sm:$0xff] %vm2124, %v3475
    %3557 = vst.msk [vmem:[#allocation5 + $0x150] sm:$0xff] %vm2124, %v3476
    %3558 = vst.msk [vmem:[#allocation5 + $0x158] sm:$0xff] %vm2124, %v3477
    %3559 = vst.msk [vmem:[#allocation5 + $0x160] sm:$0xff] %vm2124, %v3478
    %3560 = vst.msk [vmem:[#allocation5 + $0x168] sm:$0xff] %vm2124, %v3479
    %3561 = vst.msk [vmem:[#allocation5 + $0x170] sm:$0xff] %vm2124, %v3480
    %3562 = vst.msk [vmem:[#allocation5 + $0x178] sm:$0xff] %vm2124, %v3481
    %3563 = vst.msk [vmem:[#allocation5 + $0x180] sm:$0xff] %vm2124, %v3482
    %3564 = vst.msk [vmem:[#allocation5 + $0x188] sm:$0xff] %vm2124, %v3483
    %3565 = vst.msk [vmem:[#allocation5 + $0x190] sm:$0xff] %vm2124, %v3484
    %3566 = vst.msk [vmem:[#allocation5 + $0x198] sm:$0xff] %vm2124, %v3485
    %3567 = vst.msk [vmem:[#allocation5 + $0x1a0] sm:$0xff] %vm2124, %v3486
    %3568 = vst.msk [vmem:[#allocation5 + $0x1a8] sm:$0xff] %vm2124, %v3487
    %3569 = vst.msk [vmem:[#allocation5 + $0x1b0] sm:$0xff] %vm2124, %v3488
    %3570 = vst.msk [vmem:[#allocation5 + $0x1b8] sm:$0xff] %vm2124, %v3489
    %3571 = vst.msk [vmem:[#allocation5 + $0x1c0] sm:$0xff] %vm2124, %v3490
    %3572 = vst.msk [vmem:[#allocation5 + $0x1c8] sm:$0xff] %vm2124, %v3491
    %3573 = vst.msk [vmem:[#allocation5 + $0x1d0] sm:$0xff] %vm2124, %v3492
    %3574 = vst.msk [vmem:[#allocation5 + $0x1d8] sm:$0xff] %vm2124, %v3493
    %3575 = vst.msk [vmem:[#allocation5 + $0x1e0] sm:$0xff] %vm2124, %v3494
    %3576 = vst.msk [vmem:[#allocation5 + $0x1e8] sm:$0xff] %vm2124, %v3495
    %3577 = vst.msk [vmem:[#allocation5 + $0x1f0] sm:$0xff] %vm2124, %v3496
    %3578 = vst.msk [vmem:[#allocation5 + $0x1f8] sm:$0xff] %vm2124, %v3497
    %3579 = vst.msk [vmem:[#allocation5 + $0x200] sm:$0xff] %vm2124, %v3498
    %3580 = vst.msk [vmem:[#allocation5 + $0x208] sm:$0xff] %vm2124, %v3499
    %3581 = vst.msk [vmem:[#allocation5 + $0x210] sm:$0xff] %vm2124, %v3500
    %3582 = vst.msk [vmem:[#allocation5 + $0x218] sm:$0xff] %vm2124, %v3501
    %3583 = vst.msk [vmem:[#allocation5 + $0x220] sm:$0xff] %vm2124, %v3502
    %3584 = vst.msk [vmem:[#allocation5 + $0x228] sm:$0xff] %vm2124, %v3503
    %3585 = vst.msk [vmem:[#allocation5 + $0x230] sm:$0xff] %vm2124, %v3504
    %3586 = vst.msk [vmem:[#allocation5 + $0x238] sm:$0xff] %vm2124, %v3505
    %3587 = vst.msk [vmem:[#allocation5 + $0x240] sm:$0xff] %vm2124, %v3506
    %3588 = vst.msk [vmem:[#allocation5 + $0x248] sm:$0xff] %vm2124, %v3507
    %3589 = vst.msk [vmem:[#allocation5 + $0x250] sm:$0xff] %vm2124, %v3508
    %3590 = vst.msk [vmem:[#allocation5 + $0x258] sm:$0xff] %vm2124, %v3509
    %3591 = vst.msk [vmem:[#allocation5 + $0x260] sm:$0xff] %vm2124, %v3510
    %3592 = vst.msk [vmem:[#allocation5 + $0x268] sm:$0xff] %vm2124, %v3511
    %3593 = vst.msk [vmem:[#allocation5 + $0x270] sm:$0xff] %vm2124, %v3512
    %3594 = vst.msk [vmem:[#allocation5 + $0x278] sm:$0xff] %vm2124, %v3513
    %3595 = vst.msk [vmem:[#allocation5 + $0x280] sm:$0xff] %vm2124, %v3514
    %s3596 = scalar_lea.vmem [#allocation5], 19
    %v3597 = vld [vmem:[%s3596] ss:$2 sm:$0xff]
    %s3598 = scalar_lea.vmem [#allocation5], 55
    %v3599 = vld [vmem:[%s3598] ss:$2 sm:$0xff]
    %s3600 = scalar_lea.vmem [#allocation5], 91
    %v3601 = vld [vmem:[%s3600] ss:$2 sm:$0xff]
    %s3602 = scalar_lea.vmem [#allocation5], 127
    %v3603 = vld [vmem:[%s3602] ss:$2 sm:$0xff]
    %s3604 = scalar_lea.vmem [#allocation5], 163
    %v3605 = vld [vmem:[%s3604] ss:$2 sm:$0xff]
    %s3606 = scalar_lea.vmem [#allocation5], 199
    %v3607 = vld [vmem:[%s3606] ss:$2 sm:$0xff]
    %s3608 = scalar_lea.vmem [#allocation5], 235
    %v3609 = vld [vmem:[%s3608] ss:$2 sm:$0xff]
    %s3610 = scalar_lea.vmem [#allocation5], 271
    %v3611 = vld [vmem:[%s3610] ss:$2 sm:$0xff]
    %s3612 = scalar_lea.vmem [#allocation5], 343
    %v3613 = vld [vmem:[%s3612] ss:$2 sm:$0xff]
    %s3614 = scalar_lea.vmem [#allocation5], 379
    %v3615 = vld [vmem:[%s3614] ss:$2 sm:$0xff]
    %s3616 = scalar_lea.vmem [#allocation5], 415
    %v3617 = vld [vmem:[%s3616] ss:$2 sm:$0xff]
    %s3618 = scalar_lea.vmem [#allocation5], 451
    %v3619 = vld [vmem:[%s3618] ss:$2 sm:$0xff]
    %s3620 = scalar_lea.vmem [#allocation5], 487
    %v3621 = vld [vmem:[%s3620] ss:$2 sm:$0xff]
    %s3622 = scalar_lea.vmem [#allocation5], 523
    %v3623 = vld [vmem:[%s3622] ss:$2 sm:$0xff]
    %s3624 = scalar_lea.vmem [#allocation5], 559
    %v3625 = vld [vmem:[%s3624] ss:$2 sm:$0xff]
    %s3626 = scalar_lea.vmem [#allocation5], 595
    %v3627 = vld [vmem:[%s3626] ss:$2 sm:$0xff]
    %v3628 = vsel %vm2124, %v3597, 0.0
    %v3629 = vsel %vm2124, %v3599, 0.0
    %v3630 = vadd.f32 %v3628, %v3629
    %v3631 = vsel %vm2124, %v3601, 0.0
    %v3632 = vadd.f32 %v3630, %v3631
    %v3633 = vsel %vm2124, %v3603, 0.0
    %v3634 = vadd.f32 %v3632, %v3633
    %v3635 = vsel %vm2124, %v3605, 0.0
    %v3636 = vadd.f32 %v3634, %v3635
    %v3637 = vsel %vm2124, %v3607, 0.0
    %v3638 = vadd.f32 %v3636, %v3637
    %v3639 = vsel %vm2124, %v3609, 0.0
    %v3640 = vadd.f32 %v3638, %v3639
    %v3641 = vsel %vm2124, %v3611, 0.0
    %v3642 = vadd.f32 %v3640, %v3641
    %v3643 = vsel %vm2124, %v3613, 0.0
    %v3644 = vadd.f32 %v3642, %v3643
    %v3645 = vsel %vm2124, %v3615, 0.0
    %v3646 = vadd.f32 %v3644, %v3645
    %v3647 = vsel %vm2124, %v3617, 0.0
    %v3648 = vadd.f32 %v3646, %v3647
    %v3649 = vsel %vm2124, %v3619, 0.0
    %v3650 = vadd.f32 %v3648, %v3649
    %v3651 = vsel %vm2124, %v3621, 0.0
    %v3652 = vadd.f32 %v3650, %v3651
    %v3653 = vsel %vm2124, %v3623, 0.0
    %v3654 = vadd.f32 %v3652, %v3653
    %v3655 = vsel %vm2124, %v3625, 0.0
    %v3656 = vadd.f32 %v3654, %v3655
    %v3657 = vsel %vm2124, %v3627, 0.0
    %v3658 = vadd.f32 %v3656, %v3657
    %v3659 = vrot.slane %v3658, 4
    %v3660 = vadd.f32 %v3658, %v3659
    %v3661 = vrot.slane %v3660, 2
    %v3662 = vadd.f32 %v3660, %v3661
    %v3663 = vrot.slane %v3662, 1
    %v3664 = vadd.f32 %v3662, %v3663
    %v3665 = vrcp.pop 128.0
    %v3666 = vmul.f32 128.0, %v3665
    %v3667 = vsub.f32 1.0, %v3666
    %v3668 = vmul.f32 %v3665, %v3667
    %v3669 = vadd.f32 %v3665, %v3668
    %vm3670 = vweird.f32 %v3665
    %v3671 = vsel %vm3670, %v3665, %v3669
    %v3672 = vmul.f32 %v3664, %v3671
    %v3673 = vsub.f32 %v3597, %v3672
    %v3674 = vsub.f32 %v3599, %v3672
    %v3675 = vsub.f32 %v3601, %v3672
    %v3676 = vsub.f32 %v3603, %v3672
    %v3677 = vsub.f32 %v3605, %v3672
    %v3678 = vsub.f32 %v3607, %v3672
    %v3679 = vsub.f32 %v3609, %v3672
    %v3680 = vsub.f32 %v3611, %v3672
    %v3681 = vsub.f32 %v3613, %v3672
    %v3682 = vsub.f32 %v3615, %v3672
    %v3683 = vsub.f32 %v3617, %v3672
    %v3684 = vsub.f32 %v3619, %v3672
    %v3685 = vsub.f32 %v3621, %v3672
    %v3686 = vsub.f32 %v3623, %v3672
    %v3687 = vsub.f32 %v3625, %v3672
    %v3688 = vsub.f32 %v3627, %v3672
    %v3689 = vmul.f32 %v3673, %v3673
    %v3690 = vmul.f32 %v3674, %v3674
    %v3691 = vmul.f32 %v3675, %v3675
    %v3692 = vmul.f32 %v3676, %v3676
    %v3693 = vmul.f32 %v3677, %v3677
    %v3694 = vmul.f32 %v3678, %v3678
    %v3695 = vmul.f32 %v3679, %v3679
    %v3696 = vmul.f32 %v3680, %v3680
    %v3697 = vmul.f32 %v3681, %v3681
    %v3698 = vmul.f32 %v3682, %v3682
    %v3699 = vmul.f32 %v3683, %v3683
    %v3700 = vmul.f32 %v3684, %v3684
    %v3701 = vmul.f32 %v3685, %v3685
    %v3702 = vmul.f32 %v3686, %v3686
    %v3703 = vmul.f32 %v3687, %v3687
    %v3704 = vmul.f32 %v3688, %v3688
    %v3705 = vsel %vm2124, %v3689, 0.0
    %v3706 = vsel %vm2124, %v3690, 0.0
    %v3707 = vadd.f32 %v3705, %v3706
    %v3708 = vsel %vm2124, %v3691, 0.0
    %v3709 = vadd.f32 %v3707, %v3708
    %v3710 = vsel %vm2124, %v3692, 0.0
    %v3711 = vadd.f32 %v3709, %v3710
    %v3712 = vsel %vm2124, %v3693, 0.0
    %v3713 = vadd.f32 %v3711, %v3712
    %v3714 = vsel %vm2124, %v3694, 0.0
    %v3715 = vadd.f32 %v3713, %v3714
    %v3716 = vsel %vm2124, %v3695, 0.0
    %v3717 = vadd.f32 %v3715, %v3716
    %v3718 = vsel %vm2124, %v3696, 0.0
    %v3719 = vadd.f32 %v3717, %v3718
    %v3720 = vsel %vm2124, %v3697, 0.0
    %v3721 = vadd.f32 %v3719, %v3720
    %v3722 = vsel %vm2124, %v3698, 0.0
    %v3723 = vadd.f32 %v3721, %v3722
    %v3724 = vsel %vm2124, %v3699, 0.0
    %v3725 = vadd.f32 %v3723, %v3724
    %v3726 = vsel %vm2124, %v3700, 0.0
    %v3727 = vadd.f32 %v3725, %v3726
    %v3728 = vsel %vm2124, %v3701, 0.0
    %v3729 = vadd.f32 %v3727, %v3728
    %v3730 = vsel %vm2124, %v3702, 0.0
    %v3731 = vadd.f32 %v3729, %v3730
    %v3732 = vsel %vm2124, %v3703, 0.0
    %v3733 = vadd.f32 %v3731, %v3732
    %v3734 = vsel %vm2124, %v3704, 0.0
    %v3735 = vadd.f32 %v3733, %v3734
    %v3736 = vrot.slane %v3735, 4
    %v3737 = vadd.f32 %v3735, %v3736
    %v3738 = vrot.slane %v3737, 2
    %v3739 = vadd.f32 %v3737, %v3738
    %v3740 = vrot.slane %v3739, 1
    %v3741 = vadd.f32 %v3739, %v3740
    %v3742 = vmul.f32 %v3741, %v3671
    %v3743 = vld [vmem:[%s5] sm:$0x1]
    %v3744 = vadd.f32 %v3742, 1e-05
    %v3745 = vrsqrt.pop %v3744
    %v3746 = vmul.f32 %v3745, %v3744
    %v3747 = vmul.f32 %v3746, %v3745
    %v3748 = vmul.f32 0.5, %v3747
    %v3749 = vsub.f32 1.5, %v3748
    %v3750 = vmul.f32 %v3745, %v3749
    %vm3751 = vweird.f32 %v3744
    %vm3752 = vweird.f32 %v3745
    %vm3753 = vmor %vm3751, %vm3752
    %v3754 = vsel %vm3753, %v3745, %v3750
    %v3755 = vmul.f32 %v3743, %v3754
    %v3756 = vld [vmem:[%s9] sm:$0x1]
    %v3757 = vmul.f32 %v3672, %v3755
    %v3758 = vsub.f32 %v3756, %v3757
    %v3760 = vperm.slane %v3755, 0
    %v3763 = vperm.slane %v3758, 0
    %v3765 = vmul.f32 %v3597, %v3760
    %v3766 = vadd.f32 %v3765, %v3763
    %v3767 = vmax.f32 %v3766, 0.0
    %v3768 = vpack.c.bf16 %v3767, %v3767
    %v3770 = vrot.slane %v3768, 5
    %v3771 = vrot.slane %v3770, 4
    %vm3774 = vcmask 60419
    %3775 = vst.msk [vmem:[#allocation2 + $0x8] sm:$0x8] %vm3774, %v3770
    %3776 = vst.msk [vmem:[#allocation2 + $0xc] sm:$0x7] %vm80, %v3771
    %v3777 = vmul.f32 %v3599, %v3760
    %v3778 = vadd.f32 %v3777, %v3763
    %v3779 = vmax.f32 %v3778, 0.0
    %v3780 = vpack.c.bf16 %v3779, %v3779
    %3781 = vst.msk [vmem:[#allocation2 + $0x10] sm:$0xf] %vm52, %v3780
    %v3782 = vmul.f32 %v3601, %v3760
    %v3783 = vadd.f32 %v3782, %v3763
    %v3784 = vmax.f32 %v3783, 0.0
    %v3785 = vpack.c.bf16 %v3784, %v3784
    %v3787 = vrot.slane %v3785, 7
    %v3788 = vrot.slane %v3787, 4
    %vm3791 = vcmask 60417
    %3792 = vst.msk [vmem:[#allocation2 + $0x14] sm:$0xe] %vm3791, %v3787
    %vm3793 = vcmask 57344
    %3794 = vst.msk [vmem:[#allocation2 + $0x18] sm:$0x1] %vm3793, %v3788
    %v3795 = vmul.f32 %v3603, %v3760
    %v3796 = vadd.f32 %v3795, %v3763
    %v3797 = vmax.f32 %v3796, 0.0
    %v3798 = vpack.c.bf16 %v3797, %v3797
    %v3800 = vrot.slane %v3798, 6
    %v3801 = vrot.slane %v3800, 4
    %vm3804 = vcmask 60418
    %3805 = vst.msk [vmem:[#allocation2 + $0x18] sm:$0xc] %vm3804, %v3800
    %vm3806 = vcmask 58368
    %3807 = vst.msk [vmem:[#allocation2 + $0x1c] sm:$0x3] %vm3806, %v3801
    %v3808 = vmul.f32 %v3605, %v3760
    %v3809 = vadd.f32 %v3808, %v3763
    %v3810 = vmax.f32 %v3809, 0.0
    %v3811 = vpack.c.bf16 %v3810, %v3810
    %v3813 = vrot.slane %v3811, 5
    %v3814 = vrot.slane %v3813, 4
    %3817 = vst.msk [vmem:[#allocation2 + $0x1c] sm:$0x8] %vm3774, %v3813
    %3818 = vst.msk [vmem:[#allocation2 + $0x20] sm:$0x7] %vm80, %v3814
    %v3819 = vmul.f32 %v3607, %v3760
    %v3820 = vadd.f32 %v3819, %v3763
    %v3821 = vmax.f32 %v3820, 0.0
    %v3822 = vpack.c.bf16 %v3821, %v3821
    %3823 = vst.msk [vmem:[#allocation2 + $0x24] sm:$0xf] %vm52, %v3822
    %v3824 = vmul.f32 %v3609, %v3760
    %v3825 = vadd.f32 %v3824, %v3763
    %v3826 = vmax.f32 %v3825, 0.0
    %v3827 = vpack.c.bf16 %v3826, %v3826
    %v3829 = vrot.slane %v3827, 7
    %v3830 = vrot.slane %v3829, 4
    %3833 = vst.msk [vmem:[#allocation2 + $0x28] sm:$0xe] %vm3791, %v3829
    %3834 = vst.msk [vmem:[#allocation2 + $0x2c] sm:$0x1] %vm3793, %v3830
    %v3835 = vmul.f32 %v3611, %v3760
    %v3836 = vadd.f32 %v3835, %v3763
    %v3837 = vmax.f32 %v3836, 0.0
    %v3838 = vpack.c.bf16 %v3837, %v3837
    %v3840 = vrot.slane %v3838, 6
    %v3841 = vrot.slane %v3840, 4
    %3844 = vst.msk [vmem:[#allocation2 + $0x2c] sm:$0xc] %vm3804, %v3840
    %3845 = vst.msk [vmem:[#allocation2 + $0x30] sm:$0x3] %vm3806, %v3841
    %v3846 = vmul.f32 %v3613, %v3760
    %v3847 = vadd.f32 %v3846, %v3763
    %v3848 = vmax.f32 %v3847, 0.0
    %v3849 = vpack.c.bf16 %v3848, %v3848
    %v3851 = vrot.slane %v3849, 7
    %v3852 = vrot.slane %v3851, 4
    %3855 = vst.msk [vmem:[#allocation2 + $0x3c] sm:$0xe] %vm3791, %v3851
    %3856 = vst.msk [vmem:[#allocation2 + $0x40] sm:$0x1] %vm3793, %v3852
    %v3857 = vmul.f32 %v3615, %v3760
    %v3858 = vadd.f32 %v3857, %v3763
    %v3859 = vmax.f32 %v3858, 0.0
    %v3860 = vpack.c.bf16 %v3859, %v3859
    %v3862 = vrot.slane %v3860, 6
    %v3863 = vrot.slane %v3862, 4
    %3866 = vst.msk [vmem:[#allocation2 + $0x40] sm:$0xc] %vm3804, %v3862
    %3867 = vst.msk [vmem:[#allocation2 + $0x44] sm:$0x3] %vm3806, %v3863
    %v3868 = vmul.f32 %v3617, %v3760
    %v3869 = vadd.f32 %v3868, %v3763
    %v3870 = vmax.f32 %v3869, 0.0
    %v3871 = vpack.c.bf16 %v3870, %v3870
    %v3873 = vrot.slane %v3871, 5
    %v3874 = vrot.slane %v3873, 4
    %3877 = vst.msk [vmem:[#allocation2 + $0x44] sm:$0x8] %vm3774, %v3873
    %3878 = vst.msk [vmem:[#allocation2 + $0x48] sm:$0x7] %vm80, %v3874
    %v3879 = vmul.f32 %v3619, %v3760
    %v3880 = vadd.f32 %v3879, %v3763
    %v3881 = vmax.f32 %v3880, 0.0
    %v3882 = vpack.c.bf16 %v3881, %v3881
    %3883 = vst.msk [vmem:[#allocation2 + $0x4c] sm:$0xf] %vm52, %v3882
    %v3884 = vmul.f32 %v3621, %v3760
    %v3885 = vadd.f32 %v3884, %v3763
    %v3886 = vmax.f32 %v3885, 0.0
    %v3887 = vpack.c.bf16 %v3886, %v3886
    %v3889 = vrot.slane %v3887, 7
    %v3890 = vrot.slane %v3889, 4
    %3893 = vst.msk [vmem:[#allocation2 + $0x50] sm:$0xe] %vm3791, %v3889
    %3894 = vst.msk [vmem:[#allocation2 + $0x54] sm:$0x1] %vm3793, %v3890
    %v3895 = vmul.f32 %v3623, %v3760
    %v3896 = vadd.f32 %v3895, %v3763
    %v3897 = vmax.f32 %v3896, 0.0
    %v3898 = vpack.c.bf16 %v3897, %v3897
    %v3900 = vrot.slane %v3898, 6
    %v3901 = vrot.slane %v3900, 4
    %3904 = vst.msk [vmem:[#allocation2 + $0x54] sm:$0xc] %vm3804, %v3900
    %3905 = vst.msk [vmem:[#allocation2 + $0x58] sm:$0x3] %vm3806, %v3901
    %v3906 = vmul.f32 %v3625, %v3760
    %v3907 = vadd.f32 %v3906, %v3763
    %v3908 = vmax.f32 %v3907, 0.0
    %v3909 = vpack.c.bf16 %v3908, %v3908
    %v3911 = vrot.slane %v3909, 5
    %v3912 = vrot.slane %v3911, 4
    %3915 = vst.msk [vmem:[#allocation2 + $0x58] sm:$0x8] %vm3774, %v3911
    %3916 = vst.msk [vmem:[#allocation2 + $0x5c] sm:$0x7] %vm80, %v3912
    %v3917 = vmul.f32 %v3627, %v3760
    %v3918 = vadd.f32 %v3917, %v3763
    %v3919 = vmax.f32 %v3918, 0.0
    %v3920 = vpack.c.bf16 %v3919, %v3919
    %3921 = vst.msk [vmem:[#allocation2 + $0x60] sm:$0xf] %vm52, %v3920
    %v3922 = vld [vmem:[#allocation2] sm:$0xf]
    %v3923 = vld [vmem:[#allocation2 + $0x4] sm:$0xf]
    %v3924 = vld [vmem:[#allocation2 + $0x8] sm:$0xf]
    %v3925 = vld [vmem:[#allocation2 + $0xc] sm:$0xf]
    %v3926 = vld [vmem:[#allocation2 + $0x10] sm:$0xf]
    %v3927 = vld [vmem:[#allocation2 + $0x14] sm:$0xf]
    %v3928 = vld [vmem:[#allocation2 + $0x18] sm:$0xf]
    %v3929 = vld [vmem:[#allocation2 + $0x1c] sm:$0xf]
    %v3930 = vld [vmem:[#allocation2 + $0x20] sm:$0xf]
    %v3931 = vld [vmem:[#allocation2 + $0x24] sm:$0xf]
    %v3932 = vld [vmem:[#allocation2 + $0x28] sm:$0xf]
    %v3933 = vld [vmem:[#allocation2 + $0x2c] sm:$0xf]
    %v3934 = vld [vmem:[#allocation2 + $0x30] sm:$0xf]
    %v3935 = vld [vmem:[#allocation2 + $0x34] sm:$0xf]
    %v3936 = vld [vmem:[#allocation2 + $0x38] sm:$0xf]
    %v3937 = vld [vmem:[#allocation2 + $0x3c] sm:$0xf]
    %v3938 = vld [vmem:[#allocation2 + $0x40] sm:$0xf]
    %v3939 = vld [vmem:[#allocation2 + $0x44] sm:$0xf]
    %v3940 = vld [vmem:[#allocation2 + $0x48] sm:$0xf]
    %v3941 = vld [vmem:[#allocation2 + $0x4c] sm:$0xf]
    %v3942 = vld [vmem:[#allocation2 + $0x50] sm:$0xf]
    %v3943 = vld [vmem:[#allocation2 + $0x54] sm:$0xf]
    %v3944 = vld [vmem:[#allocation2 + $0x58] sm:$0xf]
    %v3945 = vld [vmem:[#allocation2 + $0x5c] sm:$0xf]
    %v3946 = vld [vmem:[#allocation2 + $0x60] sm:$0xf]
    %v3947 = vld [vmem:[#allocation2 + $0x64] sm:$0x1]
    %v3948 = vld [vmem:[#allocation2] sm:$0xe]
    %v3949 = vld [vmem:[#allocation2 + $0x4] sm:$0xe]
    %v3950 = vld [vmem:[#allocation2 + $0x64] sm:$0xf]
    %v3951 = vld [vmem:[#allocation2 + $0x68] sm:$0x1]
    %v3952 = vld [vmem:[#allocation2 + $0x68] sm:$0x3]
    %v3953 = vld [vmem:[#allocation2 + $0x4] sm:$0xc]
    %v3954 = vld [vmem:[#allocation2 + $0x8] sm:$0xc]
    %v3955 = vld [vmem:[#allocation2 + $0x68] sm:$0xf]
    %v3956 = vld [vmem:[#allocation2 + $0x6c] sm:$0x3]
    %v3957 = vld [vmem:[#allocation2 + $0x6c] sm:$0x7]
    %v3958 = vld [vmem:[#allocation2 + $0x8] sm:$0x8]
    %v3984 = vunpack.c.l.b16 %v3922
    %v3985 = vunpack.c.l.b16 %v3923
    %v3986 = vunpack.c.l.b16 %v3924
    %v3987 = vunpack.c.l.b16 %v3925
    %v3988 = vunpack.c.l.b16 %v3926
    %v3989 = vunpack.c.l.b16 %v3927
    %v3990 = vunpack.c.l.b16 %v3928
    %v3991 = vunpack.c.l.b16 %v3929
    %v3992 = vunpack.c.l.b16 %v3930
    %v3993 = vunpack.c.l.b16 %v3931
    %v3994 = vunpack.c.l.b16 %v3932
    %v3995 = vunpack.c.l.b16 %v3933
    %v3996 = vunpack.c.l.b16 %v3934
    %v3997 = vunpack.c.l.b16 %v3935
    %v3998 = vunpack.c.l.b16 %v3936
    %v3999 = vunpack.c.l.b16 %v3937
    %v4000 = vunpack.c.l.b16 %v3938
    %v4001 = vunpack.c.l.b16 %v3939
    %v4002 = vunpack.c.l.b16 %v3940
    %v4003 = vunpack.c.l.b16 %v3941
    %v4004 = vunpack.c.l.b16 %v3942
    %v4005 = vunpack.c.l.b16 %v3943
    %v4006 = vunpack.c.l.b16 %v3944
    %v4007 = vunpack.c.l.b16 %v3945
    %v4008 = vunpack.c.l.b16 %v3946
    %v4009 = vpack.c.b16 %v3985, %v3984
    %v4010 = vpack.c.b16 %v3987, %v3986
    %v4011 = vpack.c.b16 %v3989, %v3988
    %v4012 = vpack.c.b16 %v3991, %v3990
    %v4013 = vpack.c.b16 %v3993, %v3992
    %v4014 = vpack.c.b16 %v3995, %v3994
    %v4015 = vpack.c.b16 %v3997, %v3996
    %v4016 = vpack.c.b16 %v3999, %v3998
    %v4017 = vpack.c.b16 %v4001, %v4000
    %v4018 = vpack.c.b16 %v4003, %v4002
    %v4019 = vpack.c.b16 %v4005, %v4004
    %v4020 = vpack.c.b16 %v4007, %v4006
    %v4021 = vpack.c.b16 %v4008, %v4008
    %v4023 = vunpack.c.l.b16 %v3947
    %v4024 = vpack.c.b16 %v4023, %v4008
    %v4026 = vshrl.u32 %v4009, 16
    %v4028 = vshll.u32 %v4009, 16
    %v4030 = vrot.slane %v4028, 1
    %v4031 = vor.u32 %v4026, %v4030
    %v4033 = vshll.u32 %v4010, 16
    %v4035 = vrot.slane %v4033, 1
    %v4036 = vsel %vm403, %v4031, %v4035
    %v4037 = vshrl.u32 %v4010, 16
    %v4039 = vor.u32 %v4037, %v4035
    %v4041 = vshll.u32 %v4011, 16
    %v4043 = vrot.slane %v4041, 1
    %v4044 = vsel %vm403, %v4039, %v4043
    %v4045 = vshrl.u32 %v4011, 16
    %v4047 = vor.u32 %v4045, %v4043
    %v4049 = vshll.u32 %v4012, 16
    %v4051 = vrot.slane %v4049, 1
    %v4052 = vsel %vm403, %v4047, %v4051
    %v4053 = vshrl.u32 %v4012, 16
    %v4055 = vor.u32 %v4053, %v4051
    %v4057 = vshll.u32 %v4013, 16
    %v4059 = vrot.slane %v4057, 1
    %v4060 = vsel %vm403, %v4055, %v4059
    %v4061 = vshrl.u32 %v4013, 16
    %v4063 = vor.u32 %v4061, %v4059
    %v4065 = vshll.u32 %v4014, 16
    %v4067 = vrot.slane %v4065, 1
    %v4068 = vsel %vm403, %v4063, %v4067
    %v4069 = vshrl.u32 %v4014, 16
    %v4071 = vor.u32 %v4069, %v4067
    %v4073 = vshll.u32 %v4015, 16
    %v4075 = vrot.slane %v4073, 1
    %v4076 = vsel %vm403, %v4071, %v4075
    %v4077 = vshrl.u32 %v4015, 16
    %v4079 = vor.u32 %v4077, %v4075
    %v4081 = vshll.u32 %v4016, 16
    %v4083 = vrot.slane %v4081, 1
    %v4084 = vsel %vm403, %v4079, %v4083
    %v4085 = vshrl.u32 %v4016, 16
    %v4087 = vor.u32 %v4085, %v4083
    %v4089 = vshll.u32 %v4017, 16
    %v4091 = vrot.slane %v4089, 1
    %v4092 = vsel %vm403, %v4087, %v4091
    %v4093 = vshrl.u32 %v4017, 16
    %v4095 = vor.u32 %v4093, %v4091
    %v4097 = vshll.u32 %v4018, 16
    %v4099 = vrot.slane %v4097, 1
    %v4100 = vsel %vm403, %v4095, %v4099
    %v4101 = vshrl.u32 %v4018, 16
    %v4103 = vor.u32 %v4101, %v4099
    %v4105 = vshll.u32 %v4019, 16
    %v4107 = vrot.slane %v4105, 1
    %v4108 = vsel %vm403, %v4103, %v4107
    %v4109 = vshrl.u32 %v4019, 16
    %v4111 = vor.u32 %v4109, %v4107
    %v4113 = vshll.u32 %v4020, 16
    %v4115 = vrot.slane %v4113, 1
    %v4116 = vsel %vm403, %v4111, %v4115
    %v4117 = vshrl.u32 %v4020, 16
    %v4119 = vor.u32 %v4117, %v4115
    %v4121 = vshll.u32 %v4024, 16
    %v4123 = vrot.slane %v4121, 1
    %v4124 = vsel %vm403, %v4119, %v4123
    %v4125 = vshrl.u32 %v4024, 16
    %v4127 = vor.u32 %v4125, %v4123
    %4128 = vrot.lane.b32.xlu0 %v4036, 8
    %v4129 = vpop.permute.xlu0 %4128
    %4130 = vrot.lane.b32.xlu0 %v4044, 8
    %v4131 = vpop.permute.xlu0 %4130
    %4132 = vrot.lane.b32.xlu0 %v4052, 8
    %v4133 = vpop.permute.xlu0 %4132
    %4134 = vrot.lane.b32.xlu0 %v4060, 8
    %v4135 = vpop.permute.xlu0 %4134
    %4136 = vrot.lane.b32.xlu0 %v4068, 8
    %v4137 = vpop.permute.xlu0 %4136
    %4138 = vrot.lane.b32.xlu0 %v4076, 8
    %v4139 = vpop.permute.xlu0 %4138
    %4140 = vrot.lane.b32.xlu0 %v4084, 8
    %v4141 = vpop.permute.xlu0 %4140
    %4142 = vrot.lane.b32.xlu0 %v4092, 8
    %v4143 = vpop.permute.xlu0 %4142
    %4144 = vrot.lane.b32.xlu0 %v4100, 8
    %v4145 = vpop.permute.xlu0 %4144
    %4146 = vrot.lane.b32.xlu0 %v4108, 8
    %v4147 = vpop.permute.xlu0 %4146
    %4148 = vrot.lane.b32.xlu0 %v4116, 8
    %v4149 = vpop.permute.xlu0 %4148
    %4150 = vrot.lane.b32.xlu0 %v4124, 8
    %v4151 = vpop.permute.xlu0 %4150
    %4152 = vrot.lane.b32.xlu0 %v4127, 8
    %v4153 = vpop.permute.xlu0 %4152
    %v4155 = vunpack.c.l.b16 %v3948
    %v4156 = vpack.c.b16 %v3985, %v4155
    %v4157 = vrot.slane %v4156, 1
    %v4158 = vrot.slane %v4010, 1
    %v4159 = vsel %vm816, %v4157, %v4158
    %v4160 = vrot.slane %v4011, 1
    %v4161 = vsel %vm816, %v4158, %v4160
    %v4162 = vrot.slane %v4012, 1
    %v4163 = vsel %vm816, %v4160, %v4162
    %v4164 = vrot.slane %v4013, 1
    %v4165 = vsel %vm816, %v4162, %v4164
    %v4166 = vrot.slane %v4014, 1
    %v4167 = vsel %vm816, %v4164, %v4166
    %v4168 = vrot.slane %v4015, 1
    %v4169 = vsel %vm816, %v4166, %v4168
    %v4170 = vrot.slane %v4016, 1
    %v4171 = vsel %vm816, %v4168, %v4170
    %v4172 = vrot.slane %v4017, 1
    %v4173 = vsel %vm816, %v4170, %v4172
    %v4174 = vrot.slane %v4018, 1
    %v4175 = vsel %vm816, %v4172, %v4174
    %v4176 = vrot.slane %v4019, 1
    %v4177 = vsel %vm816, %v4174, %v4176
    %v4178 = vrot.slane %v4020, 1
    %v4179 = vsel %vm816, %v4176, %v4178
    %v4180 = vrot.slane %v4024, 1
    %v4181 = vsel %vm816, %v4178, %v4180
    %4182 = vrot.lane.b32.xlu0 %v4159, 16
    %v4183 = vpop.permute.xlu0 %4182
    %4184 = vrot.lane.b32.xlu0 %v4161, 16
    %v4185 = vpop.permute.xlu0 %4184
    %4186 = vrot.lane.b32.xlu0 %v4163, 16
    %v4187 = vpop.permute.xlu0 %4186
    %4188 = vrot.lane.b32.xlu0 %v4165, 16
    %v4189 = vpop.permute.xlu0 %4188
    %4190 = vrot.lane.b32.xlu0 %v4167, 16
    %v4191 = vpop.permute.xlu0 %4190
    %4192 = vrot.lane.b32.xlu0 %v4169, 16
    %v4193 = vpop.permute.xlu0 %4192
    %4194 = vrot.lane.b32.xlu0 %v4171, 16
    %v4195 = vpop.permute.xlu0 %4194
    %4196 = vrot.lane.b32.xlu0 %v4173, 16
    %v4197 = vpop.permute.xlu0 %4196
    %4198 = vrot.lane.b32.xlu0 %v4175, 16
    %v4199 = vpop.permute.xlu0 %4198
    %4200 = vrot.lane.b32.xlu0 %v4177, 16
    %v4201 = vpop.permute.xlu0 %4200
    %4202 = vrot.lane.b32.xlu0 %v4179, 16
    %v4203 = vpop.permute.xlu0 %4202
    %4204 = vrot.lane.b32.xlu0 %v4181, 16
    %v4205 = vpop.permute.xlu0 %4204
    %4206 = vrot.lane.b32.xlu0 %v4180, 16
    %v4207 = vpop.permute.xlu0 %4206
    %v4211 = vunpack.c.l.b16 %v3949
    %v4212 = vunpack.c.l.b16 %v3950
    %v4213 = vunpack.c.l.b16 %v3951
    %v4214 = vpack.c.b16 %v3986, %v4211
    %v4215 = vpack.c.b16 %v3988, %v3987
    %v4216 = vpack.c.b16 %v3990, %v3989
    %v4217 = vpack.c.b16 %v3992, %v3991
    %v4218 = vpack.c.b16 %v3994, %v3993
    %v4219 = vpack.c.b16 %v3996, %v3995
    %v4220 = vpack.c.b16 %v3998, %v3997
    %v4221 = vpack.c.b16 %v4000, %v3999
    %v4222 = vpack.c.b16 %v4002, %v4001
    %v4223 = vpack.c.b16 %v4004, %v4003
    %v4224 = vpack.c.b16 %v4006, %v4005
    %v4225 = vpack.c.b16 %v4008, %v4007
    %v4226 = vpack.c.b16 %v4213, %v4212
    %v4227 = vrot.slane %v4214, 1
    %v4228 = vrot.slane %v4215, 1
    %v4229 = vsel %vm816, %v4227, %v4228
    %v4230 = vrot.slane %v4216, 1
    %v4231 = vsel %vm816, %v4228, %v4230
    %v4232 = vrot.slane %v4217, 1
    %v4233 = vsel %vm816, %v4230, %v4232
    %v4234 = vrot.slane %v4218, 1
    %v4235 = vsel %vm816, %v4232, %v4234
    %v4236 = vrot.slane %v4219, 1
    %v4237 = vsel %vm816, %v4234, %v4236
    %v4238 = vrot.slane %v4220, 1
    %v4239 = vsel %vm816, %v4236, %v4238
    %v4240 = vrot.slane %v4221, 1
    %v4241 = vsel %vm816, %v4238, %v4240
    %v4242 = vrot.slane %v4222, 1
    %v4243 = vsel %vm816, %v4240, %v4242
    %v4244 = vrot.slane %v4223, 1
    %v4245 = vsel %vm816, %v4242, %v4244
    %v4246 = vrot.slane %v4224, 1
    %v4247 = vsel %vm816, %v4244, %v4246
    %v4248 = vrot.slane %v4225, 1
    %v4249 = vsel %vm816, %v4246, %v4248
    %v4250 = vrot.slane %v4226, 1
    %v4251 = vsel %vm816, %v4248, %v4250
    %4252 = vrot.lane.b32.xlu0 %v4229, 24
    %v4253 = vpop.permute.xlu0 %4252
    %4254 = vrot.lane.b32.xlu0 %v4231, 24
    %v4255 = vpop.permute.xlu0 %4254
    %4256 = vrot.lane.b32.xlu0 %v4233, 24
    %v4257 = vpop.permute.xlu0 %4256
    %4258 = vrot.lane.b32.xlu0 %v4235, 24
    %v4259 = vpop.permute.xlu0 %4258
    %4260 = vrot.lane.b32.xlu0 %v4237, 24
    %v4261 = vpop.permute.xlu0 %4260
    %4262 = vrot.lane.b32.xlu0 %v4239, 24
    %v4263 = vpop.permute.xlu0 %4262
    %4264 = vrot.lane.b32.xlu0 %v4241, 24
    %v4265 = vpop.permute.xlu0 %4264
    %4266 = vrot.lane.b32.xlu0 %v4243, 24
    %v4267 = vpop.permute.xlu0 %4266
    %4268 = vrot.lane.b32.xlu0 %v4245, 24
    %v4269 = vpop.permute.xlu0 %4268
    %4270 = vrot.lane.b32.xlu0 %v4247, 24
    %v4271 = vpop.permute.xlu0 %4270
    %4272 = vrot.lane.b32.xlu0 %v4249, 24
    %v4273 = vpop.permute.xlu0 %4272
    %4274 = vrot.lane.b32.xlu0 %v4251, 24
    %v4275 = vpop.permute.xlu0 %4274
    %4276 = vrot.lane.b32.xlu0 %v4250, 24
    %v4277 = vpop.permute.xlu0 %4276
    %v4279 = vunpack.c.l.b16 %v3952
    %v4280 = vpack.c.b16 %v4279, %v4212
    %v4282 = vshrl.u32 %v4214, 16
    %v4284 = vrot.slane %v4282, 1
    %v4285 = vshll.u32 %v4214, 16
    %v4287 = vrot.slane %v4285, 2
    %v4288 = vor.u32 %v4284, %v4287
    %v4290 = vshrl.u32 %v4215, 16
    %v4292 = vrot.slane %v4290, 1
    %v4293 = vshll.u32 %v4215, 16
    %v4295 = vrot.slane %v4293, 2
    %v4296 = vor.u32 %v4292, %v4295
    %v4297 = vsel %vm1082, %v4288, %v4296
    %v4299 = vshrl.u32 %v4216, 16
    %v4301 = vrot.slane %v4299, 1
    %v4302 = vshll.u32 %v4216, 16
    %v4304 = vrot.slane %v4302, 2
    %v4305 = vor.u32 %v4301, %v4304
    %v4306 = vsel %vm1082, %v4296, %v4305
    %v4308 = vshrl.u32 %v4217, 16
    %v4310 = vrot.slane %v4308, 1
    %v4311 = vshll.u32 %v4217, 16
    %v4313 = vrot.slane %v4311, 2
    %v4314 = vor.u32 %v4310, %v4313
    %v4315 = vsel %vm1082, %v4305, %v4314
    %v4317 = vshrl.u32 %v4218, 16
    %v4319 = vrot.slane %v4317, 1
    %v4320 = vshll.u32 %v4218, 16
    %v4322 = vrot.slane %v4320, 2
    %v4323 = vor.u32 %v4319, %v4322
    %v4324 = vsel %vm1082, %v4314, %v4323
    %v4326 = vshrl.u32 %v4219, 16
    %v4328 = vrot.slane %v4326, 1
    %v4329 = vshll.u32 %v4219, 16
    %v4331 = vrot.slane %v4329, 2
    %v4332 = vor.u32 %v4328, %v4331
    %v4333 = vsel %vm1082, %v4323, %v4332
    %v4335 = vshrl.u32 %v4220, 16
    %v4337 = vrot.slane %v4335, 1
    %v4338 = vshll.u32 %v4220, 16
    %v4340 = vrot.slane %v4338, 2
    %v4341 = vor.u32 %v4337, %v4340
    %v4342 = vsel %vm1082, %v4332, %v4341
    %v4344 = vshrl.u32 %v4221, 16
    %v4346 = vrot.slane %v4344, 1
    %v4347 = vshll.u32 %v4221, 16
    %v4349 = vrot.slane %v4347, 2
    %v4350 = vor.u32 %v4346, %v4349
    %v4351 = vsel %vm1082, %v4341, %v4350
    %v4353 = vshrl.u32 %v4222, 16
    %v4355 = vrot.slane %v4353, 1
    %v4356 = vshll.u32 %v4222, 16
    %v4358 = vrot.slane %v4356, 2
    %v4359 = vor.u32 %v4355, %v4358
    %v4360 = vsel %vm1082, %v4350, %v4359
    %v4362 = vshrl.u32 %v4223, 16
    %v4364 = vrot.slane %v4362, 1
    %v4365 = vshll.u32 %v4223, 16
    %v4367 = vrot.slane %v4365, 2
    %v4368 = vor.u32 %v4364, %v4367
    %v4369 = vsel %vm1082, %v4359, %v4368
    %v4371 = vshrl.u32 %v4224, 16
    %v4373 = vrot.slane %v4371, 1
    %v4374 = vshll.u32 %v4224, 16
    %v4376 = vrot.slane %v4374, 2
    %v4377 = vor.u32 %v4373, %v4376
    %v4378 = vsel %vm1082, %v4368, %v4377
    %v4380 = vshrl.u32 %v4225, 16
    %v4382 = vrot.slane %v4380, 1
    %v4383 = vshll.u32 %v4225, 16
    %v4385 = vrot.slane %v4383, 2
    %v4386 = vor.u32 %v4382, %v4385
    %v4387 = vsel %vm1082, %v4377, %v4386
    %v4389 = vshrl.u32 %v4280, 16
    %v4391 = vrot.slane %v4389, 1
    %v4392 = vshll.u32 %v4280, 16
    %v4394 = vrot.slane %v4392, 2
    %v4395 = vor.u32 %v4391, %v4394
    %v4396 = vsel %vm1082, %v4386, %v4395
    %4397 = vrot.lane.b32.xlu0 %v4297, 32
    %v4398 = vpop.permute.xlu0 %4397
    %4399 = vrot.lane.b32.xlu0 %v4306, 32
    %v4400 = vpop.permute.xlu0 %4399
    %4401 = vrot.lane.b32.xlu0 %v4315, 32
    %v4402 = vpop.permute.xlu0 %4401
    %4403 = vrot.lane.b32.xlu0 %v4324, 32
    %v4404 = vpop.permute.xlu0 %4403
    %4405 = vrot.lane.b32.xlu0 %v4333, 32
    %v4406 = vpop.permute.xlu0 %4405
    %4407 = vrot.lane.b32.xlu0 %v4342, 32
    %v4408 = vpop.permute.xlu0 %4407
    %4409 = vrot.lane.b32.xlu0 %v4351, 32
    %v4410 = vpop.permute.xlu0 %4409
    %4411 = vrot.lane.b32.xlu0 %v4360, 32
    %v4412 = vpop.permute.xlu0 %4411
    %4413 = vrot.lane.b32.xlu0 %v4369, 32
    %v4414 = vpop.permute.xlu0 %4413
    %4415 = vrot.lane.b32.xlu0 %v4378, 32
    %v4416 = vpop.permute.xlu0 %4415
    %4417 = vrot.lane.b32.xlu0 %v4387, 32
    %v4418 = vpop.permute.xlu0 %4417
    %4419 = vrot.lane.b32.xlu0 %v4396, 32
    %v4420 = vpop.permute.xlu0 %4419
    %4421 = vrot.lane.b32.xlu0 %v4395, 32
    %v4422 = vpop.permute.xlu0 %4421
    %v4424 = vunpack.c.l.b16 %v3953
    %v4425 = vpack.c.b16 %v3986, %v4424
    %v4426 = vrot.slane %v4425, 2
    %v4427 = vrot.slane %v4215, 2
    %v4428 = vsel %vm1346, %v4426, %v4427
    %v4429 = vrot.slane %v4216, 2
    %v4430 = vsel %vm1346, %v4427, %v4429
    %v4431 = vrot.slane %v4217, 2
    %v4432 = vsel %vm1346, %v4429, %v4431
    %v4433 = vrot.slane %v4218, 2
    %v4434 = vsel %vm1346, %v4431, %v4433
    %v4435 = vrot.slane %v4219, 2
    %v4436 = vsel %vm1346, %v4433, %v4435
    %v4437 = vrot.slane %v4220, 2
    %v4438 = vsel %vm1346, %v4435, %v4437
    %v4439 = vrot.slane %v4221, 2
    %v4440 = vsel %vm1346, %v4437, %v4439
    %v4441 = vrot.slane %v4222, 2
    %v4442 = vsel %vm1346, %v4439, %v4441
    %v4443 = vrot.slane %v4223, 2
    %v4444 = vsel %vm1346, %v4441, %v4443
    %v4445 = vrot.slane %v4224, 2
    %v4446 = vsel %vm1346, %v4443, %v4445
    %v4447 = vrot.slane %v4225, 2
    %v4448 = vsel %vm1346, %v4445, %v4447
    %v4449 = vrot.slane %v4280, 2
    %v4450 = vsel %vm1346, %v4447, %v4449
    %4451 = vrot.lane.b32.xlu0 %v4428, 40
    %v4452 = vpop.permute.xlu0 %4451
    %4453 = vrot.lane.b32.xlu0 %v4430, 40
    %v4454 = vpop.permute.xlu0 %4453
    %4455 = vrot.lane.b32.xlu0 %v4432, 40
    %v4456 = vpop.permute.xlu0 %4455
    %4457 = vrot.lane.b32.xlu0 %v4434, 40
    %v4458 = vpop.permute.xlu0 %4457
    %4459 = vrot.lane.b32.xlu0 %v4436, 40
    %v4460 = vpop.permute.xlu0 %4459
    %4461 = vrot.lane.b32.xlu0 %v4438, 40
    %v4462 = vpop.permute.xlu0 %4461
    %4463 = vrot.lane.b32.xlu0 %v4440, 40
    %v4464 = vpop.permute.xlu0 %4463
    %4465 = vrot.lane.b32.xlu0 %v4442, 40
    %v4466 = vpop.permute.xlu0 %4465
    %4467 = vrot.lane.b32.xlu0 %v4444, 40
    %v4468 = vpop.permute.xlu0 %4467
    %4469 = vrot.lane.b32.xlu0 %v4446, 40
    %v4470 = vpop.permute.xlu0 %4469
    %4471 = vrot.lane.b32.xlu0 %v4448, 40
    %v4472 = vpop.permute.xlu0 %4471
    %4473 = vrot.lane.b32.xlu0 %v4450, 40
    %v4474 = vpop.permute.xlu0 %4473
    %4475 = vrot.lane.b32.xlu0 %v4449, 40
    %v4476 = vpop.permute.xlu0 %4475
    %v4480 = vunpack.c.l.b16 %v3954
    %v4481 = vunpack.c.l.b16 %v3955
    %v4482 = vunpack.c.l.b16 %v3956
    %v4483 = vpack.c.b16 %v3987, %v4480
    %v4484 = vpack.c.b16 %v4212, %v4008
    %v4485 = vpack.c.b16 %v4482, %v4481
    %v4486 = vrot.slane %v4483, 2
    %v4487 = vrot.slane %v4011, 2
    %v4488 = vsel %vm1346, %v4486, %v4487
    %v4489 = vrot.slane %v4012, 2
    %v4490 = vsel %vm1346, %v4487, %v4489
    %v4491 = vrot.slane %v4013, 2
    %v4492 = vsel %vm1346, %v4489, %v4491
    %v4493 = vrot.slane %v4014, 2
    %v4494 = vsel %vm1346, %v4491, %v4493
    %v4495 = vrot.slane %v4015, 2
    %v4496 = vsel %vm1346, %v4493, %v4495
    %v4497 = vrot.slane %v4016, 2
    %v4498 = vsel %vm1346, %v4495, %v4497
    %v4499 = vrot.slane %v4017, 2
    %v4500 = vsel %vm1346, %v4497, %v4499
    %v4501 = vrot.slane %v4018, 2
    %v4502 = vsel %vm1346, %v4499, %v4501
    %v4503 = vrot.slane %v4019, 2
    %v4504 = vsel %vm1346, %v4501, %v4503
    %v4505 = vrot.slane %v4020, 2
    %v4506 = vsel %vm1346, %v4503, %v4505
    %v4507 = vrot.slane %v4484, 2
    %v4508 = vsel %vm1346, %v4505, %v4507
    %v4509 = vrot.slane %v4485, 2
    %v4510 = vsel %vm1346, %v4507, %v4509
    %4511 = vrot.lane.b32.xlu0 %v4488, 48
    %v4512 = vpop.permute.xlu0 %4511
    %4513 = vrot.lane.b32.xlu0 %v4490, 48
    %v4514 = vpop.permute.xlu0 %4513
    %4515 = vrot.lane.b32.xlu0 %v4492, 48
    %v4516 = vpop.permute.xlu0 %4515
    %4517 = vrot.lane.b32.xlu0 %v4494, 48
    %v4518 = vpop.permute.xlu0 %4517
    %4519 = vrot.lane.b32.xlu0 %v4496, 48
    %v4520 = vpop.permute.xlu0 %4519
    %4521 = vrot.lane.b32.xlu0 %v4498, 48
    %v4522 = vpop.permute.xlu0 %4521
    %4523 = vrot.lane.b32.xlu0 %v4500, 48
    %v4524 = vpop.permute.xlu0 %4523
    %4525 = vrot.lane.b32.xlu0 %v4502, 48
    %v4526 = vpop.permute.xlu0 %4525
    %4527 = vrot.lane.b32.xlu0 %v4504, 48
    %v4528 = vpop.permute.xlu0 %4527
    %4529 = vrot.lane.b32.xlu0 %v4506, 48
    %v4530 = vpop.permute.xlu0 %4529
    %4531 = vrot.lane.b32.xlu0 %v4508, 48
    %v4532 = vpop.permute.xlu0 %4531
    %4533 = vrot.lane.b32.xlu0 %v4510, 48
    %v4534 = vpop.permute.xlu0 %4533
    %4535 = vrot.lane.b32.xlu0 %v4509, 48
    %v4536 = vpop.permute.xlu0 %4535
    %v4538 = vunpack.c.l.b16 %v3957
    %v4539 = vpack.c.b16 %v4538, %v4481
    %v4541 = vshrl.u32 %v4483, 16
    %v4543 = vrot.slane %v4541, 2
    %v4544 = vshll.u32 %v4483, 16
    %v4546 = vrot.slane %v4544, 3
    %v4547 = vor.u32 %v4543, %v4546
    %v4548 = vrot.slane %v4045, 2
    %v4549 = vrot.slane %v4041, 3
    %v4550 = vor.u32 %v4548, %v4549
    %v4551 = vsel %vm1612, %v4547, %v4550
    %v4552 = vrot.slane %v4053, 2
    %v4553 = vrot.slane %v4049, 3
    %v4554 = vor.u32 %v4552, %v4553
    %v4555 = vsel %vm1612, %v4550, %v4554
    %v4556 = vrot.slane %v4061, 2
    %v4557 = vrot.slane %v4057, 3
    %v4558 = vor.u32 %v4556, %v4557
    %v4559 = vsel %vm1612, %v4554, %v4558
    %v4560 = vrot.slane %v4069, 2
    %v4561 = vrot.slane %v4065, 3
    %v4562 = vor.u32 %v4560, %v4561
    %v4563 = vsel %vm1612, %v4558, %v4562
    %v4564 = vrot.slane %v4077, 2
    %v4565 = vrot.slane %v4073, 3
    %v4566 = vor.u32 %v4564, %v4565
    %v4567 = vsel %vm1612, %v4562, %v4566
    %v4568 = vrot.slane %v4085, 2
    %v4569 = vrot.slane %v4081, 3
    %v4570 = vor.u32 %v4568, %v4569
    %v4571 = vsel %vm1612, %v4566, %v4570
    %v4572 = vrot.slane %v4093, 2
    %v4573 = vrot.slane %v4089, 3
    %v4574 = vor.u32 %v4572, %v4573
    %v4575 = vsel %vm1612, %v4570, %v4574
    %v4576 = vrot.slane %v4101, 2
    %v4577 = vrot.slane %v4097, 3
    %v4578 = vor.u32 %v4576, %v4577
    %v4579 = vsel %vm1612, %v4574, %v4578
    %v4580 = vrot.slane %v4109, 2
    %v4581 = vrot.slane %v4105, 3
    %v4582 = vor.u32 %v4580, %v4581
    %v4583 = vsel %vm1612, %v4578, %v4582
    %v4584 = vrot.slane %v4117, 2
    %v4585 = vrot.slane %v4113, 3
    %v4586 = vor.u32 %v4584, %v4585
    %v4587 = vsel %vm1612, %v4582, %v4586
    %v4589 = vshrl.u32 %v4484, 16
    %v4591 = vrot.slane %v4589, 2
    %v4592 = vshll.u32 %v4484, 16
    %v4594 = vrot.slane %v4592, 3
    %v4595 = vor.u32 %v4591, %v4594
    %v4596 = vsel %vm1612, %v4586, %v4595
    %v4598 = vshrl.u32 %v4539, 16
    %v4600 = vrot.slane %v4598, 2
    %v4601 = vshll.u32 %v4539, 16
    %v4603 = vrot.slane %v4601, 3
    %v4604 = vor.u32 %v4600, %v4603
    %v4605 = vsel %vm1612, %v4595, %v4604
    %4606 = vrot.lane.b32.xlu0 %v4551, 56
    %v4607 = vpop.permute.xlu0 %4606
    %4608 = vrot.lane.b32.xlu0 %v4555, 56
    %v4609 = vpop.permute.xlu0 %4608
    %4610 = vrot.lane.b32.xlu0 %v4559, 56
    %v4611 = vpop.permute.xlu0 %4610
    %4612 = vrot.lane.b32.xlu0 %v4563, 56
    %v4613 = vpop.permute.xlu0 %4612
    %4614 = vrot.lane.b32.xlu0 %v4567, 56
    %v4615 = vpop.permute.xlu0 %4614
    %4616 = vrot.lane.b32.xlu0 %v4571, 56
    %v4617 = vpop.permute.xlu0 %4616
    %4618 = vrot.lane.b32.xlu0 %v4575, 56
    %v4619 = vpop.permute.xlu0 %4618
    %4620 = vrot.lane.b32.xlu0 %v4579, 56
    %v4621 = vpop.permute.xlu0 %4620
    %4622 = vrot.lane.b32.xlu0 %v4583, 56
    %v4623 = vpop.permute.xlu0 %4622
    %4624 = vrot.lane.b32.xlu0 %v4587, 56
    %v4625 = vpop.permute.xlu0 %4624
    %4626 = vrot.lane.b32.xlu0 %v4596, 56
    %v4627 = vpop.permute.xlu0 %4626
    %4628 = vrot.lane.b32.xlu0 %v4605, 56
    %v4629 = vpop.permute.xlu0 %4628
    %4630 = vrot.lane.b32.xlu0 %v4604, 56
    %v4631 = vpop.permute.xlu0 %4630
    %v4633 = vunpack.c.l.b16 %v3958
    %v4634 = vpack.c.b16 %v3987, %v4633
    %v4635 = vrot.slane %v4634, 3
    %v4636 = vrot.slane %v4011, 3
    %v4637 = vsel %vm1876, %v4635, %v4636
    %v4638 = vrot.slane %v4012, 3
    %v4639 = vsel %vm1876, %v4636, %v4638
    %v4640 = vrot.slane %v4013, 3
    %v4641 = vsel %vm1876, %v4638, %v4640
    %v4642 = vrot.slane %v4014, 3
    %v4643 = vsel %vm1876, %v4640, %v4642
    %v4644 = vrot.slane %v4015, 3
    %v4645 = vsel %vm1876, %v4642, %v4644
    %v4646 = vrot.slane %v4016, 3
    %v4647 = vsel %vm1876, %v4644, %v4646
    %v4648 = vrot.slane %v4017, 3
    %v4649 = vsel %vm1876, %v4646, %v4648
    %v4650 = vrot.slane %v4018, 3
    %v4651 = vsel %vm1876, %v4648, %v4650
    %v4652 = vrot.slane %v4019, 3
    %v4653 = vsel %vm1876, %v4650, %v4652
    %v4654 = vrot.slane %v4020, 3
    %v4655 = vsel %vm1876, %v4652, %v4654
    %v4656 = vrot.slane %v4484, 3
    %v4657 = vsel %vm1876, %v4654, %v4656
    %v4658 = vrot.slane %v4539, 3
    %v4659 = vsel %vm1876, %v4656, %v4658
    %4660 = vrot.lane.b32.xlu0 %v4637, 64
    %v4661 = vpop.permute.xlu0 %4660
    %4662 = vrot.lane.b32.xlu0 %v4639, 64
    %v4663 = vpop.permute.xlu0 %4662
    %4664 = vrot.lane.b32.xlu0 %v4641, 64
    %v4665 = vpop.permute.xlu0 %4664
    %4666 = vrot.lane.b32.xlu0 %v4643, 64
    %v4667 = vpop.permute.xlu0 %4666
    %4668 = vrot.lane.b32.xlu0 %v4645, 64
    %v4669 = vpop.permute.xlu0 %4668
    %4670 = vrot.lane.b32.xlu0 %v4647, 64
    %v4671 = vpop.permute.xlu0 %4670
    %4672 = vrot.lane.b32.xlu0 %v4649, 64
    %v4673 = vpop.permute.xlu0 %4672
    %4674 = vrot.lane.b32.xlu0 %v4651, 64
    %v4675 = vpop.permute.xlu0 %4674
    %4676 = vrot.lane.b32.xlu0 %v4653, 64
    %v4677 = vpop.permute.xlu0 %4676
    %4678 = vrot.lane.b32.xlu0 %v4655, 64
    %v4679 = vpop.permute.xlu0 %4678
    %4680 = vrot.lane.b32.xlu0 %v4657, 64
    %v4681 = vpop.permute.xlu0 %4680
    %4682 = vrot.lane.b32.xlu0 %v4659, 64
    %v4683 = vpop.permute.xlu0 %4682
    %4684 = vrot.lane.b32.xlu0 %v4658, 64
    %v4685 = vpop.permute.xlu0 %4684
    %v4687 = vsel %vm2124, %v4009, %v4129
    %v4689 = vsel %vm2124, %v4010, %v4131
    %v4691 = vsel %vm2124, %v4011, %v4133
    %v4693 = vsel %vm2124, %v4012, %v4135
    %v4695 = vsel %vm2124, %v4013, %v4137
    %v4697 = vsel %vm2124, %v4014, %v4139
    %v4699 = vsel %vm2124, %v4015, %v4141
    %v4701 = vsel %vm2124, %v4016, %v4143
    %v4703 = vsel %vm2124, %v4017, %v4145
    %v4705 = vsel %vm2124, %v4018, %v4147
    %v4707 = vsel %vm2124, %v4019, %v4149
    %v4709 = vsel %vm2124, %v4020, %v4151
    %v4712 = vsel %vm2124, %v4021, %v4153
    %v4714 = vsel %vm2290, %v4687, %v4183
    %v4716 = vsel %vm2290, %v4689, %v4185
    %v4718 = vsel %vm2290, %v4691, %v4187
    %v4720 = vsel %vm2290, %v4693, %v4189
    %v4722 = vsel %vm2290, %v4695, %v4191
    %v4724 = vsel %vm2290, %v4697, %v4193
    %v4726 = vsel %vm2290, %v4699, %v4195
    %v4728 = vsel %vm2290, %v4701, %v4197
    %v4730 = vsel %vm2290, %v4703, %v4199
    %v4732 = vsel %vm2290, %v4705, %v4201
    %v4734 = vsel %vm2290, %v4707, %v4203
    %v4736 = vsel %vm2290, %v4709, %v4205
    %v4738 = vsel %vm2290, %v4712, %v4207
    %v4740 = vsel %vm2456, %v4714, %v4253
    %v4742 = vsel %vm2456, %v4716, %v4255
    %v4744 = vsel %vm2456, %v4718, %v4257
    %v4746 = vsel %vm2456, %v4720, %v4259
    %v4748 = vsel %vm2456, %v4722, %v4261
    %v4750 = vsel %vm2456, %v4724, %v4263
    %v4752 = vsel %vm2456, %v4726, %v4265
    %v4754 = vsel %vm2456, %v4728, %v4267
    %v4756 = vsel %vm2456, %v4730, %v4269
    %v4758 = vsel %vm2456, %v4732, %v4271
    %v4760 = vsel %vm2456, %v4734, %v4273
    %v4762 = vsel %vm2456, %v4736, %v4275
    %v4764 = vsel %vm2456, %v4738, %v4277
    %v4766 = vsel %vm2622, %v4740, %v4398
    %v4768 = vsel %vm2622, %v4742, %v4400
    %v4770 = vsel %vm2622, %v4744, %v4402
    %v4772 = vsel %vm2622, %v4746, %v4404
    %v4774 = vsel %vm2622, %v4748, %v4406
    %v4776 = vsel %vm2622, %v4750, %v4408
    %v4778 = vsel %vm2622, %v4752, %v4410
    %v4780 = vsel %vm2622, %v4754, %v4412
    %v4782 = vsel %vm2622, %v4756, %v4414
    %v4784 = vsel %vm2622, %v4758, %v4416
    %v4786 = vsel %vm2622, %v4760, %v4418
    %v4788 = vsel %vm2622, %v4762, %v4420
    %v4790 = vsel %vm2622, %v4764, %v4422
    %vm4791 = vcmask 326656
    %v4793 = vsel %vm4791, %v4766, %v4452
    %v4795 = vsel %vm4791, %v4768, %v4454
    %v4797 = vsel %vm4791, %v4770, %v4456
    %v4799 = vsel %vm4791, %v4772, %v4458
    %v4801 = vsel %vm4791, %v4774, %v4460
    %v4803 = vsel %vm4791, %v4776, %v4462
    %v4805 = vsel %vm4791, %v4778, %v4464
    %v4807 = vsel %vm4791, %v4780, %v4466
    %v4809 = vsel %vm4791, %v4782, %v4468
    %v4811 = vsel %vm4791, %v4784, %v4470
    %v4813 = vsel %vm4791, %v4786, %v4472
    %v4815 = vsel %vm4791, %v4788, %v4474
    %v4817 = vsel %vm4791, %v4790, %v4476
    %vm4818 = vcmask 392192
    %v4820 = vsel %vm4818, %v4793, %v4512
    %v4822 = vsel %vm4818, %v4795, %v4514
    %v4824 = vsel %vm4818, %v4797, %v4516
    %v4826 = vsel %vm4818, %v4799, %v4518
    %v4828 = vsel %vm4818, %v4801, %v4520
    %v4830 = vsel %vm4818, %v4803, %v4522
    %v4832 = vsel %vm4818, %v4805, %v4524
    %v4834 = vsel %vm4818, %v4807, %v4526
    %v4836 = vsel %vm4818, %v4809, %v4528
    %v4838 = vsel %vm4818, %v4811, %v4530
    %v4840 = vsel %vm4818, %v4813, %v4532
    %v4842 = vsel %vm4818, %v4815, %v4534
    %v4844 = vsel %vm4818, %v4817, %v4536
    %vm4845 = vcmask 457728
    %v4847 = vsel %vm4845, %v4820, %v4607
    %v4849 = vsel %vm4845, %v4822, %v4609
    %v4851 = vsel %vm4845, %v4824, %v4611
    %v4853 = vsel %vm4845, %v4826, %v4613
    %v4855 = vsel %vm4845, %v4828, %v4615
    %v4857 = vsel %vm4845, %v4830, %v4617
    %v4859 = vsel %vm4845, %v4832, %v4619
    %v4861 = vsel %vm4845, %v4834, %v4621
    %v4863 = vsel %vm4845, %v4836, %v4623
    %v4865 = vsel %vm4845, %v4838, %v4625
    %v4867 = vsel %vm4845, %v4840, %v4627
    %v4869 = vsel %vm4845, %v4842, %v4629
    %v4871 = vsel %vm4845, %v4844, %v4631
    %vm4872 = vcmask 523264
    %v4874 = vsel %vm4872, %v4847, %v4661
    %v4876 = vsel %vm4872, %v4849, %v4663
    %v4878 = vsel %vm4872, %v4851, %v4665
    %v4880 = vsel %vm4872, %v4853, %v4667
    %v4882 = vsel %vm4872, %v4855, %v4669
    %v4884 = vsel %vm4872, %v4857, %v4671
    %v4886 = vsel %vm4872, %v4859, %v4673
    %v4888 = vsel %vm4872, %v4861, %v4675
    %v4890 = vsel %vm4872, %v4863, %v4677
    %v4892 = vsel %vm4872, %v4865, %v4679
    %v4894 = vsel %vm4872, %v4867, %v4681
    %v4896 = vsel %vm4872, %v4869, %v4683
    %v4898 = vsel %vm4872, %v4871, %v4685
    %v4899 = vld [vmem:[%s2] sm:$0xf]
    %v4900 = vld [vmem:[%s2 + $0x4] sm:$0xf]
    %v4901 = vld [vmem:[%s2 + $0x8] sm:$0xf]
    %v4902 = vld [vmem:[%s2 + $0xc] sm:$0xf]
    %v4903 = vld [vmem:[%s2 + $0x10] sm:$0xf]
    %v4904 = vld [vmem:[%s2 + $0x14] sm:$0xf]
    %v4905 = vld [vmem:[%s2 + $0x18] sm:$0xf]
    %v4906 = vld [vmem:[%s2 + $0x1c] sm:$0xf]
    %v4907 = vld [vmem:[%s2 + $0x20] sm:$0xf]
    %v4917 = vunpack.c.l.b16 %v4899
    %v4918 = vunpack.c.l.b16 %v4900
    %v4919 = vunpack.c.l.b16 %v4901
    %v4920 = vunpack.c.l.b16 %v4902
    %v4921 = vunpack.c.l.b16 %v4903
    %v4922 = vunpack.c.l.b16 %v4904
    %v4923 = vunpack.c.l.b16 %v4905
    %v4924 = vunpack.c.l.b16 %v4906
    %v4925 = vunpack.c.l.b16 %v4907
    %v4926 = vpack.c.b16 %v4918, %v4917
    %v4927 = vpack.c.b16 %v4920, %v4919
    %v4928 = vpack.c.b16 %v4922, %v4921
    %v4929 = vpack.c.b16 %v4924, %v4923
    %v4930 = vpack.c.b16 %v4925, %v4925
    %vm4935 = vcmask 588800
    %v4936 = vsel %vm4935, %v4874, 0
    %v4938 = vsel %vm4935, %v4876, 0
    %v4940 = vsel %vm4935, %v4878, 0
    %v4942 = vsel %vm4935, %v4880, 0
    %v4944 = vsel %vm4935, %v4882, 0
    %v4946 = vsel %vm4935, %v4884, 0
    %v4948 = vsel %vm4935, %v4886, 0
    %v4950 = vsel %vm4935, %v4888, 0
    %v4952 = vsel %vm4935, %v4890, 0
    %v4954 = vsel %vm4935, %v4892, 0
    %v4956 = vsel %vm4935, %v4894, 0
    %v4958 = vsel %vm4935, %v4896, 0
    %v4960 = vsel %vm4935, %v4898, 0
    %vm4962 = vcmask 1043456
    %v4964 = vsel %vm4962, %v4930, 0
    %4966 = vmatpush.bf16.msra.mxu0 0
    %4967 = vmatpush.bf16.msra.mxu0 0
    %4968 = vmatpush.bf16.msra.mxu0 0
    %4969 = vmatpush.bf16.msra.mxu0 %v4964
    %4970 = vmatpush.bf16.msra.mxu0 %v4929
    %4971 = vmatpush.bf16.msra.mxu0 %v4928
    %4972 = vmatpush.bf16.msra.mxu0 %v4927
    %4973 = vmatpush.bf16.msra.mxu0 %v4926
    %4974 = vmatmul.bf16.gmra.mxu0 %v4936
    %v4975 = vpop.f32.mrf.mxu0
    %v4976 = vadd.f32 0.0, %v4975
    %v4977 = vpop.f32.mrf.mxu0
    %v4978 = vadd.f32 0.0, %v4977
    %4979 = vmatmul.bf16.gmra.mxu0 %v4938
    %v4980 = vpop.f32.mrf.mxu0
    %v4981 = vadd.f32 0.0, %v4980
    %v4982 = vpop.f32.mrf.mxu0
    %v4983 = vadd.f32 0.0, %v4982
    %4984 = vmatmul.bf16.gmra.mxu0 %v4940
    %v4985 = vpop.f32.mrf.mxu0
    %v4986 = vadd.f32 0.0, %v4985
    %v4987 = vpop.f32.mrf.mxu0
    %v4988 = vadd.f32 0.0, %v4987
    %4989 = vmatmul.bf16.gmra.mxu0 %v4942
    %v4990 = vpop.f32.mrf.mxu0
    %v4991 = vadd.f32 0.0, %v4990
    %v4992 = vpop.f32.mrf.mxu0
    %v4993 = vadd.f32 0.0, %v4992
    %4994 = vmatmul.bf16.gmra.mxu0 %v4944
    %v4995 = vpop.f32.mrf.mxu0
    %v4996 = vadd.f32 0.0, %v4995
    %v4997 = vpop.f32.mrf.mxu0
    %v4998 = vadd.f32 0.0, %v4997
    %4999 = vmatmul.bf16.gmra.mxu0 %v4946
    %v5000 = vpop.f32.mrf.mxu0
    %v5001 = vadd.f32 0.0, %v5000
    %v5002 = vpop.f32.mrf.mxu0
    %v5003 = vadd.f32 0.0, %v5002
    %5004 = vmatmul.bf16.gmra.mxu0 %v4948
    %v5005 = vpop.f32.mrf.mxu0
    %v5006 = vadd.f32 0.0, %v5005
    %v5007 = vpop.f32.mrf.mxu0
    %v5008 = vadd.f32 0.0, %v5007
    %5009 = vmatmul.bf16.gmra.mxu0 %v4950
    %v5010 = vpop.f32.mrf.mxu0
    %v5011 = vadd.f32 0.0, %v5010
    %v5012 = vpop.f32.mrf.mxu0
    %v5013 = vadd.f32 0.0, %v5012
    %5014 = vmatmul.bf16.gmra.mxu0 %v4952
    %v5015 = vpop.f32.mrf.mxu0
    %v5016 = vadd.f32 0.0, %v5015
    %v5017 = vpop.f32.mrf.mxu0
    %v5018 = vadd.f32 0.0, %v5017
    %5019 = vmatmul.bf16.gmra.mxu0 %v4954
    %v5020 = vpop.f32.mrf.mxu0
    %v5021 = vadd.f32 0.0, %v5020
    %v5022 = vpop.f32.mrf.mxu0
    %v5023 = vadd.f32 0.0, %v5022
    %5024 = vmatmul.bf16.gmra.mxu0 %v4956
    %v5025 = vpop.f32.mrf.mxu0
    %v5026 = vadd.f32 0.0, %v5025
    %v5027 = vpop.f32.mrf.mxu0
    %v5028 = vadd.f32 0.0, %v5027
    %5029 = vmatmul.bf16.gmra.mxu0 %v4958
    %v5030 = vpop.f32.mrf.mxu0
    %v5031 = vadd.f32 0.0, %v5030
    %v5032 = vpop.f32.mrf.mxu0
    %v5033 = vadd.f32 0.0, %v5032
    %5034 = vmatmul.bf16.gmra.mxu0 %v4960
    %v5035 = vpop.f32.mrf.mxu0
    %v5036 = vadd.f32 0.0, %v5035
    %v5037 = vpop.f32.mrf.mxu0
    %5038 = vdwg.mxu0
    %v5039 = vrot.slane %v4976, 1
    %v5040 = vrot.slane %v4978, 1
    %v5041 = vrot.slane %v4981, 1
    %v5042 = vrot.slane %v4983, 1
    %v5043 = vrot.slane %v4986, 1
    %v5044 = vrot.slane %v4988, 1
    %v5045 = vrot.slane %v4991, 1
    %v5046 = vrot.slane %v4993, 1
    %v5047 = vrot.slane %v4996, 1
    %v5048 = vrot.slane %v4998, 1
    %v5049 = vrot.slane %v5001, 1
    %v5050 = vrot.slane %v5003, 1
    %v5051 = vrot.slane %v5006, 1
    %v5052 = vrot.slane %v5008, 1
    %v5053 = vrot.slane %v5011, 1
    %v5054 = vrot.slane %v5013, 1
    %v5055 = vrot.slane %v5016, 1
    %v5056 = vrot.slane %v5018, 1
    %v5057 = vrot.slane %v5021, 1
    %v5058 = vrot.slane %v5023, 1
    %v5059 = vrot.slane %v5026, 1
    %v5060 = vrot.slane %v5028, 1
    %v5061 = vrot.slane %v5031, 1
    %v5062 = vrot.slane %v5033, 1
    %v5063 = vrot.slane %v5036, 1
    %v5064 = vsel %vm3108, %v5062, %v5063
    %v5065 = vsel %vm3108, %v5061, %v5062
    %v5066 = vsel %vm3108, %v5060, %v5061
    %v5067 = vsel %vm3108, %v5059, %v5060
    %v5068 = vsel %vm3108, %v5058, %v5059
    %v5069 = vsel %vm3108, %v5057, %v5058
    %v5070 = vsel %vm3108, %v5056, %v5057
    %v5071 = vsel %vm3108, %v5055, %v5056
    %v5072 = vsel %vm3108, %v5054, %v5055
    %v5073 = vsel %vm3108, %v5053, %v5054
    %v5074 = vsel %vm3108, %v5052, %v5053
    %v5075 = vsel %vm3108, %v5051, %v5052
    %v5076 = vsel %vm3108, %v5050, %v5051
    %v5077 = vsel %vm3108, %v5049, %v5050
    %v5078 = vsel %vm3108, %v5048, %v5049
    %v5079 = vsel %vm3108, %v5047, %v5048
    %v5080 = vsel %vm3108, %v5046, %v5047
    %v5081 = vsel %vm3108, %v5045, %v5046
    %v5082 = vsel %vm3108, %v5044, %v5045
    %v5083 = vsel %vm3108, %v5043, %v5044
    %v5084 = vsel %vm3108, %v5042, %v5043
    %v5085 = vsel %vm3108, %v5041, %v5042
    %v5086 = vsel %vm3108, %v5040, %v5041
    %v5087 = vsel %vm3108, %v5039, %v5040
    %v5088 = vsel %vm3108, %v5063, %v5039
    %v5089 = vmax.f32 %v4976, %v5087
    %v5090 = vmax.f32 %v4978, %v5086
    %v5091 = vmax.f32 %v4981, %v5085
    %v5092 = vmax.f32 %v4983, %v5084
    %v5093 = vmax.f32 %v4986, %v5083
    %v5094 = vmax.f32 %v4988, %v5082
    %v5095 = vmax.f32 %v4991, %v5081
    %v5096 = vmax.f32 %v4993, %v5080
    %v5097 = vmax.f32 %v4996, %v5079
    %v5098 = vmax.f32 %v4998, %v5078
    %v5099 = vmax.f32 %v5001, %v5077
    %v5100 = vmax.f32 %v5003, %v5076
    %v5101 = vmax.f32 %v5006, %v5075
    %v5102 = vmax.f32 %v5008, %v5074
    %v5103 = vmax.f32 %v5011, %v5073
    %v5104 = vmax.f32 %v5013, %v5072
    %v5105 = vmax.f32 %v5016, %v5071
    %v5106 = vmax.f32 %v5018, %v5070
    %v5107 = vmax.f32 %v5021, %v5069
    %v5108 = vmax.f32 %v5023, %v5068
    %v5109 = vmax.f32 %v5026, %v5067
    %v5110 = vmax.f32 %v5028, %v5066
    %v5111 = vmax.f32 %v5031, %v5065
    %v5112 = vmax.f32 %v5033, %v5064
    %v5113 = vmax.f32 %v5036, %v5088
    %v5114 = vrot.slane %v5089, 2
    %v5115 = vrot.slane %v5090, 2
    %v5116 = vrot.slane %v5091, 2
    %v5117 = vrot.slane %v5092, 2
    %v5118 = vrot.slane %v5093, 2
    %v5119 = vrot.slane %v5094, 2
    %v5120 = vrot.slane %v5095, 2
    %v5121 = vrot.slane %v5096, 2
    %v5122 = vrot.slane %v5097, 2
    %v5123 = vrot.slane %v5098, 2
    %v5124 = vrot.slane %v5099, 2
    %v5125 = vrot.slane %v5100, 2
    %v5126 = vrot.slane %v5101, 2
    %v5127 = vrot.slane %v5102, 2
    %v5128 = vrot.slane %v5103, 2
    %v5129 = vrot.slane %v5104, 2
    %v5130 = vrot.slane %v5105, 2
    %v5131 = vrot.slane %v5106, 2
    %v5132 = vrot.slane %v5107, 2
    %v5133 = vrot.slane %v5108, 2
    %v5134 = vrot.slane %v5109, 2
    %v5135 = vrot.slane %v5110, 2
    %v5136 = vrot.slane %v5111, 2
    %v5137 = vrot.slane %v5112, 2
    %v5138 = vrot.slane %v5113, 2
    %v5139 = vsel %vm3352, %v5137, %v5138
    %v5140 = vsel %vm3352, %v5136, %v5137
    %v5141 = vsel %vm3352, %v5135, %v5136
    %v5142 = vsel %vm3352, %v5134, %v5135
    %v5143 = vsel %vm3352, %v5133, %v5134
    %v5144 = vsel %vm3352, %v5132, %v5133
    %v5145 = vsel %vm3352, %v5131, %v5132
    %v5146 = vsel %vm3352, %v5130, %v5131
    %v5147 = vsel %vm3352, %v5129, %v5130
    %v5148 = vsel %vm3352, %v5128, %v5129
    %v5149 = vsel %vm3352, %v5127, %v5128
    %v5150 = vsel %vm3352, %v5126, %v5127
    %v5151 = vsel %vm3352, %v5125, %v5126
    %v5152 = vsel %vm3352, %v5124, %v5125
    %v5153 = vsel %vm3352, %v5123, %v5124
    %v5154 = vsel %vm3352, %v5122, %v5123
    %v5155 = vsel %vm3352, %v5121, %v5122
    %v5156 = vsel %vm3352, %v5120, %v5121
    %v5157 = vsel %vm3352, %v5119, %v5120
    %v5158 = vsel %vm3352, %v5118, %v5119
    %v5159 = vsel %vm3352, %v5117, %v5118
    %v5160 = vsel %vm3352, %v5116, %v5117
    %v5161 = vsel %vm3352, %v5115, %v5116
    %v5162 = vsel %vm3352, %v5114, %v5115
    %v5163 = vsel %vm3352, %v5138, %v5114
    %v5164 = vmax.f32 %v5089, %v5161
    %v5165 = vmax.f32 %v5090, %v5160
    %v5166 = vmax.f32 %v5091, %v5159
    %v5167 = vmax.f32 %v5092, %v5158
    %v5168 = vmax.f32 %v5093, %v5157
    %v5169 = vmax.f32 %v5094, %v5156
    %v5170 = vmax.f32 %v5095, %v5155
    %v5171 = vmax.f32 %v5096, %v5154
    %v5172 = vmax.f32 %v5097, %v5153
    %v5173 = vmax.f32 %v5098, %v5152
    %v5174 = vmax.f32 %v5099, %v5151
    %v5175 = vmax.f32 %v5100, %v5150
    %v5176 = vmax.f32 %v5101, %v5149
    %v5177 = vmax.f32 %v5102, %v5148
    %v5178 = vmax.f32 %v5103, %v5147
    %v5179 = vmax.f32 %v5104, %v5146
    %v5180 = vmax.f32 %v5105, %v5145
    %v5181 = vmax.f32 %v5106, %v5144
    %v5182 = vmax.f32 %v5107, %v5143
    %v5183 = vmax.f32 %v5108, %v5142
    %v5184 = vmax.f32 %v5109, %v5141
    %v5185 = vmax.f32 %v5110, %v5140
    %v5186 = vmax.f32 %v5111, %v5139
    %v5187 = vmax.f32 %v5112, %v5163
    %v5188 = vmax.f32 %v5113, %v5162
    %5189 = vst.msk [vmem:[#allocation6] sm:$0xff] %vm2290, %v5164
    %5190 = vst.msk [vmem:[#allocation6 + $0x8] sm:$0xff] %vm2290, %v5165
    %5191 = vst.msk [vmem:[#allocation6 + $0x10] sm:$0xff] %vm2290, %v5166
    %5192 = vst.msk [vmem:[#allocation6 + $0x18] sm:$0xff] %vm2290, %v5167
    %5193 = vst.msk [vmem:[#allocation6 + $0x20] sm:$0xff] %vm2290, %v5168
    %5194 = vst.msk [vmem:[#allocation6 + $0x28] sm:$0xff] %vm2290, %v5169
    %5195 = vst.msk [vmem:[#allocation6 + $0x30] sm:$0xff] %vm2290, %v5170
    %5196 = vst.msk [vmem:[#allocation6 + $0x38] sm:$0xff] %vm2290, %v5171
    %5197 = vst.msk [vmem:[#allocation6 + $0x40] sm:$0xff] %vm2290, %v5172
    %5198 = vst.msk [vmem:[#allocation6 + $0x48] sm:$0xff] %vm2290, %v5173
    %5199 = vst.msk [vmem:[#allocation6 + $0x50] sm:$0xff] %vm2290, %v5174
    %5200 = vst.msk [vmem:[#allocation6 + $0x58] sm:$0xff] %vm2290, %v5175
    %5201 = vst.msk [vmem:[#allocation6 + $0x60] sm:$0xff] %vm2290, %v5176
    %5202 = vst.msk [vmem:[#allocation6 + $0x68] sm:$0xff] %vm2290, %v5177
    %5203 = vst.msk [vmem:[#allocation6 + $0x70] sm:$0xff] %vm2290, %v5178
    %5204 = vst.msk [vmem:[#allocation6 + $0x78] sm:$0xff] %vm2290, %v5179
    %5205 = vst.msk [vmem:[#allocation6 + $0x80] sm:$0xff] %vm2290, %v5180
    %5206 = vst.msk [vmem:[#allocation6 + $0x88] sm:$0xff] %vm2290, %v5181
    %5207 = vst.msk [vmem:[#allocation6 + $0x90] sm:$0xff] %vm2290, %v5182
    %5208 = vst.msk [vmem:[#allocation6 + $0x98] sm:$0xff] %vm2290, %v5183
    %5209 = vst.msk [vmem:[#allocation6 + $0xa0] sm:$0xff] %vm2290, %v5184
    %5210 = vst.msk [vmem:[#allocation6 + $0xa8] sm:$0xff] %vm2290, %v5185
    %5211 = vst.msk [vmem:[#allocation6 + $0xb0] sm:$0xff] %vm2290, %v5186
    %5212 = vst.msk [vmem:[#allocation6 + $0xb8] sm:$0xff] %vm2290, %v5187
    %5213 = vst.msk [vmem:[#allocation6 + $0xc0] sm:$0xff] %vm2290, %v5188
    %s5214 = scalar_lea.vmem [#allocation6], 11
    %v5215 = vld [vmem:[%s5214] ss:$2 sm:$0xf]
    %s5216 = scalar_lea.vmem [#allocation6], 31
    %v5217 = vld [vmem:[%s5216] ss:$2 sm:$0xf]
    %s5218 = scalar_lea.vmem [#allocation6], 51
    %v5219 = vld [vmem:[%s5218] ss:$2 sm:$0xf]
    %s5220 = scalar_lea.vmem [#allocation6], 71
    %v5221 = vld [vmem:[%s5220] ss:$2 sm:$0xf]
    %s5222 = scalar_lea.vmem [#allocation6], 111
    %v5223 = vld [vmem:[%s5222] ss:$2 sm:$0xf]
    %s5224 = scalar_lea.vmem [#allocation6], 131
    %v5225 = vld [vmem:[%s5224] ss:$2 sm:$0xf]
    %s5226 = scalar_lea.vmem [#allocation6], 151
    %v5227 = vld [vmem:[%s5226] ss:$2 sm:$0xf]
    %s5228 = scalar_lea.vmem [#allocation6], 171
    %v5229 = vld [vmem:[%s5228] ss:$2 sm:$0xf]
    %v5231 = vrot.slane %v5217, 4
    %v5234 = vrot.slane %v5221, 4
    %v5237 = vrot.slane %v5225, 4
    %v5240 = vrot.slane %v5229, 4
    %v5242 = vsel %vm4962, %v5215, %v5231
    %v5243 = vsel %vm4962, %v5219, %v5234
    %v5244 = vsel %vm4962, %v5223, %v5237
    %v5245 = vsel %vm4962, %v5227, %v5240
    %v5246 = vsel %vm2290, %v5242, 0.0
    %v5247 = vsel %vm2290, %v5243, 0.0
    %v5248 = vadd.f32 %v5246, %v5247
    %v5249 = vsel %vm2290, %v5244, 0.0
    %v5250 = vadd.f32 %v5248, %v5249
    %v5251 = vsel %vm2290, %v5245, 0.0
    %v5252 = vadd.f32 %v5250, %v5251
    %v5253 = vrot.slane %v5252, 4
    %v5254 = vadd.f32 %v5252, %v5253
    %v5255 = vrot.slane %v5254, 2
    %v5256 = vadd.f32 %v5254, %v5255
    %v5257 = vrot.slane %v5256, 1
    %v5258 = vadd.f32 %v5256, %v5257
    %v5259 = vrcp.pop 32.0
    %v5260 = vmul.f32 32.0, %v5259
    %v5261 = vsub.f32 1.0, %v5260
    %v5262 = vmul.f32 %v5259, %v5261
    %v5263 = vadd.f32 %v5259, %v5262
    %vm5264 = vweird.f32 %v5259
    %v5265 = vsel %vm5264, %v5259, %v5263
    %v5266 = vmul.f32 %v5258, %v5265
    %v5267 = vsub.f32 %v5242, %v5266
    %v5268 = vsub.f32 %v5243, %v5266
    %v5269 = vsub.f32 %v5244, %v5266
    %v5270 = vsub.f32 %v5245, %v5266
    %v5271 = vmul.f32 %v5267, %v5267
    %v5272 = vmul.f32 %v5268, %v5268
    %v5273 = vmul.f32 %v5269, %v5269
    %v5274 = vmul.f32 %v5270, %v5270
    %v5275 = vsel %vm2290, %v5271, 0.0
    %v5276 = vsel %vm2290, %v5272, 0.0
    %v5277 = vadd.f32 %v5275, %v5276
    %v5278 = vsel %vm2290, %v5273, 0.0
    %v5279 = vadd.f32 %v5277, %v5278
    %v5280 = vsel %vm2290, %v5274, 0.0
    %v5281 = vadd.f32 %v5279, %v5280
    %v5282 = vrot.slane %v5281, 4
    %v5283 = vadd.f32 %v5281, %v5282
    %v5284 = vrot.slane %v5283, 2
    %v5285 = vadd.f32 %v5283, %v5284
    %v5286 = vrot.slane %v5285, 1
    %v5287 = vadd.f32 %v5285, %v5286
    %v5288 = vmul.f32 %v5287, %v5265
    %v5289 = vld [vmem:[%s6] sm:$0x1]
    %v5290 = vadd.f32 %v5288, 1e-05
    %v5291 = vrsqrt.pop %v5290
    %v5292 = vmul.f32 %v5291, %v5290
    %v5293 = vmul.f32 %v5292, %v5291
    %v5294 = vmul.f32 0.5, %v5293
    %v5295 = vsub.f32 1.5, %v5294
    %v5296 = vmul.f32 %v5291, %v5295
    %vm5297 = vweird.f32 %v5290
    %vm5298 = vweird.f32 %v5291
    %vm5299 = vmor %vm5297, %vm5298
    %v5300 = vsel %vm5299, %v5291, %v5296
    %v5301 = vmul.f32 %v5289, %v5300
    %v5302 = vld [vmem:[%s10] sm:$0x1]
    %v5303 = vmul.f32 %v5266, %v5301
    %v5304 = vsub.f32 %v5302, %v5303
    %v5306 = vperm.slane %v5301, 0
    %v5309 = vperm.slane %v5304, 0
    %v5311 = vmul.f32 %v5215, %v5306
    %v5312 = vadd.f32 %v5311, %v5309
    %v5313 = vmax.f32 %v5312, 0.0
    %v5314 = vpack.c.bf16 %v5313, %v5313
    %v5316 = vrot.slane %v5314, 5
    %v5317 = vrot.slane %v5316, 4
    %vm5320 = vcmask 125955
    %5321 = vst.msk [vmem:[#allocation3 + $0x4] sm:$0x8] %vm5320, %v5316
    %5322 = vst.msk [vmem:[#allocation3 + $0x8] sm:$0x1] %vm100, %v5317
    %v5323 = vmul.f32 %v5217, %v5306
    %v5324 = vadd.f32 %v5323, %v5309
    %v5325 = vmax.f32 %v5324, 0.0
    %v5326 = vpack.c.bf16 %v5325, %v5325
    %v5328 = vrot.slane %v5326, 6
    %vm5330 = vcmask 125954
    %5331 = vst.msk [vmem:[#allocation3 + $0x8] sm:$0xc] %vm5330, %v5328
    %v5332 = vmul.f32 %v5219, %v5306
    %v5333 = vadd.f32 %v5332, %v5309
    %v5334 = vmax.f32 %v5333, 0.0
    %v5335 = vpack.c.bf16 %v5334, %v5334
    %v5337 = vrot.slane %v5335, 7
    %vm5339 = vcmask 124929
    %5340 = vst.msk [vmem:[#allocation3 + $0xc] sm:$0x6] %vm5339, %v5337
    %v5341 = vmul.f32 %v5221, %v5306
    %v5342 = vadd.f32 %v5341, %v5309
    %v5343 = vmax.f32 %v5342, 0.0
    %v5344 = vpack.c.bf16 %v5343, %v5343
    %vm5345 = vcmask 123904
    %5346 = vst.msk [vmem:[#allocation3 + $0x10] sm:$0x3] %vm5345, %v5344
    %v5347 = vmul.f32 %v5223, %v5306
    %v5348 = vadd.f32 %v5347, %v5309
    %v5349 = vmax.f32 %v5348, 0.0
    %v5350 = vpack.c.bf16 %v5349, %v5349
    %v5352 = vrot.slane %v5350, 7
    %5354 = vst.msk [vmem:[#allocation3 + $0x18] sm:$0x6] %vm5339, %v5352
    %v5355 = vmul.f32 %v5225, %v5306
    %v5356 = vadd.f32 %v5355, %v5309
    %v5357 = vmax.f32 %v5356, 0.0
    %v5358 = vpack.c.bf16 %v5357, %v5357
    %5359 = vst.msk [vmem:[#allocation3 + $0x1c] sm:$0x3] %vm5345, %v5358
    %v5360 = vmul.f32 %v5227, %v5306
    %v5361 = vadd.f32 %v5360, %v5309
    %v5362 = vmax.f32 %v5361, 0.0
    %v5363 = vpack.c.bf16 %v5362, %v5362
    %v5365 = vrot.slane %v5363, 5
    %v5366 = vrot.slane %v5365, 4
    %5369 = vst.msk [vmem:[#allocation3 + $0x1c] sm:$0x8] %vm5320, %v5365
    %5370 = vst.msk [vmem:[#allocation3 + $0x20] sm:$0x1] %vm100, %v5366
    %v5371 = vmul.f32 %v5229, %v5306
    %v5372 = vadd.f32 %v5371, %v5309
    %v5373 = vmax.f32 %v5372, 0.0
    %v5374 = vpack.c.bf16 %v5373, %v5373
    %v5376 = vrot.slane %v5374, 6
    %5378 = vst.msk [vmem:[#allocation3 + $0x20] sm:$0xc] %vm5330, %v5376
    %v5379 = vld [vmem:[#allocation3] sm:$0xf]
    %v5380 = vld [vmem:[#allocation3 + $0x4] sm:$0xf]
    %v5381 = vld [vmem:[#allocation3 + $0x8] sm:$0xf]
    %v5382 = vld [vmem:[#allocation3 + $0xc] sm:$0xf]
    %v5383 = vld [vmem:[#allocation3 + $0x10] sm:$0xf]
    %v5384 = vld [vmem:[#allocation3 + $0x14] sm:$0xf]
    %v5385 = vld [vmem:[#allocation3 + $0x18] sm:$0xf]
    %v5386 = vld [vmem:[#allocation3 + $0x1c] sm:$0xf]
    %v5387 = vld [vmem:[#allocation3 + $0x20] sm:$0xf]
    %v5388 = vld [vmem:[#allocation3 + $0x24] sm:$0x1]
    %v5389 = vld [vmem:[#allocation3] sm:$0xe]
    %v5390 = vld [vmem:[#allocation3] sm:$0x8]
    %v5391 = vld [vmem:[#allocation3 + $0x24] sm:$0x7]
    %v5392 = vld [vmem:[#allocation3 + $0x24] sm:$0xf]
    %v5393 = vld [vmem:[#allocation3 + $0x4] sm:$0xc]
    %v5394 = vld [vmem:[#allocation3 + $0x28] sm:$0x3]
    %v5395 = vld [vmem:[#allocation3 + $0x28] sm:$0x7]
    %v5396 = vld [vmem:[#allocation3 + $0x4] sm:$0x8]
    %v5406 = vunpack.c.l.b16 %v5379
    %v5407 = vunpack.c.l.b16 %v5380
    %v5408 = vunpack.c.l.b16 %v5381
    %v5409 = vunpack.c.l.b16 %v5382
    %v5410 = vunpack.c.l.b16 %v5383
    %v5411 = vunpack.c.l.b16 %v5384
    %v5412 = vunpack.c.l.b16 %v5385
    %v5413 = vunpack.c.l.b16 %v5386
    %v5414 = vunpack.c.l.b16 %v5387
    %v5415 = vpack.c.b16 %v5407, %v5406
    %v5416 = vpack.c.b16 %v5409, %v5408
    %v5417 = vpack.c.b16 %v5411, %v5410
    %v5418 = vpack.c.b16 %v5413, %v5412
    %v5419 = vpack.c.b16 %v5414, %v5414
    %v5421 = vunpack.c.l.b16 %v5388
    %v5422 = vpack.c.b16 %v5421, %v5414
    %v5424 = vshrl.u32 %v5415, 16
    %v5426 = vshll.u32 %v5415, 16
    %v5428 = vrot.slane %v5426, 1
    %v5429 = vor.u32 %v5424, %v5428
    %v5431 = vshll.u32 %v5416, 16
    %v5433 = vrot.slane %v5431, 1
    %v5434 = vsel %vm403, %v5429, %v5433
    %v5435 = vshrl.u32 %v5416, 16
    %v5437 = vor.u32 %v5435, %v5433
    %v5439 = vshll.u32 %v5417, 16
    %v5441 = vrot.slane %v5439, 1
    %v5442 = vsel %vm403, %v5437, %v5441
    %v5443 = vshrl.u32 %v5417, 16
    %v5445 = vor.u32 %v5443, %v5441
    %v5447 = vshll.u32 %v5418, 16
    %v5449 = vrot.slane %v5447, 1
    %v5450 = vsel %vm403, %v5445, %v5449
    %v5451 = vshrl.u32 %v5418, 16
    %v5453 = vor.u32 %v5451, %v5449
    %v5455 = vshll.u32 %v5422, 16
    %v5457 = vrot.slane %v5455, 1
    %v5458 = vsel %vm403, %v5453, %v5457
    %v5459 = vshrl.u32 %v5422, 16
    %v5461 = vor.u32 %v5459, %v5457
    %5462 = vrot.lane.b32.xlu0 %v5434, 16
    %v5463 = vpop.permute.xlu0 %5462
    %5464 = vrot.lane.b32.xlu0 %v5442, 16
    %v5465 = vpop.permute.xlu0 %5464
    %5466 = vrot.lane.b32.xlu0 %v5450, 16
    %v5467 = vpop.permute.xlu0 %5466
    %5468 = vrot.lane.b32.xlu0 %v5458, 16
    %v5469 = vpop.permute.xlu0 %5468
    %5470 = vrot.lane.b32.xlu0 %v5461, 16
    %v5471 = vpop.permute.xlu0 %5470
    %v5473 = vunpack.c.l.b16 %v5389
    %v5474 = vpack.c.b16 %v5407, %v5473
    %v5475 = vrot.slane %v5474, 1
    %v5476 = vrot.slane %v5416, 1
    %v5477 = vsel %vm816, %v5475, %v5476
    %v5478 = vrot.slane %v5417, 1
    %v5479 = vsel %vm816, %v5476, %v5478
    %v5480 = vrot.slane %v5418, 1
    %v5481 = vsel %vm816, %v5478, %v5480
    %v5482 = vrot.slane %v5422, 1
    %v5483 = vsel %vm816, %v5480, %v5482
    %5484 = vrot.lane.b32.xlu0 %v5477, 32
    %v5485 = vpop.permute.xlu0 %5484
    %5486 = vrot.lane.b32.xlu0 %v5479, 32
    %v5487 = vpop.permute.xlu0 %5486
    %5488 = vrot.lane.b32.xlu0 %v5481, 32
    %v5489 = vpop.permute.xlu0 %5488
    %5490 = vrot.lane.b32.xlu0 %v5483, 32
    %v5491 = vpop.permute.xlu0 %5490
    %5492 = vrot.lane.b32.xlu0 %v5482, 32
    %v5493 = vpop.permute.xlu0 %5492
    %v5496 = vunpack.c.l.b16 %v5390
    %v5497 = vunpack.c.l.b16 %v5391
    %v5498 = vpack.c.b16 %v5407, %v5496
    %v5499 = vpack.c.b16 %v5497, %v5414
    %v5500 = vrot.slane %v5498, 3
    %v5501 = vrot.slane %v5416, 3
    %v5502 = vsel %vm1876, %v5500, %v5501
    %v5503 = vrot.slane %v5417, 3
    %v5504 = vsel %vm1876, %v5501, %v5503
    %v5505 = vrot.slane %v5418, 3
    %v5506 = vsel %vm1876, %v5503, %v5505
    %v5507 = vrot.slane %v5499, 3
    %v5508 = vsel %vm1876, %v5505, %v5507
    %5509 = vrot.lane.b32.xlu0 %v5502, 48
    %v5510 = vpop.permute.xlu0 %5509
    %5511 = vrot.lane.b32.xlu0 %v5504, 48
    %v5512 = vpop.permute.xlu0 %5511
    %5513 = vrot.lane.b32.xlu0 %v5506, 48
    %v5514 = vpop.permute.xlu0 %5513
    %5515 = vrot.lane.b32.xlu0 %v5508, 48
    %v5516 = vpop.permute.xlu0 %5515
    %5517 = vrot.lane.b32.xlu0 %v5507, 48
    %v5518 = vpop.permute.xlu0 %5517
    %v5520 = vunpack.c.l.b16 %v5392
    %v5521 = vpack.c.b16 %v5520, %v5414
    %vm5522 = vsmask.f32 4352
    %v5524 = vshrl.u32 %v5498, 16
    %v5526 = vrot.slane %v5524, 3
    %v5527 = vshll.u32 %v5498, 16
    %v5529 = vrot.slane %v5527, 4
    %v5530 = vor.u32 %v5526, %v5529
    %v5531 = vrot.slane %v5435, 3
    %v5532 = vrot.slane %v5431, 4
    %v5533 = vor.u32 %v5531, %v5532
    %v5534 = vsel %vm5522, %v5530, %v5533
    %v5535 = vrot.slane %v5443, 3
    %v5536 = vrot.slane %v5439, 4
    %v5537 = vor.u32 %v5535, %v5536
    %v5538 = vsel %vm5522, %v5533, %v5537
    %v5539 = vrot.slane %v5451, 3
    %v5540 = vrot.slane %v5447, 4
    %v5541 = vor.u32 %v5539, %v5540
    %v5542 = vsel %vm5522, %v5537, %v5541
    %v5544 = vshrl.u32 %v5521, 16
    %v5546 = vrot.slane %v5544, 3
    %v5547 = vshll.u32 %v5521, 16
    %v5549 = vrot.slane %v5547, 4
    %v5550 = vor.u32 %v5546, %v5549
    %v5551 = vsel %vm5522, %v5541, %v5550
    %5552 = vrot.lane.b32.xlu0 %v5534, 64
    %v5553 = vpop.permute.xlu0 %5552
    %5554 = vrot.lane.b32.xlu0 %v5538, 64
    %v5555 = vpop.permute.xlu0 %5554
    %5556 = vrot.lane.b32.xlu0 %v5542, 64
    %v5557 = vpop.permute.xlu0 %5556
    %5558 = vrot.lane.b32.xlu0 %v5551, 64
    %v5559 = vpop.permute.xlu0 %5558
    %5560 = vrot.lane.b32.xlu0 %v5550, 64
    %v5561 = vpop.permute.xlu0 %5560
    %v5562 = vpack.c.b16 %v5408, %v5407
    %v5563 = vpack.c.b16 %v5410, %v5409
    %v5564 = vpack.c.b16 %v5412, %v5411
    %v5565 = vpack.c.b16 %v5414, %v5413
    %v5566 = vpack.c.b16 %v5520, %v5520
    %5567 = vrot.lane.b32.xlu0 %v5562, 80
    %v5568 = vpop.permute.xlu0 %5567
    %5569 = vrot.lane.b32.xlu0 %v5563, 80
    %v5570 = vpop.permute.xlu0 %5569
    %5571 = vrot.lane.b32.xlu0 %v5564, 80
    %v5572 = vpop.permute.xlu0 %5571
    %5573 = vrot.lane.b32.xlu0 %v5565, 80
    %v5574 = vpop.permute.xlu0 %5573
    %5575 = vrot.lane.b32.xlu0 %v5566, 80
    %v5576 = vpop.permute.xlu0 %5575
    %v5579 = vunpack.c.l.b16 %v5393
    %v5580 = vunpack.c.l.b16 %v5394
    %v5581 = vpack.c.b16 %v5408, %v5579
    %v5582 = vpack.c.b16 %v5580, %v5520
    %v5583 = vrot.slane %v5581, 2
    %v5584 = vrot.slane %v5563, 2
    %v5585 = vsel %vm1346, %v5583, %v5584
    %v5586 = vrot.slane %v5564, 2
    %v5587 = vsel %vm1346, %v5584, %v5586
    %v5588 = vrot.slane %v5565, 2
    %v5589 = vsel %vm1346, %v5586, %v5588
    %v5590 = vrot.slane %v5582, 2
    %v5591 = vsel %vm1346, %v5588, %v5590
    %5592 = vrot.lane.b32.xlu0 %v5585, 96
    %v5593 = vpop.permute.xlu0 %5592
    %5594 = vrot.lane.b32.xlu0 %v5587, 96
    %v5595 = vpop.permute.xlu0 %5594
    %5596 = vrot.lane.b32.xlu0 %v5589, 96
    %v5597 = vpop.permute.xlu0 %5596
    %5598 = vrot.lane.b32.xlu0 %v5591, 96
    %v5599 = vpop.permute.xlu0 %5598
    %5600 = vrot.lane.b32.xlu0 %v5590, 96
    %v5601 = vpop.permute.xlu0 %5600
    %v5603 = vunpack.c.l.b16 %v5395
    %v5604 = vpack.c.b16 %v5603, %v5520
    %v5606 = vshrl.u32 %v5581, 16
    %v5608 = vrot.slane %v5606, 2
    %v5609 = vshll.u32 %v5581, 16
    %v5611 = vrot.slane %v5609, 3
    %v5612 = vor.u32 %v5608, %v5611
    %v5614 = vshrl.u32 %v5563, 16
    %v5616 = vrot.slane %v5614, 2
    %v5617 = vshll.u32 %v5563, 16
    %v5619 = vrot.slane %v5617, 3
    %v5620 = vor.u32 %v5616, %v5619
    %v5621 = vsel %vm1612, %v5612, %v5620
    %v5623 = vshrl.u32 %v5564, 16
    %v5625 = vrot.slane %v5623, 2
    %v5626 = vshll.u32 %v5564, 16
    %v5628 = vrot.slane %v5626, 3
    %v5629 = vor.u32 %v5625, %v5628
    %v5630 = vsel %vm1612, %v5620, %v5629
    %v5632 = vshrl.u32 %v5565, 16
    %v5634 = vrot.slane %v5632, 2
    %v5635 = vshll.u32 %v5565, 16
    %v5637 = vrot.slane %v5635, 3
    %v5638 = vor.u32 %v5634, %v5637
    %v5639 = vsel %vm1612, %v5629, %v5638
    %v5641 = vshrl.u32 %v5604, 16
    %v5643 = vrot.slane %v5641, 2
    %v5644 = vshll.u32 %v5604, 16
    %v5646 = vrot.slane %v5644, 3
    %v5647 = vor.u32 %v5643, %v5646
    %v5648 = vsel %vm1612, %v5638, %v5647
    %5649 = vrot.lane.b32.xlu0 %v5621, 112
    %v5650 = vpop.permute.xlu0 %5649
    %5651 = vrot.lane.b32.xlu0 %v5630, 112
    %v5652 = vpop.permute.xlu0 %5651
    %5653 = vrot.lane.b32.xlu0 %v5639, 112
    %v5654 = vpop.permute.xlu0 %5653
    %5655 = vrot.lane.b32.xlu0 %v5648, 112
    %v5656 = vpop.permute.xlu0 %5655
    %5657 = vrot.lane.b32.xlu0 %v5647, 112
    %v5658 = vpop.permute.xlu0 %5657
    %v5660 = vunpack.c.l.b16 %v5396
    %v5661 = vpack.c.b16 %v5408, %v5660
    %v5662 = vrot.slane %v5661, 3
    %v5663 = vrot.slane %v5563, 3
    %v5664 = vsel %vm1876, %v5662, %v5663
    %v5665 = vrot.slane %v5564, 3
    %v5666 = vsel %vm1876, %v5663, %v5665
    %v5667 = vrot.slane %v5565, 3
    %v5668 = vsel %vm1876, %v5665, %v5667
    %v5669 = vrot.slane %v5604, 3
    %v5670 = vsel %vm1876, %v5667, %v5669
    %v5672 = vsel %vm2290, %v5415, %v5463
    %v5674 = vsel %vm2290, %v5416, %v5465
    %v5676 = vsel %vm2290, %v5417, %v5467
    %v5678 = vsel %vm2290, %v5418, %v5469
    %v5681 = vsel %vm2290, %v5419, %v5471
    %v5683 = vsel %vm2622, %v5672, %v5485
    %v5685 = vsel %vm2622, %v5674, %v5487
    %v5687 = vsel %vm2622, %v5676, %v5489
    %v5689 = vsel %vm2622, %v5678, %v5491
    %v5691 = vsel %vm2622, %v5681, %v5493
    %v5693 = vsel %vm4818, %v5683, %v5510
    %v5695 = vsel %vm4818, %v5685, %v5512
    %v5697 = vsel %vm4818, %v5687, %v5514
    %v5699 = vsel %vm4818, %v5689, %v5516
    %v5701 = vsel %vm4818, %v5691, %v5518
    %v5703 = vsel %vm4872, %v5693, %v5553
    %v5705 = vsel %vm4872, %v5695, %v5555
    %v5707 = vsel %vm4872, %v5697, %v5557
    %v5709 = vsel %vm4872, %v5699, %v5559
    %v5711 = vsel %vm4872, %v5701, %v5561
    %vm5712 = vcmask 654336
    %v5714 = vsel %vm5712, %v5703, %v5568
    %v5716 = vsel %vm5712, %v5705, %v5570
    %v5718 = vsel %vm5712, %v5707, %v5572
    %v5720 = vsel %vm5712, %v5709, %v5574
    %v5722 = vsel %vm5712, %v5711, %v5576
    %vm5723 = vcmask 785408
    %v5725 = vsel %vm5723, %v5714, %v5593
    %v5727 = vsel %vm5723, %v5716, %v5595
    %v5729 = vsel %vm5723, %v5718, %v5597
    %v5731 = vsel %vm5723, %v5720, %v5599
    %v5733 = vsel %vm5723, %v5722, %v5601
    %vm5734 = vcmask 916480
    %v5736 = vsel %vm5734, %v5725, %v5650
    %v5739 = vsel %vm5734, %v5727, %v5652
    %v5742 = vsel %vm5734, %v5729, %v5654
    %v5745 = vsel %vm5734, %v5731, %v5656
    %v5748 = vsel %vm5734, %v5733, %v5658
    %v5750 = vld [vmem:[%s3] sm:$0xf]
    %v5751 = vld [vmem:[%s3 + $0x4] sm:$0xf]
    %v5752 = vld [vmem:[%s3 + $0x8] sm:$0xf]
    %v5753 = vld [vmem:[%s3 + $0xc] sm:$0xf]
    %v5754 = vld [vmem:[%s3 + $0x10] sm:$0xf]
    %v5755 = vld [vmem:[%s3 + $0x14] sm:$0xf]
    %v5756 = vld [vmem:[%s3 + $0x18] sm:$0xf]
    %v5757 = vld [vmem:[%s3 + $0x1c] sm:$0xf]
    %v5758 = vld [vmem:[%s3 + $0x20] sm:$0xf]
    %v5759 = vld [vmem:[%s3 + $0x24] sm:$0xf]
    %v5760 = vld [vmem:[%s3 + $0x28] sm:$0xf]
    %v5761 = vld [vmem:[%s3 + $0x2c] sm:$0xf]
    %v5762 = vld [vmem:[%s3 + $0x30] sm:$0xf]
    %v5763 = vld [vmem:[%s3 + $0x34] sm:$0xf]
    %v5764 = vld [vmem:[%s3 + $0x38] sm:$0xf]
    %v5765 = vld [vmem:[%s3 + $0x3c] sm:$0xf]
    %v5766 = vld [vmem:[%s3 + $0x40] sm:$0xf]
    %v5767 = vld [vmem:[%s3 + $0x44] sm:$0xf]
    %v5786 = vunpack.c.l.b16 %v5750
    %v5787 = vunpack.c.l.b16 %v5751
    %v5788 = vunpack.c.l.b16 %v5752
    %v5789 = vunpack.c.l.b16 %v5753
    %v5790 = vunpack.c.l.b16 %v5754
    %v5791 = vunpack.c.l.b16 %v5755
    %v5792 = vunpack.c.l.b16 %v5756
    %v5793 = vunpack.c.l.b16 %v5757
    %v5794 = vunpack.c.l.b16 %v5758
    %v5795 = vunpack.c.l.b16 %v5759
    %v5796 = vunpack.c.l.b16 %v5760
    %v5797 = vunpack.c.l.b16 %v5761
    %v5798 = vunpack.c.l.b16 %v5762
    %v5799 = vunpack.c.l.b16 %v5763
    %v5800 = vunpack.c.l.b16 %v5764
    %v5801 = vunpack.c.l.b16 %v5765
    %v5802 = vunpack.c.l.b16 %v5766
    %v5803 = vunpack.c.l.b16 %v5767
    %v5804 = vpack.c.b16 %v5787, %v5786
    %v5805 = vpack.c.b16 %v5789, %v5788
    %v5806 = vpack.c.b16 %v5791, %v5790
    %v5807 = vpack.c.b16 %v5793, %v5792
    %v5808 = vpack.c.b16 %v5795, %v5794
    %v5809 = vpack.c.b16 %v5797, %v5796
    %v5810 = vpack.c.b16 %v5799, %v5798
    %v5811 = vpack.c.b16 %v5801, %v5800
    %v5812 = vpack.c.b16 %v5803, %v5802
    %v5823 = vsel %vm2290, %v5664, 0
    %v5826 = vsel %vm2290, %v5666, 0
    %v5829 = vsel %vm2290, %v5668, 0
    %v5832 = vsel %vm2290, %v5670, 0
    %v5835 = vsel %vm2290, %v5669, 0
    %5837 = vmatpush.bf16.msra.mxu0 %v5811
    %5838 = vmatpush.bf16.msra.mxu0 %v5810
    %5839 = vmatpush.bf16.msra.mxu0 %v5809
    %5840 = vmatpush.bf16.msra.mxu0 %v5808
    %5841 = vmatpush.bf16.msra.mxu0 %v5807
    %5842 = vmatpush.bf16.msra.mxu0 %v5806
    %5843 = vmatpush.bf16.msra.mxu0 %v5805
    %5844 = vmatpush.bf16.msra.mxu0 %v5804
    %5845 = vmatmul.bf16.gmra.mxu0 %v5736
    %v5846 = vpop.f32.mrf.mxu0
    %v5847 = vadd.f32 0.0, %v5846
    %v5848 = vpop.f32.mrf.mxu0
    %v5849 = vadd.f32 0.0, %v5848
    %5850 = vmatmul.bf16.gmra.mxu0 %v5739
    %v5851 = vpop.f32.mrf.mxu0
    %v5852 = vadd.f32 0.0, %v5851
    %v5853 = vpop.f32.mrf.mxu0
    %v5854 = vadd.f32 0.0, %v5853
    %5855 = vmatmul.bf16.gmra.mxu0 %v5742
    %v5856 = vpop.f32.mrf.mxu0
    %v5857 = vadd.f32 0.0, %v5856
    %v5858 = vpop.f32.mrf.mxu0
    %v5859 = vadd.f32 0.0, %v5858
    %5860 = vmatmul.bf16.gmra.mxu0 %v5745
    %v5861 = vpop.f32.mrf.mxu0
    %v5862 = vadd.f32 0.0, %v5861
    %v5863 = vpop.f32.mrf.mxu0
    %v5864 = vadd.f32 0.0, %v5863
    %5865 = vmatmul.bf16.gmra.mxu0 %v5748
    %v5866 = vpop.f32.mrf.mxu0
    %v5867 = vadd.f32 0.0, %v5866
    %v5868 = vpop.f32.mrf.mxu0
    %5869 = vdwg.mxu0
    %5870 = vmatpush.bf16.msra.mxu0 0
    %5871 = vmatpush.bf16.msra.mxu0 0
    %5872 = vmatpush.bf16.msra.mxu0 0
    %5873 = vmatpush.bf16.msra.mxu0 0
    %5874 = vmatpush.bf16.msra.mxu0 0
    %5875 = vmatpush.bf16.msra.mxu0 0
    %5876 = vmatpush.bf16.msra.mxu0 0
    %5877 = vmatpush.bf16.msra.mxu0 %v5812
    %5878 = vmatmul.bf16.gmra.mxu0 %v5823
    %v5879 = vpop.f32.mrf.mxu0
    %v5880 = vadd.f32 %v5847, %v5879
    %v5881 = vpop.f32.mrf.mxu0
    %v5882 = vadd.f32 %v5849, %v5881
    %5883 = vmatmul.bf16.gmra.mxu0 %v5826
    %v5884 = vpop.f32.mrf.mxu0
    %v5885 = vadd.f32 %v5852, %v5884
    %v5886 = vpop.f32.mrf.mxu0
    %v5887 = vadd.f32 %v5854, %v5886
    %5888 = vmatmul.bf16.gmra.mxu0 %v5829
    %v5889 = vpop.f32.mrf.mxu0
    %v5890 = vadd.f32 %v5857, %v5889
    %v5891 = vpop.f32.mrf.mxu0
    %v5892 = vadd.f32 %v5859, %v5891
    %5893 = vmatmul.bf16.gmra.mxu0 %v5832
    %v5894 = vpop.f32.mrf.mxu0
    %v5895 = vadd.f32 %v5862, %v5894
    %v5896 = vpop.f32.mrf.mxu0
    %v5897 = vadd.f32 %v5864, %v5896
    %5898 = vmatmul.bf16.gmra.mxu0 %v5835
    %v5899 = vpop.f32.mrf.mxu0
    %v5900 = vadd.f32 %v5867, %v5899
    %v5901 = vpop.f32.mrf.mxu0
    %5902 = vdwg.mxu0
    %v5903 = vrot.slane %v5880, 1
    %v5904 = vrot.slane %v5882, 1
    %v5905 = vrot.slane %v5885, 1
    %v5906 = vrot.slane %v5887, 1
    %v5907 = vrot.slane %v5890, 1
    %v5908 = vrot.slane %v5892, 1
    %v5909 = vrot.slane %v5895, 1
    %v5910 = vrot.slane %v5897, 1
    %v5911 = vrot.slane %v5900, 1
    %v5912 = vsel %vm3108, %v5910, %v5911
    %v5913 = vsel %vm3108, %v5909, %v5910
    %v5914 = vsel %vm3108, %v5908, %v5909
    %v5915 = vsel %vm3108, %v5907, %v5908
    %v5916 = vsel %vm3108, %v5906, %v5907
    %v5917 = vsel %vm3108, %v5905, %v5906
    %v5918 = vsel %vm3108, %v5904, %v5905
    %v5919 = vsel %vm3108, %v5903, %v5904
    %v5920 = vsel %vm3108, %v5911, %v5903
    %v5921 = vmax.f32 %v5880, %v5919
    %v5922 = vmax.f32 %v5882, %v5918
    %v5923 = vmax.f32 %v5885, %v5917
    %v5924 = vmax.f32 %v5887, %v5916
    %v5925 = vmax.f32 %v5890, %v5915
    %v5926 = vmax.f32 %v5892, %v5914
    %v5927 = vmax.f32 %v5895, %v5913
    %v5928 = vmax.f32 %v5897, %v5912
    %v5929 = vmax.f32 %v5900, %v5920
    %v5930 = vrot.slane %v5921, 6
    %v5931 = vrot.slane %v5922, 6
    %v5932 = vrot.slane %v5923, 6
    %v5933 = vrot.slane %v5924, 6
    %v5934 = vrot.slane %v5925, 6
    %v5935 = vrot.slane %v5926, 6
    %v5936 = vrot.slane %v5927, 6
    %v5937 = vrot.slane %v5928, 6
    %v5938 = vrot.slane %v5929, 6
    %vm5939 = vcmp.lt.s32.totalorder %v3107, 2
    %v5940 = vsel %vm5939, %v5937, %v5938
    %v5941 = vsel %vm5939, %v5936, %v5937
    %v5942 = vsel %vm5939, %v5935, %v5936
    %v5943 = vsel %vm5939, %v5934, %v5935
    %v5944 = vsel %vm5939, %v5933, %v5934
    %v5945 = vsel %vm5939, %v5932, %v5933
    %v5946 = vsel %vm5939, %v5931, %v5932
    %v5947 = vsel %vm5939, %v5930, %v5931
    %v5948 = vsel %vm5939, %v5938, %v5930
    %v5949 = vmax.f32 %v5921, %v5947
    %v5950 = vmax.f32 %v5922, %v5946
    %v5951 = vmax.f32 %v5923, %v5945
    %v5952 = vmax.f32 %v5924, %v5944
    %v5953 = vmax.f32 %v5925, %v5943
    %v5954 = vmax.f32 %v5926, %v5942
    %v5955 = vmax.f32 %v5927, %v5941
    %v5956 = vmax.f32 %v5928, %v5940
    %v5957 = vmax.f32 %v5929, %v5948
    %5958 = vst.msk [vmem:[#allocation7] sm:$0xff] %vm2290, %v5949
    %5959 = vst.msk [vmem:[#allocation7 + $0x8] sm:$0xff] %vm2290, %v5950
    %5960 = vst.msk [vmem:[#allocation7 + $0x10] sm:$0xff] %vm2290, %v5951
    %5961 = vst.msk [vmem:[#allocation7 + $0x18] sm:$0xff] %vm2290, %v5952
    %5962 = vst.msk [vmem:[#allocation7 + $0x20] sm:$0xff] %vm2290, %v5953
    %5963 = vst.msk [vmem:[#allocation7 + $0x28] sm:$0xff] %vm2290, %v5954
    %5964 = vst.msk [vmem:[#allocation7 + $0x30] sm:$0xff] %vm2290, %v5955
    %5965 = vst.msk [vmem:[#allocation7 + $0x38] sm:$0xff] %vm2290, %v5956
    %5966 = vst.msk [vmem:[#allocation7 + $0x40] sm:$0xff] %vm2290, %v5957
    %s5967 = scalar_lea.vmem [#allocation7], 7
    %v5968 = vld [vmem:[%s5967] ss:$2 sm:$0x3]
    %s5969 = scalar_lea.vmem [#allocation7], 19
    %v5970 = vld [vmem:[%s5969] ss:$2 sm:$0x3]
    %s5971 = scalar_lea.vmem [#allocation7], 43
    %v5972 = vld [vmem:[%s5971] ss:$2 sm:$0x3]
    %s5973 = scalar_lea.vmem [#allocation7], 55
    %v5974 = vld [vmem:[%s5973] ss:$2 sm:$0x3]
    %v5976 = vrot.slane %v5970, 6
    %v5979 = vrot.slane %v5972, 4
    %v5982 = vrot.slane %v5974, 2
    %v5984 = vsel %vm2808, %v5968, %v5976
    %v5985 = vsel %vm4962, %v5984, %v5979
    %vm5986 = vcmask 1045504
    %v5987 = vsel %vm5986, %v5985, %v5982
    %v5988 = vsel %vm2290, %v5987, 0.0
    %v5989 = vrot.slane %v5988, 4
    %v5990 = vadd.f32 %v5988, %v5989
    %v5991 = vrot.slane %v5990, 2
    %v5992 = vadd.f32 %v5990, %v5991
    %v5993 = vrot.slane %v5992, 1
    %v5994 = vadd.f32 %v5992, %v5993
    %v5995 = vrcp.pop 8.0
    %v5996 = vmul.f32 8.0, %v5995
    %v5997 = vsub.f32 1.0, %v5996
    %v5998 = vmul.f32 %v5995, %v5997
    %v5999 = vadd.f32 %v5995, %v5998
    %vm6000 = vweird.f32 %v5995
    %v6001 = vsel %vm6000, %v5995, %v5999
    %v6002 = vmul.f32 %v5994, %v6001
    %v6003 = vsub.f32 %v5987, %v6002
    %v6004 = vmul.f32 %v6003, %v6003
    %v6005 = vsel %vm2290, %v6004, 0.0
    %v6006 = vrot.slane %v6005, 4
    %v6007 = vadd.f32 %v6005, %v6006
    %v6008 = vrot.slane %v6007, 2
    %v6009 = vadd.f32 %v6007, %v6008
    %v6010 = vrot.slane %v6009, 1
    %v6011 = vadd.f32 %v6009, %v6010
    %v6012 = vmul.f32 %v6011, %v6001
    %v6013 = vld [vmem:[%s7] sm:$0x1]
    %v6014 = vadd.f32 %v6012, 1e-05
    %v6015 = vrsqrt.pop %v6014
    %v6016 = vmul.f32 %v6015, %v6014
    %v6017 = vmul.f32 %v6016, %v6015
    %v6018 = vmul.f32 0.5, %v6017
    %v6019 = vsub.f32 1.5, %v6018
    %v6020 = vmul.f32 %v6015, %v6019
    %vm6021 = vweird.f32 %v6014
    %vm6022 = vweird.f32 %v6015
    %vm6023 = vmor %vm6021, %vm6022
    %v6024 = vsel %vm6023, %v6015, %v6020
    %v6025 = vmul.f32 %v6013, %v6024
    %v6026 = vld [vmem:[%s11] sm:$0x1]
    %v6027 = vmul.f32 %v6002, %v6025
    %v6028 = vsub.f32 %v6026, %v6027
    %v6030 = vperm.slane %v6025, 0
    %v6033 = vperm.slane %v6028, 0
    %v6035 = vmul.f32 %v5968, %v6030
    %v6036 = vadd.f32 %v6035, %v6033
    %v6037 = vmax.f32 %v6036, 0.0
    %v6038 = vpack.c.bf16 %v6037, %v6037
    %v6040 = vrot.slane %v6038, 7
    %vm6042 = vcmask 123905
    %6043 = vst.msk [vmem:[#allocation4 + $0x4] sm:$0x2] %vm6042, %v6040
    %v6044 = vmul.f32 %v5970, %v6030
    %v6045 = vadd.f32 %v6044, %v6033
    %v6046 = vmax.f32 %v6045, 0.0
    %v6047 = vpack.c.bf16 %v6046, %v6046
    %v6049 = vrot.slane %v6047, 5
    %6051 = vst.msk [vmem:[#allocation4 + $0x4] sm:$0x8] %vm5320, %v6049
    %v6052 = vmul.f32 %v5972, %v6030
    %v6053 = vadd.f32 %v6052, %v6033
    %v6054 = vmax.f32 %v6053, 0.0
    %v6055 = vpack.c.bf16 %v6054, %v6054
    %v6057 = vrot.slane %v6055, 7
    %6059 = vst.msk [vmem:[#allocation4 + $0xc] sm:$0x2] %vm6042, %v6057
    %v6060 = vmul.f32 %v5974, %v6030
    %v6061 = vadd.f32 %v6060, %v6033
    %v6062 = vmax.f32 %v6061, 0.0
    %v6063 = vpack.c.bf16 %v6062, %v6062
    %v6065 = vrot.slane %v6063, 5
    %6067 = vst.msk [vmem:[#allocation4 + $0xc] sm:$0x8] %vm5320, %v6065
    %v6068 = vld [vmem:[#allocation4] sm:$0xf]
    %v6069 = vld [vmem:[#allocation4 + $0x4] sm:$0xf]
    %v6070 = vld [vmem:[#allocation4 + $0x8] sm:$0xf]
    %v6071 = vld [vmem:[#allocation4 + $0xc] sm:$0xf]
    %v6072 = vld [vmem:[#allocation4 + $0x10] sm:$0x1]
    %v6073 = vld [vmem:[#allocation4] sm:$0xe]
    %v6074 = vld [vmem:[#allocation4] sm:$0xc]
    %v6075 = vld [vmem:[#allocation4 + $0x10] sm:$0x3]
    %v6076 = vld [vmem:[#allocation4 + $0x10] sm:$0x7]
    %v6077 = vld [vmem:[#allocation4] sm:$0x8]
    %v6078 = vld [vmem:[#allocation4 + $0x10] sm:$0xf]
    %v6079 = vld [vmem:[#allocation4 + $0x14] sm:$0x1]
    %v6080 = vld [vmem:[#allocation4 + $0x4] sm:$0xe]
    %v6085 = vunpack.c.l.b16 %v6068
    %v6086 = vunpack.c.l.b16 %v6069
    %v6087 = vunpack.c.l.b16 %v6070
    %v6088 = vunpack.c.l.b16 %v6071
    %v6089 = vpack.c.b16 %v6086, %v6085
    %v6090 = vpack.c.b16 %v6088, %v6087
    %v6092 = vunpack.c.l.b16 %v6072
    %v6093 = vpack.c.b16 %v6092, %v6092
    %v6095 = vshrl.u32 %v6089, 16
    %v6097 = vshll.u32 %v6089, 16
    %v6099 = vrot.slane %v6097, 1
    %v6100 = vor.u32 %v6095, %v6099
    %v6102 = vshll.u32 %v6090, 16
    %v6104 = vrot.slane %v6102, 1
    %v6105 = vsel %vm403, %v6100, %v6104
    %v6106 = vshrl.u32 %v6090, 16
    %v6108 = vor.u32 %v6106, %v6104
    %v6110 = vshll.u32 %v6093, 16
    %v6112 = vrot.slane %v6110, 1
    %v6113 = vsel %vm403, %v6108, %v6112
    %6114 = vrot.lane.b32.xlu0 %v6105, 16
    %v6115 = vpop.permute.xlu0 %6114
    %6116 = vrot.lane.b32.xlu0 %v6113, 16
    %v6117 = vpop.permute.xlu0 %6116
    %v6119 = vunpack.c.l.b16 %v6073
    %v6120 = vpack.c.b16 %v6086, %v6119
    %v6121 = vrot.slane %v6120, 1
    %v6122 = vrot.slane %v6090, 1
    %v6123 = vsel %vm816, %v6121, %v6122
    %v6124 = vrot.slane %v6093, 1
    %v6125 = vsel %vm816, %v6122, %v6124
    %6126 = vrot.lane.b32.xlu0 %v6123, 32
    %v6127 = vpop.permute.xlu0 %6126
    %6128 = vrot.lane.b32.xlu0 %v6125, 32
    %v6129 = vpop.permute.xlu0 %6128
    %v6132 = vunpack.c.l.b16 %v6074
    %v6133 = vunpack.c.l.b16 %v6075
    %v6134 = vpack.c.b16 %v6086, %v6132
    %v6135 = vpack.c.b16 %v6133, %v6133
    %v6136 = vrot.slane %v6134, 2
    %v6137 = vrot.slane %v6090, 2
    %v6138 = vsel %vm1346, %v6136, %v6137
    %v6139 = vrot.slane %v6135, 2
    %v6140 = vsel %vm1346, %v6137, %v6139
    %6141 = vrot.lane.b32.xlu0 %v6138, 48
    %v6142 = vpop.permute.xlu0 %6141
    %6143 = vrot.lane.b32.xlu0 %v6140, 48
    %v6144 = vpop.permute.xlu0 %6143
    %v6146 = vunpack.c.l.b16 %v6076
    %v6147 = vpack.c.b16 %v6146, %v6146
    %v6149 = vshrl.u32 %v6134, 16
    %v6151 = vrot.slane %v6149, 2
    %v6152 = vshll.u32 %v6134, 16
    %v6154 = vrot.slane %v6152, 3
    %v6155 = vor.u32 %v6151, %v6154
    %v6156 = vrot.slane %v6106, 2
    %v6157 = vrot.slane %v6102, 3
    %v6158 = vor.u32 %v6156, %v6157
    %v6159 = vsel %vm1612, %v6155, %v6158
    %v6161 = vshrl.u32 %v6147, 16
    %v6163 = vrot.slane %v6161, 2
    %v6164 = vshll.u32 %v6147, 16
    %v6166 = vrot.slane %v6164, 3
    %v6167 = vor.u32 %v6163, %v6166
    %v6168 = vsel %vm1612, %v6158, %v6167
    %6169 = vrot.lane.b32.xlu0 %v6159, 64
    %v6170 = vpop.permute.xlu0 %6169
    %6171 = vrot.lane.b32.xlu0 %v6168, 64
    %v6172 = vpop.permute.xlu0 %6171
    %v6174 = vunpack.c.l.b16 %v6077
    %v6175 = vpack.c.b16 %v6086, %v6174
    %v6176 = vrot.slane %v6175, 3
    %v6177 = vrot.slane %v6090, 3
    %v6178 = vsel %vm1876, %v6176, %v6177
    %v6179 = vrot.slane %v6147, 3
    %v6180 = vsel %vm1876, %v6177, %v6179
    %6181 = vrot.lane.b32.xlu0 %v6178, 80
    %v6182 = vpop.permute.xlu0 %6181
    %6183 = vrot.lane.b32.xlu0 %v6180, 80
    %v6184 = vpop.permute.xlu0 %6183
    %v6186 = vunpack.c.l.b16 %v6078
    %v6187 = vpack.c.b16 %v6087, %v6086
    %v6188 = vpack.c.b16 %v6186, %v6088
    %6189 = vrot.lane.b32.xlu0 %v6187, 96
    %v6190 = vpop.permute.xlu0 %6189
    %6191 = vrot.lane.b32.xlu0 %v6188, 96
    %v6192 = vpop.permute.xlu0 %6191
    %v6194 = vunpack.c.l.b16 %v6079
    %v6195 = vpack.c.b16 %v6194, %v6194
    %v6197 = vshrl.u32 %v6187, 16
    %v6199 = vshll.u32 %v6187, 16
    %v6201 = vrot.slane %v6199, 1
    %v6202 = vor.u32 %v6197, %v6201
    %v6204 = vshll.u32 %v6188, 16
    %v6206 = vrot.slane %v6204, 1
    %v6207 = vsel %vm403, %v6202, %v6206
    %v6208 = vshrl.u32 %v6188, 16
    %v6210 = vor.u32 %v6208, %v6206
    %v6212 = vshll.u32 %v6195, 16
    %v6214 = vrot.slane %v6212, 1
    %v6215 = vsel %vm403, %v6210, %v6214
    %6216 = vrot.lane.b32.xlu0 %v6207, 112
    %v6217 = vpop.permute.xlu0 %6216
    %6218 = vrot.lane.b32.xlu0 %v6215, 112
    %v6219 = vpop.permute.xlu0 %6218
    %v6221 = vunpack.c.l.b16 %v6080
    %v6222 = vpack.c.b16 %v6087, %v6221
    %v6223 = vrot.slane %v6222, 1
    %v6224 = vrot.slane %v6188, 1
    %v6225 = vsel %vm816, %v6223, %v6224
    %v6226 = vrot.slane %v6195, 1
    %v6227 = vsel %vm816, %v6224, %v6226
    %v6229 = vsel %vm2290, %v6089, %v6115
    %v6231 = vsel %vm2290, %v6090, %v6117
    %v6233 = vsel %vm2622, %v6229, %v6127
    %v6235 = vsel %vm2622, %v6231, %v6129
    %v6237 = vsel %vm4818, %v6233, %v6142
    %v6239 = vsel %vm4818, %v6235, %v6144
    %v6241 = vsel %vm4872, %v6237, %v6170
    %v6243 = vsel %vm4872, %v6239, %v6172
    %v6245 = vsel %vm5712, %v6241, %v6182
    %v6247 = vsel %vm5712, %v6243, %v6184
    %v6249 = vsel %vm5723, %v6245, %v6190
    %v6251 = vsel %vm5723, %v6247, %v6192
    %v6253 = vsel %vm5734, %v6249, %v6217
    %v6256 = vsel %vm5734, %v6251, %v6219
    %v6258 = vld [vmem:[%s4] sm:$0xf]
    %v6259 = vld [vmem:[%s4 + $0x4] sm:$0xf]
    %v6260 = vld [vmem:[%s4 + $0x8] sm:$0xf]
    %v6261 = vld [vmem:[%s4 + $0xc] sm:$0xf]
    %v6262 = vld [vmem:[%s4 + $0x10] sm:$0xf]
    %v6263 = vld [vmem:[%s4 + $0x14] sm:$0xf]
    %v6264 = vld [vmem:[%s4 + $0x18] sm:$0xf]
    %v6265 = vld [vmem:[%s4 + $0x1c] sm:$0xf]
    %v6266 = vld [vmem:[%s4 + $0x20] sm:$0xf]
    %v6267 = vld [vmem:[%s4 + $0x24] sm:$0xf]
    %v6268 = vld [vmem:[%s4 + $0x28] sm:$0xf]
    %v6269 = vld [vmem:[%s4 + $0x2c] sm:$0xf]
    %v6270 = vld [vmem:[%s4 + $0x30] sm:$0xf]
    %v6271 = vld [vmem:[%s4 + $0x34] sm:$0xf]
    %v6272 = vld [vmem:[%s4 + $0x38] sm:$0xf]
    %v6273 = vld [vmem:[%s4 + $0x3c] sm:$0xf]
    %v6274 = vld [vmem:[%s4 + $0x40] sm:$0xf]
    %v6275 = vld [vmem:[%s4 + $0x44] sm:$0xf]
    %v6294 = vunpack.c.l.b16 %v6258
    %v6295 = vunpack.c.l.b16 %v6259
    %v6296 = vunpack.c.l.b16 %v6260
    %v6297 = vunpack.c.l.b16 %v6261
    %v6298 = vunpack.c.l.b16 %v6262
    %v6299 = vunpack.c.l.b16 %v6263
    %v6300 = vunpack.c.l.b16 %v6264
    %v6301 = vunpack.c.l.b16 %v6265
    %v6302 = vunpack.c.l.b16 %v6266
    %v6303 = vunpack.c.l.b16 %v6267
    %v6304 = vunpack.c.l.b16 %v6268
    %v6305 = vunpack.c.l.b16 %v6269
    %v6306 = vunpack.c.l.b16 %v6270
    %v6307 = vunpack.c.l.b16 %v6271
    %v6308 = vunpack.c.l.b16 %v6272
    %v6309 = vunpack.c.l.b16 %v6273
    %v6310 = vunpack.c.l.b16 %v6274
    %v6311 = vunpack.c.l.b16 %v6275
    %v6312 = vpack.c.b16 %v6295, %v6294
    %v6313 = vpack.c.b16 %v6297, %v6296
    %v6314 = vpack.c.b16 %v6299, %v6298
    %v6315 = vpack.c.b16 %v6301, %v6300
    %v6316 = vpack.c.b16 %v6303, %v6302
    %v6317 = vpack.c.b16 %v6305, %v6304
    %v6318 = vpack.c.b16 %v6307, %v6306
    %v6319 = vpack.c.b16 %v6309, %v6308
    %v6320 = vpack.c.b16 %v6311, %v6310
    %v6331 = vsel %vm2290, %v6225, 0
    %v6334 = vsel %vm2290, %v6227, 0
    %6336 = vmatpush.bf16.msra.mxu0 %v6319
    %6337 = vmatpush.bf16.msra.mxu0 %v6318
    %6338 = vmatpush.bf16.msra.mxu0 %v6317
    %6339 = vmatpush.bf16.msra.mxu0 %v6316
    %6340 = vmatpush.bf16.msra.mxu0 %v6315
    %6341 = vmatpush.bf16.msra.mxu0 %v6314
    %6342 = vmatpush.bf16.msra.mxu0 %v6313
    %6343 = vmatpush.bf16.msra.mxu0 %v6312
    %6344 = vmatmul.bf16.gmra.mxu0 %v6253
    %v6345 = vpop.f32.mrf.mxu0
    %v6346 = vadd.f32 0.0, %v6345
    %v6347 = vpop.f32.mrf.mxu0
    %v6348 = vadd.f32 0.0, %v6347
    %6349 = vmatmul.bf16.gmra.mxu0 %v6256
    %v6350 = vpop.f32.mrf.mxu0
    %v6351 = vadd.f32 0.0, %v6350
    %v6352 = vpop.f32.mrf.mxu0
    %v6353 = vadd.f32 0.0, %v6352
    %6354 = vdwg.mxu0
    %6355 = vmatpush.bf16.msra.mxu0 0
    %6356 = vmatpush.bf16.msra.mxu0 0
    %6357 = vmatpush.bf16.msra.mxu0 0
    %6358 = vmatpush.bf16.msra.mxu0 0
    %6359 = vmatpush.bf16.msra.mxu0 0
    %6360 = vmatpush.bf16.msra.mxu0 0
    %6361 = vmatpush.bf16.msra.mxu0 0
    %6362 = vmatpush.bf16.msra.mxu0 %v6320
    %6363 = vmatmul.bf16.gmra.mxu0 %v6331
    %v6364 = vpop.f32.mrf.mxu0
    %v6365 = vadd.f32 %v6346, %v6364
    %v6366 = vpop.f32.mrf.mxu0
    %v6367 = vadd.f32 %v6348, %v6366
    %6368 = vmatmul.bf16.gmra.mxu0 %v6334
    %v6369 = vpop.f32.mrf.mxu0
    %v6370 = vadd.f32 %v6351, %v6369
    %v6371 = vpop.f32.mrf.mxu0
    %v6372 = vadd.f32 %v6353, %v6371
    %6373 = vdwg.mxu0
    %v6374 = vrot.slane %v6365, 1
    %v6375 = vrot.slane %v6367, 1
    %v6376 = vrot.slane %v6370, 1
    %v6377 = vrot.slane %v6372, 1
    %v6378 = vsel %vm3108, %v6376, %v6377
    %v6379 = vsel %vm3108, %v6375, %v6376
    %v6380 = vsel %vm3108, %v6374, %v6375
    %v6381 = vsel %vm3108, %v6377, %v6374
    %v6382 = vmax.f32 %v6365, %v6380
    %v6383 = vmax.f32 %v6367, %v6379
    %v6384 = vmax.f32 %v6370, %v6378
    %v6385 = vmax.f32 %v6372, %v6381
    %v6386 = vrot.slane %v6382, 4
    %v6387 = vrot.slane %v6383, 4
    %v6388 = vrot.slane %v6384, 4
    %v6389 = vrot.slane %v6385, 4
    %vm6390 = vcmp.lt.s32.totalorder %v3107, 4
    %v6391 = vsel %vm6390, %v6388, %v6389
    %v6392 = vsel %vm6390, %v6387, %v6388
    %v6393 = vsel %vm6390, %v6386, %v6387
    %v6394 = vsel %vm6390, %v6389, %v6386
    %v6395 = vmax.f32 %v6382, %v6393
    %v6396 = vmax.f32 %v6383, %v6392
    %v6397 = vmax.f32 %v6384, %v6391
    %v6398 = vmax.f32 %v6385, %v6394
    %6399 = vst.msk [vmem:[#allocation8] sm:$0xff] %vm2290, %v6395
    %6400 = vst.msk [vmem:[#allocation8 + $0x8] sm:$0xff] %vm2290, %v6396
    %6401 = vst.msk [vmem:[#allocation8 + $0x10] sm:$0xff] %vm2290, %v6397
    %6402 = vst.msk [vmem:[#allocation8 + $0x18] sm:$0xff] %vm2290, %v6398
    %v6403 = vld [vmem:[#allocation8 + $0x5] sm:$0x1]
    %v6404 = vld [vmem:[#allocation8 + $0x15] sm:$0x1]
    %v6406 = vrot.slane %v6404, 7
    %vm6408 = vcmask 1040384
    %v6409 = vsel %vm6408, %v6403, %v6406
    %v6410 = vsel %vm5345, %v6409, 0.0
    %v6411 = vrot.slane %v6410, 4
    %v6412 = vadd.f32 %v6410, %v6411
    %v6413 = vrot.slane %v6412, 2
    %v6414 = vadd.f32 %v6412, %v6413
    %v6415 = vrot.slane %v6414, 1
    %v6416 = vadd.f32 %v6414, %v6415
    %v6417 = vrcp.pop 2.0
    %v6418 = vmul.f32 2.0, %v6417
    %v6419 = vsub.f32 1.0, %v6418
    %v6420 = vmul.f32 %v6417, %v6419
    %v6421 = vadd.f32 %v6417, %v6420
    %vm6422 = vweird.f32 %v6417
    %v6423 = vsel %vm6422, %v6417, %v6421
    %v6424 = vmul.f32 %v6416, %v6423
    %v6425 = vsub.f32 %v6409, %v6424
    %v6426 = vmul.f32 %v6425, %v6425
    %v6427 = vsel %vm5345, %v6426, 0.0
    %v6428 = vrot.slane %v6427, 4
    %v6429 = vadd.f32 %v6427, %v6428
    %v6430 = vrot.slane %v6429, 2
    %v6431 = vadd.f32 %v6429, %v6430
    %v6432 = vrot.slane %v6431, 1
    %v6433 = vadd.f32 %v6431, %v6432
    %v6434 = vmul.f32 %v6433, %v6423
    %v6435 = vld [vmem:[%s8] sm:$0x1]
    %v6436 = vadd.f32 %v6434, 1e-05
    %v6437 = vrsqrt.pop %v6436
    %v6438 = vmul.f32 %v6437, %v6436
    %v6439 = vmul.f32 %v6438, %v6437
    %v6440 = vmul.f32 0.5, %v6439
    %v6441 = vsub.f32 1.5, %v6440
    %v6442 = vmul.f32 %v6437, %v6441
    %vm6443 = vweird.f32 %v6436
    %vm6444 = vweird.f32 %v6437
    %vm6445 = vmor %vm6443, %vm6444
    %v6446 = vsel %vm6445, %v6437, %v6442
    %v6447 = vmul.f32 %v6435, %v6446
    %v6448 = vld [vmem:[%s12] sm:$0x1]
    %v6449 = vmul.f32 %v6424, %v6447
    %v6450 = vsub.f32 %v6448, %v6449
    %v6452 = vperm.slane %v6447, 0
    %v6454 = vmul.f32 %v6409, %v6452
    %v6456 = vperm.slane %v6450, 0
    %v6458 = vadd.f32 %v6454, %v6456
    %v6459 = vmax.f32 %v6458, 0.0
    %v6460 = vpack.c.bf16 %v6459, %v6459
    %v6461 = vld [vmem:[%s13] sm:$0xf]
    %v6462 = vld [vmem:[%s13 + $0x4] sm:$0xf]
    %v6463 = vld [vmem:[%s14] sm:$0x1]
    %v6465 = vperm.slane %v6463, 0
    %v6469 = vunpack.c.l.b16 %v6461
    %v6470 = vunpack.c.l.b16 %v6462
    %v6471 = vpack.c.b16 %v6470, %v6469
    %v6474 = vsel %vm2290, %v6460, 0
    %6476 = vmatpush.bf16.msra.mxu0 0
    %6477 = vmatpush.bf16.msra.mxu0 0
    %6478 = vmatpush.bf16.msra.mxu0 0
    %6479 = vmatpush.bf16.msra.mxu0 0
    %6480 = vmatpush.bf16.msra.mxu0 0
    %6481 = vmatpush.bf16.msra.mxu0 0
    %6482 = vmatpush.bf16.msra.mxu0 0
    %6483 = vmatpush.bf16.msra.mxu0 %v6471
    %6484 = vmatmul.bf16.gmra.mxu0 %v6474
    %v6485 = vpop.f32.mrf.mxu0
    %v6486 = vadd.f32 %v6465, %v6485
    %v6487 = vpop.f32.mrf.mxu0
    %6488 = vdwg.mxu0
    %vm6489 = vcmask 74752
    %6490 = vst.msk [vmem:[#allocation9] sm:$0x3] %vm6489, %v6486
    // Predicated region
    $region62: #{tpu_custom_call.1} parent=1 // pred_check
      _
    $region63: #{tpu_custom_call.1} parent=1 // pred_check_branch
      %6492 = sbr.rel (0) target = $region65
    $region64: #{tpu_custom_call.1} parent=1 // pred_region
      %6494 = vsyncadd [#allocation10], 0
      %s6496 = sshll.u32 [#allocation9], 4
      %s6497 = int_to_ptr.vmem [resolvable:$true] %s6496
      %s6498 = sshll.u32 %s15, 4
      %s6499 = int_to_ptr.hbm [resolvable:$true] %s6498
      %6501 = dma.vmem_to_hbm [thread:$0]  %s6497, 32, %s6499, [#allocation10]
    $region65: #{tpu_custom_call.1} parent=1 // pred_fallthru
      _
    // Predicated region
    $region66: #{tpu_custom_call.1} parent=1 // pred_check
      _
    $region67: #{tpu_custom_call.1} parent=1 // pred_check_branch
      %6503 = sbr.rel (0) target = $region69
    $region68: #{tpu_custom_call.1} parent=1 // pred_region
      %6505 = dma.done [#allocation10], 32
    $region69: #{tpu_custom_call.1} parent=1 // pred_fallthru
      _
    %6506 = vsyncpa [#allocation10], 1

</llo_original>
